<compile_context>
chip_gen: v7x
topology: tpu7x:2x2x1
jax: 0.10.0
libtpu: 0.0.40
codegen_flags: <defaults>
</compile_context>

<pallas_src>
import functools

import jax
import jax.numpy as jnp
from jax.experimental import pallas as pl
from jax.experimental.pallas import tpu as pltpu


# ----------------------------------------------------------------------------
# Depthwise KxK 'same' conv (dilation=dil) + bias + residual, in (C, HW) layout
# ----------------------------------------------------------------------------
def _dwconv_residual(x, w_ck, b_c1, rr, cc, *, H, W, K, dil):
    """x: (C, H*W) f32. w_ck: (C, K*K). b_c1: (C, 1). rr/cc: (1, H*W) int32.

    Each tap is a lane-axis roll (XLU slot) + border mask (VPU select), so the
    whole accumulation stays lane-dense and needs no padded scratch.
    """
    HW = H * W
    half = K // 2

    # Per-offset validity masks, computed once and reused across the K*K taps.
    row_ok = []
    col_ok = []
    for k in range(K):
        d = (k - half) * dil
        row_ok.append(jnp.logical_and(rr + d >= 0, rr + d < H))
        col_ok.append(jnp.logical_and(cc + d >= 0, cc + d < W))

    acc = x + b_c1                                   # fused residual + bias
    for kh in range(K):
        dh = (kh - half) * dil
        for kw in range(K):
            dw = (kw - half) * dil
            shift = dh * W + dw                      # flat-index tap offset
            if shift == 0:
                src = x
            else:
                src = pltpu.roll(x, shift=(-shift) % HW, axis=1)
            mask = jnp.logical_and(row_ok[kh], col_ok[kw])       # (1, HW)
            w_tap = w_ck[:, kh * K + kw:kh * K + kw + 1]         # (C, 1)
            acc = acc + jnp.where(mask, src, 0.0) * w_tap
    return acc


# ----------------------------------------------------------------------------
# Fused kernel: dwconv(7x7,d=1)+res -> dwconv(7x7,d=3)+res -> LN -> MLP -> +in
# One grid step per batch element; everything intermediate stays in VMEM.
# ----------------------------------------------------------------------------
def _focal_block_kernel(x_ref, wdw_ref, bdw_ref, wdw3_ref, bdw3_ref,
                        g_ref, beta_ref, w1t_ref, b1_ref, w2t_ref, b2_ref,
                        rc_ref, out_ref, *, H, W, K, eps):
    x = x_ref[0]                                     # (C, HW) lane-dense
    rr = rc_ref[0:1, :]                              # (1, HW) row index
    cc = rc_ref[1:2, :]                              # (1, HW) col index

    # dwconv(7x7, d=1) + input ; dwconv(7x7, d=3) + x1
    x1 = _dwconv_residual(x, wdw_ref[...], bdw_ref[...], rr, cc,
                          H=H, W=W, K=K, dil=1)
    x2 = _dwconv_residual(x1, wdw3_ref[...], bdw3_ref[...], rr, cc,
                          H=H, W=W, K=K, dil=3)

    # LayerNorm (channels_last) == per-pixel reduction over the C sublane axis.
    mean = jnp.mean(x2, axis=0, keepdims=True)                   # (1, HW)
    xc = x2 - mean
    var = jnp.mean(xc * xc, axis=0, keepdims=True)
    xn = xc * jax.lax.rsqrt(var + eps)
    xn = xn * g_ref[...] + beta_ref[...]                         # per-channel affine

    # MLP with transposed weights: MXU N dimension = HW (lane-dense, >=128).
    h = jnp.dot(w1t_ref[...], xn, preferred_element_type=jnp.float32)
    h = h + b1_ref[...]
    h = 0.5 * h * (1.0 + jax.lax.erf(h * 0.7071067811865476))    # exact GELU
    y = jnp.dot(w2t_ref[...], h, preferred_element_type=jnp.float32)
    y = y + b2_ref[...]

    # gamma is None (layer_scale_init_value == 0); drop_path modules are identity.
    out_ref[0] = x + y                                           # lane-dense store


def focal_next_block(x_nchw, params):
    """NCHW in / NCHW out, matching the PyTorch module's forward."""
    B, C, H, W = x_nchw.shape
    K = params["w_dw"].shape[0]
    HW = H * W
    H4 = params["w1"].shape[1]
    f32 = jnp.float32

    x_flat = x_nchw.reshape(B, C, HW).astype(f32)                 # relabel only
    w_dw = params["w_dw"].reshape(K * K, C).T.astype(f32)         # (C, K*K)
    w_dw3 = params["w_dw3"].reshape(K * K, C).T.astype(f32)       # (C, K*K)
    b_dw = params["b_dw"].reshape(C, 1).astype(f32)
    b_dw3 = params["b_dw3"].reshape(C, 1).astype(f32)
    ln_g = params["ln_g"].reshape(C, 1).astype(f32)
    ln_b = params["ln_b"].reshape(C, 1).astype(f32)
    w1t = params["w1"].T.astype(f32)                              # (4C, C)
    b1 = params["b1"].reshape(H4, 1).astype(f32)
    w2t = params["w2"].T.astype(f32)                              # (C, 4C)
    b2 = params["b2"].reshape(C, 1).astype(f32)

    # Row / column index of every flattened spatial position (for edge masks).
    rows = jnp.repeat(jnp.arange(H, dtype=jnp.int32), W)
    cols = jnp.tile(jnp.arange(W, dtype=jnp.int32), H)
    rc = jnp.stack([rows, cols], axis=0)                          # (2, HW)

    kern = functools.partial(_focal_block_kernel, H=H, W=W, K=K, eps=1e-6)
    const2 = lambda i: (0, 0)

    # Explicit VMEM budget: double-buffered in/out blocks + resident
    # activations (x/x1/x2/rolled tap + (4C,HW) GELU intermediate) + weights.
    vmem_bytes = 4 * (4 * C * HW
                      + 5 * C * HW + H4 * HW
                      + 2 * C * K * K + 2 * C * H4
                      + H4 + 7 * C + 2 * HW)
    vmem_limit = int(min(max(2 * vmem_bytes, 16 << 20), 64 << 20))

    flops = B * (2 * 2 * K * K * C * HW + 2 * 2 * H4 * C * HW)
    cost = pl.CostEstimate(flops=flops,
                           transcendentals=B * H4 * HW,
                           bytes_accessed=2 * B * C * HW * 4)

    out_flat = pl.pallas_call(
        kern,
        out_shape=jax.ShapeDtypeStruct((B, C, HW), f32),
        grid=(B,),
        in_specs=[
            pl.BlockSpec((1, C, HW), lambda i: (i, 0, 0)),   # x (NCHW, flat HW)
            pl.BlockSpec((C, K * K), const2),                # dwconv d=1 weights
            pl.BlockSpec((C, 1), const2),                    # dwconv d=1 bias
            pl.BlockSpec((C, K * K), const2),                # dwconv d=3 weights
            pl.BlockSpec((C, 1), const2),                    # dwconv d=3 bias
            pl.BlockSpec((C, 1), const2),                    # LN gamma
            pl.BlockSpec((C, 1), const2),                    # LN beta
            pl.BlockSpec((H4, C), const2),                   # pwconv1 weight^T
            pl.BlockSpec((H4, 1), const2),                   # pwconv1 bias
            pl.BlockSpec((C, H4), const2),                   # pwconv2 weight^T
            pl.BlockSpec((C, 1), const2),                    # pwconv2 bias
            pl.BlockSpec((2, HW), const2),                   # row/col indices
        ],
        out_specs=pl.BlockSpec((1, C, HW), lambda i: (i, 0, 0)),
        compiler_params=pltpu.CompilerParams(
            dimension_semantics=("parallel",),
            vmem_limit_bytes=vmem_limit),
        cost_estimate=cost,
    )(x_flat, w_dw, b_dw, w_dw3, b_dw3, ln_g, ln_b, w1t, b1, w2t, b2, rc)

    return out_flat.reshape(B, C, H, W)


# ----------------------------------------------------------------------------
# Pure-JAX reference (mirrors the PyTorch forward) for a correctness check.
# ----------------------------------------------------------------------------
def _reference(x_nchw, params):
    x = jnp.transpose(x_nchw, (0, 2, 3, 1)).astype(jnp.float32)
    C = x.shape[-1]

    def dw(xin, w, b, dil):
        wr = w.reshape(7, 7, 1, C)
        pad = dil * 3
        out = jax.lax.conv_general_dilated(
            xin, wr, window_strides=(1, 1), padding=[(pad, pad), (pad, pad)],
            rhs_dilation=(dil, dil),
            dimension_numbers=("NHWC", "HWIO", "NHWC"),
            feature_group_count=C)
        return out + b

    x1 = dw(x, params["w_dw"], params["b_dw"], 1) + x
    x2 = dw(x1, params["w_dw3"], params["b_dw3"], 3) + x1
    mean = x2.mean(-1, keepdims=True)
    var = ((x2 - mean) ** 2).mean(-1, keepdims=True)
    xn = (x2 - mean) / jnp.sqrt(var + 1e-6)
    xn = xn * params["ln_g"] + params["ln_b"]
    h = xn @ params["w1"] + params["b1"]
    h = 0.5 * h * (1.0 + jax.lax.erf(h * 0.7071067811865476))
    y = h @ params["w2"] + params["b2"]
    y = x + y
    return jnp.transpose(y, (0, 3, 1, 2))


if __name__ == "__main__":
    B, C, H, W = 2, 32, 16, 16           # dim = 32, hidden = 4*dim = 128
    key = jax.random.PRNGKey(0)
    ks = jax.random.split(key, 10)

    params = {
        "w_dw":  0.1 * jax.random.normal(ks[0], (7, 7, C), jnp.float32),
        "b_dw":  0.1 * jax.random.normal(ks[1], (C,), jnp.float32),
        "w_dw3": 0.1 * jax.random.normal(ks[2], (7, 7, C), jnp.float32),
        "b_dw3": 0.1 * jax.random.normal(ks[3], (C,), jnp.float32),
        "ln_g":  jnp.ones((C,), jnp.float32),
        "ln_b":  jnp.zeros((C,), jnp.float32),
        "w1":    0.1 * jax.random.normal(ks[4], (C, 4 * C), jnp.float32),
        "b1":    0.1 * jax.random.normal(ks[5], (4 * C,), jnp.float32),
        "w2":    0.1 * jax.random.normal(ks[6], (4 * C, C), jnp.float32),
        "b2":    0.1 * jax.random.normal(ks[7], (C,), jnp.float32),
    }
    x = jax.random.normal(ks[8], (B, C, H, W), jnp.float32)

    out = jax.block_until_ready(focal_next_block(x, params))
    ref = jax.block_until_ready(_reference(x, params))
    assert out.shape == (B, C, H, W)
    err = float(jnp.max(jnp.abs(out - ref)))
    assert jnp.allclose(out, ref, atol=2e-4, rtol=2e-4), err
    print("KERNEL_OK")
</pallas_src>

<mosaic_0001>
module attributes {stable_mosaic.version = 11 : i64} {
  func.func @_focal_block_kernel(%arg0: i32, %arg1: memref<1x32x256xf32, #tpu.memory_space<vmem>>, %arg2: memref<32x49xf32, #tpu.memory_space<vmem>>, %arg3: memref<32x1xf32, #tpu.memory_space<vmem>>, %arg4: memref<32x49xf32, #tpu.memory_space<vmem>>, %arg5: memref<32x1xf32, #tpu.memory_space<vmem>>, %arg6: memref<32x1xf32, #tpu.memory_space<vmem>>, %arg7: memref<32x1xf32, #tpu.memory_space<vmem>>, %arg8: memref<128x32xf32, #tpu.memory_space<vmem>>, %arg9: memref<128x1xf32, #tpu.memory_space<vmem>>, %arg10: memref<32x128xf32, #tpu.memory_space<vmem>>, %arg11: memref<32x1xf32, #tpu.memory_space<vmem>>, %arg12: memref<2x256xi32, #tpu.memory_space<vmem>>, %arg13: memref<1x32x256xf32, #tpu.memory_space<vmem>>) attributes {dimension_semantics = [#tpu.dimension_semantics<parallel>], iteration_bounds = array<i64: 2>, scalar_prefetch = 0 : i64, scratch_operands = 0 : i64, tpu.core_type = #tpu.core_type<tc>, window_params = [{transform_indices = @transform_0, window_bounds = array<i64: 1, 32, 256>}, {pipeline_mode = #tpu.pipeline_mode<synchronous>, transform_indices = @transform_1, window_bounds = array<i64: 32, 49>}, {pipeline_mode = #tpu.pipeline_mode<synchronous>, transform_indices = @transform_2, window_bounds = array<i64: 32, 1>}, {pipeline_mode = #tpu.pipeline_mode<synchronous>, transform_indices = @transform_3, window_bounds = array<i64: 32, 49>}, {pipeline_mode = #tpu.pipeline_mode<synchronous>, transform_indices = @transform_4, window_bounds = array<i64: 32, 1>}, {pipeline_mode = #tpu.pipeline_mode<synchronous>, transform_indices = @transform_5, window_bounds = array<i64: 32, 1>}, {pipeline_mode = #tpu.pipeline_mode<synchronous>, transform_indices = @transform_6, window_bounds = array<i64: 32, 1>}, {pipeline_mode = #tpu.pipeline_mode<synchronous>, transform_indices = @transform_7, window_bounds = array<i64: 128, 32>}, {pipeline_mode = #tpu.pipeline_mode<synchronous>, transform_indices = @transform_8, window_bounds = array<i64: 128, 1>}, {pipeline_mode = #tpu.pipeline_mode<synchronous>, transform_indices = @transform_9, window_bounds = array<i64: 32, 128>}, {pipeline_mode = #tpu.pipeline_mode<synchronous>, transform_indices = @transform_10, window_bounds = array<i64: 32, 1>}, {pipeline_mode = #tpu.pipeline_mode<synchronous>, transform_indices = @transform_11, window_bounds = array<i64: 2, 256>}, {transform_indices = @transform_12, window_bounds = array<i64: 1, 32, 256>}]} {
    %c0 = arith.constant 0 : index
    %c0_0 = arith.constant 0 : index
    %c0_1 = arith.constant 0 : index
    %0 = vector.load %arg1[%c0, %c0_0, %c0_1] : memref<1x32x256xf32, #tpu.memory_space<vmem>>, vector<1x32x256xf32>
    %1 = vector.shape_cast %0 : vector<1x32x256xf32> to vector<32x256xf32>
    %c0_2 = arith.constant 0 : index
    %c0_3 = arith.constant 0 : index
    %2 = vector.load %arg12[%c0_2, %c0_3] : memref<2x256xi32, #tpu.memory_space<vmem>>, vector<1x256xi32>
    %c1 = arith.constant 1 : index
    %c0_4 = arith.constant 0 : index
    %3 = vector.load %arg12[%c1, %c0_4] : memref<2x256xi32, #tpu.memory_space<vmem>>, vector<1x256xi32>
    %c0_5 = arith.constant 0 : index
    %c0_6 = arith.constant 0 : index
    %4 = vector.load %arg2[%c0_5, %c0_6] : memref<32x49xf32, #tpu.memory_space<vmem>>, vector<32x49xf32>
    %c0_7 = arith.constant 0 : index
    %c0_8 = arith.constant 0 : index
    %5 = vector.load %arg3[%c0_7, %c0_8] : memref<32x1xf32, #tpu.memory_space<vmem>>, vector<32x1xf32>
    %c-3_i32 = arith.constant -3 : i32
    %6 = vector.broadcast %c-3_i32 : i32 to vector<1x256xi32>
    %7 = arith.addi %2, %6 : vector<1x256xi32>
    %c0_i32 = arith.constant 0 : i32
    %8 = vector.broadcast %c0_i32 : i32 to vector<1x256xi32>
    %9 = arith.cmpi sge, %7, %8 : vector<1x256xi32>
    %c-3_i32_9 = arith.constant -3 : i32
    %10 = vector.broadcast %c-3_i32_9 : i32 to vector<1x256xi32>
    %11 = arith.addi %2, %10 : vector<1x256xi32>
    %c16_i32 = arith.constant 16 : i32
    %12 = vector.broadcast %c16_i32 : i32 to vector<1x256xi32>
    %13 = arith.cmpi slt, %11, %12 : vector<1x256xi32>
    %14 = arith.andi %9, %13 : vector<1x256xi1>
    %c-3_i32_10 = arith.constant -3 : i32
    %15 = vector.broadcast %c-3_i32_10 : i32 to vector<1x256xi32>
    %16 = arith.addi %3, %15 : vector<1x256xi32>
    %c0_i32_11 = arith.constant 0 : i32
    %17 = vector.broadcast %c0_i32_11 : i32 to vector<1x256xi32>
    %18 = arith.cmpi sge, %16, %17 : vector<1x256xi32>
    %c-3_i32_12 = arith.constant -3 : i32
    %19 = vector.broadcast %c-3_i32_12 : i32 to vector<1x256xi32>
    %20 = arith.addi %3, %19 : vector<1x256xi32>
    %c16_i32_13 = arith.constant 16 : i32
    %21 = vector.broadcast %c16_i32_13 : i32 to vector<1x256xi32>
    %22 = arith.cmpi slt, %20, %21 : vector<1x256xi32>
    %23 = arith.andi %18, %22 : vector<1x256xi1>
    %c-2_i32 = arith.constant -2 : i32
    %24 = vector.broadcast %c-2_i32 : i32 to vector<1x256xi32>
    %25 = arith.addi %2, %24 : vector<1x256xi32>
    %c0_i32_14 = arith.constant 0 : i32
    %26 = vector.broadcast %c0_i32_14 : i32 to vector<1x256xi32>
    %27 = arith.cmpi sge, %25, %26 : vector<1x256xi32>
    %c-2_i32_15 = arith.constant -2 : i32
    %28 = vector.broadcast %c-2_i32_15 : i32 to vector<1x256xi32>
    %29 = arith.addi %2, %28 : vector<1x256xi32>
    %c16_i32_16 = arith.constant 16 : i32
    %30 = vector.broadcast %c16_i32_16 : i32 to vector<1x256xi32>
    %31 = arith.cmpi slt, %29, %30 : vector<1x256xi32>
    %32 = arith.andi %27, %31 : vector<1x256xi1>
    %c-2_i32_17 = arith.constant -2 : i32
    %33 = vector.broadcast %c-2_i32_17 : i32 to vector<1x256xi32>
    %34 = arith.addi %3, %33 : vector<1x256xi32>
    %c0_i32_18 = arith.constant 0 : i32
    %35 = vector.broadcast %c0_i32_18 : i32 to vector<1x256xi32>
    %36 = arith.cmpi sge, %34, %35 : vector<1x256xi32>
    %c-2_i32_19 = arith.constant -2 : i32
    %37 = vector.broadcast %c-2_i32_19 : i32 to vector<1x256xi32>
    %38 = arith.addi %3, %37 : vector<1x256xi32>
    %c16_i32_20 = arith.constant 16 : i32
    %39 = vector.broadcast %c16_i32_20 : i32 to vector<1x256xi32>
    %40 = arith.cmpi slt, %38, %39 : vector<1x256xi32>
    %41 = arith.andi %36, %40 : vector<1x256xi1>
    %c-1_i32 = arith.constant -1 : i32
    %42 = vector.broadcast %c-1_i32 : i32 to vector<1x256xi32>
    %43 = arith.addi %2, %42 : vector<1x256xi32>
    %c0_i32_21 = arith.constant 0 : i32
    %44 = vector.broadcast %c0_i32_21 : i32 to vector<1x256xi32>
    %45 = arith.cmpi sge, %43, %44 : vector<1x256xi32>
    %c-1_i32_22 = arith.constant -1 : i32
    %46 = vector.broadcast %c-1_i32_22 : i32 to vector<1x256xi32>
    %47 = arith.addi %2, %46 : vector<1x256xi32>
    %c16_i32_23 = arith.constant 16 : i32
    %48 = vector.broadcast %c16_i32_23 : i32 to vector<1x256xi32>
    %49 = arith.cmpi slt, %47, %48 : vector<1x256xi32>
    %50 = arith.andi %45, %49 : vector<1x256xi1>
    %c-1_i32_24 = arith.constant -1 : i32
    %51 = vector.broadcast %c-1_i32_24 : i32 to vector<1x256xi32>
    %52 = arith.addi %3, %51 : vector<1x256xi32>
    %c0_i32_25 = arith.constant 0 : i32
    %53 = vector.broadcast %c0_i32_25 : i32 to vector<1x256xi32>
    %54 = arith.cmpi sge, %52, %53 : vector<1x256xi32>
    %c-1_i32_26 = arith.constant -1 : i32
    %55 = vector.broadcast %c-1_i32_26 : i32 to vector<1x256xi32>
    %56 = arith.addi %3, %55 : vector<1x256xi32>
    %c16_i32_27 = arith.constant 16 : i32
    %57 = vector.broadcast %c16_i32_27 : i32 to vector<1x256xi32>
    %58 = arith.cmpi slt, %56, %57 : vector<1x256xi32>
    %59 = arith.andi %54, %58 : vector<1x256xi1>
    %c0_i32_28 = arith.constant 0 : i32
    %60 = vector.broadcast %c0_i32_28 : i32 to vector<1x256xi32>
    %61 = arith.addi %2, %60 : vector<1x256xi32>
    %c0_i32_29 = arith.constant 0 : i32
    %62 = vector.broadcast %c0_i32_29 : i32 to vector<1x256xi32>
    %63 = arith.cmpi sge, %61, %62 : vector<1x256xi32>
    %c0_i32_30 = arith.constant 0 : i32
    %64 = vector.broadcast %c0_i32_30 : i32 to vector<1x256xi32>
    %65 = arith.addi %2, %64 : vector<1x256xi32>
    %c16_i32_31 = arith.constant 16 : i32
    %66 = vector.broadcast %c16_i32_31 : i32 to vector<1x256xi32>
    %67 = arith.cmpi slt, %65, %66 : vector<1x256xi32>
    %68 = arith.andi %63, %67 : vector<1x256xi1>
    %c0_i32_32 = arith.constant 0 : i32
    %69 = vector.broadcast %c0_i32_32 : i32 to vector<1x256xi32>
    %70 = arith.addi %3, %69 : vector<1x256xi32>
    %c0_i32_33 = arith.constant 0 : i32
    %71 = vector.broadcast %c0_i32_33 : i32 to vector<1x256xi32>
    %72 = arith.cmpi sge, %70, %71 : vector<1x256xi32>
    %c0_i32_34 = arith.constant 0 : i32
    %73 = vector.broadcast %c0_i32_34 : i32 to vector<1x256xi32>
    %74 = arith.addi %3, %73 : vector<1x256xi32>
    %c16_i32_35 = arith.constant 16 : i32
    %75 = vector.broadcast %c16_i32_35 : i32 to vector<1x256xi32>
    %76 = arith.cmpi slt, %74, %75 : vector<1x256xi32>
    %77 = arith.andi %72, %76 : vector<1x256xi1>
    %c1_i32 = arith.constant 1 : i32
    %78 = vector.broadcast %c1_i32 : i32 to vector<1x256xi32>
    %79 = arith.addi %2, %78 : vector<1x256xi32>
    %c0_i32_36 = arith.constant 0 : i32
    %80 = vector.broadcast %c0_i32_36 : i32 to vector<1x256xi32>
    %81 = arith.cmpi sge, %79, %80 : vector<1x256xi32>
    %c1_i32_37 = arith.constant 1 : i32
    %82 = vector.broadcast %c1_i32_37 : i32 to vector<1x256xi32>
    %83 = arith.addi %2, %82 : vector<1x256xi32>
    %c16_i32_38 = arith.constant 16 : i32
    %84 = vector.broadcast %c16_i32_38 : i32 to vector<1x256xi32>
    %85 = arith.cmpi slt, %83, %84 : vector<1x256xi32>
    %86 = arith.andi %81, %85 : vector<1x256xi1>
    %c1_i32_39 = arith.constant 1 : i32
    %87 = vector.broadcast %c1_i32_39 : i32 to vector<1x256xi32>
    %88 = arith.addi %3, %87 : vector<1x256xi32>
    %c0_i32_40 = arith.constant 0 : i32
    %89 = vector.broadcast %c0_i32_40 : i32 to vector<1x256xi32>
    %90 = arith.cmpi sge, %88, %89 : vector<1x256xi32>
    %c1_i32_41 = arith.constant 1 : i32
    %91 = vector.broadcast %c1_i32_41 : i32 to vector<1x256xi32>
    %92 = arith.addi %3, %91 : vector<1x256xi32>
    %c16_i32_42 = arith.constant 16 : i32
    %93 = vector.broadcast %c16_i32_42 : i32 to vector<1x256xi32>
    %94 = arith.cmpi slt, %92, %93 : vector<1x256xi32>
    %95 = arith.andi %90, %94 : vector<1x256xi1>
    %c2_i32 = arith.constant 2 : i32
    %96 = vector.broadcast %c2_i32 : i32 to vector<1x256xi32>
    %97 = arith.addi %2, %96 : vector<1x256xi32>
    %c0_i32_43 = arith.constant 0 : i32
    %98 = vector.broadcast %c0_i32_43 : i32 to vector<1x256xi32>
    %99 = arith.cmpi sge, %97, %98 : vector<1x256xi32>
    %c2_i32_44 = arith.constant 2 : i32
    %100 = vector.broadcast %c2_i32_44 : i32 to vector<1x256xi32>
    %101 = arith.addi %2, %100 : vector<1x256xi32>
    %c16_i32_45 = arith.constant 16 : i32
    %102 = vector.broadcast %c16_i32_45 : i32 to vector<1x256xi32>
    %103 = arith.cmpi slt, %101, %102 : vector<1x256xi32>
    %104 = arith.andi %99, %103 : vector<1x256xi1>
    %c2_i32_46 = arith.constant 2 : i32
    %105 = vector.broadcast %c2_i32_46 : i32 to vector<1x256xi32>
    %106 = arith.addi %3, %105 : vector<1x256xi32>
    %c0_i32_47 = arith.constant 0 : i32
    %107 = vector.broadcast %c0_i32_47 : i32 to vector<1x256xi32>
    %108 = arith.cmpi sge, %106, %107 : vector<1x256xi32>
    %c2_i32_48 = arith.constant 2 : i32
    %109 = vector.broadcast %c2_i32_48 : i32 to vector<1x256xi32>
    %110 = arith.addi %3, %109 : vector<1x256xi32>
    %c16_i32_49 = arith.constant 16 : i32
    %111 = vector.broadcast %c16_i32_49 : i32 to vector<1x256xi32>
    %112 = arith.cmpi slt, %110, %111 : vector<1x256xi32>
    %113 = arith.andi %108, %112 : vector<1x256xi1>
    %c3_i32 = arith.constant 3 : i32
    %114 = vector.broadcast %c3_i32 : i32 to vector<1x256xi32>
    %115 = arith.addi %2, %114 : vector<1x256xi32>
    %c0_i32_50 = arith.constant 0 : i32
    %116 = vector.broadcast %c0_i32_50 : i32 to vector<1x256xi32>
    %117 = arith.cmpi sge, %115, %116 : vector<1x256xi32>
    %c3_i32_51 = arith.constant 3 : i32
    %118 = vector.broadcast %c3_i32_51 : i32 to vector<1x256xi32>
    %119 = arith.addi %2, %118 : vector<1x256xi32>
    %c16_i32_52 = arith.constant 16 : i32
    %120 = vector.broadcast %c16_i32_52 : i32 to vector<1x256xi32>
    %121 = arith.cmpi slt, %119, %120 : vector<1x256xi32>
    %122 = arith.andi %117, %121 : vector<1x256xi1>
    %c3_i32_53 = arith.constant 3 : i32
    %123 = vector.broadcast %c3_i32_53 : i32 to vector<1x256xi32>
    %124 = arith.addi %3, %123 : vector<1x256xi32>
    %c0_i32_54 = arith.constant 0 : i32
    %125 = vector.broadcast %c0_i32_54 : i32 to vector<1x256xi32>
    %126 = arith.cmpi sge, %124, %125 : vector<1x256xi32>
    %c3_i32_55 = arith.constant 3 : i32
    %127 = vector.broadcast %c3_i32_55 : i32 to vector<1x256xi32>
    %128 = arith.addi %3, %127 : vector<1x256xi32>
    %c16_i32_56 = arith.constant 16 : i32
    %129 = vector.broadcast %c16_i32_56 : i32 to vector<1x256xi32>
    %130 = arith.cmpi slt, %128, %129 : vector<1x256xi32>
    %131 = arith.andi %126, %130 : vector<1x256xi1>
    %132 = vector.broadcast %5 : vector<32x1xf32> to vector<32x256xf32>
    %133 = arith.addf %1, %132 : vector<32x256xf32>
    %c51_i32 = arith.constant 51 : i32
    %134 = tpu.dynamic_rotate %1 by %c51_i32 dim 1 : vector<32x256xf32>, i32 -> vector<32x256xf32>
    %135 = arith.andi %14, %23 : vector<1x256xi1>
    %136 = vector.extract_strided_slice %4 {offsets = [0, 0], sizes = [32, 1], strides = [1, 1]} : vector<32x49xf32> to vector<32x1xf32>
    %cst = arith.constant 0.000000e+00 : f32
    %137 = vector.shape_cast %135 : vector<1x256xi1> to vector<1x256xi1>
    %138 = vector.broadcast %137 : vector<1x256xi1> to vector<32x256xi1>
    %139 = vector.broadcast %cst : f32 to vector<32x256xf32>
    %140 = arith.select %138, %134, %139 : vector<32x256xi1>, vector<32x256xf32>
    %141 = vector.broadcast %136 : vector<32x1xf32> to vector<32x256xf32>
    %142 = arith.mulf %140, %141 : vector<32x256xf32>
    %143 = arith.addf %133, %142 : vector<32x256xf32>
    %c50_i32 = arith.constant 50 : i32
    %144 = tpu.dynamic_rotate %1 by %c50_i32 dim 1 : vector<32x256xf32>, i32 -> vector<32x256xf32>
    %145 = arith.andi %14, %41 : vector<1x256xi1>
    %146 = vector.extract_strided_slice %4 {offsets = [0, 1], sizes = [32, 1], strides = [1, 1]} : vector<32x49xf32> to vector<32x1xf32>
    %cst_57 = arith.constant 0.000000e+00 : f32
    %147 = vector.shape_cast %145 : vector<1x256xi1> to vector<1x256xi1>
    %148 = vector.broadcast %147 : vector<1x256xi1> to vector<32x256xi1>
    %149 = vector.broadcast %cst_57 : f32 to vector<32x256xf32>
    %150 = arith.select %148, %144, %149 : vector<32x256xi1>, vector<32x256xf32>
    %151 = vector.broadcast %146 : vector<32x1xf32> to vector<32x256xf32>
    %152 = arith.mulf %150, %151 : vector<32x256xf32>
    %153 = arith.addf %143, %152 : vector<32x256xf32>
    %c49_i32 = arith.constant 49 : i32
    %154 = tpu.dynamic_rotate %1 by %c49_i32 dim 1 : vector<32x256xf32>, i32 -> vector<32x256xf32>
    %155 = arith.andi %14, %59 : vector<1x256xi1>
    %156 = vector.extract_strided_slice %4 {offsets = [0, 2], sizes = [32, 1], strides = [1, 1]} : vector<32x49xf32> to vector<32x1xf32>
    %cst_58 = arith.constant 0.000000e+00 : f32
    %157 = vector.shape_cast %155 : vector<1x256xi1> to vector<1x256xi1>
    %158 = vector.broadcast %157 : vector<1x256xi1> to vector<32x256xi1>
    %159 = vector.broadcast %cst_58 : f32 to vector<32x256xf32>
    %160 = arith.select %158, %154, %159 : vector<32x256xi1>, vector<32x256xf32>
    %161 = vector.broadcast %156 : vector<32x1xf32> to vector<32x256xf32>
    %162 = arith.mulf %160, %161 : vector<32x256xf32>
    %163 = arith.addf %153, %162 : vector<32x256xf32>
    %c48_i32 = arith.constant 48 : i32
    %164 = tpu.dynamic_rotate %1 by %c48_i32 dim 1 : vector<32x256xf32>, i32 -> vector<32x256xf32>
    %165 = arith.andi %14, %77 : vector<1x256xi1>
    %166 = vector.extract_strided_slice %4 {offsets = [0, 3], sizes = [32, 1], strides = [1, 1]} : vector<32x49xf32> to vector<32x1xf32>
    %cst_59 = arith.constant 0.000000e+00 : f32
    %167 = vector.shape_cast %165 : vector<1x256xi1> to vector<1x256xi1>
    %168 = vector.broadcast %167 : vector<1x256xi1> to vector<32x256xi1>
    %169 = vector.broadcast %cst_59 : f32 to vector<32x256xf32>
    %170 = arith.select %168, %164, %169 : vector<32x256xi1>, vector<32x256xf32>
    %171 = vector.broadcast %166 : vector<32x1xf32> to vector<32x256xf32>
    %172 = arith.mulf %170, %171 : vector<32x256xf32>
    %173 = arith.addf %163, %172 : vector<32x256xf32>
    %c47_i32 = arith.constant 47 : i32
    %174 = tpu.dynamic_rotate %1 by %c47_i32 dim 1 : vector<32x256xf32>, i32 -> vector<32x256xf32>
    %175 = arith.andi %14, %95 : vector<1x256xi1>
    %176 = vector.extract_strided_slice %4 {offsets = [0, 4], sizes = [32, 1], strides = [1, 1]} : vector<32x49xf32> to vector<32x1xf32>
    %cst_60 = arith.constant 0.000000e+00 : f32
    %177 = vector.shape_cast %175 : vector<1x256xi1> to vector<1x256xi1>
    %178 = vector.broadcast %177 : vector<1x256xi1> to vector<32x256xi1>
    %179 = vector.broadcast %cst_60 : f32 to vector<32x256xf32>
    %180 = arith.select %178, %174, %179 : vector<32x256xi1>, vector<32x256xf32>
    %181 = vector.broadcast %176 : vector<32x1xf32> to vector<32x256xf32>
    %182 = arith.mulf %180, %181 : vector<32x256xf32>
    %183 = arith.addf %173, %182 : vector<32x256xf32>
    %c46_i32 = arith.constant 46 : i32
    %184 = tpu.dynamic_rotate %1 by %c46_i32 dim 1 : vector<32x256xf32>, i32 -> vector<32x256xf32>
    %185 = arith.andi %14, %113 : vector<1x256xi1>
    %186 = vector.extract_strided_slice %4 {offsets = [0, 5], sizes = [32, 1], strides = [1, 1]} : vector<32x49xf32> to vector<32x1xf32>
    %cst_61 = arith.constant 0.000000e+00 : f32
    %187 = vector.shape_cast %185 : vector<1x256xi1> to vector<1x256xi1>
    %188 = vector.broadcast %187 : vector<1x256xi1> to vector<32x256xi1>
    %189 = vector.broadcast %cst_61 : f32 to vector<32x256xf32>
    %190 = arith.select %188, %184, %189 : vector<32x256xi1>, vector<32x256xf32>
    %191 = vector.broadcast %186 : vector<32x1xf32> to vector<32x256xf32>
    %192 = arith.mulf %190, %191 : vector<32x256xf32>
    %193 = arith.addf %183, %192 : vector<32x256xf32>
    %c45_i32 = arith.constant 45 : i32
    %194 = tpu.dynamic_rotate %1 by %c45_i32 dim 1 : vector<32x256xf32>, i32 -> vector<32x256xf32>
    %195 = arith.andi %14, %131 : vector<1x256xi1>
    %196 = vector.extract_strided_slice %4 {offsets = [0, 6], sizes = [32, 1], strides = [1, 1]} : vector<32x49xf32> to vector<32x1xf32>
    %cst_62 = arith.constant 0.000000e+00 : f32
    %197 = vector.shape_cast %195 : vector<1x256xi1> to vector<1x256xi1>
    %198 = vector.broadcast %197 : vector<1x256xi1> to vector<32x256xi1>
    %199 = vector.broadcast %cst_62 : f32 to vector<32x256xf32>
    %200 = arith.select %198, %194, %199 : vector<32x256xi1>, vector<32x256xf32>
    %201 = vector.broadcast %196 : vector<32x1xf32> to vector<32x256xf32>
    %202 = arith.mulf %200, %201 : vector<32x256xf32>
    %203 = arith.addf %193, %202 : vector<32x256xf32>
    %c35_i32 = arith.constant 35 : i32
    %204 = tpu.dynamic_rotate %1 by %c35_i32 dim 1 : vector<32x256xf32>, i32 -> vector<32x256xf32>
    %205 = arith.andi %32, %23 : vector<1x256xi1>
    %206 = vector.extract_strided_slice %4 {offsets = [0, 7], sizes = [32, 1], strides = [1, 1]} : vector<32x49xf32> to vector<32x1xf32>
    %cst_63 = arith.constant 0.000000e+00 : f32
    %207 = vector.shape_cast %205 : vector<1x256xi1> to vector<1x256xi1>
    %208 = vector.broadcast %207 : vector<1x256xi1> to vector<32x256xi1>
    %209 = vector.broadcast %cst_63 : f32 to vector<32x256xf32>
    %210 = arith.select %208, %204, %209 : vector<32x256xi1>, vector<32x256xf32>
    %211 = vector.broadcast %206 : vector<32x1xf32> to vector<32x256xf32>
    %212 = arith.mulf %210, %211 : vector<32x256xf32>
    %213 = arith.addf %203, %212 : vector<32x256xf32>
    %c34_i32 = arith.constant 34 : i32
    %214 = tpu.dynamic_rotate %1 by %c34_i32 dim 1 : vector<32x256xf32>, i32 -> vector<32x256xf32>
    %215 = arith.andi %32, %41 : vector<1x256xi1>
    %216 = vector.extract_strided_slice %4 {offsets = [0, 8], sizes = [32, 1], strides = [1, 1]} : vector<32x49xf32> to vector<32x1xf32>
    %cst_64 = arith.constant 0.000000e+00 : f32
    %217 = vector.shape_cast %215 : vector<1x256xi1> to vector<1x256xi1>
    %218 = vector.broadcast %217 : vector<1x256xi1> to vector<32x256xi1>
    %219 = vector.broadcast %cst_64 : f32 to vector<32x256xf32>
    %220 = arith.select %218, %214, %219 : vector<32x256xi1>, vector<32x256xf32>
    %221 = vector.broadcast %216 : vector<32x1xf32> to vector<32x256xf32>
    %222 = arith.mulf %220, %221 : vector<32x256xf32>
    %223 = arith.addf %213, %222 : vector<32x256xf32>
    %c33_i32 = arith.constant 33 : i32
    %224 = tpu.dynamic_rotate %1 by %c33_i32 dim 1 : vector<32x256xf32>, i32 -> vector<32x256xf32>
    %225 = arith.andi %32, %59 : vector<1x256xi1>
    %226 = vector.extract_strided_slice %4 {offsets = [0, 9], sizes = [32, 1], strides = [1, 1]} : vector<32x49xf32> to vector<32x1xf32>
    %cst_65 = arith.constant 0.000000e+00 : f32
    %227 = vector.shape_cast %225 : vector<1x256xi1> to vector<1x256xi1>
    %228 = vector.broadcast %227 : vector<1x256xi1> to vector<32x256xi1>
    %229 = vector.broadcast %cst_65 : f32 to vector<32x256xf32>
    %230 = arith.select %228, %224, %229 : vector<32x256xi1>, vector<32x256xf32>
    %231 = vector.broadcast %226 : vector<32x1xf32> to vector<32x256xf32>
    %232 = arith.mulf %230, %231 : vector<32x256xf32>
    %233 = arith.addf %223, %232 : vector<32x256xf32>
    %c32_i32 = arith.constant 32 : i32
    %234 = tpu.dynamic_rotate %1 by %c32_i32 dim 1 : vector<32x256xf32>, i32 -> vector<32x256xf32>
    %235 = arith.andi %32, %77 : vector<1x256xi1>
    %236 = vector.extract_strided_slice %4 {offsets = [0, 10], sizes = [32, 1], strides = [1, 1]} : vector<32x49xf32> to vector<32x1xf32>
    %cst_66 = arith.constant 0.000000e+00 : f32
    %237 = vector.shape_cast %235 : vector<1x256xi1> to vector<1x256xi1>
    %238 = vector.broadcast %237 : vector<1x256xi1> to vector<32x256xi1>
    %239 = vector.broadcast %cst_66 : f32 to vector<32x256xf32>
    %240 = arith.select %238, %234, %239 : vector<32x256xi1>, vector<32x256xf32>
    %241 = vector.broadcast %236 : vector<32x1xf32> to vector<32x256xf32>
    %242 = arith.mulf %240, %241 : vector<32x256xf32>
    %243 = arith.addf %233, %242 : vector<32x256xf32>
    %c31_i32 = arith.constant 31 : i32
    %244 = tpu.dynamic_rotate %1 by %c31_i32 dim 1 : vector<32x256xf32>, i32 -> vector<32x256xf32>
    %245 = arith.andi %32, %95 : vector<1x256xi1>
    %246 = vector.extract_strided_slice %4 {offsets = [0, 11], sizes = [32, 1], strides = [1, 1]} : vector<32x49xf32> to vector<32x1xf32>
    %cst_67 = arith.constant 0.000000e+00 : f32
    %247 = vector.shape_cast %245 : vector<1x256xi1> to vector<1x256xi1>
    %248 = vector.broadcast %247 : vector<1x256xi1> to vector<32x256xi1>
    %249 = vector.broadcast %cst_67 : f32 to vector<32x256xf32>
    %250 = arith.select %248, %244, %249 : vector<32x256xi1>, vector<32x256xf32>
    %251 = vector.broadcast %246 : vector<32x1xf32> to vector<32x256xf32>
    %252 = arith.mulf %250, %251 : vector<32x256xf32>
    %253 = arith.addf %243, %252 : vector<32x256xf32>
    %c30_i32 = arith.constant 30 : i32
    %254 = tpu.dynamic_rotate %1 by %c30_i32 dim 1 : vector<32x256xf32>, i32 -> vector<32x256xf32>
    %255 = arith.andi %32, %113 : vector<1x256xi1>
    %256 = vector.extract_strided_slice %4 {offsets = [0, 12], sizes = [32, 1], strides = [1, 1]} : vector<32x49xf32> to vector<32x1xf32>
    %cst_68 = arith.constant 0.000000e+00 : f32
    %257 = vector.shape_cast %255 : vector<1x256xi1> to vector<1x256xi1>
    %258 = vector.broadcast %257 : vector<1x256xi1> to vector<32x256xi1>
    %259 = vector.broadcast %cst_68 : f32 to vector<32x256xf32>
    %260 = arith.select %258, %254, %259 : vector<32x256xi1>, vector<32x256xf32>
    %261 = vector.broadcast %256 : vector<32x1xf32> to vector<32x256xf32>
    %262 = arith.mulf %260, %261 : vector<32x256xf32>
    %263 = arith.addf %253, %262 : vector<32x256xf32>
    %c29_i32 = arith.constant 29 : i32
    %264 = tpu.dynamic_rotate %1 by %c29_i32 dim 1 : vector<32x256xf32>, i32 -> vector<32x256xf32>
    %265 = arith.andi %32, %131 : vector<1x256xi1>
    %266 = vector.extract_strided_slice %4 {offsets = [0, 13], sizes = [32, 1], strides = [1, 1]} : vector<32x49xf32> to vector<32x1xf32>
    %cst_69 = arith.constant 0.000000e+00 : f32
    %267 = vector.shape_cast %265 : vector<1x256xi1> to vector<1x256xi1>
    %268 = vector.broadcast %267 : vector<1x256xi1> to vector<32x256xi1>
    %269 = vector.broadcast %cst_69 : f32 to vector<32x256xf32>
    %270 = arith.select %268, %264, %269 : vector<32x256xi1>, vector<32x256xf32>
    %271 = vector.broadcast %266 : vector<32x1xf32> to vector<32x256xf32>
    %272 = arith.mulf %270, %271 : vector<32x256xf32>
    %273 = arith.addf %263, %272 : vector<32x256xf32>
    %c19_i32 = arith.constant 19 : i32
    %274 = tpu.dynamic_rotate %1 by %c19_i32 dim 1 : vector<32x256xf32>, i32 -> vector<32x256xf32>
    %275 = arith.andi %50, %23 : vector<1x256xi1>
    %276 = vector.extract_strided_slice %4 {offsets = [0, 14], sizes = [32, 1], strides = [1, 1]} : vector<32x49xf32> to vector<32x1xf32>
    %cst_70 = arith.constant 0.000000e+00 : f32
    %277 = vector.shape_cast %275 : vector<1x256xi1> to vector<1x256xi1>
    %278 = vector.broadcast %277 : vector<1x256xi1> to vector<32x256xi1>
    %279 = vector.broadcast %cst_70 : f32 to vector<32x256xf32>
    %280 = arith.select %278, %274, %279 : vector<32x256xi1>, vector<32x256xf32>
    %281 = vector.broadcast %276 : vector<32x1xf32> to vector<32x256xf32>
    %282 = arith.mulf %280, %281 : vector<32x256xf32>
    %283 = arith.addf %273, %282 : vector<32x256xf32>
    %c18_i32 = arith.constant 18 : i32
    %284 = tpu.dynamic_rotate %1 by %c18_i32 dim 1 : vector<32x256xf32>, i32 -> vector<32x256xf32>
    %285 = arith.andi %50, %41 : vector<1x256xi1>
    %286 = vector.extract_strided_slice %4 {offsets = [0, 15], sizes = [32, 1], strides = [1, 1]} : vector<32x49xf32> to vector<32x1xf32>
    %cst_71 = arith.constant 0.000000e+00 : f32
    %287 = vector.shape_cast %285 : vector<1x256xi1> to vector<1x256xi1>
    %288 = vector.broadcast %287 : vector<1x256xi1> to vector<32x256xi1>
    %289 = vector.broadcast %cst_71 : f32 to vector<32x256xf32>
    %290 = arith.select %288, %284, %289 : vector<32x256xi1>, vector<32x256xf32>
    %291 = vector.broadcast %286 : vector<32x1xf32> to vector<32x256xf32>
    %292 = arith.mulf %290, %291 : vector<32x256xf32>
    %293 = arith.addf %283, %292 : vector<32x256xf32>
    %c17_i32 = arith.constant 17 : i32
    %294 = tpu.dynamic_rotate %1 by %c17_i32 dim 1 : vector<32x256xf32>, i32 -> vector<32x256xf32>
    %295 = arith.andi %50, %59 : vector<1x256xi1>
    %296 = vector.extract_strided_slice %4 {offsets = [0, 16], sizes = [32, 1], strides = [1, 1]} : vector<32x49xf32> to vector<32x1xf32>
    %cst_72 = arith.constant 0.000000e+00 : f32
    %297 = vector.shape_cast %295 : vector<1x256xi1> to vector<1x256xi1>
    %298 = vector.broadcast %297 : vector<1x256xi1> to vector<32x256xi1>
    %299 = vector.broadcast %cst_72 : f32 to vector<32x256xf32>
    %300 = arith.select %298, %294, %299 : vector<32x256xi1>, vector<32x256xf32>
    %301 = vector.broadcast %296 : vector<32x1xf32> to vector<32x256xf32>
    %302 = arith.mulf %300, %301 : vector<32x256xf32>
    %303 = arith.addf %293, %302 : vector<32x256xf32>
    %c16_i32_73 = arith.constant 16 : i32
    %304 = tpu.dynamic_rotate %1 by %c16_i32_73 dim 1 : vector<32x256xf32>, i32 -> vector<32x256xf32>
    %305 = arith.andi %50, %77 : vector<1x256xi1>
    %306 = vector.extract_strided_slice %4 {offsets = [0, 17], sizes = [32, 1], strides = [1, 1]} : vector<32x49xf32> to vector<32x1xf32>
    %cst_74 = arith.constant 0.000000e+00 : f32
    %307 = vector.shape_cast %305 : vector<1x256xi1> to vector<1x256xi1>
    %308 = vector.broadcast %307 : vector<1x256xi1> to vector<32x256xi1>
    %309 = vector.broadcast %cst_74 : f32 to vector<32x256xf32>
    %310 = arith.select %308, %304, %309 : vector<32x256xi1>, vector<32x256xf32>
    %311 = vector.broadcast %306 : vector<32x1xf32> to vector<32x256xf32>
    %312 = arith.mulf %310, %311 : vector<32x256xf32>
    %313 = arith.addf %303, %312 : vector<32x256xf32>
    %c15_i32 = arith.constant 15 : i32
    %314 = tpu.dynamic_rotate %1 by %c15_i32 dim 1 : vector<32x256xf32>, i32 -> vector<32x256xf32>
    %315 = arith.andi %50, %95 : vector<1x256xi1>
    %316 = vector.extract_strided_slice %4 {offsets = [0, 18], sizes = [32, 1], strides = [1, 1]} : vector<32x49xf32> to vector<32x1xf32>
    %cst_75 = arith.constant 0.000000e+00 : f32
    %317 = vector.shape_cast %315 : vector<1x256xi1> to vector<1x256xi1>
    %318 = vector.broadcast %317 : vector<1x256xi1> to vector<32x256xi1>
    %319 = vector.broadcast %cst_75 : f32 to vector<32x256xf32>
    %320 = arith.select %318, %314, %319 : vector<32x256xi1>, vector<32x256xf32>
    %321 = vector.broadcast %316 : vector<32x1xf32> to vector<32x256xf32>
    %322 = arith.mulf %320, %321 : vector<32x256xf32>
    %323 = arith.addf %313, %322 : vector<32x256xf32>
    %c14_i32 = arith.constant 14 : i32
    %324 = tpu.dynamic_rotate %1 by %c14_i32 dim 1 : vector<32x256xf32>, i32 -> vector<32x256xf32>
    %325 = arith.andi %50, %113 : vector<1x256xi1>
    %326 = vector.extract_strided_slice %4 {offsets = [0, 19], sizes = [32, 1], strides = [1, 1]} : vector<32x49xf32> to vector<32x1xf32>
    %cst_76 = arith.constant 0.000000e+00 : f32
    %327 = vector.shape_cast %325 : vector<1x256xi1> to vector<1x256xi1>
    %328 = vector.broadcast %327 : vector<1x256xi1> to vector<32x256xi1>
    %329 = vector.broadcast %cst_76 : f32 to vector<32x256xf32>
    %330 = arith.select %328, %324, %329 : vector<32x256xi1>, vector<32x256xf32>
    %331 = vector.broadcast %326 : vector<32x1xf32> to vector<32x256xf32>
    %332 = arith.mulf %330, %331 : vector<32x256xf32>
    %333 = arith.addf %323, %332 : vector<32x256xf32>
    %c13_i32 = arith.constant 13 : i32
    %334 = tpu.dynamic_rotate %1 by %c13_i32 dim 1 : vector<32x256xf32>, i32 -> vector<32x256xf32>
    %335 = arith.andi %50, %131 : vector<1x256xi1>
    %336 = vector.extract_strided_slice %4 {offsets = [0, 20], sizes = [32, 1], strides = [1, 1]} : vector<32x49xf32> to vector<32x1xf32>
    %cst_77 = arith.constant 0.000000e+00 : f32
    %337 = vector.shape_cast %335 : vector<1x256xi1> to vector<1x256xi1>
    %338 = vector.broadcast %337 : vector<1x256xi1> to vector<32x256xi1>
    %339 = vector.broadcast %cst_77 : f32 to vector<32x256xf32>
    %340 = arith.select %338, %334, %339 : vector<32x256xi1>, vector<32x256xf32>
    %341 = vector.broadcast %336 : vector<32x1xf32> to vector<32x256xf32>
    %342 = arith.mulf %340, %341 : vector<32x256xf32>
    %343 = arith.addf %333, %342 : vector<32x256xf32>
    %c3_i32_78 = arith.constant 3 : i32
    %344 = tpu.dynamic_rotate %1 by %c3_i32_78 dim 1 : vector<32x256xf32>, i32 -> vector<32x256xf32>
    %345 = arith.andi %68, %23 : vector<1x256xi1>
    %346 = vector.extract_strided_slice %4 {offsets = [0, 21], sizes = [32, 1], strides = [1, 1]} : vector<32x49xf32> to vector<32x1xf32>
    %cst_79 = arith.constant 0.000000e+00 : f32
    %347 = vector.shape_cast %345 : vector<1x256xi1> to vector<1x256xi1>
    %348 = vector.broadcast %347 : vector<1x256xi1> to vector<32x256xi1>
    %349 = vector.broadcast %cst_79 : f32 to vector<32x256xf32>
    %350 = arith.select %348, %344, %349 : vector<32x256xi1>, vector<32x256xf32>
    %351 = vector.broadcast %346 : vector<32x1xf32> to vector<32x256xf32>
    %352 = arith.mulf %350, %351 : vector<32x256xf32>
    %353 = arith.addf %343, %352 : vector<32x256xf32>
    %c2_i32_80 = arith.constant 2 : i32
    %354 = tpu.dynamic_rotate %1 by %c2_i32_80 dim 1 : vector<32x256xf32>, i32 -> vector<32x256xf32>
    %355 = arith.andi %68, %41 : vector<1x256xi1>
    %356 = vector.extract_strided_slice %4 {offsets = [0, 22], sizes = [32, 1], strides = [1, 1]} : vector<32x49xf32> to vector<32x1xf32>
    %cst_81 = arith.constant 0.000000e+00 : f32
    %357 = vector.shape_cast %355 : vector<1x256xi1> to vector<1x256xi1>
    %358 = vector.broadcast %357 : vector<1x256xi1> to vector<32x256xi1>
    %359 = vector.broadcast %cst_81 : f32 to vector<32x256xf32>
    %360 = arith.select %358, %354, %359 : vector<32x256xi1>, vector<32x256xf32>
    %361 = vector.broadcast %356 : vector<32x1xf32> to vector<32x256xf32>
    %362 = arith.mulf %360, %361 : vector<32x256xf32>
    %363 = arith.addf %353, %362 : vector<32x256xf32>
    %c1_i32_82 = arith.constant 1 : i32
    %364 = tpu.dynamic_rotate %1 by %c1_i32_82 dim 1 : vector<32x256xf32>, i32 -> vector<32x256xf32>
    %365 = arith.andi %68, %59 : vector<1x256xi1>
    %366 = vector.extract_strided_slice %4 {offsets = [0, 23], sizes = [32, 1], strides = [1, 1]} : vector<32x49xf32> to vector<32x1xf32>
    %cst_83 = arith.constant 0.000000e+00 : f32
    %367 = vector.shape_cast %365 : vector<1x256xi1> to vector<1x256xi1>
    %368 = vector.broadcast %367 : vector<1x256xi1> to vector<32x256xi1>
    %369 = vector.broadcast %cst_83 : f32 to vector<32x256xf32>
    %370 = arith.select %368, %364, %369 : vector<32x256xi1>, vector<32x256xf32>
    %371 = vector.broadcast %366 : vector<32x1xf32> to vector<32x256xf32>
    %372 = arith.mulf %370, %371 : vector<32x256xf32>
    %373 = arith.addf %363, %372 : vector<32x256xf32>
    %374 = arith.andi %68, %77 : vector<1x256xi1>
    %375 = vector.extract_strided_slice %4 {offsets = [0, 24], sizes = [32, 1], strides = [1, 1]} : vector<32x49xf32> to vector<32x1xf32>
    %cst_84 = arith.constant 0.000000e+00 : f32
    %376 = vector.shape_cast %374 : vector<1x256xi1> to vector<1x256xi1>
    %377 = vector.broadcast %376 : vector<1x256xi1> to vector<32x256xi1>
    %378 = vector.broadcast %cst_84 : f32 to vector<32x256xf32>
    %379 = arith.select %377, %1, %378 : vector<32x256xi1>, vector<32x256xf32>
    %380 = vector.broadcast %375 : vector<32x1xf32> to vector<32x256xf32>
    %381 = arith.mulf %379, %380 : vector<32x256xf32>
    %382 = arith.addf %373, %381 : vector<32x256xf32>
    %c255_i32 = arith.constant 255 : i32
    %383 = tpu.dynamic_rotate %1 by %c255_i32 dim 1 : vector<32x256xf32>, i32 -> vector<32x256xf32>
    %384 = arith.andi %68, %95 : vector<1x256xi1>
    %385 = vector.extract_strided_slice %4 {offsets = [0, 25], sizes = [32, 1], strides = [1, 1]} : vector<32x49xf32> to vector<32x1xf32>
    %cst_85 = arith.constant 0.000000e+00 : f32
    %386 = vector.shape_cast %384 : vector<1x256xi1> to vector<1x256xi1>
    %387 = vector.broadcast %386 : vector<1x256xi1> to vector<32x256xi1>
    %388 = vector.broadcast %cst_85 : f32 to vector<32x256xf32>
    %389 = arith.select %387, %383, %388 : vector<32x256xi1>, vector<32x256xf32>
    %390 = vector.broadcast %385 : vector<32x1xf32> to vector<32x256xf32>
    %391 = arith.mulf %389, %390 : vector<32x256xf32>
    %392 = arith.addf %382, %391 : vector<32x256xf32>
    %c254_i32 = arith.constant 254 : i32
    %393 = tpu.dynamic_rotate %1 by %c254_i32 dim 1 : vector<32x256xf32>, i32 -> vector<32x256xf32>
    %394 = arith.andi %68, %113 : vector<1x256xi1>
    %395 = vector.extract_strided_slice %4 {offsets = [0, 26], sizes = [32, 1], strides = [1, 1]} : vector<32x49xf32> to vector<32x1xf32>
    %cst_86 = arith.constant 0.000000e+00 : f32
    %396 = vector.shape_cast %394 : vector<1x256xi1> to vector<1x256xi1>
    %397 = vector.broadcast %396 : vector<1x256xi1> to vector<32x256xi1>
    %398 = vector.broadcast %cst_86 : f32 to vector<32x256xf32>
    %399 = arith.select %397, %393, %398 : vector<32x256xi1>, vector<32x256xf32>
    %400 = vector.broadcast %395 : vector<32x1xf32> to vector<32x256xf32>
    %401 = arith.mulf %399, %400 : vector<32x256xf32>
    %402 = arith.addf %392, %401 : vector<32x256xf32>
    %c253_i32 = arith.constant 253 : i32
    %403 = tpu.dynamic_rotate %1 by %c253_i32 dim 1 : vector<32x256xf32>, i32 -> vector<32x256xf32>
    %404 = arith.andi %68, %131 : vector<1x256xi1>
    %405 = vector.extract_strided_slice %4 {offsets = [0, 27], sizes = [32, 1], strides = [1, 1]} : vector<32x49xf32> to vector<32x1xf32>
    %cst_87 = arith.constant 0.000000e+00 : f32
    %406 = vector.shape_cast %404 : vector<1x256xi1> to vector<1x256xi1>
    %407 = vector.broadcast %406 : vector<1x256xi1> to vector<32x256xi1>
    %408 = vector.broadcast %cst_87 : f32 to vector<32x256xf32>
    %409 = arith.select %407, %403, %408 : vector<32x256xi1>, vector<32x256xf32>
    %410 = vector.broadcast %405 : vector<32x1xf32> to vector<32x256xf32>
    %411 = arith.mulf %409, %410 : vector<32x256xf32>
    %412 = arith.addf %402, %411 : vector<32x256xf32>
    %c243_i32 = arith.constant 243 : i32
    %413 = tpu.dynamic_rotate %1 by %c243_i32 dim 1 : vector<32x256xf32>, i32 -> vector<32x256xf32>
    %414 = arith.andi %86, %23 : vector<1x256xi1>
    %415 = vector.extract_strided_slice %4 {offsets = [0, 28], sizes = [32, 1], strides = [1, 1]} : vector<32x49xf32> to vector<32x1xf32>
    %cst_88 = arith.constant 0.000000e+00 : f32
    %416 = vector.shape_cast %414 : vector<1x256xi1> to vector<1x256xi1>
    %417 = vector.broadcast %416 : vector<1x256xi1> to vector<32x256xi1>
    %418 = vector.broadcast %cst_88 : f32 to vector<32x256xf32>
    %419 = arith.select %417, %413, %418 : vector<32x256xi1>, vector<32x256xf32>
    %420 = vector.broadcast %415 : vector<32x1xf32> to vector<32x256xf32>
    %421 = arith.mulf %419, %420 : vector<32x256xf32>
    %422 = arith.addf %412, %421 : vector<32x256xf32>
    %c242_i32 = arith.constant 242 : i32
    %423 = tpu.dynamic_rotate %1 by %c242_i32 dim 1 : vector<32x256xf32>, i32 -> vector<32x256xf32>
    %424 = arith.andi %86, %41 : vector<1x256xi1>
    %425 = vector.extract_strided_slice %4 {offsets = [0, 29], sizes = [32, 1], strides = [1, 1]} : vector<32x49xf32> to vector<32x1xf32>
    %cst_89 = arith.constant 0.000000e+00 : f32
    %426 = vector.shape_cast %424 : vector<1x256xi1> to vector<1x256xi1>
    %427 = vector.broadcast %426 : vector<1x256xi1> to vector<32x256xi1>
    %428 = vector.broadcast %cst_89 : f32 to vector<32x256xf32>
    %429 = arith.select %427, %423, %428 : vector<32x256xi1>, vector<32x256xf32>
    %430 = vector.broadcast %425 : vector<32x1xf32> to vector<32x256xf32>
    %431 = arith.mulf %429, %430 : vector<32x256xf32>
    %432 = arith.addf %422, %431 : vector<32x256xf32>
    %c241_i32 = arith.constant 241 : i32
    %433 = tpu.dynamic_rotate %1 by %c241_i32 dim 1 : vector<32x256xf32>, i32 -> vector<32x256xf32>
    %434 = arith.andi %86, %59 : vector<1x256xi1>
    %435 = vector.extract_strided_slice %4 {offsets = [0, 30], sizes = [32, 1], strides = [1, 1]} : vector<32x49xf32> to vector<32x1xf32>
    %cst_90 = arith.constant 0.000000e+00 : f32
    %436 = vector.shape_cast %434 : vector<1x256xi1> to vector<1x256xi1>
    %437 = vector.broadcast %436 : vector<1x256xi1> to vector<32x256xi1>
    %438 = vector.broadcast %cst_90 : f32 to vector<32x256xf32>
    %439 = arith.select %437, %433, %438 : vector<32x256xi1>, vector<32x256xf32>
    %440 = vector.broadcast %435 : vector<32x1xf32> to vector<32x256xf32>
    %441 = arith.mulf %439, %440 : vector<32x256xf32>
    %442 = arith.addf %432, %441 : vector<32x256xf32>
    %c240_i32 = arith.constant 240 : i32
    %443 = tpu.dynamic_rotate %1 by %c240_i32 dim 1 : vector<32x256xf32>, i32 -> vector<32x256xf32>
    %444 = arith.andi %86, %77 : vector<1x256xi1>
    %445 = vector.extract_strided_slice %4 {offsets = [0, 31], sizes = [32, 1], strides = [1, 1]} : vector<32x49xf32> to vector<32x1xf32>
    %cst_91 = arith.constant 0.000000e+00 : f32
    %446 = vector.shape_cast %444 : vector<1x256xi1> to vector<1x256xi1>
    %447 = vector.broadcast %446 : vector<1x256xi1> to vector<32x256xi1>
    %448 = vector.broadcast %cst_91 : f32 to vector<32x256xf32>
    %449 = arith.select %447, %443, %448 : vector<32x256xi1>, vector<32x256xf32>
    %450 = vector.broadcast %445 : vector<32x1xf32> to vector<32x256xf32>
    %451 = arith.mulf %449, %450 : vector<32x256xf32>
    %452 = arith.addf %442, %451 : vector<32x256xf32>
    %c239_i32 = arith.constant 239 : i32
    %453 = tpu.dynamic_rotate %1 by %c239_i32 dim 1 : vector<32x256xf32>, i32 -> vector<32x256xf32>
    %454 = arith.andi %86, %95 : vector<1x256xi1>
    %455 = vector.extract_strided_slice %4 {offsets = [0, 32], sizes = [32, 1], strides = [1, 1]} : vector<32x49xf32> to vector<32x1xf32>
    %cst_92 = arith.constant 0.000000e+00 : f32
    %456 = vector.shape_cast %454 : vector<1x256xi1> to vector<1x256xi1>
    %457 = vector.broadcast %456 : vector<1x256xi1> to vector<32x256xi1>
    %458 = vector.broadcast %cst_92 : f32 to vector<32x256xf32>
    %459 = arith.select %457, %453, %458 : vector<32x256xi1>, vector<32x256xf32>
    %460 = vector.broadcast %455 : vector<32x1xf32> to vector<32x256xf32>
    %461 = arith.mulf %459, %460 : vector<32x256xf32>
    %462 = arith.addf %452, %461 : vector<32x256xf32>
    %c238_i32 = arith.constant 238 : i32
    %463 = tpu.dynamic_rotate %1 by %c238_i32 dim 1 : vector<32x256xf32>, i32 -> vector<32x256xf32>
    %464 = arith.andi %86, %113 : vector<1x256xi1>
    %465 = vector.extract_strided_slice %4 {offsets = [0, 33], sizes = [32, 1], strides = [1, 1]} : vector<32x49xf32> to vector<32x1xf32>
    %cst_93 = arith.constant 0.000000e+00 : f32
    %466 = vector.shape_cast %464 : vector<1x256xi1> to vector<1x256xi1>
    %467 = vector.broadcast %466 : vector<1x256xi1> to vector<32x256xi1>
    %468 = vector.broadcast %cst_93 : f32 to vector<32x256xf32>
    %469 = arith.select %467, %463, %468 : vector<32x256xi1>, vector<32x256xf32>
    %470 = vector.broadcast %465 : vector<32x1xf32> to vector<32x256xf32>
    %471 = arith.mulf %469, %470 : vector<32x256xf32>
    %472 = arith.addf %462, %471 : vector<32x256xf32>
    %c237_i32 = arith.constant 237 : i32
    %473 = tpu.dynamic_rotate %1 by %c237_i32 dim 1 : vector<32x256xf32>, i32 -> vector<32x256xf32>
    %474 = arith.andi %86, %131 : vector<1x256xi1>
    %475 = vector.extract_strided_slice %4 {offsets = [0, 34], sizes = [32, 1], strides = [1, 1]} : vector<32x49xf32> to vector<32x1xf32>
    %cst_94 = arith.constant 0.000000e+00 : f32
    %476 = vector.shape_cast %474 : vector<1x256xi1> to vector<1x256xi1>
    %477 = vector.broadcast %476 : vector<1x256xi1> to vector<32x256xi1>
    %478 = vector.broadcast %cst_94 : f32 to vector<32x256xf32>
    %479 = arith.select %477, %473, %478 : vector<32x256xi1>, vector<32x256xf32>
    %480 = vector.broadcast %475 : vector<32x1xf32> to vector<32x256xf32>
    %481 = arith.mulf %479, %480 : vector<32x256xf32>
    %482 = arith.addf %472, %481 : vector<32x256xf32>
    %c227_i32 = arith.constant 227 : i32
    %483 = tpu.dynamic_rotate %1 by %c227_i32 dim 1 : vector<32x256xf32>, i32 -> vector<32x256xf32>
    %484 = arith.andi %104, %23 : vector<1x256xi1>
    %485 = vector.extract_strided_slice %4 {offsets = [0, 35], sizes = [32, 1], strides = [1, 1]} : vector<32x49xf32> to vector<32x1xf32>
    %cst_95 = arith.constant 0.000000e+00 : f32
    %486 = vector.shape_cast %484 : vector<1x256xi1> to vector<1x256xi1>
    %487 = vector.broadcast %486 : vector<1x256xi1> to vector<32x256xi1>
    %488 = vector.broadcast %cst_95 : f32 to vector<32x256xf32>
    %489 = arith.select %487, %483, %488 : vector<32x256xi1>, vector<32x256xf32>
    %490 = vector.broadcast %485 : vector<32x1xf32> to vector<32x256xf32>
    %491 = arith.mulf %489, %490 : vector<32x256xf32>
    %492 = arith.addf %482, %491 : vector<32x256xf32>
    %c226_i32 = arith.constant 226 : i32
    %493 = tpu.dynamic_rotate %1 by %c226_i32 dim 1 : vector<32x256xf32>, i32 -> vector<32x256xf32>
    %494 = arith.andi %104, %41 : vector<1x256xi1>
    %495 = vector.extract_strided_slice %4 {offsets = [0, 36], sizes = [32, 1], strides = [1, 1]} : vector<32x49xf32> to vector<32x1xf32>
    %cst_96 = arith.constant 0.000000e+00 : f32
    %496 = vector.shape_cast %494 : vector<1x256xi1> to vector<1x256xi1>
    %497 = vector.broadcast %496 : vector<1x256xi1> to vector<32x256xi1>
    %498 = vector.broadcast %cst_96 : f32 to vector<32x256xf32>
    %499 = arith.select %497, %493, %498 : vector<32x256xi1>, vector<32x256xf32>
    %500 = vector.broadcast %495 : vector<32x1xf32> to vector<32x256xf32>
    %501 = arith.mulf %499, %500 : vector<32x256xf32>
    %502 = arith.addf %492, %501 : vector<32x256xf32>
    %c225_i32 = arith.constant 225 : i32
    %503 = tpu.dynamic_rotate %1 by %c225_i32 dim 1 : vector<32x256xf32>, i32 -> vector<32x256xf32>
    %504 = arith.andi %104, %59 : vector<1x256xi1>
    %505 = vector.extract_strided_slice %4 {offsets = [0, 37], sizes = [32, 1], strides = [1, 1]} : vector<32x49xf32> to vector<32x1xf32>
    %cst_97 = arith.constant 0.000000e+00 : f32
    %506 = vector.shape_cast %504 : vector<1x256xi1> to vector<1x256xi1>
    %507 = vector.broadcast %506 : vector<1x256xi1> to vector<32x256xi1>
    %508 = vector.broadcast %cst_97 : f32 to vector<32x256xf32>
    %509 = arith.select %507, %503, %508 : vector<32x256xi1>, vector<32x256xf32>
    %510 = vector.broadcast %505 : vector<32x1xf32> to vector<32x256xf32>
    %511 = arith.mulf %509, %510 : vector<32x256xf32>
    %512 = arith.addf %502, %511 : vector<32x256xf32>
    %c224_i32 = arith.constant 224 : i32
    %513 = tpu.dynamic_rotate %1 by %c224_i32 dim 1 : vector<32x256xf32>, i32 -> vector<32x256xf32>
    %514 = arith.andi %104, %77 : vector<1x256xi1>
    %515 = vector.extract_strided_slice %4 {offsets = [0, 38], sizes = [32, 1], strides = [1, 1]} : vector<32x49xf32> to vector<32x1xf32>
    %cst_98 = arith.constant 0.000000e+00 : f32
    %516 = vector.shape_cast %514 : vector<1x256xi1> to vector<1x256xi1>
    %517 = vector.broadcast %516 : vector<1x256xi1> to vector<32x256xi1>
    %518 = vector.broadcast %cst_98 : f32 to vector<32x256xf32>
    %519 = arith.select %517, %513, %518 : vector<32x256xi1>, vector<32x256xf32>
    %520 = vector.broadcast %515 : vector<32x1xf32> to vector<32x256xf32>
    %521 = arith.mulf %519, %520 : vector<32x256xf32>
    %522 = arith.addf %512, %521 : vector<32x256xf32>
    %c223_i32 = arith.constant 223 : i32
    %523 = tpu.dynamic_rotate %1 by %c223_i32 dim 1 : vector<32x256xf32>, i32 -> vector<32x256xf32>
    %524 = arith.andi %104, %95 : vector<1x256xi1>
    %525 = vector.extract_strided_slice %4 {offsets = [0, 39], sizes = [32, 1], strides = [1, 1]} : vector<32x49xf32> to vector<32x1xf32>
    %cst_99 = arith.constant 0.000000e+00 : f32
    %526 = vector.shape_cast %524 : vector<1x256xi1> to vector<1x256xi1>
    %527 = vector.broadcast %526 : vector<1x256xi1> to vector<32x256xi1>
    %528 = vector.broadcast %cst_99 : f32 to vector<32x256xf32>
    %529 = arith.select %527, %523, %528 : vector<32x256xi1>, vector<32x256xf32>
    %530 = vector.broadcast %525 : vector<32x1xf32> to vector<32x256xf32>
    %531 = arith.mulf %529, %530 : vector<32x256xf32>
    %532 = arith.addf %522, %531 : vector<32x256xf32>
    %c222_i32 = arith.constant 222 : i32
    %533 = tpu.dynamic_rotate %1 by %c222_i32 dim 1 : vector<32x256xf32>, i32 -> vector<32x256xf32>
    %534 = arith.andi %104, %113 : vector<1x256xi1>
    %535 = vector.extract_strided_slice %4 {offsets = [0, 40], sizes = [32, 1], strides = [1, 1]} : vector<32x49xf32> to vector<32x1xf32>
    %cst_100 = arith.constant 0.000000e+00 : f32
    %536 = vector.shape_cast %534 : vector<1x256xi1> to vector<1x256xi1>
    %537 = vector.broadcast %536 : vector<1x256xi1> to vector<32x256xi1>
    %538 = vector.broadcast %cst_100 : f32 to vector<32x256xf32>
    %539 = arith.select %537, %533, %538 : vector<32x256xi1>, vector<32x256xf32>
    %540 = vector.broadcast %535 : vector<32x1xf32> to vector<32x256xf32>
    %541 = arith.mulf %539, %540 : vector<32x256xf32>
    %542 = arith.addf %532, %541 : vector<32x256xf32>
    %c221_i32 = arith.constant 221 : i32
    %543 = tpu.dynamic_rotate %1 by %c221_i32 dim 1 : vector<32x256xf32>, i32 -> vector<32x256xf32>
    %544 = arith.andi %104, %131 : vector<1x256xi1>
    %545 = vector.extract_strided_slice %4 {offsets = [0, 41], sizes = [32, 1], strides = [1, 1]} : vector<32x49xf32> to vector<32x1xf32>
    %cst_101 = arith.constant 0.000000e+00 : f32
    %546 = vector.shape_cast %544 : vector<1x256xi1> to vector<1x256xi1>
    %547 = vector.broadcast %546 : vector<1x256xi1> to vector<32x256xi1>
    %548 = vector.broadcast %cst_101 : f32 to vector<32x256xf32>
    %549 = arith.select %547, %543, %548 : vector<32x256xi1>, vector<32x256xf32>
    %550 = vector.broadcast %545 : vector<32x1xf32> to vector<32x256xf32>
    %551 = arith.mulf %549, %550 : vector<32x256xf32>
    %552 = arith.addf %542, %551 : vector<32x256xf32>
    %c211_i32 = arith.constant 211 : i32
    %553 = tpu.dynamic_rotate %1 by %c211_i32 dim 1 : vector<32x256xf32>, i32 -> vector<32x256xf32>
    %554 = arith.andi %122, %23 : vector<1x256xi1>
    %555 = vector.extract_strided_slice %4 {offsets = [0, 42], sizes = [32, 1], strides = [1, 1]} : vector<32x49xf32> to vector<32x1xf32>
    %cst_102 = arith.constant 0.000000e+00 : f32
    %556 = vector.shape_cast %554 : vector<1x256xi1> to vector<1x256xi1>
    %557 = vector.broadcast %556 : vector<1x256xi1> to vector<32x256xi1>
    %558 = vector.broadcast %cst_102 : f32 to vector<32x256xf32>
    %559 = arith.select %557, %553, %558 : vector<32x256xi1>, vector<32x256xf32>
    %560 = vector.broadcast %555 : vector<32x1xf32> to vector<32x256xf32>
    %561 = arith.mulf %559, %560 : vector<32x256xf32>
    %562 = arith.addf %552, %561 : vector<32x256xf32>
    %c210_i32 = arith.constant 210 : i32
    %563 = tpu.dynamic_rotate %1 by %c210_i32 dim 1 : vector<32x256xf32>, i32 -> vector<32x256xf32>
    %564 = arith.andi %122, %41 : vector<1x256xi1>
    %565 = vector.extract_strided_slice %4 {offsets = [0, 43], sizes = [32, 1], strides = [1, 1]} : vector<32x49xf32> to vector<32x1xf32>
    %cst_103 = arith.constant 0.000000e+00 : f32
    %566 = vector.shape_cast %564 : vector<1x256xi1> to vector<1x256xi1>
    %567 = vector.broadcast %566 : vector<1x256xi1> to vector<32x256xi1>
    %568 = vector.broadcast %cst_103 : f32 to vector<32x256xf32>
    %569 = arith.select %567, %563, %568 : vector<32x256xi1>, vector<32x256xf32>
    %570 = vector.broadcast %565 : vector<32x1xf32> to vector<32x256xf32>
    %571 = arith.mulf %569, %570 : vector<32x256xf32>
    %572 = arith.addf %562, %571 : vector<32x256xf32>
    %c209_i32 = arith.constant 209 : i32
    %573 = tpu.dynamic_rotate %1 by %c209_i32 dim 1 : vector<32x256xf32>, i32 -> vector<32x256xf32>
    %574 = arith.andi %122, %59 : vector<1x256xi1>
    %575 = vector.extract_strided_slice %4 {offsets = [0, 44], sizes = [32, 1], strides = [1, 1]} : vector<32x49xf32> to vector<32x1xf32>
    %cst_104 = arith.constant 0.000000e+00 : f32
    %576 = vector.shape_cast %574 : vector<1x256xi1> to vector<1x256xi1>
    %577 = vector.broadcast %576 : vector<1x256xi1> to vector<32x256xi1>
    %578 = vector.broadcast %cst_104 : f32 to vector<32x256xf32>
    %579 = arith.select %577, %573, %578 : vector<32x256xi1>, vector<32x256xf32>
    %580 = vector.broadcast %575 : vector<32x1xf32> to vector<32x256xf32>
    %581 = arith.mulf %579, %580 : vector<32x256xf32>
    %582 = arith.addf %572, %581 : vector<32x256xf32>
    %c208_i32 = arith.constant 208 : i32
    %583 = tpu.dynamic_rotate %1 by %c208_i32 dim 1 : vector<32x256xf32>, i32 -> vector<32x256xf32>
    %584 = arith.andi %122, %77 : vector<1x256xi1>
    %585 = vector.extract_strided_slice %4 {offsets = [0, 45], sizes = [32, 1], strides = [1, 1]} : vector<32x49xf32> to vector<32x1xf32>
    %cst_105 = arith.constant 0.000000e+00 : f32
    %586 = vector.shape_cast %584 : vector<1x256xi1> to vector<1x256xi1>
    %587 = vector.broadcast %586 : vector<1x256xi1> to vector<32x256xi1>
    %588 = vector.broadcast %cst_105 : f32 to vector<32x256xf32>
    %589 = arith.select %587, %583, %588 : vector<32x256xi1>, vector<32x256xf32>
    %590 = vector.broadcast %585 : vector<32x1xf32> to vector<32x256xf32>
    %591 = arith.mulf %589, %590 : vector<32x256xf32>
    %592 = arith.addf %582, %591 : vector<32x256xf32>
    %c207_i32 = arith.constant 207 : i32
    %593 = tpu.dynamic_rotate %1 by %c207_i32 dim 1 : vector<32x256xf32>, i32 -> vector<32x256xf32>
    %594 = arith.andi %122, %95 : vector<1x256xi1>
    %595 = vector.extract_strided_slice %4 {offsets = [0, 46], sizes = [32, 1], strides = [1, 1]} : vector<32x49xf32> to vector<32x1xf32>
    %cst_106 = arith.constant 0.000000e+00 : f32
    %596 = vector.shape_cast %594 : vector<1x256xi1> to vector<1x256xi1>
    %597 = vector.broadcast %596 : vector<1x256xi1> to vector<32x256xi1>
    %598 = vector.broadcast %cst_106 : f32 to vector<32x256xf32>
    %599 = arith.select %597, %593, %598 : vector<32x256xi1>, vector<32x256xf32>
    %600 = vector.broadcast %595 : vector<32x1xf32> to vector<32x256xf32>
    %601 = arith.mulf %599, %600 : vector<32x256xf32>
    %602 = arith.addf %592, %601 : vector<32x256xf32>
    %c206_i32 = arith.constant 206 : i32
    %603 = tpu.dynamic_rotate %1 by %c206_i32 dim 1 : vector<32x256xf32>, i32 -> vector<32x256xf32>
    %604 = arith.andi %122, %113 : vector<1x256xi1>
    %605 = vector.extract_strided_slice %4 {offsets = [0, 47], sizes = [32, 1], strides = [1, 1]} : vector<32x49xf32> to vector<32x1xf32>
    %cst_107 = arith.constant 0.000000e+00 : f32
    %606 = vector.shape_cast %604 : vector<1x256xi1> to vector<1x256xi1>
    %607 = vector.broadcast %606 : vector<1x256xi1> to vector<32x256xi1>
    %608 = vector.broadcast %cst_107 : f32 to vector<32x256xf32>
    %609 = arith.select %607, %603, %608 : vector<32x256xi1>, vector<32x256xf32>
    %610 = vector.broadcast %605 : vector<32x1xf32> to vector<32x256xf32>
    %611 = arith.mulf %609, %610 : vector<32x256xf32>
    %612 = arith.addf %602, %611 : vector<32x256xf32>
    %c205_i32 = arith.constant 205 : i32
    %613 = tpu.dynamic_rotate %1 by %c205_i32 dim 1 : vector<32x256xf32>, i32 -> vector<32x256xf32>
    %614 = arith.andi %122, %131 : vector<1x256xi1>
    %615 = vector.extract_strided_slice %4 {offsets = [0, 48], sizes = [32, 1], strides = [1, 1]} : vector<32x49xf32> to vector<32x1xf32>
    %cst_108 = arith.constant 0.000000e+00 : f32
    %616 = vector.shape_cast %614 : vector<1x256xi1> to vector<1x256xi1>
    %617 = vector.broadcast %616 : vector<1x256xi1> to vector<32x256xi1>
    %618 = vector.broadcast %cst_108 : f32 to vector<32x256xf32>
    %619 = arith.select %617, %613, %618 : vector<32x256xi1>, vector<32x256xf32>
    %620 = vector.broadcast %615 : vector<32x1xf32> to vector<32x256xf32>
    %621 = arith.mulf %619, %620 : vector<32x256xf32>
    %622 = arith.addf %612, %621 : vector<32x256xf32>
    %c0_109 = arith.constant 0 : index
    %c0_110 = arith.constant 0 : index
    %623 = vector.load %arg4[%c0_109, %c0_110] : memref<32x49xf32, #tpu.memory_space<vmem>>, vector<32x49xf32>
    %c0_111 = arith.constant 0 : index
    %c0_112 = arith.constant 0 : index
    %624 = vector.load %arg5[%c0_111, %c0_112] : memref<32x1xf32, #tpu.memory_space<vmem>>, vector<32x1xf32>
    %c-9_i32 = arith.constant -9 : i32
    %625 = vector.broadcast %c-9_i32 : i32 to vector<1x256xi32>
    %626 = arith.addi %2, %625 : vector<1x256xi32>
    %c0_i32_113 = arith.constant 0 : i32
    %627 = vector.broadcast %c0_i32_113 : i32 to vector<1x256xi32>
    %628 = arith.cmpi sge, %626, %627 : vector<1x256xi32>
    %c-9_i32_114 = arith.constant -9 : i32
    %629 = vector.broadcast %c-9_i32_114 : i32 to vector<1x256xi32>
    %630 = arith.addi %2, %629 : vector<1x256xi32>
    %c16_i32_115 = arith.constant 16 : i32
    %631 = vector.broadcast %c16_i32_115 : i32 to vector<1x256xi32>
    %632 = arith.cmpi slt, %630, %631 : vector<1x256xi32>
    %633 = arith.andi %628, %632 : vector<1x256xi1>
    %c-9_i32_116 = arith.constant -9 : i32
    %634 = vector.broadcast %c-9_i32_116 : i32 to vector<1x256xi32>
    %635 = arith.addi %3, %634 : vector<1x256xi32>
    %c0_i32_117 = arith.constant 0 : i32
    %636 = vector.broadcast %c0_i32_117 : i32 to vector<1x256xi32>
    %637 = arith.cmpi sge, %635, %636 : vector<1x256xi32>
    %c-9_i32_118 = arith.constant -9 : i32
    %638 = vector.broadcast %c-9_i32_118 : i32 to vector<1x256xi32>
    %639 = arith.addi %3, %638 : vector<1x256xi32>
    %c16_i32_119 = arith.constant 16 : i32
    %640 = vector.broadcast %c16_i32_119 : i32 to vector<1x256xi32>
    %641 = arith.cmpi slt, %639, %640 : vector<1x256xi32>
    %642 = arith.andi %637, %641 : vector<1x256xi1>
    %c-6_i32 = arith.constant -6 : i32
    %643 = vector.broadcast %c-6_i32 : i32 to vector<1x256xi32>
    %644 = arith.addi %2, %643 : vector<1x256xi32>
    %c0_i32_120 = arith.constant 0 : i32
    %645 = vector.broadcast %c0_i32_120 : i32 to vector<1x256xi32>
    %646 = arith.cmpi sge, %644, %645 : vector<1x256xi32>
    %c-6_i32_121 = arith.constant -6 : i32
    %647 = vector.broadcast %c-6_i32_121 : i32 to vector<1x256xi32>
    %648 = arith.addi %2, %647 : vector<1x256xi32>
    %c16_i32_122 = arith.constant 16 : i32
    %649 = vector.broadcast %c16_i32_122 : i32 to vector<1x256xi32>
    %650 = arith.cmpi slt, %648, %649 : vector<1x256xi32>
    %651 = arith.andi %646, %650 : vector<1x256xi1>
    %c-6_i32_123 = arith.constant -6 : i32
    %652 = vector.broadcast %c-6_i32_123 : i32 to vector<1x256xi32>
    %653 = arith.addi %3, %652 : vector<1x256xi32>
    %c0_i32_124 = arith.constant 0 : i32
    %654 = vector.broadcast %c0_i32_124 : i32 to vector<1x256xi32>
    %655 = arith.cmpi sge, %653, %654 : vector<1x256xi32>
    %c-6_i32_125 = arith.constant -6 : i32
    %656 = vector.broadcast %c-6_i32_125 : i32 to vector<1x256xi32>
    %657 = arith.addi %3, %656 : vector<1x256xi32>
    %c16_i32_126 = arith.constant 16 : i32
    %658 = vector.broadcast %c16_i32_126 : i32 to vector<1x256xi32>
    %659 = arith.cmpi slt, %657, %658 : vector<1x256xi32>
    %660 = arith.andi %655, %659 : vector<1x256xi1>
    %c-3_i32_127 = arith.constant -3 : i32
    %661 = vector.broadcast %c-3_i32_127 : i32 to vector<1x256xi32>
    %662 = arith.addi %2, %661 : vector<1x256xi32>
    %c0_i32_128 = arith.constant 0 : i32
    %663 = vector.broadcast %c0_i32_128 : i32 to vector<1x256xi32>
    %664 = arith.cmpi sge, %662, %663 : vector<1x256xi32>
    %c-3_i32_129 = arith.constant -3 : i32
    %665 = vector.broadcast %c-3_i32_129 : i32 to vector<1x256xi32>
    %666 = arith.addi %2, %665 : vector<1x256xi32>
    %c16_i32_130 = arith.constant 16 : i32
    %667 = vector.broadcast %c16_i32_130 : i32 to vector<1x256xi32>
    %668 = arith.cmpi slt, %666, %667 : vector<1x256xi32>
    %669 = arith.andi %664, %668 : vector<1x256xi1>
    %c-3_i32_131 = arith.constant -3 : i32
    %670 = vector.broadcast %c-3_i32_131 : i32 to vector<1x256xi32>
    %671 = arith.addi %3, %670 : vector<1x256xi32>
    %c0_i32_132 = arith.constant 0 : i32
    %672 = vector.broadcast %c0_i32_132 : i32 to vector<1x256xi32>
    %673 = arith.cmpi sge, %671, %672 : vector<1x256xi32>
    %c-3_i32_133 = arith.constant -3 : i32
    %674 = vector.broadcast %c-3_i32_133 : i32 to vector<1x256xi32>
    %675 = arith.addi %3, %674 : vector<1x256xi32>
    %c16_i32_134 = arith.constant 16 : i32
    %676 = vector.broadcast %c16_i32_134 : i32 to vector<1x256xi32>
    %677 = arith.cmpi slt, %675, %676 : vector<1x256xi32>
    %678 = arith.andi %673, %677 : vector<1x256xi1>
    %c0_i32_135 = arith.constant 0 : i32
    %679 = vector.broadcast %c0_i32_135 : i32 to vector<1x256xi32>
    %680 = arith.addi %2, %679 : vector<1x256xi32>
    %c0_i32_136 = arith.constant 0 : i32
    %681 = vector.broadcast %c0_i32_136 : i32 to vector<1x256xi32>
    %682 = arith.cmpi sge, %680, %681 : vector<1x256xi32>
    %c0_i32_137 = arith.constant 0 : i32
    %683 = vector.broadcast %c0_i32_137 : i32 to vector<1x256xi32>
    %684 = arith.addi %2, %683 : vector<1x256xi32>
    %c16_i32_138 = arith.constant 16 : i32
    %685 = vector.broadcast %c16_i32_138 : i32 to vector<1x256xi32>
    %686 = arith.cmpi slt, %684, %685 : vector<1x256xi32>
    %687 = arith.andi %682, %686 : vector<1x256xi1>
    %c0_i32_139 = arith.constant 0 : i32
    %688 = vector.broadcast %c0_i32_139 : i32 to vector<1x256xi32>
    %689 = arith.addi %3, %688 : vector<1x256xi32>
    %c0_i32_140 = arith.constant 0 : i32
    %690 = vector.broadcast %c0_i32_140 : i32 to vector<1x256xi32>
    %691 = arith.cmpi sge, %689, %690 : vector<1x256xi32>
    %c0_i32_141 = arith.constant 0 : i32
    %692 = vector.broadcast %c0_i32_141 : i32 to vector<1x256xi32>
    %693 = arith.addi %3, %692 : vector<1x256xi32>
    %c16_i32_142 = arith.constant 16 : i32
    %694 = vector.broadcast %c16_i32_142 : i32 to vector<1x256xi32>
    %695 = arith.cmpi slt, %693, %694 : vector<1x256xi32>
    %696 = arith.andi %691, %695 : vector<1x256xi1>
    %c3_i32_143 = arith.constant 3 : i32
    %697 = vector.broadcast %c3_i32_143 : i32 to vector<1x256xi32>
    %698 = arith.addi %2, %697 : vector<1x256xi32>
    %c0_i32_144 = arith.constant 0 : i32
    %699 = vector.broadcast %c0_i32_144 : i32 to vector<1x256xi32>
    %700 = arith.cmpi sge, %698, %699 : vector<1x256xi32>
    %c3_i32_145 = arith.constant 3 : i32
    %701 = vector.broadcast %c3_i32_145 : i32 to vector<1x256xi32>
    %702 = arith.addi %2, %701 : vector<1x256xi32>
    %c16_i32_146 = arith.constant 16 : i32
    %703 = vector.broadcast %c16_i32_146 : i32 to vector<1x256xi32>
    %704 = arith.cmpi slt, %702, %703 : vector<1x256xi32>
    %705 = arith.andi %700, %704 : vector<1x256xi1>
    %c3_i32_147 = arith.constant 3 : i32
    %706 = vector.broadcast %c3_i32_147 : i32 to vector<1x256xi32>
    %707 = arith.addi %3, %706 : vector<1x256xi32>
    %c0_i32_148 = arith.constant 0 : i32
    %708 = vector.broadcast %c0_i32_148 : i32 to vector<1x256xi32>
    %709 = arith.cmpi sge, %707, %708 : vector<1x256xi32>
    %c3_i32_149 = arith.constant 3 : i32
    %710 = vector.broadcast %c3_i32_149 : i32 to vector<1x256xi32>
    %711 = arith.addi %3, %710 : vector<1x256xi32>
    %c16_i32_150 = arith.constant 16 : i32
    %712 = vector.broadcast %c16_i32_150 : i32 to vector<1x256xi32>
    %713 = arith.cmpi slt, %711, %712 : vector<1x256xi32>
    %714 = arith.andi %709, %713 : vector<1x256xi1>
    %c6_i32 = arith.constant 6 : i32
    %715 = vector.broadcast %c6_i32 : i32 to vector<1x256xi32>
    %716 = arith.addi %2, %715 : vector<1x256xi32>
    %c0_i32_151 = arith.constant 0 : i32
    %717 = vector.broadcast %c0_i32_151 : i32 to vector<1x256xi32>
    %718 = arith.cmpi sge, %716, %717 : vector<1x256xi32>
    %c6_i32_152 = arith.constant 6 : i32
    %719 = vector.broadcast %c6_i32_152 : i32 to vector<1x256xi32>
    %720 = arith.addi %2, %719 : vector<1x256xi32>
    %c16_i32_153 = arith.constant 16 : i32
    %721 = vector.broadcast %c16_i32_153 : i32 to vector<1x256xi32>
    %722 = arith.cmpi slt, %720, %721 : vector<1x256xi32>
    %723 = arith.andi %718, %722 : vector<1x256xi1>
    %c6_i32_154 = arith.constant 6 : i32
    %724 = vector.broadcast %c6_i32_154 : i32 to vector<1x256xi32>
    %725 = arith.addi %3, %724 : vector<1x256xi32>
    %c0_i32_155 = arith.constant 0 : i32
    %726 = vector.broadcast %c0_i32_155 : i32 to vector<1x256xi32>
    %727 = arith.cmpi sge, %725, %726 : vector<1x256xi32>
    %c6_i32_156 = arith.constant 6 : i32
    %728 = vector.broadcast %c6_i32_156 : i32 to vector<1x256xi32>
    %729 = arith.addi %3, %728 : vector<1x256xi32>
    %c16_i32_157 = arith.constant 16 : i32
    %730 = vector.broadcast %c16_i32_157 : i32 to vector<1x256xi32>
    %731 = arith.cmpi slt, %729, %730 : vector<1x256xi32>
    %732 = arith.andi %727, %731 : vector<1x256xi1>
    %c9_i32 = arith.constant 9 : i32
    %733 = vector.broadcast %c9_i32 : i32 to vector<1x256xi32>
    %734 = arith.addi %2, %733 : vector<1x256xi32>
    %c0_i32_158 = arith.constant 0 : i32
    %735 = vector.broadcast %c0_i32_158 : i32 to vector<1x256xi32>
    %736 = arith.cmpi sge, %734, %735 : vector<1x256xi32>
    %c9_i32_159 = arith.constant 9 : i32
    %737 = vector.broadcast %c9_i32_159 : i32 to vector<1x256xi32>
    %738 = arith.addi %2, %737 : vector<1x256xi32>
    %c16_i32_160 = arith.constant 16 : i32
    %739 = vector.broadcast %c16_i32_160 : i32 to vector<1x256xi32>
    %740 = arith.cmpi slt, %738, %739 : vector<1x256xi32>
    %741 = arith.andi %736, %740 : vector<1x256xi1>
    %c9_i32_161 = arith.constant 9 : i32
    %742 = vector.broadcast %c9_i32_161 : i32 to vector<1x256xi32>
    %743 = arith.addi %3, %742 : vector<1x256xi32>
    %c0_i32_162 = arith.constant 0 : i32
    %744 = vector.broadcast %c0_i32_162 : i32 to vector<1x256xi32>
    %745 = arith.cmpi sge, %743, %744 : vector<1x256xi32>
    %c9_i32_163 = arith.constant 9 : i32
    %746 = vector.broadcast %c9_i32_163 : i32 to vector<1x256xi32>
    %747 = arith.addi %3, %746 : vector<1x256xi32>
    %c16_i32_164 = arith.constant 16 : i32
    %748 = vector.broadcast %c16_i32_164 : i32 to vector<1x256xi32>
    %749 = arith.cmpi slt, %747, %748 : vector<1x256xi32>
    %750 = arith.andi %745, %749 : vector<1x256xi1>
    %751 = vector.broadcast %624 : vector<32x1xf32> to vector<32x256xf32>
    %752 = arith.addf %622, %751 : vector<32x256xf32>
    %c153_i32 = arith.constant 153 : i32
    %753 = tpu.dynamic_rotate %622 by %c153_i32 dim 1 : vector<32x256xf32>, i32 -> vector<32x256xf32>
    %754 = arith.andi %633, %642 : vector<1x256xi1>
    %755 = vector.extract_strided_slice %623 {offsets = [0, 0], sizes = [32, 1], strides = [1, 1]} : vector<32x49xf32> to vector<32x1xf32>
    %cst_165 = arith.constant 0.000000e+00 : f32
    %756 = vector.shape_cast %754 : vector<1x256xi1> to vector<1x256xi1>
    %757 = vector.broadcast %756 : vector<1x256xi1> to vector<32x256xi1>
    %758 = vector.broadcast %cst_165 : f32 to vector<32x256xf32>
    %759 = arith.select %757, %753, %758 : vector<32x256xi1>, vector<32x256xf32>
    %760 = vector.broadcast %755 : vector<32x1xf32> to vector<32x256xf32>
    %761 = arith.mulf %759, %760 : vector<32x256xf32>
    %762 = arith.addf %752, %761 : vector<32x256xf32>
    %c150_i32 = arith.constant 150 : i32
    %763 = tpu.dynamic_rotate %622 by %c150_i32 dim 1 : vector<32x256xf32>, i32 -> vector<32x256xf32>
    %764 = arith.andi %633, %660 : vector<1x256xi1>
    %765 = vector.extract_strided_slice %623 {offsets = [0, 1], sizes = [32, 1], strides = [1, 1]} : vector<32x49xf32> to vector<32x1xf32>
    %cst_166 = arith.constant 0.000000e+00 : f32
    %766 = vector.shape_cast %764 : vector<1x256xi1> to vector<1x256xi1>
    %767 = vector.broadcast %766 : vector<1x256xi1> to vector<32x256xi1>
    %768 = vector.broadcast %cst_166 : f32 to vector<32x256xf32>
    %769 = arith.select %767, %763, %768 : vector<32x256xi1>, vector<32x256xf32>
    %770 = vector.broadcast %765 : vector<32x1xf32> to vector<32x256xf32>
    %771 = arith.mulf %769, %770 : vector<32x256xf32>
    %772 = arith.addf %762, %771 : vector<32x256xf32>
    %c147_i32 = arith.constant 147 : i32
    %773 = tpu.dynamic_rotate %622 by %c147_i32 dim 1 : vector<32x256xf32>, i32 -> vector<32x256xf32>
    %774 = arith.andi %633, %678 : vector<1x256xi1>
    %775 = vector.extract_strided_slice %623 {offsets = [0, 2], sizes = [32, 1], strides = [1, 1]} : vector<32x49xf32> to vector<32x1xf32>
    %cst_167 = arith.constant 0.000000e+00 : f32
    %776 = vector.shape_cast %774 : vector<1x256xi1> to vector<1x256xi1>
    %777 = vector.broadcast %776 : vector<1x256xi1> to vector<32x256xi1>
    %778 = vector.broadcast %cst_167 : f32 to vector<32x256xf32>
    %779 = arith.select %777, %773, %778 : vector<32x256xi1>, vector<32x256xf32>
    %780 = vector.broadcast %775 : vector<32x1xf32> to vector<32x256xf32>
    %781 = arith.mulf %779, %780 : vector<32x256xf32>
    %782 = arith.addf %772, %781 : vector<32x256xf32>
    %c144_i32 = arith.constant 144 : i32
    %783 = tpu.dynamic_rotate %622 by %c144_i32 dim 1 : vector<32x256xf32>, i32 -> vector<32x256xf32>
    %784 = arith.andi %633, %696 : vector<1x256xi1>
    %785 = vector.extract_strided_slice %623 {offsets = [0, 3], sizes = [32, 1], strides = [1, 1]} : vector<32x49xf32> to vector<32x1xf32>
    %cst_168 = arith.constant 0.000000e+00 : f32
    %786 = vector.shape_cast %784 : vector<1x256xi1> to vector<1x256xi1>
    %787 = vector.broadcast %786 : vector<1x256xi1> to vector<32x256xi1>
    %788 = vector.broadcast %cst_168 : f32 to vector<32x256xf32>
    %789 = arith.select %787, %783, %788 : vector<32x256xi1>, vector<32x256xf32>
    %790 = vector.broadcast %785 : vector<32x1xf32> to vector<32x256xf32>
    %791 = arith.mulf %789, %790 : vector<32x256xf32>
    %792 = arith.addf %782, %791 : vector<32x256xf32>
    %c141_i32 = arith.constant 141 : i32
    %793 = tpu.dynamic_rotate %622 by %c141_i32 dim 1 : vector<32x256xf32>, i32 -> vector<32x256xf32>
    %794 = arith.andi %633, %714 : vector<1x256xi1>
    %795 = vector.extract_strided_slice %623 {offsets = [0, 4], sizes = [32, 1], strides = [1, 1]} : vector<32x49xf32> to vector<32x1xf32>
    %cst_169 = arith.constant 0.000000e+00 : f32
    %796 = vector.shape_cast %794 : vector<1x256xi1> to vector<1x256xi1>
    %797 = vector.broadcast %796 : vector<1x256xi1> to vector<32x256xi1>
    %798 = vector.broadcast %cst_169 : f32 to vector<32x256xf32>
    %799 = arith.select %797, %793, %798 : vector<32x256xi1>, vector<32x256xf32>
    %800 = vector.broadcast %795 : vector<32x1xf32> to vector<32x256xf32>
    %801 = arith.mulf %799, %800 : vector<32x256xf32>
    %802 = arith.addf %792, %801 : vector<32x256xf32>
    %c138_i32 = arith.constant 138 : i32
    %803 = tpu.dynamic_rotate %622 by %c138_i32 dim 1 : vector<32x256xf32>, i32 -> vector<32x256xf32>
    %804 = arith.andi %633, %732 : vector<1x256xi1>
    %805 = vector.extract_strided_slice %623 {offsets = [0, 5], sizes = [32, 1], strides = [1, 1]} : vector<32x49xf32> to vector<32x1xf32>
    %cst_170 = arith.constant 0.000000e+00 : f32
    %806 = vector.shape_cast %804 : vector<1x256xi1> to vector<1x256xi1>
    %807 = vector.broadcast %806 : vector<1x256xi1> to vector<32x256xi1>
    %808 = vector.broadcast %cst_170 : f32 to vector<32x256xf32>
    %809 = arith.select %807, %803, %808 : vector<32x256xi1>, vector<32x256xf32>
    %810 = vector.broadcast %805 : vector<32x1xf32> to vector<32x256xf32>
    %811 = arith.mulf %809, %810 : vector<32x256xf32>
    %812 = arith.addf %802, %811 : vector<32x256xf32>
    %c135_i32 = arith.constant 135 : i32
    %813 = tpu.dynamic_rotate %622 by %c135_i32 dim 1 : vector<32x256xf32>, i32 -> vector<32x256xf32>
    %814 = arith.andi %633, %750 : vector<1x256xi1>
    %815 = vector.extract_strided_slice %623 {offsets = [0, 6], sizes = [32, 1], strides = [1, 1]} : vector<32x49xf32> to vector<32x1xf32>
    %cst_171 = arith.constant 0.000000e+00 : f32
    %816 = vector.shape_cast %814 : vector<1x256xi1> to vector<1x256xi1>
    %817 = vector.broadcast %816 : vector<1x256xi1> to vector<32x256xi1>
    %818 = vector.broadcast %cst_171 : f32 to vector<32x256xf32>
    %819 = arith.select %817, %813, %818 : vector<32x256xi1>, vector<32x256xf32>
    %820 = vector.broadcast %815 : vector<32x1xf32> to vector<32x256xf32>
    %821 = arith.mulf %819, %820 : vector<32x256xf32>
    %822 = arith.addf %812, %821 : vector<32x256xf32>
    %c105_i32 = arith.constant 105 : i32
    %823 = tpu.dynamic_rotate %622 by %c105_i32 dim 1 : vector<32x256xf32>, i32 -> vector<32x256xf32>
    %824 = arith.andi %651, %642 : vector<1x256xi1>
    %825 = vector.extract_strided_slice %623 {offsets = [0, 7], sizes = [32, 1], strides = [1, 1]} : vector<32x49xf32> to vector<32x1xf32>
    %cst_172 = arith.constant 0.000000e+00 : f32
    %826 = vector.shape_cast %824 : vector<1x256xi1> to vector<1x256xi1>
    %827 = vector.broadcast %826 : vector<1x256xi1> to vector<32x256xi1>
    %828 = vector.broadcast %cst_172 : f32 to vector<32x256xf32>
    %829 = arith.select %827, %823, %828 : vector<32x256xi1>, vector<32x256xf32>
    %830 = vector.broadcast %825 : vector<32x1xf32> to vector<32x256xf32>
    %831 = arith.mulf %829, %830 : vector<32x256xf32>
    %832 = arith.addf %822, %831 : vector<32x256xf32>
    %c102_i32 = arith.constant 102 : i32
    %833 = tpu.dynamic_rotate %622 by %c102_i32 dim 1 : vector<32x256xf32>, i32 -> vector<32x256xf32>
    %834 = arith.andi %651, %660 : vector<1x256xi1>
    %835 = vector.extract_strided_slice %623 {offsets = [0, 8], sizes = [32, 1], strides = [1, 1]} : vector<32x49xf32> to vector<32x1xf32>
    %cst_173 = arith.constant 0.000000e+00 : f32
    %836 = vector.shape_cast %834 : vector<1x256xi1> to vector<1x256xi1>
    %837 = vector.broadcast %836 : vector<1x256xi1> to vector<32x256xi1>
    %838 = vector.broadcast %cst_173 : f32 to vector<32x256xf32>
    %839 = arith.select %837, %833, %838 : vector<32x256xi1>, vector<32x256xf32>
    %840 = vector.broadcast %835 : vector<32x1xf32> to vector<32x256xf32>
    %841 = arith.mulf %839, %840 : vector<32x256xf32>
    %842 = arith.addf %832, %841 : vector<32x256xf32>
    %c99_i32 = arith.constant 99 : i32
    %843 = tpu.dynamic_rotate %622 by %c99_i32 dim 1 : vector<32x256xf32>, i32 -> vector<32x256xf32>
    %844 = arith.andi %651, %678 : vector<1x256xi1>
    %845 = vector.extract_strided_slice %623 {offsets = [0, 9], sizes = [32, 1], strides = [1, 1]} : vector<32x49xf32> to vector<32x1xf32>
    %cst_174 = arith.constant 0.000000e+00 : f32
    %846 = vector.shape_cast %844 : vector<1x256xi1> to vector<1x256xi1>
    %847 = vector.broadcast %846 : vector<1x256xi1> to vector<32x256xi1>
    %848 = vector.broadcast %cst_174 : f32 to vector<32x256xf32>
    %849 = arith.select %847, %843, %848 : vector<32x256xi1>, vector<32x256xf32>
    %850 = vector.broadcast %845 : vector<32x1xf32> to vector<32x256xf32>
    %851 = arith.mulf %849, %850 : vector<32x256xf32>
    %852 = arith.addf %842, %851 : vector<32x256xf32>
    %c96_i32 = arith.constant 96 : i32
    %853 = tpu.dynamic_rotate %622 by %c96_i32 dim 1 : vector<32x256xf32>, i32 -> vector<32x256xf32>
    %854 = arith.andi %651, %696 : vector<1x256xi1>
    %855 = vector.extract_strided_slice %623 {offsets = [0, 10], sizes = [32, 1], strides = [1, 1]} : vector<32x49xf32> to vector<32x1xf32>
    %cst_175 = arith.constant 0.000000e+00 : f32
    %856 = vector.shape_cast %854 : vector<1x256xi1> to vector<1x256xi1>
    %857 = vector.broadcast %856 : vector<1x256xi1> to vector<32x256xi1>
    %858 = vector.broadcast %cst_175 : f32 to vector<32x256xf32>
    %859 = arith.select %857, %853, %858 : vector<32x256xi1>, vector<32x256xf32>
    %860 = vector.broadcast %855 : vector<32x1xf32> to vector<32x256xf32>
    %861 = arith.mulf %859, %860 : vector<32x256xf32>
    %862 = arith.addf %852, %861 : vector<32x256xf32>
    %c93_i32 = arith.constant 93 : i32
    %863 = tpu.dynamic_rotate %622 by %c93_i32 dim 1 : vector<32x256xf32>, i32 -> vector<32x256xf32>
    %864 = arith.andi %651, %714 : vector<1x256xi1>
    %865 = vector.extract_strided_slice %623 {offsets = [0, 11], sizes = [32, 1], strides = [1, 1]} : vector<32x49xf32> to vector<32x1xf32>
    %cst_176 = arith.constant 0.000000e+00 : f32
    %866 = vector.shape_cast %864 : vector<1x256xi1> to vector<1x256xi1>
    %867 = vector.broadcast %866 : vector<1x256xi1> to vector<32x256xi1>
    %868 = vector.broadcast %cst_176 : f32 to vector<32x256xf32>
    %869 = arith.select %867, %863, %868 : vector<32x256xi1>, vector<32x256xf32>
    %870 = vector.broadcast %865 : vector<32x1xf32> to vector<32x256xf32>
    %871 = arith.mulf %869, %870 : vector<32x256xf32>
    %872 = arith.addf %862, %871 : vector<32x256xf32>
    %c90_i32 = arith.constant 90 : i32
    %873 = tpu.dynamic_rotate %622 by %c90_i32 dim 1 : vector<32x256xf32>, i32 -> vector<32x256xf32>
    %874 = arith.andi %651, %732 : vector<1x256xi1>
    %875 = vector.extract_strided_slice %623 {offsets = [0, 12], sizes = [32, 1], strides = [1, 1]} : vector<32x49xf32> to vector<32x1xf32>
    %cst_177 = arith.constant 0.000000e+00 : f32
    %876 = vector.shape_cast %874 : vector<1x256xi1> to vector<1x256xi1>
    %877 = vector.broadcast %876 : vector<1x256xi1> to vector<32x256xi1>
    %878 = vector.broadcast %cst_177 : f32 to vector<32x256xf32>
    %879 = arith.select %877, %873, %878 : vector<32x256xi1>, vector<32x256xf32>
    %880 = vector.broadcast %875 : vector<32x1xf32> to vector<32x256xf32>
    %881 = arith.mulf %879, %880 : vector<32x256xf32>
    %882 = arith.addf %872, %881 : vector<32x256xf32>
    %c87_i32 = arith.constant 87 : i32
    %883 = tpu.dynamic_rotate %622 by %c87_i32 dim 1 : vector<32x256xf32>, i32 -> vector<32x256xf32>
    %884 = arith.andi %651, %750 : vector<1x256xi1>
    %885 = vector.extract_strided_slice %623 {offsets = [0, 13], sizes = [32, 1], strides = [1, 1]} : vector<32x49xf32> to vector<32x1xf32>
    %cst_178 = arith.constant 0.000000e+00 : f32
    %886 = vector.shape_cast %884 : vector<1x256xi1> to vector<1x256xi1>
    %887 = vector.broadcast %886 : vector<1x256xi1> to vector<32x256xi1>
    %888 = vector.broadcast %cst_178 : f32 to vector<32x256xf32>
    %889 = arith.select %887, %883, %888 : vector<32x256xi1>, vector<32x256xf32>
    %890 = vector.broadcast %885 : vector<32x1xf32> to vector<32x256xf32>
    %891 = arith.mulf %889, %890 : vector<32x256xf32>
    %892 = arith.addf %882, %891 : vector<32x256xf32>
    %c57_i32 = arith.constant 57 : i32
    %893 = tpu.dynamic_rotate %622 by %c57_i32 dim 1 : vector<32x256xf32>, i32 -> vector<32x256xf32>
    %894 = arith.andi %669, %642 : vector<1x256xi1>
    %895 = vector.extract_strided_slice %623 {offsets = [0, 14], sizes = [32, 1], strides = [1, 1]} : vector<32x49xf32> to vector<32x1xf32>
    %cst_179 = arith.constant 0.000000e+00 : f32
    %896 = vector.shape_cast %894 : vector<1x256xi1> to vector<1x256xi1>
    %897 = vector.broadcast %896 : vector<1x256xi1> to vector<32x256xi1>
    %898 = vector.broadcast %cst_179 : f32 to vector<32x256xf32>
    %899 = arith.select %897, %893, %898 : vector<32x256xi1>, vector<32x256xf32>
    %900 = vector.broadcast %895 : vector<32x1xf32> to vector<32x256xf32>
    %901 = arith.mulf %899, %900 : vector<32x256xf32>
    %902 = arith.addf %892, %901 : vector<32x256xf32>
    %c54_i32 = arith.constant 54 : i32
    %903 = tpu.dynamic_rotate %622 by %c54_i32 dim 1 : vector<32x256xf32>, i32 -> vector<32x256xf32>
    %904 = arith.andi %669, %660 : vector<1x256xi1>
    %905 = vector.extract_strided_slice %623 {offsets = [0, 15], sizes = [32, 1], strides = [1, 1]} : vector<32x49xf32> to vector<32x1xf32>
    %cst_180 = arith.constant 0.000000e+00 : f32
    %906 = vector.shape_cast %904 : vector<1x256xi1> to vector<1x256xi1>
    %907 = vector.broadcast %906 : vector<1x256xi1> to vector<32x256xi1>
    %908 = vector.broadcast %cst_180 : f32 to vector<32x256xf32>
    %909 = arith.select %907, %903, %908 : vector<32x256xi1>, vector<32x256xf32>
    %910 = vector.broadcast %905 : vector<32x1xf32> to vector<32x256xf32>
    %911 = arith.mulf %909, %910 : vector<32x256xf32>
    %912 = arith.addf %902, %911 : vector<32x256xf32>
    %c51_i32_181 = arith.constant 51 : i32
    %913 = tpu.dynamic_rotate %622 by %c51_i32_181 dim 1 : vector<32x256xf32>, i32 -> vector<32x256xf32>
    %914 = arith.andi %669, %678 : vector<1x256xi1>
    %915 = vector.extract_strided_slice %623 {offsets = [0, 16], sizes = [32, 1], strides = [1, 1]} : vector<32x49xf32> to vector<32x1xf32>
    %cst_182 = arith.constant 0.000000e+00 : f32
    %916 = vector.shape_cast %914 : vector<1x256xi1> to vector<1x256xi1>
    %917 = vector.broadcast %916 : vector<1x256xi1> to vector<32x256xi1>
    %918 = vector.broadcast %cst_182 : f32 to vector<32x256xf32>
    %919 = arith.select %917, %913, %918 : vector<32x256xi1>, vector<32x256xf32>
    %920 = vector.broadcast %915 : vector<32x1xf32> to vector<32x256xf32>
    %921 = arith.mulf %919, %920 : vector<32x256xf32>
    %922 = arith.addf %912, %921 : vector<32x256xf32>
    %c48_i32_183 = arith.constant 48 : i32
    %923 = tpu.dynamic_rotate %622 by %c48_i32_183 dim 1 : vector<32x256xf32>, i32 -> vector<32x256xf32>
    %924 = arith.andi %669, %696 : vector<1x256xi1>
    %925 = vector.extract_strided_slice %623 {offsets = [0, 17], sizes = [32, 1], strides = [1, 1]} : vector<32x49xf32> to vector<32x1xf32>
    %cst_184 = arith.constant 0.000000e+00 : f32
    %926 = vector.shape_cast %924 : vector<1x256xi1> to vector<1x256xi1>
    %927 = vector.broadcast %926 : vector<1x256xi1> to vector<32x256xi1>
    %928 = vector.broadcast %cst_184 : f32 to vector<32x256xf32>
    %929 = arith.select %927, %923, %928 : vector<32x256xi1>, vector<32x256xf32>
    %930 = vector.broadcast %925 : vector<32x1xf32> to vector<32x256xf32>
    %931 = arith.mulf %929, %930 : vector<32x256xf32>
    %932 = arith.addf %922, %931 : vector<32x256xf32>
    %c45_i32_185 = arith.constant 45 : i32
    %933 = tpu.dynamic_rotate %622 by %c45_i32_185 dim 1 : vector<32x256xf32>, i32 -> vector<32x256xf32>
    %934 = arith.andi %669, %714 : vector<1x256xi1>
    %935 = vector.extract_strided_slice %623 {offsets = [0, 18], sizes = [32, 1], strides = [1, 1]} : vector<32x49xf32> to vector<32x1xf32>
    %cst_186 = arith.constant 0.000000e+00 : f32
    %936 = vector.shape_cast %934 : vector<1x256xi1> to vector<1x256xi1>
    %937 = vector.broadcast %936 : vector<1x256xi1> to vector<32x256xi1>
    %938 = vector.broadcast %cst_186 : f32 to vector<32x256xf32>
    %939 = arith.select %937, %933, %938 : vector<32x256xi1>, vector<32x256xf32>
    %940 = vector.broadcast %935 : vector<32x1xf32> to vector<32x256xf32>
    %941 = arith.mulf %939, %940 : vector<32x256xf32>
    %942 = arith.addf %932, %941 : vector<32x256xf32>
    %c42_i32 = arith.constant 42 : i32
    %943 = tpu.dynamic_rotate %622 by %c42_i32 dim 1 : vector<32x256xf32>, i32 -> vector<32x256xf32>
    %944 = arith.andi %669, %732 : vector<1x256xi1>
    %945 = vector.extract_strided_slice %623 {offsets = [0, 19], sizes = [32, 1], strides = [1, 1]} : vector<32x49xf32> to vector<32x1xf32>
    %cst_187 = arith.constant 0.000000e+00 : f32
    %946 = vector.shape_cast %944 : vector<1x256xi1> to vector<1x256xi1>
    %947 = vector.broadcast %946 : vector<1x256xi1> to vector<32x256xi1>
    %948 = vector.broadcast %cst_187 : f32 to vector<32x256xf32>
    %949 = arith.select %947, %943, %948 : vector<32x256xi1>, vector<32x256xf32>
    %950 = vector.broadcast %945 : vector<32x1xf32> to vector<32x256xf32>
    %951 = arith.mulf %949, %950 : vector<32x256xf32>
    %952 = arith.addf %942, %951 : vector<32x256xf32>
    %c39_i32 = arith.constant 39 : i32
    %953 = tpu.dynamic_rotate %622 by %c39_i32 dim 1 : vector<32x256xf32>, i32 -> vector<32x256xf32>
    %954 = arith.andi %669, %750 : vector<1x256xi1>
    %955 = vector.extract_strided_slice %623 {offsets = [0, 20], sizes = [32, 1], strides = [1, 1]} : vector<32x49xf32> to vector<32x1xf32>
    %cst_188 = arith.constant 0.000000e+00 : f32
    %956 = vector.shape_cast %954 : vector<1x256xi1> to vector<1x256xi1>
    %957 = vector.broadcast %956 : vector<1x256xi1> to vector<32x256xi1>
    %958 = vector.broadcast %cst_188 : f32 to vector<32x256xf32>
    %959 = arith.select %957, %953, %958 : vector<32x256xi1>, vector<32x256xf32>
    %960 = vector.broadcast %955 : vector<32x1xf32> to vector<32x256xf32>
    %961 = arith.mulf %959, %960 : vector<32x256xf32>
    %962 = arith.addf %952, %961 : vector<32x256xf32>
    %c9_i32_189 = arith.constant 9 : i32
    %963 = tpu.dynamic_rotate %622 by %c9_i32_189 dim 1 : vector<32x256xf32>, i32 -> vector<32x256xf32>
    %964 = arith.andi %687, %642 : vector<1x256xi1>
    %965 = vector.extract_strided_slice %623 {offsets = [0, 21], sizes = [32, 1], strides = [1, 1]} : vector<32x49xf32> to vector<32x1xf32>
    %cst_190 = arith.constant 0.000000e+00 : f32
    %966 = vector.shape_cast %964 : vector<1x256xi1> to vector<1x256xi1>
    %967 = vector.broadcast %966 : vector<1x256xi1> to vector<32x256xi1>
    %968 = vector.broadcast %cst_190 : f32 to vector<32x256xf32>
    %969 = arith.select %967, %963, %968 : vector<32x256xi1>, vector<32x256xf32>
    %970 = vector.broadcast %965 : vector<32x1xf32> to vector<32x256xf32>
    %971 = arith.mulf %969, %970 : vector<32x256xf32>
    %972 = arith.addf %962, %971 : vector<32x256xf32>
    %c6_i32_191 = arith.constant 6 : i32
    %973 = tpu.dynamic_rotate %622 by %c6_i32_191 dim 1 : vector<32x256xf32>, i32 -> vector<32x256xf32>
    %974 = arith.andi %687, %660 : vector<1x256xi1>
    %975 = vector.extract_strided_slice %623 {offsets = [0, 22], sizes = [32, 1], strides = [1, 1]} : vector<32x49xf32> to vector<32x1xf32>
    %cst_192 = arith.constant 0.000000e+00 : f32
    %976 = vector.shape_cast %974 : vector<1x256xi1> to vector<1x256xi1>
    %977 = vector.broadcast %976 : vector<1x256xi1> to vector<32x256xi1>
    %978 = vector.broadcast %cst_192 : f32 to vector<32x256xf32>
    %979 = arith.select %977, %973, %978 : vector<32x256xi1>, vector<32x256xf32>
    %980 = vector.broadcast %975 : vector<32x1xf32> to vector<32x256xf32>
    %981 = arith.mulf %979, %980 : vector<32x256xf32>
    %982 = arith.addf %972, %981 : vector<32x256xf32>
    %c3_i32_193 = arith.constant 3 : i32
    %983 = tpu.dynamic_rotate %622 by %c3_i32_193 dim 1 : vector<32x256xf32>, i32 -> vector<32x256xf32>
    %984 = arith.andi %687, %678 : vector<1x256xi1>
    %985 = vector.extract_strided_slice %623 {offsets = [0, 23], sizes = [32, 1], strides = [1, 1]} : vector<32x49xf32> to vector<32x1xf32>
    %cst_194 = arith.constant 0.000000e+00 : f32
    %986 = vector.shape_cast %984 : vector<1x256xi1> to vector<1x256xi1>
    %987 = vector.broadcast %986 : vector<1x256xi1> to vector<32x256xi1>
    %988 = vector.broadcast %cst_194 : f32 to vector<32x256xf32>
    %989 = arith.select %987, %983, %988 : vector<32x256xi1>, vector<32x256xf32>
    %990 = vector.broadcast %985 : vector<32x1xf32> to vector<32x256xf32>
    %991 = arith.mulf %989, %990 : vector<32x256xf32>
    %992 = arith.addf %982, %991 : vector<32x256xf32>
    %993 = arith.andi %687, %696 : vector<1x256xi1>
    %994 = vector.extract_strided_slice %623 {offsets = [0, 24], sizes = [32, 1], strides = [1, 1]} : vector<32x49xf32> to vector<32x1xf32>
    %cst_195 = arith.constant 0.000000e+00 : f32
    %995 = vector.shape_cast %993 : vector<1x256xi1> to vector<1x256xi1>
    %996 = vector.broadcast %995 : vector<1x256xi1> to vector<32x256xi1>
    %997 = vector.broadcast %cst_195 : f32 to vector<32x256xf32>
    %998 = arith.select %996, %622, %997 : vector<32x256xi1>, vector<32x256xf32>
    %999 = vector.broadcast %994 : vector<32x1xf32> to vector<32x256xf32>
    %1000 = arith.mulf %998, %999 : vector<32x256xf32>
    %1001 = arith.addf %992, %1000 : vector<32x256xf32>
    %c253_i32_196 = arith.constant 253 : i32
    %1002 = tpu.dynamic_rotate %622 by %c253_i32_196 dim 1 : vector<32x256xf32>, i32 -> vector<32x256xf32>
    %1003 = arith.andi %687, %714 : vector<1x256xi1>
    %1004 = vector.extract_strided_slice %623 {offsets = [0, 25], sizes = [32, 1], strides = [1, 1]} : vector<32x49xf32> to vector<32x1xf32>
    %cst_197 = arith.constant 0.000000e+00 : f32
    %1005 = vector.shape_cast %1003 : vector<1x256xi1> to vector<1x256xi1>
    %1006 = vector.broadcast %1005 : vector<1x256xi1> to vector<32x256xi1>
    %1007 = vector.broadcast %cst_197 : f32 to vector<32x256xf32>
    %1008 = arith.select %1006, %1002, %1007 : vector<32x256xi1>, vector<32x256xf32>
    %1009 = vector.broadcast %1004 : vector<32x1xf32> to vector<32x256xf32>
    %1010 = arith.mulf %1008, %1009 : vector<32x256xf32>
    %1011 = arith.addf %1001, %1010 : vector<32x256xf32>
    %c250_i32 = arith.constant 250 : i32
    %1012 = tpu.dynamic_rotate %622 by %c250_i32 dim 1 : vector<32x256xf32>, i32 -> vector<32x256xf32>
    %1013 = arith.andi %687, %732 : vector<1x256xi1>
    %1014 = vector.extract_strided_slice %623 {offsets = [0, 26], sizes = [32, 1], strides = [1, 1]} : vector<32x49xf32> to vector<32x1xf32>
    %cst_198 = arith.constant 0.000000e+00 : f32
    %1015 = vector.shape_cast %1013 : vector<1x256xi1> to vector<1x256xi1>
    %1016 = vector.broadcast %1015 : vector<1x256xi1> to vector<32x256xi1>
    %1017 = vector.broadcast %cst_198 : f32 to vector<32x256xf32>
    %1018 = arith.select %1016, %1012, %1017 : vector<32x256xi1>, vector<32x256xf32>
    %1019 = vector.broadcast %1014 : vector<32x1xf32> to vector<32x256xf32>
    %1020 = arith.mulf %1018, %1019 : vector<32x256xf32>
    %1021 = arith.addf %1011, %1020 : vector<32x256xf32>
    %c247_i32 = arith.constant 247 : i32
    %1022 = tpu.dynamic_rotate %622 by %c247_i32 dim 1 : vector<32x256xf32>, i32 -> vector<32x256xf32>
    %1023 = arith.andi %687, %750 : vector<1x256xi1>
    %1024 = vector.extract_strided_slice %623 {offsets = [0, 27], sizes = [32, 1], strides = [1, 1]} : vector<32x49xf32> to vector<32x1xf32>
    %cst_199 = arith.constant 0.000000e+00 : f32
    %1025 = vector.shape_cast %1023 : vector<1x256xi1> to vector<1x256xi1>
    %1026 = vector.broadcast %1025 : vector<1x256xi1> to vector<32x256xi1>
    %1027 = vector.broadcast %cst_199 : f32 to vector<32x256xf32>
    %1028 = arith.select %1026, %1022, %1027 : vector<32x256xi1>, vector<32x256xf32>
    %1029 = vector.broadcast %1024 : vector<32x1xf32> to vector<32x256xf32>
    %1030 = arith.mulf %1028, %1029 : vector<32x256xf32>
    %1031 = arith.addf %1021, %1030 : vector<32x256xf32>
    %c217_i32 = arith.constant 217 : i32
    %1032 = tpu.dynamic_rotate %622 by %c217_i32 dim 1 : vector<32x256xf32>, i32 -> vector<32x256xf32>
    %1033 = arith.andi %705, %642 : vector<1x256xi1>
    %1034 = vector.extract_strided_slice %623 {offsets = [0, 28], sizes = [32, 1], strides = [1, 1]} : vector<32x49xf32> to vector<32x1xf32>
    %cst_200 = arith.constant 0.000000e+00 : f32
    %1035 = vector.shape_cast %1033 : vector<1x256xi1> to vector<1x256xi1>
    %1036 = vector.broadcast %1035 : vector<1x256xi1> to vector<32x256xi1>
    %1037 = vector.broadcast %cst_200 : f32 to vector<32x256xf32>
    %1038 = arith.select %1036, %1032, %1037 : vector<32x256xi1>, vector<32x256xf32>
    %1039 = vector.broadcast %1034 : vector<32x1xf32> to vector<32x256xf32>
    %1040 = arith.mulf %1038, %1039 : vector<32x256xf32>
    %1041 = arith.addf %1031, %1040 : vector<32x256xf32>
    %c214_i32 = arith.constant 214 : i32
    %1042 = tpu.dynamic_rotate %622 by %c214_i32 dim 1 : vector<32x256xf32>, i32 -> vector<32x256xf32>
    %1043 = arith.andi %705, %660 : vector<1x256xi1>
    %1044 = vector.extract_strided_slice %623 {offsets = [0, 29], sizes = [32, 1], strides = [1, 1]} : vector<32x49xf32> to vector<32x1xf32>
    %cst_201 = arith.constant 0.000000e+00 : f32
    %1045 = vector.shape_cast %1043 : vector<1x256xi1> to vector<1x256xi1>
    %1046 = vector.broadcast %1045 : vector<1x256xi1> to vector<32x256xi1>
    %1047 = vector.broadcast %cst_201 : f32 to vector<32x256xf32>
    %1048 = arith.select %1046, %1042, %1047 : vector<32x256xi1>, vector<32x256xf32>
    %1049 = vector.broadcast %1044 : vector<32x1xf32> to vector<32x256xf32>
    %1050 = arith.mulf %1048, %1049 : vector<32x256xf32>
    %1051 = arith.addf %1041, %1050 : vector<32x256xf32>
    %c211_i32_202 = arith.constant 211 : i32
    %1052 = tpu.dynamic_rotate %622 by %c211_i32_202 dim 1 : vector<32x256xf32>, i32 -> vector<32x256xf32>
    %1053 = arith.andi %705, %678 : vector<1x256xi1>
    %1054 = vector.extract_strided_slice %623 {offsets = [0, 30], sizes = [32, 1], strides = [1, 1]} : vector<32x49xf32> to vector<32x1xf32>
    %cst_203 = arith.constant 0.000000e+00 : f32
    %1055 = vector.shape_cast %1053 : vector<1x256xi1> to vector<1x256xi1>
    %1056 = vector.broadcast %1055 : vector<1x256xi1> to vector<32x256xi1>
    %1057 = vector.broadcast %cst_203 : f32 to vector<32x256xf32>
    %1058 = arith.select %1056, %1052, %1057 : vector<32x256xi1>, vector<32x256xf32>
    %1059 = vector.broadcast %1054 : vector<32x1xf32> to vector<32x256xf32>
    %1060 = arith.mulf %1058, %1059 : vector<32x256xf32>
    %1061 = arith.addf %1051, %1060 : vector<32x256xf32>
    %c208_i32_204 = arith.constant 208 : i32
    %1062 = tpu.dynamic_rotate %622 by %c208_i32_204 dim 1 : vector<32x256xf32>, i32 -> vector<32x256xf32>
    %1063 = arith.andi %705, %696 : vector<1x256xi1>
    %1064 = vector.extract_strided_slice %623 {offsets = [0, 31], sizes = [32, 1], strides = [1, 1]} : vector<32x49xf32> to vector<32x1xf32>
    %cst_205 = arith.constant 0.000000e+00 : f32
    %1065 = vector.shape_cast %1063 : vector<1x256xi1> to vector<1x256xi1>
    %1066 = vector.broadcast %1065 : vector<1x256xi1> to vector<32x256xi1>
    %1067 = vector.broadcast %cst_205 : f32 to vector<32x256xf32>
    %1068 = arith.select %1066, %1062, %1067 : vector<32x256xi1>, vector<32x256xf32>
    %1069 = vector.broadcast %1064 : vector<32x1xf32> to vector<32x256xf32>
    %1070 = arith.mulf %1068, %1069 : vector<32x256xf32>
    %1071 = arith.addf %1061, %1070 : vector<32x256xf32>
    %c205_i32_206 = arith.constant 205 : i32
    %1072 = tpu.dynamic_rotate %622 by %c205_i32_206 dim 1 : vector<32x256xf32>, i32 -> vector<32x256xf32>
    %1073 = arith.andi %705, %714 : vector<1x256xi1>
    %1074 = vector.extract_strided_slice %623 {offsets = [0, 32], sizes = [32, 1], strides = [1, 1]} : vector<32x49xf32> to vector<32x1xf32>
    %cst_207 = arith.constant 0.000000e+00 : f32
    %1075 = vector.shape_cast %1073 : vector<1x256xi1> to vector<1x256xi1>
    %1076 = vector.broadcast %1075 : vector<1x256xi1> to vector<32x256xi1>
    %1077 = vector.broadcast %cst_207 : f32 to vector<32x256xf32>
    %1078 = arith.select %1076, %1072, %1077 : vector<32x256xi1>, vector<32x256xf32>
    %1079 = vector.broadcast %1074 : vector<32x1xf32> to vector<32x256xf32>
    %1080 = arith.mulf %1078, %1079 : vector<32x256xf32>
    %1081 = arith.addf %1071, %1080 : vector<32x256xf32>
    %c202_i32 = arith.constant 202 : i32
    %1082 = tpu.dynamic_rotate %622 by %c202_i32 dim 1 : vector<32x256xf32>, i32 -> vector<32x256xf32>
    %1083 = arith.andi %705, %732 : vector<1x256xi1>
    %1084 = vector.extract_strided_slice %623 {offsets = [0, 33], sizes = [32, 1], strides = [1, 1]} : vector<32x49xf32> to vector<32x1xf32>
    %cst_208 = arith.constant 0.000000e+00 : f32
    %1085 = vector.shape_cast %1083 : vector<1x256xi1> to vector<1x256xi1>
    %1086 = vector.broadcast %1085 : vector<1x256xi1> to vector<32x256xi1>
    %1087 = vector.broadcast %cst_208 : f32 to vector<32x256xf32>
    %1088 = arith.select %1086, %1082, %1087 : vector<32x256xi1>, vector<32x256xf32>
    %1089 = vector.broadcast %1084 : vector<32x1xf32> to vector<32x256xf32>
    %1090 = arith.mulf %1088, %1089 : vector<32x256xf32>
    %1091 = arith.addf %1081, %1090 : vector<32x256xf32>
    %c199_i32 = arith.constant 199 : i32
    %1092 = tpu.dynamic_rotate %622 by %c199_i32 dim 1 : vector<32x256xf32>, i32 -> vector<32x256xf32>
    %1093 = arith.andi %705, %750 : vector<1x256xi1>
    %1094 = vector.extract_strided_slice %623 {offsets = [0, 34], sizes = [32, 1], strides = [1, 1]} : vector<32x49xf32> to vector<32x1xf32>
    %cst_209 = arith.constant 0.000000e+00 : f32
    %1095 = vector.shape_cast %1093 : vector<1x256xi1> to vector<1x256xi1>
    %1096 = vector.broadcast %1095 : vector<1x256xi1> to vector<32x256xi1>
    %1097 = vector.broadcast %cst_209 : f32 to vector<32x256xf32>
    %1098 = arith.select %1096, %1092, %1097 : vector<32x256xi1>, vector<32x256xf32>
    %1099 = vector.broadcast %1094 : vector<32x1xf32> to vector<32x256xf32>
    %1100 = arith.mulf %1098, %1099 : vector<32x256xf32>
    %1101 = arith.addf %1091, %1100 : vector<32x256xf32>
    %c169_i32 = arith.constant 169 : i32
    %1102 = tpu.dynamic_rotate %622 by %c169_i32 dim 1 : vector<32x256xf32>, i32 -> vector<32x256xf32>
    %1103 = arith.andi %723, %642 : vector<1x256xi1>
    %1104 = vector.extract_strided_slice %623 {offsets = [0, 35], sizes = [32, 1], strides = [1, 1]} : vector<32x49xf32> to vector<32x1xf32>
    %cst_210 = arith.constant 0.000000e+00 : f32
    %1105 = vector.shape_cast %1103 : vector<1x256xi1> to vector<1x256xi1>
    %1106 = vector.broadcast %1105 : vector<1x256xi1> to vector<32x256xi1>
    %1107 = vector.broadcast %cst_210 : f32 to vector<32x256xf32>
    %1108 = arith.select %1106, %1102, %1107 : vector<32x256xi1>, vector<32x256xf32>
    %1109 = vector.broadcast %1104 : vector<32x1xf32> to vector<32x256xf32>
    %1110 = arith.mulf %1108, %1109 : vector<32x256xf32>
    %1111 = arith.addf %1101, %1110 : vector<32x256xf32>
    %c166_i32 = arith.constant 166 : i32
    %1112 = tpu.dynamic_rotate %622 by %c166_i32 dim 1 : vector<32x256xf32>, i32 -> vector<32x256xf32>
    %1113 = arith.andi %723, %660 : vector<1x256xi1>
    %1114 = vector.extract_strided_slice %623 {offsets = [0, 36], sizes = [32, 1], strides = [1, 1]} : vector<32x49xf32> to vector<32x1xf32>
    %cst_211 = arith.constant 0.000000e+00 : f32
    %1115 = vector.shape_cast %1113 : vector<1x256xi1> to vector<1x256xi1>
    %1116 = vector.broadcast %1115 : vector<1x256xi1> to vector<32x256xi1>
    %1117 = vector.broadcast %cst_211 : f32 to vector<32x256xf32>
    %1118 = arith.select %1116, %1112, %1117 : vector<32x256xi1>, vector<32x256xf32>
    %1119 = vector.broadcast %1114 : vector<32x1xf32> to vector<32x256xf32>
    %1120 = arith.mulf %1118, %1119 : vector<32x256xf32>
    %1121 = arith.addf %1111, %1120 : vector<32x256xf32>
    %c163_i32 = arith.constant 163 : i32
    %1122 = tpu.dynamic_rotate %622 by %c163_i32 dim 1 : vector<32x256xf32>, i32 -> vector<32x256xf32>
    %1123 = arith.andi %723, %678 : vector<1x256xi1>
    %1124 = vector.extract_strided_slice %623 {offsets = [0, 37], sizes = [32, 1], strides = [1, 1]} : vector<32x49xf32> to vector<32x1xf32>
    %cst_212 = arith.constant 0.000000e+00 : f32
    %1125 = vector.shape_cast %1123 : vector<1x256xi1> to vector<1x256xi1>
    %1126 = vector.broadcast %1125 : vector<1x256xi1> to vector<32x256xi1>
    %1127 = vector.broadcast %cst_212 : f32 to vector<32x256xf32>
    %1128 = arith.select %1126, %1122, %1127 : vector<32x256xi1>, vector<32x256xf32>
    %1129 = vector.broadcast %1124 : vector<32x1xf32> to vector<32x256xf32>
    %1130 = arith.mulf %1128, %1129 : vector<32x256xf32>
    %1131 = arith.addf %1121, %1130 : vector<32x256xf32>
    %c160_i32 = arith.constant 160 : i32
    %1132 = tpu.dynamic_rotate %622 by %c160_i32 dim 1 : vector<32x256xf32>, i32 -> vector<32x256xf32>
    %1133 = arith.andi %723, %696 : vector<1x256xi1>
    %1134 = vector.extract_strided_slice %623 {offsets = [0, 38], sizes = [32, 1], strides = [1, 1]} : vector<32x49xf32> to vector<32x1xf32>
    %cst_213 = arith.constant 0.000000e+00 : f32
    %1135 = vector.shape_cast %1133 : vector<1x256xi1> to vector<1x256xi1>
    %1136 = vector.broadcast %1135 : vector<1x256xi1> to vector<32x256xi1>
    %1137 = vector.broadcast %cst_213 : f32 to vector<32x256xf32>
    %1138 = arith.select %1136, %1132, %1137 : vector<32x256xi1>, vector<32x256xf32>
    %1139 = vector.broadcast %1134 : vector<32x1xf32> to vector<32x256xf32>
    %1140 = arith.mulf %1138, %1139 : vector<32x256xf32>
    %1141 = arith.addf %1131, %1140 : vector<32x256xf32>
    %c157_i32 = arith.constant 157 : i32
    %1142 = tpu.dynamic_rotate %622 by %c157_i32 dim 1 : vector<32x256xf32>, i32 -> vector<32x256xf32>
    %1143 = arith.andi %723, %714 : vector<1x256xi1>
    %1144 = vector.extract_strided_slice %623 {offsets = [0, 39], sizes = [32, 1], strides = [1, 1]} : vector<32x49xf32> to vector<32x1xf32>
    %cst_214 = arith.constant 0.000000e+00 : f32
    %1145 = vector.shape_cast %1143 : vector<1x256xi1> to vector<1x256xi1>
    %1146 = vector.broadcast %1145 : vector<1x256xi1> to vector<32x256xi1>
    %1147 = vector.broadcast %cst_214 : f32 to vector<32x256xf32>
    %1148 = arith.select %1146, %1142, %1147 : vector<32x256xi1>, vector<32x256xf32>
    %1149 = vector.broadcast %1144 : vector<32x1xf32> to vector<32x256xf32>
    %1150 = arith.mulf %1148, %1149 : vector<32x256xf32>
    %1151 = arith.addf %1141, %1150 : vector<32x256xf32>
    %c154_i32 = arith.constant 154 : i32
    %1152 = tpu.dynamic_rotate %622 by %c154_i32 dim 1 : vector<32x256xf32>, i32 -> vector<32x256xf32>
    %1153 = arith.andi %723, %732 : vector<1x256xi1>
    %1154 = vector.extract_strided_slice %623 {offsets = [0, 40], sizes = [32, 1], strides = [1, 1]} : vector<32x49xf32> to vector<32x1xf32>
    %cst_215 = arith.constant 0.000000e+00 : f32
    %1155 = vector.shape_cast %1153 : vector<1x256xi1> to vector<1x256xi1>
    %1156 = vector.broadcast %1155 : vector<1x256xi1> to vector<32x256xi1>
    %1157 = vector.broadcast %cst_215 : f32 to vector<32x256xf32>
    %1158 = arith.select %1156, %1152, %1157 : vector<32x256xi1>, vector<32x256xf32>
    %1159 = vector.broadcast %1154 : vector<32x1xf32> to vector<32x256xf32>
    %1160 = arith.mulf %1158, %1159 : vector<32x256xf32>
    %1161 = arith.addf %1151, %1160 : vector<32x256xf32>
    %c151_i32 = arith.constant 151 : i32
    %1162 = tpu.dynamic_rotate %622 by %c151_i32 dim 1 : vector<32x256xf32>, i32 -> vector<32x256xf32>
    %1163 = arith.andi %723, %750 : vector<1x256xi1>
    %1164 = vector.extract_strided_slice %623 {offsets = [0, 41], sizes = [32, 1], strides = [1, 1]} : vector<32x49xf32> to vector<32x1xf32>
    %cst_216 = arith.constant 0.000000e+00 : f32
    %1165 = vector.shape_cast %1163 : vector<1x256xi1> to vector<1x256xi1>
    %1166 = vector.broadcast %1165 : vector<1x256xi1> to vector<32x256xi1>
    %1167 = vector.broadcast %cst_216 : f32 to vector<32x256xf32>
    %1168 = arith.select %1166, %1162, %1167 : vector<32x256xi1>, vector<32x256xf32>
    %1169 = vector.broadcast %1164 : vector<32x1xf32> to vector<32x256xf32>
    %1170 = arith.mulf %1168, %1169 : vector<32x256xf32>
    %1171 = arith.addf %1161, %1170 : vector<32x256xf32>
    %c121_i32 = arith.constant 121 : i32
    %1172 = tpu.dynamic_rotate %622 by %c121_i32 dim 1 : vector<32x256xf32>, i32 -> vector<32x256xf32>
    %1173 = arith.andi %741, %642 : vector<1x256xi1>
    %1174 = vector.extract_strided_slice %623 {offsets = [0, 42], sizes = [32, 1], strides = [1, 1]} : vector<32x49xf32> to vector<32x1xf32>
    %cst_217 = arith.constant 0.000000e+00 : f32
    %1175 = vector.shape_cast %1173 : vector<1x256xi1> to vector<1x256xi1>
    %1176 = vector.broadcast %1175 : vector<1x256xi1> to vector<32x256xi1>
    %1177 = vector.broadcast %cst_217 : f32 to vector<32x256xf32>
    %1178 = arith.select %1176, %1172, %1177 : vector<32x256xi1>, vector<32x256xf32>
    %1179 = vector.broadcast %1174 : vector<32x1xf32> to vector<32x256xf32>
    %1180 = arith.mulf %1178, %1179 : vector<32x256xf32>
    %1181 = arith.addf %1171, %1180 : vector<32x256xf32>
    %c118_i32 = arith.constant 118 : i32
    %1182 = tpu.dynamic_rotate %622 by %c118_i32 dim 1 : vector<32x256xf32>, i32 -> vector<32x256xf32>
    %1183 = arith.andi %741, %660 : vector<1x256xi1>
    %1184 = vector.extract_strided_slice %623 {offsets = [0, 43], sizes = [32, 1], strides = [1, 1]} : vector<32x49xf32> to vector<32x1xf32>
    %cst_218 = arith.constant 0.000000e+00 : f32
    %1185 = vector.shape_cast %1183 : vector<1x256xi1> to vector<1x256xi1>
    %1186 = vector.broadcast %1185 : vector<1x256xi1> to vector<32x256xi1>
    %1187 = vector.broadcast %cst_218 : f32 to vector<32x256xf32>
    %1188 = arith.select %1186, %1182, %1187 : vector<32x256xi1>, vector<32x256xf32>
    %1189 = vector.broadcast %1184 : vector<32x1xf32> to vector<32x256xf32>
    %1190 = arith.mulf %1188, %1189 : vector<32x256xf32>
    %1191 = arith.addf %1181, %1190 : vector<32x256xf32>
    %c115_i32 = arith.constant 115 : i32
    %1192 = tpu.dynamic_rotate %622 by %c115_i32 dim 1 : vector<32x256xf32>, i32 -> vector<32x256xf32>
    %1193 = arith.andi %741, %678 : vector<1x256xi1>
    %1194 = vector.extract_strided_slice %623 {offsets = [0, 44], sizes = [32, 1], strides = [1, 1]} : vector<32x49xf32> to vector<32x1xf32>
    %cst_219 = arith.constant 0.000000e+00 : f32
    %1195 = vector.shape_cast %1193 : vector<1x256xi1> to vector<1x256xi1>
    %1196 = vector.broadcast %1195 : vector<1x256xi1> to vector<32x256xi1>
    %1197 = vector.broadcast %cst_219 : f32 to vector<32x256xf32>
    %1198 = arith.select %1196, %1192, %1197 : vector<32x256xi1>, vector<32x256xf32>
    %1199 = vector.broadcast %1194 : vector<32x1xf32> to vector<32x256xf32>
    %1200 = arith.mulf %1198, %1199 : vector<32x256xf32>
    %1201 = arith.addf %1191, %1200 : vector<32x256xf32>
    %c112_i32 = arith.constant 112 : i32
    %1202 = tpu.dynamic_rotate %622 by %c112_i32 dim 1 : vector<32x256xf32>, i32 -> vector<32x256xf32>
    %1203 = arith.andi %741, %696 : vector<1x256xi1>
    %1204 = vector.extract_strided_slice %623 {offsets = [0, 45], sizes = [32, 1], strides = [1, 1]} : vector<32x49xf32> to vector<32x1xf32>
    %cst_220 = arith.constant 0.000000e+00 : f32
    %1205 = vector.shape_cast %1203 : vector<1x256xi1> to vector<1x256xi1>
    %1206 = vector.broadcast %1205 : vector<1x256xi1> to vector<32x256xi1>
    %1207 = vector.broadcast %cst_220 : f32 to vector<32x256xf32>
    %1208 = arith.select %1206, %1202, %1207 : vector<32x256xi1>, vector<32x256xf32>
    %1209 = vector.broadcast %1204 : vector<32x1xf32> to vector<32x256xf32>
    %1210 = arith.mulf %1208, %1209 : vector<32x256xf32>
    %1211 = arith.addf %1201, %1210 : vector<32x256xf32>
    %c109_i32 = arith.constant 109 : i32
    %1212 = tpu.dynamic_rotate %622 by %c109_i32 dim 1 : vector<32x256xf32>, i32 -> vector<32x256xf32>
    %1213 = arith.andi %741, %714 : vector<1x256xi1>
    %1214 = vector.extract_strided_slice %623 {offsets = [0, 46], sizes = [32, 1], strides = [1, 1]} : vector<32x49xf32> to vector<32x1xf32>
    %cst_221 = arith.constant 0.000000e+00 : f32
    %1215 = vector.shape_cast %1213 : vector<1x256xi1> to vector<1x256xi1>
    %1216 = vector.broadcast %1215 : vector<1x256xi1> to vector<32x256xi1>
    %1217 = vector.broadcast %cst_221 : f32 to vector<32x256xf32>
    %1218 = arith.select %1216, %1212, %1217 : vector<32x256xi1>, vector<32x256xf32>
    %1219 = vector.broadcast %1214 : vector<32x1xf32> to vector<32x256xf32>
    %1220 = arith.mulf %1218, %1219 : vector<32x256xf32>
    %1221 = arith.addf %1211, %1220 : vector<32x256xf32>
    %c106_i32 = arith.constant 106 : i32
    %1222 = tpu.dynamic_rotate %622 by %c106_i32 dim 1 : vector<32x256xf32>, i32 -> vector<32x256xf32>
    %1223 = arith.andi %741, %732 : vector<1x256xi1>
    %1224 = vector.extract_strided_slice %623 {offsets = [0, 47], sizes = [32, 1], strides = [1, 1]} : vector<32x49xf32> to vector<32x1xf32>
    %cst_222 = arith.constant 0.000000e+00 : f32
    %1225 = vector.shape_cast %1223 : vector<1x256xi1> to vector<1x256xi1>
    %1226 = vector.broadcast %1225 : vector<1x256xi1> to vector<32x256xi1>
    %1227 = vector.broadcast %cst_222 : f32 to vector<32x256xf32>
    %1228 = arith.select %1226, %1222, %1227 : vector<32x256xi1>, vector<32x256xf32>
    %1229 = vector.broadcast %1224 : vector<32x1xf32> to vector<32x256xf32>
    %1230 = arith.mulf %1228, %1229 : vector<32x256xf32>
    %1231 = arith.addf %1221, %1230 : vector<32x256xf32>
    %c103_i32 = arith.constant 103 : i32
    %1232 = tpu.dynamic_rotate %622 by %c103_i32 dim 1 : vector<32x256xf32>, i32 -> vector<32x256xf32>
    %1233 = arith.andi %741, %750 : vector<1x256xi1>
    %1234 = vector.extract_strided_slice %623 {offsets = [0, 48], sizes = [32, 1], strides = [1, 1]} : vector<32x49xf32> to vector<32x1xf32>
    %cst_223 = arith.constant 0.000000e+00 : f32
    %1235 = vector.shape_cast %1233 : vector<1x256xi1> to vector<1x256xi1>
    %1236 = vector.broadcast %1235 : vector<1x256xi1> to vector<32x256xi1>
    %1237 = vector.broadcast %cst_223 : f32 to vector<32x256xf32>
    %1238 = arith.select %1236, %1232, %1237 : vector<32x256xi1>, vector<32x256xf32>
    %1239 = vector.broadcast %1234 : vector<32x1xf32> to vector<32x256xf32>
    %1240 = arith.mulf %1238, %1239 : vector<32x256xf32>
    %1241 = arith.addf %1231, %1240 : vector<32x256xf32>
    %cst_224 = arith.constant dense<0.000000e+00> : vector<256xf32>
    %1242 = vector.multi_reduction <add>, %1241, %cst_224 [0] : vector<32x256xf32> to vector<256xf32>
    %1243 = vector.shape_cast %1242 : vector<256xf32> to vector<1x256xf32>
    %cst_225 = arith.constant 3.200000e+01 : f32
    %1244 = vector.broadcast %cst_225 : f32 to vector<1x256xf32>
    %1245 = arith.divf %1243, %1244 : vector<1x256xf32>
    %1246 = vector.broadcast %1245 : vector<1x256xf32> to vector<32x256xf32>
    %1247 = arith.subf %1241, %1246 : vector<32x256xf32>
    %1248 = arith.mulf %1247, %1247 : vector<32x256xf32>
    %cst_226 = arith.constant dense<0.000000e+00> : vector<256xf32>
    %1249 = vector.multi_reduction <add>, %1248, %cst_226 [0] : vector<32x256xf32> to vector<256xf32>
    %1250 = vector.shape_cast %1249 : vector<256xf32> to vector<1x256xf32>
    %cst_227 = arith.constant 3.200000e+01 : f32
    %1251 = vector.broadcast %cst_227 : f32 to vector<1x256xf32>
    %1252 = arith.divf %1250, %1251 : vector<1x256xf32>
    %cst_228 = arith.constant 9.99999997E-7 : f32
    %1253 = vector.broadcast %cst_228 : f32 to vector<1x256xf32>
    %1254 = arith.addf %1252, %1253 : vector<1x256xf32>
    %1255 = math.rsqrt %1254 : vector<1x256xf32>
    %1256 = vector.broadcast %1255 : vector<1x256xf32> to vector<32x256xf32>
    %1257 = arith.mulf %1247, %1256 : vector<32x256xf32>
    %c0_229 = arith.constant 0 : index
    %c0_230 = arith.constant 0 : index
    %1258 = vector.load %arg6[%c0_229, %c0_230] : memref<32x1xf32, #tpu.memory_space<vmem>>, vector<32x1xf32>
    %1259 = vector.broadcast %1258 : vector<32x1xf32> to vector<32x256xf32>
    %1260 = arith.mulf %1257, %1259 : vector<32x256xf32>
    %c0_231 = arith.constant 0 : index
    %c0_232 = arith.constant 0 : index
    %1261 = vector.load %arg7[%c0_231, %c0_232] : memref<32x1xf32, #tpu.memory_space<vmem>>, vector<32x1xf32>
    %1262 = vector.broadcast %1261 : vector<32x1xf32> to vector<32x256xf32>
    %1263 = arith.addf %1260, %1262 : vector<32x256xf32>
    %c0_233 = arith.constant 0 : index
    %c0_234 = arith.constant 0 : index
    %1264 = vector.load %arg8[%c0_233, %c0_234] : memref<128x32xf32, #tpu.memory_space<vmem>>, vector<128x32xf32>
    %cst_235 = arith.constant dense<0.000000e+00> : vector<128x256xf32>
    %1265 = tpu.matmul %1264, %1263, %cst_235 {dimension_numbers = #tpu.dot_dimension_numbers<[1], [0], [0], [1], [0, 0, 1, 1], [], []>} : vector<128x32xf32>, vector<32x256xf32>, vector<128x256xf32> -> vector<128x256xf32>
    %c0_236 = arith.constant 0 : index
    %c0_237 = arith.constant 0 : index
    %1266 = vector.load %arg9[%c0_236, %c0_237] : memref<128x1xf32, #tpu.memory_space<vmem>>, vector<128x1xf32>
    %1267 = vector.broadcast %1266 : vector<128x1xf32> to vector<128x256xf32>
    %1268 = arith.addf %1265, %1267 : vector<128x256xf32>
    %cst_238 = arith.constant 5.000000e-01 : f32
    %1269 = vector.broadcast %cst_238 : f32 to vector<128x256xf32>
    %1270 = arith.mulf %1269, %1268 : vector<128x256xf32>
    %cst_239 = arith.constant 0.707106769 : f32
    %1271 = vector.broadcast %cst_239 : f32 to vector<128x256xf32>
    %1272 = arith.mulf %1268, %1271 : vector<128x256xf32>
    %1273 = math.erf %1272 : vector<128x256xf32>
    %cst_240 = arith.constant 1.000000e+00 : f32
    %1274 = vector.broadcast %cst_240 : f32 to vector<128x256xf32>
    %1275 = arith.addf %1274, %1273 : vector<128x256xf32>
    %1276 = arith.mulf %1270, %1275 : vector<128x256xf32>
    %c0_241 = arith.constant 0 : index
    %c0_242 = arith.constant 0 : index
    %1277 = vector.load %arg10[%c0_241, %c0_242] : memref<32x128xf32, #tpu.memory_space<vmem>>, vector<32x128xf32>
    %cst_243 = arith.constant dense<0.000000e+00> : vector<32x256xf32>
    %1278 = tpu.matmul %1277, %1276, %cst_243 {dimension_numbers = #tpu.dot_dimension_numbers<[1], [0], [0], [1], [0, 0, 1, 1], [], []>} : vector<32x128xf32>, vector<128x256xf32>, vector<32x256xf32> -> vector<32x256xf32>
    %c0_244 = arith.constant 0 : index
    %c0_245 = arith.constant 0 : index
    %1279 = vector.load %arg11[%c0_244, %c0_245] : memref<32x1xf32, #tpu.memory_space<vmem>>, vector<32x1xf32>
    %1280 = vector.broadcast %1279 : vector<32x1xf32> to vector<32x256xf32>
    %1281 = arith.addf %1278, %1280 : vector<32x256xf32>
    %1282 = arith.addf %1, %1281 : vector<32x256xf32>
    %c0_246 = arith.constant 0 : index
    %c0_247 = arith.constant 0 : index
    %c0_248 = arith.constant 0 : index
    %1283 = vector.load %arg13[%c0_246, %c0_247, %c0_248] : memref<1x32x256xf32, #tpu.memory_space<vmem>>, vector<1x32x256xf32>
    %1284 = vector.shape_cast %1283 : vector<1x32x256xf32> to vector<32x256xf32>
    %1285 = vector.shape_cast %1282 : vector<32x256xf32> to vector<1x32x256xf32>
    tpu.vector_store %arg13[%c0_246, %c0_247, %c0_248], %1285 {strides = array<i32>} : memref<1x32x256xf32, #tpu.memory_space<vmem>>, vector<1x32x256xf32>,
    return
  }
  func.func @transform_0(%arg0: i32) -> (i32, i32, i32) {
    %c0_i32 = arith.constant 0 : i32
    %c0_i32_0 = arith.constant 0 : i32
    %c0_i32_1 = arith.constant 0 : i32
    return %arg0, %c0_i32, %c0_i32_0 : i32, i32, i32
  }
  func.func @transform_1(%arg0: i32) -> (i32, i32) {
    %c0_i32 = arith.constant 0 : i32
    %c0_i32_0 = arith.constant 0 : i32
    %c0_i32_1 = arith.constant 0 : i32
    return %c0_i32, %c0_i32_0 : i32, i32
  }
  func.func @transform_2(%arg0: i32) -> (i32, i32) {
    %c0_i32 = arith.constant 0 : i32
    %c0_i32_0 = arith.constant 0 : i32
    %c0_i32_1 = arith.constant 0 : i32
    return %c0_i32, %c0_i32_0 : i32, i32
  }
  func.func @transform_3(%arg0: i32) -> (i32, i32) {
    %c0_i32 = arith.constant 0 : i32
    %c0_i32_0 = arith.constant 0 : i32
    %c0_i32_1 = arith.constant 0 : i32
    return %c0_i32, %c0_i32_0 : i32, i32
  }
  func.func @transform_4(%arg0: i32) -> (i32, i32) {
    %c0_i32 = arith.constant 0 : i32
    %c0_i32_0 = arith.constant 0 : i32
    %c0_i32_1 = arith.constant 0 : i32
    return %c0_i32, %c0_i32_0 : i32, i32
  }
  func.func @transform_5(%arg0: i32) -> (i32, i32) {
    %c0_i32 = arith.constant 0 : i32
    %c0_i32_0 = arith.constant 0 : i32
    %c0_i32_1 = arith.constant 0 : i32
    return %c0_i32, %c0_i32_0 : i32, i32
  }
  func.func @transform_6(%arg0: i32) -> (i32, i32) {
    %c0_i32 = arith.constant 0 : i32
    %c0_i32_0 = arith.constant 0 : i32
    %c0_i32_1 = arith.constant 0 : i32
    return %c0_i32, %c0_i32_0 : i32, i32
  }
  func.func @transform_7(%arg0: i32) -> (i32, i32) {
    %c0_i32 = arith.constant 0 : i32
    %c0_i32_0 = arith.constant 0 : i32
    %c0_i32_1 = arith.constant 0 : i32
    return %c0_i32, %c0_i32_0 : i32, i32
  }
  func.func @transform_8(%arg0: i32) -> (i32, i32) {
    %c0_i32 = arith.constant 0 : i32
    %c0_i32_0 = arith.constant 0 : i32
    %c0_i32_1 = arith.constant 0 : i32
    return %c0_i32, %c0_i32_0 : i32, i32
  }
  func.func @transform_9(%arg0: i32) -> (i32, i32) {
    %c0_i32 = arith.constant 0 : i32
    %c0_i32_0 = arith.constant 0 : i32
    %c0_i32_1 = arith.constant 0 : i32
    return %c0_i32, %c0_i32_0 : i32, i32
  }
  func.func @transform_10(%arg0: i32) -> (i32, i32) {
    %c0_i32 = arith.constant 0 : i32
    %c0_i32_0 = arith.constant 0 : i32
    %c0_i32_1 = arith.constant 0 : i32
    return %c0_i32, %c0_i32_0 : i32, i32
  }
  func.func @transform_11(%arg0: i32) -> (i32, i32) {
    %c0_i32 = arith.constant 0 : i32
    %c0_i32_0 = arith.constant 0 : i32
    %c0_i32_1 = arith.constant 0 : i32
    return %c0_i32, %c0_i32_0 : i32, i32
  }
  func.func @transform_12(%arg0: i32) -> (i32, i32, i32) {
    %c0_i32 = arith.constant 0 : i32
    %c0_i32_0 = arith.constant 0 : i32
    %c0_i32_1 = arith.constant 0 : i32
    return %arg0, %c0_i32, %c0_i32_0 : i32, i32, i32
  }
}

</mosaic_0001>

<llo_original>
// kernel: tpu_custom_call.1
$region0: #{tpu_custom_call.1}
  #allocation0 [shape = 'u32[]', space=smem, size = 0x4, offset = 0x4, fixed_abs, tag = 'smem constant byte address 0x4 - core index']
  #allocation1 [shape = 'u32[144,128]{1,0:T(1,128)}', space=vmem, size = 0x12000, scoped, tag = 'internal scratch']
  %s0 = inlined_call_operand.vmem [shape: f32[2,32,256], index: 0, kind: input, shape index: {}]
  %s1 = inlined_call_operand.vmem [shape: f32[32,49], index: 1, kind: input, shape index: {}]
  %s2 = inlined_call_operand.vmem [shape: f32[32,1], index: 2, kind: input, shape index: {}]
  %s3 = inlined_call_operand.vmem [shape: f32[32,49], index: 3, kind: input, shape index: {}]
  %s4 = inlined_call_operand.vmem [shape: f32[32,1], index: 4, kind: input, shape index: {}]
  %s5 = inlined_call_operand.vmem [shape: f32[32,1], index: 5, kind: input, shape index: {}]
  %s6 = inlined_call_operand.vmem [shape: f32[32,1], index: 6, kind: input, shape index: {}]
  %s7 = inlined_call_operand.vmem [shape: f32[128,32], index: 7, kind: input, shape index: {}]
  %s8 = inlined_call_operand.vmem [shape: f32[128,1], index: 8, kind: input, shape index: {}]
  %s9 = inlined_call_operand.vmem [shape: f32[32,128], index: 9, kind: input, shape index: {}]
  %s10 = inlined_call_operand.vmem [shape: f32[32,1], index: 10, kind: input, shape index: {}]
  %s11 = inlined_call_operand.vmem [shape: s32[2,256], index: 11, kind: input, shape index: {}]
  %s12 = inlined_call_operand.hbm [shape: f32[2,32,256], index: 12, kind: output, shape index: {}]
  %s13 = sld [smem:[#allocation0]]
  $region81: #{tpu_custom_call.1} parent=0
    _
  %s15 = ssub.s32 1, %s13
  %s16 = scalar_select 0, %s15, %s13
  $region1: #{tpu_custom_call.1} parent=0
    #allocation2 [shape = 'u8[65536]{0}', space=vmem, size = 0x10000, scoped, tag = 'output window, operand 0']
    #allocation3 [shape = 's32[2]{0}', space=sflag, size = 0x8, scoped, tag = 'scoped memory for tpu_custom_call.1']
    %17 = vsyncpa [#allocation3], 0
    %s18 = scalar_lea.sflag [#allocation3], 1
    %19 = vsyncpa %s18, 0
    loop: start=0, step=1, limit=4
    $region2: #{tpu_custom_call.1} parent=1 // loop_pre_header
      _
    $region3: #{tpu_custom_call.1} parent=1 // loop_header
      %s21 = sphi 0, %s25
      %p22 = scmp.ge.s32.totalorder %s21, 4
      %s31 = sphi 0, %s33
      %s34 = sphi 0, %s31
      %s35 = sphi 0, %s34
      %s51 = sphi 0, %s35
      %s55 = sphi 0, %s55
      %s57 = sphi 0, %s55
      %s58 = sphi 0, %s57
      %s72 = sphi 0, %s58
      %s76 = sphi 0, %s76
      %s78 = sphi 0, %s76
      %s79 = sphi 0, %s78
      %s93 = sphi 0, %s79
      %s97 = sphi 0, %s97
      %s99 = sphi 0, %s97
      %s100 = sphi 0, %s99
      %s114 = sphi 0, %s100
      %s118 = sphi 0, %s118
      %s120 = sphi 0, %s118
      %s121 = sphi 0, %s120
      %s135 = sphi 0, %s121
      %s139 = sphi 0, %s139
      %s141 = sphi 0, %s139
      %s142 = sphi 0, %s141
      %s156 = sphi 0, %s142
      %s160 = sphi 0, %s160
      %s162 = sphi 0, %s160
      %s163 = sphi 0, %s162
      %s177 = sphi 0, %s163
      %s181 = sphi 0, %s181
      %s183 = sphi 0, %s181
      %s184 = sphi 0, %s183
      %s198 = sphi 0, %s184
      %s202 = sphi 0, %s202
      %s204 = sphi 0, %s202
      %s205 = sphi 0, %s204
      %s219 = sphi 0, %s205
      %s223 = sphi 0, %s223
      %s225 = sphi 0, %s223
      %s226 = sphi 0, %s225
      %s240 = sphi 0, %s226
      %s244 = sphi 0, %s244
      %s246 = sphi 0, %s244
      %s247 = sphi 0, %s246
      %s261 = sphi 0, %s247
      %s265 = sphi 0, %s265
      %s267 = sphi 0, %s265
      %s268 = sphi 0, %s267
      %s282 = sphi 0, %s268
      %s288 = sphi 0, %s290
      %s291 = sphi 0, %s288
      %s292 = sphi 0, %s291
      %s308 = sphi 0, %s292
    $region4: #{tpu_custom_call.1} parent=1 // loop_header_branch
      %24 = sbr.rel (%p22) target = $region8
    $region5: #{tpu_custom_call.1} parent=1 // loop_body
      %s26 = ssub.s32 %s21, 1
      %s27 = ssub.s32 %s21, 2
      %s28 = sadd.s32 %s21, 1
      %s29 = ssub.s32 %s21, %s28
      %p30 = scmp.eq.s32.totalorder %s29, 0
      %s32 = sadd.s32 %s31, 1
      %s33 = scalar_select %p30, %s31, %s32
      %p36 = pneg %p30
      %p37 = scmp.eq.s32.totalorder %s21, 1
      %p38 = por %p36, %p37
      %p39 = scmp.ne.s32.totalorder %s31, %s34
      %p40 = scmp.eq.s32.totalorder %s21, 0
      %p41 = por %p39, %p40
      %p42 = scmp.ne.s32.totalorder %s31, %s34
      %p43 = scmp.eq.s32.totalorder %s26, 1
      %p44 = por %p42, %p43
      %p45 = scmp.ne.s32.totalorder %s34, %s35
      %p46 = scmp.eq.s32.totalorder %s26, 0
      %p47 = por %p45, %p46
      %p48 = scmp.ne.s32.totalorder %s34, %s35
      %p49 = scmp.eq.s32.totalorder %s27, 1
      %p50 = por %p48, %p49
      %p52 = scmp.ne.s32.totalorder %s35, %s51
      %p53 = scmp.eq.s32.totalorder %s27, 0
      %p54 = por %p52, %p53
      %s56 = sadd.s32 %s55, 1
      %p59 = scmp.eq.s32.totalorder %s21, 1
      %p60 = scmp.ne.s32.totalorder %s55, %s57
      %p61 = scmp.eq.s32.totalorder %s21, 0
      %p62 = por %p60, %p61
      %p63 = scmp.ne.s32.totalorder %s55, %s57
      %p64 = scmp.eq.s32.totalorder %s26, 1
      %p65 = por %p63, %p64
      %p66 = scmp.ne.s32.totalorder %s57, %s58
      %p67 = scmp.eq.s32.totalorder %s26, 0
      %p68 = por %p66, %p67
      %p69 = scmp.ne.s32.totalorder %s57, %s58
      %p70 = scmp.eq.s32.totalorder %s27, 1
      %p71 = por %p69, %p70
      %p73 = scmp.ne.s32.totalorder %s58, %s72
      %p74 = scmp.eq.s32.totalorder %s27, 0
      %p75 = por %p73, %p74
      %s77 = sadd.s32 %s76, 1
      %p80 = scmp.eq.s32.totalorder %s21, 1
      %p81 = scmp.ne.s32.totalorder %s76, %s78
      %p82 = scmp.eq.s32.totalorder %s21, 0
      %p83 = por %p81, %p82
      %p84 = scmp.ne.s32.totalorder %s76, %s78
      %p85 = scmp.eq.s32.totalorder %s26, 1
      %p86 = por %p84, %p85
      %p87 = scmp.ne.s32.totalorder %s78, %s79
      %p88 = scmp.eq.s32.totalorder %s26, 0
      %p89 = por %p87, %p88
      %p90 = scmp.ne.s32.totalorder %s78, %s79
      %p91 = scmp.eq.s32.totalorder %s27, 1
      %p92 = por %p90, %p91
      %p94 = scmp.ne.s32.totalorder %s79, %s93
      %p95 = scmp.eq.s32.totalorder %s27, 0
      %p96 = por %p94, %p95
      %s98 = sadd.s32 %s97, 1
      %p101 = scmp.eq.s32.totalorder %s21, 1
      %p102 = scmp.ne.s32.totalorder %s97, %s99
      %p103 = scmp.eq.s32.totalorder %s21, 0
      %p104 = por %p102, %p103
      %p105 = scmp.ne.s32.totalorder %s97, %s99
      %p106 = scmp.eq.s32.totalorder %s26, 1
      %p107 = por %p105, %p106
      %p108 = scmp.ne.s32.totalorder %s99, %s100
      %p109 = scmp.eq.s32.totalorder %s26, 0
      %p110 = por %p108, %p109
      %p111 = scmp.ne.s32.totalorder %s99, %s100
      %p112 = scmp.eq.s32.totalorder %s27, 1
      %p113 = por %p111, %p112
      %p115 = scmp.ne.s32.totalorder %s100, %s114
      %p116 = scmp.eq.s32.totalorder %s27, 0
      %p117 = por %p115, %p116
      %s119 = sadd.s32 %s118, 1
      %p122 = scmp.eq.s32.totalorder %s21, 1
      %p123 = scmp.ne.s32.totalorder %s118, %s120
      %p124 = scmp.eq.s32.totalorder %s21, 0
      %p125 = por %p123, %p124
      %p126 = scmp.ne.s32.totalorder %s118, %s120
      %p127 = scmp.eq.s32.totalorder %s26, 1
      %p128 = por %p126, %p127
      %p129 = scmp.ne.s32.totalorder %s120, %s121
      %p130 = scmp.eq.s32.totalorder %s26, 0
      %p131 = por %p129, %p130
      %p132 = scmp.ne.s32.totalorder %s120, %s121
      %p133 = scmp.eq.s32.totalorder %s27, 1
      %p134 = por %p132, %p133
      %p136 = scmp.ne.s32.totalorder %s121, %s135
      %p137 = scmp.eq.s32.totalorder %s27, 0
      %p138 = por %p136, %p137
      %s140 = sadd.s32 %s139, 1
      %p143 = scmp.eq.s32.totalorder %s21, 1
      %p144 = scmp.ne.s32.totalorder %s139, %s141
      %p145 = scmp.eq.s32.totalorder %s21, 0
      %p146 = por %p144, %p145
      %p147 = scmp.ne.s32.totalorder %s139, %s141
      %p148 = scmp.eq.s32.totalorder %s26, 1
      %p149 = por %p147, %p148
      %p150 = scmp.ne.s32.totalorder %s141, %s142
      %p151 = scmp.eq.s32.totalorder %s26, 0
      %p152 = por %p150, %p151
      %p153 = scmp.ne.s32.totalorder %s141, %s142
      %p154 = scmp.eq.s32.totalorder %s27, 1
      %p155 = por %p153, %p154
      %p157 = scmp.ne.s32.totalorder %s142, %s156
      %p158 = scmp.eq.s32.totalorder %s27, 0
      %p159 = por %p157, %p158
      %s161 = sadd.s32 %s160, 1
      %p164 = scmp.eq.s32.totalorder %s21, 1
      %p165 = scmp.ne.s32.totalorder %s160, %s162
      %p166 = scmp.eq.s32.totalorder %s21, 0
      %p167 = por %p165, %p166
      %p168 = scmp.ne.s32.totalorder %s160, %s162
      %p169 = scmp.eq.s32.totalorder %s26, 1
      %p170 = por %p168, %p169
      %p171 = scmp.ne.s32.totalorder %s162, %s163
      %p172 = scmp.eq.s32.totalorder %s26, 0
      %p173 = por %p171, %p172
      %p174 = scmp.ne.s32.totalorder %s162, %s163
      %p175 = scmp.eq.s32.totalorder %s27, 1
      %p176 = por %p174, %p175
      %p178 = scmp.ne.s32.totalorder %s163, %s177
      %p179 = scmp.eq.s32.totalorder %s27, 0
      %p180 = por %p178, %p179
      %s182 = sadd.s32 %s181, 1
      %p185 = scmp.eq.s32.totalorder %s21, 1
      %p186 = scmp.ne.s32.totalorder %s181, %s183
      %p187 = scmp.eq.s32.totalorder %s21, 0
      %p188 = por %p186, %p187
      %p189 = scmp.ne.s32.totalorder %s181, %s183
      %p190 = scmp.eq.s32.totalorder %s26, 1
      %p191 = por %p189, %p190
      %p192 = scmp.ne.s32.totalorder %s183, %s184
      %p193 = scmp.eq.s32.totalorder %s26, 0
      %p194 = por %p192, %p193
      %p195 = scmp.ne.s32.totalorder %s183, %s184
      %p196 = scmp.eq.s32.totalorder %s27, 1
      %p197 = por %p195, %p196
      %p199 = scmp.ne.s32.totalorder %s184, %s198
      %p200 = scmp.eq.s32.totalorder %s27, 0
      %p201 = por %p199, %p200
      %s203 = sadd.s32 %s202, 1
      %p206 = scmp.eq.s32.totalorder %s21, 1
      %p207 = scmp.ne.s32.totalorder %s202, %s204
      %p208 = scmp.eq.s32.totalorder %s21, 0
      %p209 = por %p207, %p208
      %p210 = scmp.ne.s32.totalorder %s202, %s204
      %p211 = scmp.eq.s32.totalorder %s26, 1
      %p212 = por %p210, %p211
      %p213 = scmp.ne.s32.totalorder %s204, %s205
      %p214 = scmp.eq.s32.totalorder %s26, 0
      %p215 = por %p213, %p214
      %p216 = scmp.ne.s32.totalorder %s204, %s205
      %p217 = scmp.eq.s32.totalorder %s27, 1
      %p218 = por %p216, %p217
      %p220 = scmp.ne.s32.totalorder %s205, %s219
      %p221 = scmp.eq.s32.totalorder %s27, 0
      %p222 = por %p220, %p221
      %s224 = sadd.s32 %s223, 1
      %p227 = scmp.eq.s32.totalorder %s21, 1
      %p228 = scmp.ne.s32.totalorder %s223, %s225
      %p229 = scmp.eq.s32.totalorder %s21, 0
      %p230 = por %p228, %p229
      %p231 = scmp.ne.s32.totalorder %s223, %s225
      %p232 = scmp.eq.s32.totalorder %s26, 1
      %p233 = por %p231, %p232
      %p234 = scmp.ne.s32.totalorder %s225, %s226
      %p235 = scmp.eq.s32.totalorder %s26, 0
      %p236 = por %p234, %p235
      %p237 = scmp.ne.s32.totalorder %s225, %s226
      %p238 = scmp.eq.s32.totalorder %s27, 1
      %p239 = por %p237, %p238
      %p241 = scmp.ne.s32.totalorder %s226, %s240
      %p242 = scmp.eq.s32.totalorder %s27, 0
      %p243 = por %p241, %p242
      %s245 = sadd.s32 %s244, 1
      %p248 = scmp.eq.s32.totalorder %s21, 1
      %p249 = scmp.ne.s32.totalorder %s244, %s246
      %p250 = scmp.eq.s32.totalorder %s21, 0
      %p251 = por %p249, %p250
      %p252 = scmp.ne.s32.totalorder %s244, %s246
      %p253 = scmp.eq.s32.totalorder %s26, 1
      %p254 = por %p252, %p253
      %p255 = scmp.ne.s32.totalorder %s246, %s247
      %p256 = scmp.eq.s32.totalorder %s26, 0
      %p257 = por %p255, %p256
      %p258 = scmp.ne.s32.totalorder %s246, %s247
      %p259 = scmp.eq.s32.totalorder %s27, 1
      %p260 = por %p258, %p259
      %p262 = scmp.ne.s32.totalorder %s247, %s261
      %p263 = scmp.eq.s32.totalorder %s27, 0
      %p264 = por %p262, %p263
      %s266 = sadd.s32 %s265, 1
      %p269 = scmp.eq.s32.totalorder %s21, 1
      %p270 = scmp.ne.s32.totalorder %s265, %s267
      %p271 = scmp.eq.s32.totalorder %s21, 0
      %p272 = por %p270, %p271
      %p273 = scmp.ne.s32.totalorder %s265, %s267
      %p274 = scmp.eq.s32.totalorder %s26, 1
      %p275 = por %p273, %p274
      %p276 = scmp.ne.s32.totalorder %s267, %s268
      %p277 = scmp.eq.s32.totalorder %s26, 0
      %p278 = por %p276, %p277
      %p279 = scmp.ne.s32.totalorder %s267, %s268
      %p280 = scmp.eq.s32.totalorder %s27, 1
      %p281 = por %p279, %p280
      %p283 = scmp.ne.s32.totalorder %s268, %s282
      %p284 = scmp.eq.s32.totalorder %s27, 0
      %p285 = por %p283, %p284
      %s286 = ssub.s32 %s21, %s28
      %p287 = scmp.eq.s32.totalorder %s286, 0
      %s289 = sadd.s32 %s288, 1
      %s290 = scalar_select %p287, %s288, %s289
      %p293 = pneg %p287
      %p294 = scmp.eq.s32.totalorder %s21, 1
      %p295 = por %p293, %p294
      %p296 = scmp.ne.s32.totalorder %s288, %s291
      %p297 = scmp.eq.s32.totalorder %s21, 0
      %p298 = por %p296, %p297
      %p299 = scmp.ne.s32.totalorder %s288, %s291
      %p300 = scmp.eq.s32.totalorder %s26, 1
      %p301 = por %p299, %p300
      %p302 = scmp.ne.s32.totalorder %s291, %s292
      %p303 = scmp.eq.s32.totalorder %s26, 0
      %p304 = por %p302, %p303
      %p305 = scmp.ne.s32.totalorder %s291, %s292
      %p306 = scmp.eq.s32.totalorder %s27, 1
      %p307 = por %p305, %p306
      %p309 = scmp.ne.s32.totalorder %s292, %s308
      %p310 = scmp.eq.s32.totalorder %s27, 0
      %p311 = por %p309, %p310
      %p312 = scmp.le.s32.totalorder 1, %s21
      %p313 = scmp.lt.s32.totalorder %s21, 3
      %p314 = pnand %p312, %p313
      %p315 = pneg %p314
      // Predicated region
      $region9: #{tpu_custom_call.1} parent=5 // pred_check
        _
      $region10: #{tpu_custom_call.1} parent=5 // pred_check_branch
        %317 = sbr.rel (%p314) target = $region12
      $region11: #{tpu_custom_call.1} parent=5 // pred_region
        %s318 = ssub.s32 %s21, 1
        // Predicated region
        $region13: #{tpu_custom_call.1} parent=11 // pred_check
          %p319 = pneg %p68
        $region14: #{tpu_custom_call.1} parent=11 // pred_check_branch
          %321 = sbr.rel (%p319) target = $region16
        $region15: #{tpu_custom_call.1} parent=11 // pred_region
          _
        $region16: #{tpu_custom_call.1} parent=11 // pred_fallthru
          _
        // Predicated region
        $region17: #{tpu_custom_call.1} parent=11 // pred_check
          %p322 = pneg %p89
        $region18: #{tpu_custom_call.1} parent=11 // pred_check_branch
          %324 = sbr.rel (%p322) target = $region20
        $region19: #{tpu_custom_call.1} parent=11 // pred_region
          _
        $region20: #{tpu_custom_call.1} parent=11 // pred_fallthru
          _
        // Predicated region
        $region21: #{tpu_custom_call.1} parent=11 // pred_check
          %p325 = pneg %p110
        $region22: #{tpu_custom_call.1} parent=11 // pred_check_branch
          %327 = sbr.rel (%p325) target = $region24
        $region23: #{tpu_custom_call.1} parent=11 // pred_region
          _
        $region24: #{tpu_custom_call.1} parent=11 // pred_fallthru
          _
        // Predicated region
        $region25: #{tpu_custom_call.1} parent=11 // pred_check
          %p328 = pneg %p131
        $region26: #{tpu_custom_call.1} parent=11 // pred_check_branch
          %330 = sbr.rel (%p328) target = $region28
        $region27: #{tpu_custom_call.1} parent=11 // pred_region
          _
        $region28: #{tpu_custom_call.1} parent=11 // pred_fallthru
          _
        // Predicated region
        $region29: #{tpu_custom_call.1} parent=11 // pred_check
          %p331 = pneg %p152
        $region30: #{tpu_custom_call.1} parent=11 // pred_check_branch
          %333 = sbr.rel (%p331) target = $region32
        $region31: #{tpu_custom_call.1} parent=11 // pred_region
          _
        $region32: #{tpu_custom_call.1} parent=11 // pred_fallthru
          _
        // Predicated region
        $region33: #{tpu_custom_call.1} parent=11 // pred_check
          %p334 = pneg %p173
        $region34: #{tpu_custom_call.1} parent=11 // pred_check_branch
          %336 = sbr.rel (%p334) target = $region36
        $region35: #{tpu_custom_call.1} parent=11 // pred_region
          _
        $region36: #{tpu_custom_call.1} parent=11 // pred_fallthru
          _
        // Predicated region
        $region37: #{tpu_custom_call.1} parent=11 // pred_check
          %p337 = pneg %p194
        $region38: #{tpu_custom_call.1} parent=11 // pred_check_branch
          %339 = sbr.rel (%p337) target = $region40
        $region39: #{tpu_custom_call.1} parent=11 // pred_region
          _
        $region40: #{tpu_custom_call.1} parent=11 // pred_fallthru
          _
        // Predicated region
        $region41: #{tpu_custom_call.1} parent=11 // pred_check
          %p340 = pneg %p215
        $region42: #{tpu_custom_call.1} parent=11 // pred_check_branch
          %342 = sbr.rel (%p340) target = $region44
        $region43: #{tpu_custom_call.1} parent=11 // pred_region
          _
        $region44: #{tpu_custom_call.1} parent=11 // pred_fallthru
          _
        // Predicated region
        $region45: #{tpu_custom_call.1} parent=11 // pred_check
          %p343 = pneg %p236
        $region46: #{tpu_custom_call.1} parent=11 // pred_check_branch
          %345 = sbr.rel (%p343) target = $region48
        $region47: #{tpu_custom_call.1} parent=11 // pred_region
          _
        $region48: #{tpu_custom_call.1} parent=11 // pred_fallthru
          _
        // Predicated region
        $region49: #{tpu_custom_call.1} parent=11 // pred_check
          %p346 = pneg %p257
        $region50: #{tpu_custom_call.1} parent=11 // pred_check_branch
          %348 = sbr.rel (%p346) target = $region52
        $region51: #{tpu_custom_call.1} parent=11 // pred_region
          _
        $region52: #{tpu_custom_call.1} parent=11 // pred_fallthru
          _
        // Predicated region
        $region53: #{tpu_custom_call.1} parent=11 // pred_check
          %p349 = pneg %p278
        $region54: #{tpu_custom_call.1} parent=11 // pred_check_branch
          %351 = sbr.rel (%p349) target = $region56
        $region55: #{tpu_custom_call.1} parent=11 // pred_region
          _
        $region56: #{tpu_custom_call.1} parent=11 // pred_fallthru
          _
      $region12: #{tpu_custom_call.1} parent=5 // pred_fallthru
        _
      %p352 = scmp.lt.s32.totalorder %s21, 2
      // Predicated region
      $region57: #{tpu_custom_call.1} parent=5 // pred_check
        %p353 = pneg %p352
      $region58: #{tpu_custom_call.1} parent=5 // pred_check_branch
        %355 = sbr.rel (%p353) target = $region60
      $region59: #{tpu_custom_call.1} parent=5 // pred_region
        // Predicated region
        $region61: #{tpu_custom_call.1} parent=59 // pred_check
          %p356 = pneg %p41
        $region62: #{tpu_custom_call.1} parent=59 // pred_check_branch
          %358 = sbr.rel (%p356) target = $region64
        $region63: #{tpu_custom_call.1} parent=59 // pred_region
          %p359 = scmp.lt.s32.totalorder %s21, 1
          %s360 = scalar_select %p359, %s21, 1
          %s361 = smul.addr %s360, 8
          %s362 = smul.addr %s361, 8
          %s363 = scalar_lea.vmem %s0, %s362
        $region64: #{tpu_custom_call.1} parent=59 // pred_fallthru
          _
      $region60: #{tpu_custom_call.1} parent=5 // pred_fallthru
        _
      %p364 = scmp.le.s32.totalorder 1, %s21
      %p365 = scmp.lt.s32.totalorder %s21, 3
      %p366 = pnand %p364, %p365
      %p367 = pneg %p366
      // Predicated region
      $region65: #{tpu_custom_call.1} parent=5 // pred_check
        _
      $region66: #{tpu_custom_call.1} parent=5 // pred_check_branch
        %369 = sbr.rel (%p366) target = $region68
      $region67: #{tpu_custom_call.1} parent=5 // pred_region
        %s370 = ssub.s32 %s21, 1
        %p371 = scmp.lt.s32.totalorder %s26, 1
        %s372 = scalar_select %p371, %s26, 1
        %s373 = smul.addr %s372, 8
        %s374 = smul.addr %s373, 8
        %s375 = scalar_lea.vmem %s0, %s374
        %p376 = pneg %p47
        %p377 = pneg %p44
        %p378 = pneg %p68
        %p379 = pneg %p65
        %p380 = pneg %p89
        %p381 = pneg %p86
        %p382 = pneg %p110
        %p383 = pneg %p107
        %p384 = pneg %p131
        %p385 = pneg %p128
        %p386 = pneg %p152
        %p387 = pneg %p149
        %p388 = pneg %p173
        %p389 = pneg %p170
        %p390 = pneg %p194
        %p391 = pneg %p191
        %p392 = pneg %p215
        %p393 = pneg %p212
        %p394 = pneg %p236
        %p395 = pneg %p233
        %p396 = pneg %p257
        %p397 = pneg %p254
        %p398 = pneg %p278
        %p399 = pneg %p275
        %p400 = pneg %p304
        %p401 = pneg %p301
        %s402 = sand.u32 %s291, 1
        %s403 = scalar_lea.sflag [#allocation3], %s402
        %s404 = sand.u32 %s291, 1
        %s405 = smul.addr %s404, 64
        %s406 = scalar_lea.vmem [#allocation2], %s405
        %p407 = scmp.lt.s32.totalorder %s26, 1
        %s408 = scalar_select %p407, %s26, 1
        %s409 = smul.addr %s408, 8
        %s410 = smul.addr %s409, 8
        %s411 = scalar_lea.vmem %s0, %s410
        %v412 = vld [vmem:[%s411] sm:$0xff]
        %v413 = vld [vmem:[%s411 + $0x8] sm:$0xff]
        %v414 = vld [vmem:[%s411 + $0x10] sm:$0xff]
        %v415 = vld [vmem:[%s411 + $0x18] sm:$0xff]
        %v416 = vld [vmem:[%s411 + $0x20] sm:$0xff]
        %v417 = vld [vmem:[%s411 + $0x28] sm:$0xff]
        %v418 = vld [vmem:[%s411 + $0x30] sm:$0xff]
        %v419 = vld [vmem:[%s411 + $0x38] sm:$0xff]
        %v420 = vld [vmem:[%s11] ss:$2 sm:$0x3]
        %s421 = scalar_lea.vmem %s11, 1
        %v422 = vld [vmem:[%s421] ss:$2 sm:$0x3]
        %v423 = vld [vmem:[%s1] sm:$0xff]
        %v424 = vld [vmem:[%s1 + $0x8] sm:$0xff]
        %v425 = vld [vmem:[%s1 + $0x10] sm:$0xff]
        %v426 = vld [vmem:[%s1 + $0x18] sm:$0xff]
        %v427 = vld [vmem:[%s2] sm:$0xff]
        %v428 = vld [vmem:[%s2 + $0x8] sm:$0xff]
        %v429 = vld [vmem:[%s2 + $0x10] sm:$0xff]
        %v430 = vld [vmem:[%s2 + $0x18] sm:$0xff]
        %v431 = vadd.s32 %v420, 4294967293
        %vm432 = vcmp.ge.s32.totalorder %v431, 0
        %vm433 = vcmp.lt.s32.totalorder %v431, 16
        %vm434 = vmand %vm432, %vm433
        %v435 = vadd.s32 %v422, 4294967293
        %vm436 = vcmp.ge.s32.totalorder %v435, 0
        %vm437 = vcmp.lt.s32.totalorder %v435, 16
        %vm438 = vmand %vm436, %vm437
        %v439 = vadd.s32 %v420, 4294967294
        %vm440 = vcmp.ge.s32.totalorder %v439, 0
        %vm441 = vcmp.lt.s32.totalorder %v439, 16
        %vm442 = vmand %vm440, %vm441
        %v443 = vadd.s32 %v422, 4294967294
        %vm444 = vcmp.ge.s32.totalorder %v443, 0
        %vm445 = vcmp.lt.s32.totalorder %v443, 16
        %vm446 = vmand %vm444, %vm445
        %v447 = vadd.s32 %v420, 4294967295
        %vm448 = vcmp.ge.s32.totalorder %v447, 0
        %vm449 = vcmp.lt.s32.totalorder %v447, 16
        %vm450 = vmand %vm448, %vm449
        %v451 = vadd.s32 %v422, 4294967295
        %vm452 = vcmp.ge.s32.totalorder %v451, 0
        %vm453 = vcmp.lt.s32.totalorder %v451, 16
        %vm454 = vmand %vm452, %vm453
        %vm455 = vcmp.ge.s32.totalorder %v420, 0
        %vm456 = vcmp.lt.s32.totalorder %v420, 16
        %vm457 = vmand %vm455, %vm456
        %vm458 = vcmp.ge.s32.totalorder %v422, 0
        %vm459 = vcmp.lt.s32.totalorder %v422, 16
        %vm460 = vmand %vm458, %vm459
        %v461 = vadd.s32 %v420, 1
        %vm462 = vcmp.ge.s32.totalorder %v461, 0
        %vm463 = vcmp.lt.s32.totalorder %v461, 16
        %vm464 = vmand %vm462, %vm463
        %v465 = vadd.s32 %v422, 1
        %vm466 = vcmp.ge.s32.totalorder %v465, 0
        %vm467 = vcmp.lt.s32.totalorder %v465, 16
        %vm468 = vmand %vm466, %vm467
        %v469 = vadd.s32 %v420, 2
        %vm470 = vcmp.ge.s32.totalorder %v469, 0
        %vm471 = vcmp.lt.s32.totalorder %v469, 16
        %vm472 = vmand %vm470, %vm471
        %v473 = vadd.s32 %v422, 2
        %vm474 = vcmp.ge.s32.totalorder %v473, 0
        %vm475 = vcmp.lt.s32.totalorder %v473, 16
        %vm476 = vmand %vm474, %vm475
        %v477 = vadd.s32 %v420, 3
        %vm478 = vcmp.ge.s32.totalorder %v477, 0
        %vm479 = vcmp.lt.s32.totalorder %v477, 16
        %vm480 = vmand %vm478, %vm479
        %v481 = vadd.s32 %v422, 3
        %vm482 = vcmp.ge.s32.totalorder %v481, 0
        %vm483 = vcmp.lt.s32.totalorder %v481, 16
        %vm484 = vmand %vm482, %vm483
        %486 = vset.pattern.permute.xlu0 0
        %487 = vperm.xlu0 %486, %v427
        %v488 = vpop.permute.xlu0 %487
        %491 = vset.pattern.permute.xlu0 0
        %492 = vperm.xlu0 %491, %v428
        %v493 = vpop.permute.xlu0 %492
        %496 = vset.pattern.permute.xlu0 0
        %497 = vperm.xlu0 %496, %v429
        %v498 = vpop.permute.xlu0 %497
        %501 = vset.pattern.permute.xlu0 0
        %502 = vperm.xlu0 %501, %v430
        %v503 = vpop.permute.xlu0 %502
        %v505 = vadd.f32 %v412, %v488
        %v506 = vadd.f32 %v413, %v488
        %v507 = vadd.f32 %v414, %v493
        %v508 = vadd.f32 %v415, %v493
        %v509 = vadd.f32 %v416, %v498
        %v510 = vadd.f32 %v417, %v498
        %v511 = vadd.f32 %v418, %v503
        %v512 = vadd.f32 %v419, %v503
        %513 = vrot.lane.b32.xlu0 %v412, 51
        %v514 = vpop.permute.xlu0 %513
        %515 = vrot.lane.b32.xlu0 %v414, 51
        %v516 = vpop.permute.xlu0 %515
        %517 = vrot.lane.b32.xlu0 %v416, 51
        %v518 = vpop.permute.xlu0 %517
        %519 = vrot.lane.b32.xlu0 %v418, 51
        %v520 = vpop.permute.xlu0 %519
        %521 = vrot.lane.b32.xlu0 %v413, 51
        %v522 = vpop.permute.xlu0 %521
        %523 = vrot.lane.b32.xlu0 %v415, 51
        %v524 = vpop.permute.xlu0 %523
        %525 = vrot.lane.b32.xlu0 %v417, 51
        %v526 = vpop.permute.xlu0 %525
        %527 = vrot.lane.b32.xlu0 %v419, 51
        %v528 = vpop.permute.xlu0 %527
        %v529 = vlaneseq
        %v530 = vand.u32 %v529, 127
        %vm531 = vcmp.lt.s32.totalorder %v530, 51
        %v532 = vsel %vm531, %v514, %v522
        %v533 = vsel %vm531, %v516, %v524
        %v534 = vsel %vm531, %v518, %v526
        %v535 = vsel %vm531, %v520, %v528
        %v536 = vsel %vm531, %v522, %v514
        %v537 = vsel %vm531, %v524, %v516
        %v538 = vsel %vm531, %v526, %v518
        %v539 = vsel %vm531, %v528, %v520
        %vm540 = vmand %vm434, %vm438
        %v541 = vsel %vm540, 1, 0
        %v542 = vlaneseq
        %v543 = vshrl.u32 %v542, 7
        %v544 = vsub.s32 0, %v543
        %v545 = vrot.slane %v541, %v544
        %v546 = vlaneseq
        %v547 = vshrl.u32 %v546, 7
        %v548 = vsub.s32 1, %v547
        %v549 = vrot.slane %v541, %v548
        %vm550 = vcmp.eq.s32.totalorder %v545, 1
        %vm551 = vcmp.eq.s32.totalorder %v549, 1
        %v552 = vsel %vm550, %v536, 0.0
        %v553 = vsel %vm551, %v532, 0.0
        %v554 = vsel %vm550, %v537, 0.0
        %v555 = vsel %vm551, %v533, 0.0
        %v556 = vsel %vm550, %v538, 0.0
        %v557 = vsel %vm551, %v534, 0.0
        %v558 = vsel %vm550, %v539, 0.0
        %v559 = vsel %vm551, %v535, 0.0
        %561 = vset.pattern.permute.xlu0 0
        %562 = vperm.xlu0 %561, %v423
        %v563 = vpop.permute.xlu0 %562
        %566 = vset.pattern.permute.xlu0 0
        %567 = vperm.xlu0 %566, %v424
        %v568 = vpop.permute.xlu0 %567
        %571 = vset.pattern.permute.xlu0 0
        %572 = vperm.xlu0 %571, %v425
        %v573 = vpop.permute.xlu0 %572
        %576 = vset.pattern.permute.xlu0 0
        %577 = vperm.xlu0 %576, %v426
        %v578 = vpop.permute.xlu0 %577
        %v580 = vmul.f32 %v552, %v563
        %v581 = vmul.f32 %v553, %v563
        %v582 = vmul.f32 %v554, %v568
        %v583 = vmul.f32 %v555, %v568
        %v584 = vmul.f32 %v556, %v573
        %v585 = vmul.f32 %v557, %v573
        %v586 = vmul.f32 %v558, %v578
        %v587 = vmul.f32 %v559, %v578
        %v588 = vadd.f32 %v505, %v580
        %v589 = vadd.f32 %v506, %v581
        %v590 = vadd.f32 %v507, %v582
        %v591 = vadd.f32 %v508, %v583
        %v592 = vadd.f32 %v509, %v584
        %v593 = vadd.f32 %v510, %v585
        %v594 = vadd.f32 %v511, %v586
        %v595 = vadd.f32 %v512, %v587
        %596 = vrot.lane.b32.xlu0 %v412, 50
        %v597 = vpop.permute.xlu0 %596
        %598 = vrot.lane.b32.xlu0 %v414, 50
        %v599 = vpop.permute.xlu0 %598
        %600 = vrot.lane.b32.xlu0 %v416, 50
        %v601 = vpop.permute.xlu0 %600
        %602 = vrot.lane.b32.xlu0 %v418, 50
        %v603 = vpop.permute.xlu0 %602
        %604 = vrot.lane.b32.xlu0 %v413, 50
        %v605 = vpop.permute.xlu0 %604
        %606 = vrot.lane.b32.xlu0 %v415, 50
        %v607 = vpop.permute.xlu0 %606
        %608 = vrot.lane.b32.xlu0 %v417, 50
        %v609 = vpop.permute.xlu0 %608
        %610 = vrot.lane.b32.xlu0 %v419, 50
        %v611 = vpop.permute.xlu0 %610
        %vm612 = vcmp.lt.s32.totalorder %v530, 50
        %v613 = vsel %vm612, %v597, %v605
        %v614 = vsel %vm612, %v599, %v607
        %v615 = vsel %vm612, %v601, %v609
        %v616 = vsel %vm612, %v603, %v611
        %v617 = vsel %vm612, %v605, %v597
        %v618 = vsel %vm612, %v607, %v599
        %v619 = vsel %vm612, %v609, %v601
        %v620 = vsel %vm612, %v611, %v603
        %vm621 = vmand %vm434, %vm446
        %v622 = vsel %vm621, 1, 0
        %v623 = vlaneseq
        %v624 = vshrl.u32 %v623, 7
        %v625 = vsub.s32 0, %v624
        %v626 = vrot.slane %v622, %v625
        %v627 = vlaneseq
        %v628 = vshrl.u32 %v627, 7
        %v629 = vsub.s32 1, %v628
        %v630 = vrot.slane %v622, %v629
        %vm631 = vcmp.eq.s32.totalorder %v626, 1
        %vm632 = vcmp.eq.s32.totalorder %v630, 1
        %v633 = vsel %vm631, %v617, 0.0
        %v634 = vsel %vm632, %v613, 0.0
        %v635 = vsel %vm631, %v618, 0.0
        %v636 = vsel %vm632, %v614, 0.0
        %v637 = vsel %vm631, %v619, 0.0
        %v638 = vsel %vm632, %v615, 0.0
        %v639 = vsel %vm631, %v620, 0.0
        %v640 = vsel %vm632, %v616, 0.0
        %641 = vset.pattern.permute.xlu0 1
        %642 = vperm.xlu0 %641, %v423
        %v643 = vpop.permute.xlu0 %642
        %645 = vset.pattern.permute.xlu0 1
        %646 = vperm.xlu0 %645, %v424
        %v647 = vpop.permute.xlu0 %646
        %649 = vset.pattern.permute.xlu0 1
        %650 = vperm.xlu0 %649, %v425
        %v651 = vpop.permute.xlu0 %650
        %653 = vset.pattern.permute.xlu0 1
        %654 = vperm.xlu0 %653, %v426
        %v655 = vpop.permute.xlu0 %654
        %v657 = vmul.f32 %v633, %v643
        %v658 = vmul.f32 %v634, %v643
        %v659 = vmul.f32 %v635, %v647
        %v660 = vmul.f32 %v636, %v647
        %v661 = vmul.f32 %v637, %v651
        %v662 = vmul.f32 %v638, %v651
        %v663 = vmul.f32 %v639, %v655
        %v664 = vmul.f32 %v640, %v655
        %v665 = vadd.f32 %v588, %v657
        %v666 = vadd.f32 %v589, %v658
        %v667 = vadd.f32 %v590, %v659
        %v668 = vadd.f32 %v591, %v660
        %v669 = vadd.f32 %v592, %v661
        %v670 = vadd.f32 %v593, %v662
        %v671 = vadd.f32 %v594, %v663
        %v672 = vadd.f32 %v595, %v664
        %673 = vrot.lane.b32.xlu0 %v412, 49
        %v674 = vpop.permute.xlu0 %673
        %675 = vrot.lane.b32.xlu0 %v414, 49
        %v676 = vpop.permute.xlu0 %675
        %677 = vrot.lane.b32.xlu0 %v416, 49
        %v678 = vpop.permute.xlu0 %677
        %679 = vrot.lane.b32.xlu0 %v418, 49
        %v680 = vpop.permute.xlu0 %679
        %681 = vrot.lane.b32.xlu0 %v413, 49
        %v682 = vpop.permute.xlu0 %681
        %683 = vrot.lane.b32.xlu0 %v415, 49
        %v684 = vpop.permute.xlu0 %683
        %685 = vrot.lane.b32.xlu0 %v417, 49
        %v686 = vpop.permute.xlu0 %685
        %687 = vrot.lane.b32.xlu0 %v419, 49
        %v688 = vpop.permute.xlu0 %687
        %vm689 = vcmp.lt.s32.totalorder %v530, 49
        %v690 = vsel %vm689, %v674, %v682
        %v691 = vsel %vm689, %v676, %v684
        %v692 = vsel %vm689, %v678, %v686
        %v693 = vsel %vm689, %v680, %v688
        %v694 = vsel %vm689, %v682, %v674
        %v695 = vsel %vm689, %v684, %v676
        %v696 = vsel %vm689, %v686, %v678
        %v697 = vsel %vm689, %v688, %v680
        %vm698 = vmand %vm434, %vm454
        %v699 = vsel %vm698, 1, 0
        %v700 = vlaneseq
        %v701 = vshrl.u32 %v700, 7
        %v702 = vsub.s32 0, %v701
        %v703 = vrot.slane %v699, %v702
        %v704 = vlaneseq
        %v705 = vshrl.u32 %v704, 7
        %v706 = vsub.s32 1, %v705
        %v707 = vrot.slane %v699, %v706
        %vm708 = vcmp.eq.s32.totalorder %v703, 1
        %vm709 = vcmp.eq.s32.totalorder %v707, 1
        %v710 = vsel %vm708, %v694, 0.0
        %v711 = vsel %vm709, %v690, 0.0
        %v712 = vsel %vm708, %v695, 0.0
        %v713 = vsel %vm709, %v691, 0.0
        %v714 = vsel %vm708, %v696, 0.0
        %v715 = vsel %vm709, %v692, 0.0
        %v716 = vsel %vm708, %v697, 0.0
        %v717 = vsel %vm709, %v693, 0.0
        %718 = vset.pattern.permute.xlu0 2
        %719 = vperm.xlu0 %718, %v423
        %v720 = vpop.permute.xlu0 %719
        %722 = vset.pattern.permute.xlu0 2
        %723 = vperm.xlu0 %722, %v424
        %v724 = vpop.permute.xlu0 %723
        %726 = vset.pattern.permute.xlu0 2
        %727 = vperm.xlu0 %726, %v425
        %v728 = vpop.permute.xlu0 %727
        %730 = vset.pattern.permute.xlu0 2
        %731 = vperm.xlu0 %730, %v426
        %v732 = vpop.permute.xlu0 %731
        %v734 = vmul.f32 %v710, %v720
        %v735 = vmul.f32 %v711, %v720
        %v736 = vmul.f32 %v712, %v724
        %v737 = vmul.f32 %v713, %v724
        %v738 = vmul.f32 %v714, %v728
        %v739 = vmul.f32 %v715, %v728
        %v740 = vmul.f32 %v716, %v732
        %v741 = vmul.f32 %v717, %v732
        %v742 = vadd.f32 %v665, %v734
        %v743 = vadd.f32 %v666, %v735
        %v744 = vadd.f32 %v667, %v736
        %v745 = vadd.f32 %v668, %v737
        %v746 = vadd.f32 %v669, %v738
        %v747 = vadd.f32 %v670, %v739
        %v748 = vadd.f32 %v671, %v740
        %v749 = vadd.f32 %v672, %v741
        %750 = vrot.lane.b32.xlu0 %v412, 48
        %v751 = vpop.permute.xlu0 %750
        %752 = vrot.lane.b32.xlu0 %v414, 48
        %v753 = vpop.permute.xlu0 %752
        %754 = vrot.lane.b32.xlu0 %v416, 48
        %v755 = vpop.permute.xlu0 %754
        %756 = vrot.lane.b32.xlu0 %v418, 48
        %v757 = vpop.permute.xlu0 %756
        %758 = vrot.lane.b32.xlu0 %v413, 48
        %v759 = vpop.permute.xlu0 %758
        %760 = vrot.lane.b32.xlu0 %v415, 48
        %v761 = vpop.permute.xlu0 %760
        %762 = vrot.lane.b32.xlu0 %v417, 48
        %v763 = vpop.permute.xlu0 %762
        %764 = vrot.lane.b32.xlu0 %v419, 48
        %v765 = vpop.permute.xlu0 %764
        %vm766 = vcmp.lt.s32.totalorder %v530, 48
        %v767 = vsel %vm766, %v751, %v759
        %v768 = vsel %vm766, %v753, %v761
        %v769 = vsel %vm766, %v755, %v763
        %v770 = vsel %vm766, %v757, %v765
        %v771 = vsel %vm766, %v759, %v751
        %v772 = vsel %vm766, %v761, %v753
        %v773 = vsel %vm766, %v763, %v755
        %v774 = vsel %vm766, %v765, %v757
        %vm775 = vmand %vm434, %vm460
        %v776 = vsel %vm775, 1, 0
        %v777 = vlaneseq
        %v778 = vshrl.u32 %v777, 7
        %v779 = vsub.s32 0, %v778
        %v780 = vrot.slane %v776, %v779
        %v781 = vlaneseq
        %v782 = vshrl.u32 %v781, 7
        %v783 = vsub.s32 1, %v782
        %v784 = vrot.slane %v776, %v783
        %vm785 = vcmp.eq.s32.totalorder %v780, 1
        %vm786 = vcmp.eq.s32.totalorder %v784, 1
        %v787 = vsel %vm785, %v771, 0.0
        %v788 = vsel %vm786, %v767, 0.0
        %v789 = vsel %vm785, %v772, 0.0
        %v790 = vsel %vm786, %v768, 0.0
        %v791 = vsel %vm785, %v773, 0.0
        %v792 = vsel %vm786, %v769, 0.0
        %v793 = vsel %vm785, %v774, 0.0
        %v794 = vsel %vm786, %v770, 0.0
        %795 = vset.pattern.permute.xlu0 3
        %796 = vperm.xlu0 %795, %v423
        %v797 = vpop.permute.xlu0 %796
        %799 = vset.pattern.permute.xlu0 3
        %800 = vperm.xlu0 %799, %v424
        %v801 = vpop.permute.xlu0 %800
        %803 = vset.pattern.permute.xlu0 3
        %804 = vperm.xlu0 %803, %v425
        %v805 = vpop.permute.xlu0 %804
        %807 = vset.pattern.permute.xlu0 3
        %808 = vperm.xlu0 %807, %v426
        %v809 = vpop.permute.xlu0 %808
        %v811 = vmul.f32 %v787, %v797
        %v812 = vmul.f32 %v788, %v797
        %v813 = vmul.f32 %v789, %v801
        %v814 = vmul.f32 %v790, %v801
        %v815 = vmul.f32 %v791, %v805
        %v816 = vmul.f32 %v792, %v805
        %v817 = vmul.f32 %v793, %v809
        %v818 = vmul.f32 %v794, %v809
        %v819 = vadd.f32 %v742, %v811
        %v820 = vadd.f32 %v743, %v812
        %v821 = vadd.f32 %v744, %v813
        %v822 = vadd.f32 %v745, %v814
        %v823 = vadd.f32 %v746, %v815
        %v824 = vadd.f32 %v747, %v816
        %v825 = vadd.f32 %v748, %v817
        %v826 = vadd.f32 %v749, %v818
        %827 = vrot.lane.b32.xlu0 %v412, 47
        %v828 = vpop.permute.xlu0 %827
        %829 = vrot.lane.b32.xlu0 %v414, 47
        %v830 = vpop.permute.xlu0 %829
        %831 = vrot.lane.b32.xlu0 %v416, 47
        %v832 = vpop.permute.xlu0 %831
        %833 = vrot.lane.b32.xlu0 %v418, 47
        %v834 = vpop.permute.xlu0 %833
        %835 = vrot.lane.b32.xlu0 %v413, 47
        %v836 = vpop.permute.xlu0 %835
        %837 = vrot.lane.b32.xlu0 %v415, 47
        %v838 = vpop.permute.xlu0 %837
        %839 = vrot.lane.b32.xlu0 %v417, 47
        %v840 = vpop.permute.xlu0 %839
        %841 = vrot.lane.b32.xlu0 %v419, 47
        %v842 = vpop.permute.xlu0 %841
        %vm843 = vcmp.lt.s32.totalorder %v530, 47
        %v844 = vsel %vm843, %v828, %v836
        %v845 = vsel %vm843, %v830, %v838
        %v846 = vsel %vm843, %v832, %v840
        %v847 = vsel %vm843, %v834, %v842
        %v848 = vsel %vm843, %v836, %v828
        %v849 = vsel %vm843, %v838, %v830
        %v850 = vsel %vm843, %v840, %v832
        %v851 = vsel %vm843, %v842, %v834
        %vm852 = vmand %vm434, %vm468
        %v853 = vsel %vm852, 1, 0
        %v854 = vlaneseq
        %v855 = vshrl.u32 %v854, 7
        %v856 = vsub.s32 0, %v855
        %v857 = vrot.slane %v853, %v856
        %v858 = vlaneseq
        %v859 = vshrl.u32 %v858, 7
        %v860 = vsub.s32 1, %v859
        %v861 = vrot.slane %v853, %v860
        %vm862 = vcmp.eq.s32.totalorder %v857, 1
        %vm863 = vcmp.eq.s32.totalorder %v861, 1
        %v864 = vsel %vm862, %v848, 0.0
        %v865 = vsel %vm863, %v844, 0.0
        %v866 = vsel %vm862, %v849, 0.0
        %v867 = vsel %vm863, %v845, 0.0
        %v868 = vsel %vm862, %v850, 0.0
        %v869 = vsel %vm863, %v846, 0.0
        %v870 = vsel %vm862, %v851, 0.0
        %v871 = vsel %vm863, %v847, 0.0
        %872 = vset.pattern.permute.xlu0 4
        %873 = vperm.xlu0 %872, %v423
        %v874 = vpop.permute.xlu0 %873
        %876 = vset.pattern.permute.xlu0 4
        %877 = vperm.xlu0 %876, %v424
        %v878 = vpop.permute.xlu0 %877
        %880 = vset.pattern.permute.xlu0 4
        %881 = vperm.xlu0 %880, %v425
        %v882 = vpop.permute.xlu0 %881
        %884 = vset.pattern.permute.xlu0 4
        %885 = vperm.xlu0 %884, %v426
        %v886 = vpop.permute.xlu0 %885
        %v888 = vmul.f32 %v864, %v874
        %v889 = vmul.f32 %v865, %v874
        %v890 = vmul.f32 %v866, %v878
        %v891 = vmul.f32 %v867, %v878
        %v892 = vmul.f32 %v868, %v882
        %v893 = vmul.f32 %v869, %v882
        %v894 = vmul.f32 %v870, %v886
        %v895 = vmul.f32 %v871, %v886
        %v896 = vadd.f32 %v819, %v888
        %v897 = vadd.f32 %v820, %v889
        %v898 = vadd.f32 %v821, %v890
        %v899 = vadd.f32 %v822, %v891
        %v900 = vadd.f32 %v823, %v892
        %v901 = vadd.f32 %v824, %v893
        %v902 = vadd.f32 %v825, %v894
        %v903 = vadd.f32 %v826, %v895
        %904 = vrot.lane.b32.xlu0 %v412, 46
        %v905 = vpop.permute.xlu0 %904
        %906 = vrot.lane.b32.xlu0 %v414, 46
        %v907 = vpop.permute.xlu0 %906
        %908 = vrot.lane.b32.xlu0 %v416, 46
        %v909 = vpop.permute.xlu0 %908
        %910 = vrot.lane.b32.xlu0 %v418, 46
        %v911 = vpop.permute.xlu0 %910
        %912 = vrot.lane.b32.xlu0 %v413, 46
        %v913 = vpop.permute.xlu0 %912
        %914 = vrot.lane.b32.xlu0 %v415, 46
        %v915 = vpop.permute.xlu0 %914
        %916 = vrot.lane.b32.xlu0 %v417, 46
        %v917 = vpop.permute.xlu0 %916
        %918 = vrot.lane.b32.xlu0 %v419, 46
        %v919 = vpop.permute.xlu0 %918
        %vm920 = vcmp.lt.s32.totalorder %v530, 46
        %v921 = vsel %vm920, %v905, %v913
        %v922 = vsel %vm920, %v907, %v915
        %v923 = vsel %vm920, %v909, %v917
        %v924 = vsel %vm920, %v911, %v919
        %v925 = vsel %vm920, %v913, %v905
        %v926 = vsel %vm920, %v915, %v907
        %v927 = vsel %vm920, %v917, %v909
        %v928 = vsel %vm920, %v919, %v911
        %vm929 = vmand %vm434, %vm476
        %v930 = vsel %vm929, 1, 0
        %v931 = vlaneseq
        %v932 = vshrl.u32 %v931, 7
        %v933 = vsub.s32 0, %v932
        %v934 = vrot.slane %v930, %v933
        %v935 = vlaneseq
        %v936 = vshrl.u32 %v935, 7
        %v937 = vsub.s32 1, %v936
        %v938 = vrot.slane %v930, %v937
        %vm939 = vcmp.eq.s32.totalorder %v934, 1
        %vm940 = vcmp.eq.s32.totalorder %v938, 1
        %v941 = vsel %vm939, %v925, 0.0
        %v942 = vsel %vm940, %v921, 0.0
        %v943 = vsel %vm939, %v926, 0.0
        %v944 = vsel %vm940, %v922, 0.0
        %v945 = vsel %vm939, %v927, 0.0
        %v946 = vsel %vm940, %v923, 0.0
        %v947 = vsel %vm939, %v928, 0.0
        %v948 = vsel %vm940, %v924, 0.0
        %949 = vset.pattern.permute.xlu0 5
        %950 = vperm.xlu0 %949, %v423
        %v951 = vpop.permute.xlu0 %950
        %953 = vset.pattern.permute.xlu0 5
        %954 = vperm.xlu0 %953, %v424
        %v955 = vpop.permute.xlu0 %954
        %957 = vset.pattern.permute.xlu0 5
        %958 = vperm.xlu0 %957, %v425
        %v959 = vpop.permute.xlu0 %958
        %961 = vset.pattern.permute.xlu0 5
        %962 = vperm.xlu0 %961, %v426
        %v963 = vpop.permute.xlu0 %962
        %v965 = vmul.f32 %v941, %v951
        %v966 = vmul.f32 %v942, %v951
        %v967 = vmul.f32 %v943, %v955
        %v968 = vmul.f32 %v944, %v955
        %v969 = vmul.f32 %v945, %v959
        %v970 = vmul.f32 %v946, %v959
        %v971 = vmul.f32 %v947, %v963
        %v972 = vmul.f32 %v948, %v963
        %v973 = vadd.f32 %v896, %v965
        %v974 = vadd.f32 %v897, %v966
        %v975 = vadd.f32 %v898, %v967
        %v976 = vadd.f32 %v899, %v968
        %v977 = vadd.f32 %v900, %v969
        %v978 = vadd.f32 %v901, %v970
        %v979 = vadd.f32 %v902, %v971
        %v980 = vadd.f32 %v903, %v972
        %981 = vrot.lane.b32.xlu0 %v412, 45
        %v982 = vpop.permute.xlu0 %981
        %983 = vrot.lane.b32.xlu0 %v414, 45
        %v984 = vpop.permute.xlu0 %983
        %985 = vrot.lane.b32.xlu0 %v416, 45
        %v986 = vpop.permute.xlu0 %985
        %987 = vrot.lane.b32.xlu0 %v418, 45
        %v988 = vpop.permute.xlu0 %987
        %989 = vrot.lane.b32.xlu0 %v413, 45
        %v990 = vpop.permute.xlu0 %989
        %991 = vrot.lane.b32.xlu0 %v415, 45
        %v992 = vpop.permute.xlu0 %991
        %993 = vrot.lane.b32.xlu0 %v417, 45
        %v994 = vpop.permute.xlu0 %993
        %995 = vrot.lane.b32.xlu0 %v419, 45
        %v996 = vpop.permute.xlu0 %995
        %vm997 = vcmp.lt.s32.totalorder %v530, 45
        %v998 = vsel %vm997, %v982, %v990
        %v999 = vsel %vm997, %v984, %v992
        %v1000 = vsel %vm997, %v986, %v994
        %v1001 = vsel %vm997, %v988, %v996
        %v1002 = vsel %vm997, %v990, %v982
        %v1003 = vsel %vm997, %v992, %v984
        %v1004 = vsel %vm997, %v994, %v986
        %v1005 = vsel %vm997, %v996, %v988
        %vm1006 = vmand %vm434, %vm484
        %v1007 = vsel %vm1006, 1, 0
        %v1008 = vlaneseq
        %v1009 = vshrl.u32 %v1008, 7
        %v1010 = vsub.s32 0, %v1009
        %v1011 = vrot.slane %v1007, %v1010
        %v1012 = vlaneseq
        %v1013 = vshrl.u32 %v1012, 7
        %v1014 = vsub.s32 1, %v1013
        %v1015 = vrot.slane %v1007, %v1014
        %vm1016 = vcmp.eq.s32.totalorder %v1011, 1
        %vm1017 = vcmp.eq.s32.totalorder %v1015, 1
        %v1018 = vsel %vm1016, %v1002, 0.0
        %v1019 = vsel %vm1017, %v998, 0.0
        %v1020 = vsel %vm1016, %v1003, 0.0
        %v1021 = vsel %vm1017, %v999, 0.0
        %v1022 = vsel %vm1016, %v1004, 0.0
        %v1023 = vsel %vm1017, %v1000, 0.0
        %v1024 = vsel %vm1016, %v1005, 0.0
        %v1025 = vsel %vm1017, %v1001, 0.0
        %1026 = vset.pattern.permute.xlu0 6
        %1027 = vperm.xlu0 %1026, %v423
        %v1028 = vpop.permute.xlu0 %1027
        %1030 = vset.pattern.permute.xlu0 6
        %1031 = vperm.xlu0 %1030, %v424
        %v1032 = vpop.permute.xlu0 %1031
        %1034 = vset.pattern.permute.xlu0 6
        %1035 = vperm.xlu0 %1034, %v425
        %v1036 = vpop.permute.xlu0 %1035
        %1038 = vset.pattern.permute.xlu0 6
        %1039 = vperm.xlu0 %1038, %v426
        %v1040 = vpop.permute.xlu0 %1039
        %v1042 = vmul.f32 %v1018, %v1028
        %v1043 = vmul.f32 %v1019, %v1028
        %v1044 = vmul.f32 %v1020, %v1032
        %v1045 = vmul.f32 %v1021, %v1032
        %v1046 = vmul.f32 %v1022, %v1036
        %v1047 = vmul.f32 %v1023, %v1036
        %v1048 = vmul.f32 %v1024, %v1040
        %v1049 = vmul.f32 %v1025, %v1040
        %v1050 = vadd.f32 %v973, %v1042
        %v1051 = vadd.f32 %v974, %v1043
        %v1052 = vadd.f32 %v975, %v1044
        %v1053 = vadd.f32 %v976, %v1045
        %v1054 = vadd.f32 %v977, %v1046
        %v1055 = vadd.f32 %v978, %v1047
        %v1056 = vadd.f32 %v979, %v1048
        %v1057 = vadd.f32 %v980, %v1049
        %1058 = vrot.lane.b32.xlu0 %v412, 35
        %v1059 = vpop.permute.xlu0 %1058
        %1060 = vrot.lane.b32.xlu0 %v414, 35
        %v1061 = vpop.permute.xlu0 %1060
        %1062 = vrot.lane.b32.xlu0 %v416, 35
        %v1063 = vpop.permute.xlu0 %1062
        %1064 = vrot.lane.b32.xlu0 %v418, 35
        %v1065 = vpop.permute.xlu0 %1064
        %1066 = vrot.lane.b32.xlu0 %v413, 35
        %v1067 = vpop.permute.xlu0 %1066
        %1068 = vrot.lane.b32.xlu0 %v415, 35
        %v1069 = vpop.permute.xlu0 %1068
        %1070 = vrot.lane.b32.xlu0 %v417, 35
        %v1071 = vpop.permute.xlu0 %1070
        %1072 = vrot.lane.b32.xlu0 %v419, 35
        %v1073 = vpop.permute.xlu0 %1072
        %vm1074 = vcmp.lt.s32.totalorder %v530, 35
        %v1075 = vsel %vm1074, %v1059, %v1067
        %v1076 = vsel %vm1074, %v1061, %v1069
        %v1077 = vsel %vm1074, %v1063, %v1071
        %v1078 = vsel %vm1074, %v1065, %v1073
        %v1079 = vsel %vm1074, %v1067, %v1059
        %v1080 = vsel %vm1074, %v1069, %v1061
        %v1081 = vsel %vm1074, %v1071, %v1063
        %v1082 = vsel %vm1074, %v1073, %v1065
        %vm1083 = vmand %vm442, %vm438
        %v1084 = vsel %vm1083, 1, 0
        %v1085 = vlaneseq
        %v1086 = vshrl.u32 %v1085, 7
        %v1087 = vsub.s32 0, %v1086
        %v1088 = vrot.slane %v1084, %v1087
        %v1089 = vlaneseq
        %v1090 = vshrl.u32 %v1089, 7
        %v1091 = vsub.s32 1, %v1090
        %v1092 = vrot.slane %v1084, %v1091
        %vm1093 = vcmp.eq.s32.totalorder %v1088, 1
        %vm1094 = vcmp.eq.s32.totalorder %v1092, 1
        %v1095 = vsel %vm1093, %v1079, 0.0
        %v1096 = vsel %vm1094, %v1075, 0.0
        %v1097 = vsel %vm1093, %v1080, 0.0
        %v1098 = vsel %vm1094, %v1076, 0.0
        %v1099 = vsel %vm1093, %v1081, 0.0
        %v1100 = vsel %vm1094, %v1077, 0.0
        %v1101 = vsel %vm1093, %v1082, 0.0
        %v1102 = vsel %vm1094, %v1078, 0.0
        %1103 = vset.pattern.permute.xlu0 7
        %1104 = vperm.xlu0 %1103, %v423
        %v1105 = vpop.permute.xlu0 %1104
        %1107 = vset.pattern.permute.xlu0 7
        %1108 = vperm.xlu0 %1107, %v424
        %v1109 = vpop.permute.xlu0 %1108
        %1111 = vset.pattern.permute.xlu0 7
        %1112 = vperm.xlu0 %1111, %v425
        %v1113 = vpop.permute.xlu0 %1112
        %1115 = vset.pattern.permute.xlu0 7
        %1116 = vperm.xlu0 %1115, %v426
        %v1117 = vpop.permute.xlu0 %1116
        %v1119 = vmul.f32 %v1095, %v1105
        %v1120 = vmul.f32 %v1096, %v1105
        %v1121 = vmul.f32 %v1097, %v1109
        %v1122 = vmul.f32 %v1098, %v1109
        %v1123 = vmul.f32 %v1099, %v1113
        %v1124 = vmul.f32 %v1100, %v1113
        %v1125 = vmul.f32 %v1101, %v1117
        %v1126 = vmul.f32 %v1102, %v1117
        %v1127 = vadd.f32 %v1050, %v1119
        %v1128 = vadd.f32 %v1051, %v1120
        %v1129 = vadd.f32 %v1052, %v1121
        %v1130 = vadd.f32 %v1053, %v1122
        %v1131 = vadd.f32 %v1054, %v1123
        %v1132 = vadd.f32 %v1055, %v1124
        %v1133 = vadd.f32 %v1056, %v1125
        %v1134 = vadd.f32 %v1057, %v1126
        %1135 = vrot.lane.b32.xlu0 %v412, 34
        %v1136 = vpop.permute.xlu0 %1135
        %1137 = vrot.lane.b32.xlu0 %v414, 34
        %v1138 = vpop.permute.xlu0 %1137
        %1139 = vrot.lane.b32.xlu0 %v416, 34
        %v1140 = vpop.permute.xlu0 %1139
        %1141 = vrot.lane.b32.xlu0 %v418, 34
        %v1142 = vpop.permute.xlu0 %1141
        %1143 = vrot.lane.b32.xlu0 %v413, 34
        %v1144 = vpop.permute.xlu0 %1143
        %1145 = vrot.lane.b32.xlu0 %v415, 34
        %v1146 = vpop.permute.xlu0 %1145
        %1147 = vrot.lane.b32.xlu0 %v417, 34
        %v1148 = vpop.permute.xlu0 %1147
        %1149 = vrot.lane.b32.xlu0 %v419, 34
        %v1150 = vpop.permute.xlu0 %1149
        %vm1151 = vcmp.lt.s32.totalorder %v530, 34
        %v1152 = vsel %vm1151, %v1136, %v1144
        %v1153 = vsel %vm1151, %v1138, %v1146
        %v1154 = vsel %vm1151, %v1140, %v1148
        %v1155 = vsel %vm1151, %v1142, %v1150
        %v1156 = vsel %vm1151, %v1144, %v1136
        %v1157 = vsel %vm1151, %v1146, %v1138
        %v1158 = vsel %vm1151, %v1148, %v1140
        %v1159 = vsel %vm1151, %v1150, %v1142
        %vm1160 = vmand %vm442, %vm446
        %v1161 = vsel %vm1160, 1, 0
        %v1162 = vlaneseq
        %v1163 = vshrl.u32 %v1162, 7
        %v1164 = vsub.s32 0, %v1163
        %v1165 = vrot.slane %v1161, %v1164
        %v1166 = vlaneseq
        %v1167 = vshrl.u32 %v1166, 7
        %v1168 = vsub.s32 1, %v1167
        %v1169 = vrot.slane %v1161, %v1168
        %vm1170 = vcmp.eq.s32.totalorder %v1165, 1
        %vm1171 = vcmp.eq.s32.totalorder %v1169, 1
        %v1172 = vsel %vm1170, %v1156, 0.0
        %v1173 = vsel %vm1171, %v1152, 0.0
        %v1174 = vsel %vm1170, %v1157, 0.0
        %v1175 = vsel %vm1171, %v1153, 0.0
        %v1176 = vsel %vm1170, %v1158, 0.0
        %v1177 = vsel %vm1171, %v1154, 0.0
        %v1178 = vsel %vm1170, %v1159, 0.0
        %v1179 = vsel %vm1171, %v1155, 0.0
        %1180 = vset.pattern.permute.xlu0 8
        %1181 = vperm.xlu0 %1180, %v423
        %v1182 = vpop.permute.xlu0 %1181
        %1184 = vset.pattern.permute.xlu0 8
        %1185 = vperm.xlu0 %1184, %v424
        %v1186 = vpop.permute.xlu0 %1185
        %1188 = vset.pattern.permute.xlu0 8
        %1189 = vperm.xlu0 %1188, %v425
        %v1190 = vpop.permute.xlu0 %1189
        %1192 = vset.pattern.permute.xlu0 8
        %1193 = vperm.xlu0 %1192, %v426
        %v1194 = vpop.permute.xlu0 %1193
        %v1196 = vmul.f32 %v1172, %v1182
        %v1197 = vmul.f32 %v1173, %v1182
        %v1198 = vmul.f32 %v1174, %v1186
        %v1199 = vmul.f32 %v1175, %v1186
        %v1200 = vmul.f32 %v1176, %v1190
        %v1201 = vmul.f32 %v1177, %v1190
        %v1202 = vmul.f32 %v1178, %v1194
        %v1203 = vmul.f32 %v1179, %v1194
        %v1204 = vadd.f32 %v1127, %v1196
        %v1205 = vadd.f32 %v1128, %v1197
        %v1206 = vadd.f32 %v1129, %v1198
        %v1207 = vadd.f32 %v1130, %v1199
        %v1208 = vadd.f32 %v1131, %v1200
        %v1209 = vadd.f32 %v1132, %v1201
        %v1210 = vadd.f32 %v1133, %v1202
        %v1211 = vadd.f32 %v1134, %v1203
        %1212 = vrot.lane.b32.xlu0 %v412, 33
        %v1213 = vpop.permute.xlu0 %1212
        %1214 = vrot.lane.b32.xlu0 %v414, 33
        %v1215 = vpop.permute.xlu0 %1214
        %1216 = vrot.lane.b32.xlu0 %v416, 33
        %v1217 = vpop.permute.xlu0 %1216
        %1218 = vrot.lane.b32.xlu0 %v418, 33
        %v1219 = vpop.permute.xlu0 %1218
        %1220 = vrot.lane.b32.xlu0 %v413, 33
        %v1221 = vpop.permute.xlu0 %1220
        %1222 = vrot.lane.b32.xlu0 %v415, 33
        %v1223 = vpop.permute.xlu0 %1222
        %1224 = vrot.lane.b32.xlu0 %v417, 33
        %v1225 = vpop.permute.xlu0 %1224
        %1226 = vrot.lane.b32.xlu0 %v419, 33
        %v1227 = vpop.permute.xlu0 %1226
        %vm1228 = vcmp.lt.s32.totalorder %v530, 33
        %v1229 = vsel %vm1228, %v1213, %v1221
        %v1230 = vsel %vm1228, %v1215, %v1223
        %v1231 = vsel %vm1228, %v1217, %v1225
        %v1232 = vsel %vm1228, %v1219, %v1227
        %v1233 = vsel %vm1228, %v1221, %v1213
        %v1234 = vsel %vm1228, %v1223, %v1215
        %v1235 = vsel %vm1228, %v1225, %v1217
        %v1236 = vsel %vm1228, %v1227, %v1219
        %vm1237 = vmand %vm442, %vm454
        %v1238 = vsel %vm1237, 1, 0
        %v1239 = vlaneseq
        %v1240 = vshrl.u32 %v1239, 7
        %v1241 = vsub.s32 0, %v1240
        %v1242 = vrot.slane %v1238, %v1241
        %v1243 = vlaneseq
        %v1244 = vshrl.u32 %v1243, 7
        %v1245 = vsub.s32 1, %v1244
        %v1246 = vrot.slane %v1238, %v1245
        %vm1247 = vcmp.eq.s32.totalorder %v1242, 1
        %vm1248 = vcmp.eq.s32.totalorder %v1246, 1
        %v1249 = vsel %vm1247, %v1233, 0.0
        %v1250 = vsel %vm1248, %v1229, 0.0
        %v1251 = vsel %vm1247, %v1234, 0.0
        %v1252 = vsel %vm1248, %v1230, 0.0
        %v1253 = vsel %vm1247, %v1235, 0.0
        %v1254 = vsel %vm1248, %v1231, 0.0
        %v1255 = vsel %vm1247, %v1236, 0.0
        %v1256 = vsel %vm1248, %v1232, 0.0
        %1257 = vset.pattern.permute.xlu0 9
        %1258 = vperm.xlu0 %1257, %v423
        %v1259 = vpop.permute.xlu0 %1258
        %1261 = vset.pattern.permute.xlu0 9
        %1262 = vperm.xlu0 %1261, %v424
        %v1263 = vpop.permute.xlu0 %1262
        %1265 = vset.pattern.permute.xlu0 9
        %1266 = vperm.xlu0 %1265, %v425
        %v1267 = vpop.permute.xlu0 %1266
        %1269 = vset.pattern.permute.xlu0 9
        %1270 = vperm.xlu0 %1269, %v426
        %v1271 = vpop.permute.xlu0 %1270
        %v1273 = vmul.f32 %v1249, %v1259
        %v1274 = vmul.f32 %v1250, %v1259
        %v1275 = vmul.f32 %v1251, %v1263
        %v1276 = vmul.f32 %v1252, %v1263
        %v1277 = vmul.f32 %v1253, %v1267
        %v1278 = vmul.f32 %v1254, %v1267
        %v1279 = vmul.f32 %v1255, %v1271
        %v1280 = vmul.f32 %v1256, %v1271
        %v1281 = vadd.f32 %v1204, %v1273
        %v1282 = vadd.f32 %v1205, %v1274
        %v1283 = vadd.f32 %v1206, %v1275
        %v1284 = vadd.f32 %v1207, %v1276
        %v1285 = vadd.f32 %v1208, %v1277
        %v1286 = vadd.f32 %v1209, %v1278
        %v1287 = vadd.f32 %v1210, %v1279
        %v1288 = vadd.f32 %v1211, %v1280
        %1289 = vrot.lane.b32.xlu0 %v412, 32
        %v1290 = vpop.permute.xlu0 %1289
        %1291 = vrot.lane.b32.xlu0 %v414, 32
        %v1292 = vpop.permute.xlu0 %1291
        %1293 = vrot.lane.b32.xlu0 %v416, 32
        %v1294 = vpop.permute.xlu0 %1293
        %1295 = vrot.lane.b32.xlu0 %v418, 32
        %v1296 = vpop.permute.xlu0 %1295
        %1297 = vrot.lane.b32.xlu0 %v413, 32
        %v1298 = vpop.permute.xlu0 %1297
        %1299 = vrot.lane.b32.xlu0 %v415, 32
        %v1300 = vpop.permute.xlu0 %1299
        %1301 = vrot.lane.b32.xlu0 %v417, 32
        %v1302 = vpop.permute.xlu0 %1301
        %1303 = vrot.lane.b32.xlu0 %v419, 32
        %v1304 = vpop.permute.xlu0 %1303
        %vm1305 = vcmp.lt.s32.totalorder %v530, 32
        %v1306 = vsel %vm1305, %v1290, %v1298
        %v1307 = vsel %vm1305, %v1292, %v1300
        %v1308 = vsel %vm1305, %v1294, %v1302
        %v1309 = vsel %vm1305, %v1296, %v1304
        %v1310 = vsel %vm1305, %v1298, %v1290
        %v1311 = vsel %vm1305, %v1300, %v1292
        %v1312 = vsel %vm1305, %v1302, %v1294
        %v1313 = vsel %vm1305, %v1304, %v1296
        %vm1314 = vmand %vm442, %vm460
        %v1315 = vsel %vm1314, 1, 0
        %v1316 = vlaneseq
        %v1317 = vshrl.u32 %v1316, 7
        %v1318 = vsub.s32 0, %v1317
        %v1319 = vrot.slane %v1315, %v1318
        %v1320 = vlaneseq
        %v1321 = vshrl.u32 %v1320, 7
        %v1322 = vsub.s32 1, %v1321
        %v1323 = vrot.slane %v1315, %v1322
        %vm1324 = vcmp.eq.s32.totalorder %v1319, 1
        %vm1325 = vcmp.eq.s32.totalorder %v1323, 1
        %v1326 = vsel %vm1324, %v1310, 0.0
        %v1327 = vsel %vm1325, %v1306, 0.0
        %v1328 = vsel %vm1324, %v1311, 0.0
        %v1329 = vsel %vm1325, %v1307, 0.0
        %v1330 = vsel %vm1324, %v1312, 0.0
        %v1331 = vsel %vm1325, %v1308, 0.0
        %v1332 = vsel %vm1324, %v1313, 0.0
        %v1333 = vsel %vm1325, %v1309, 0.0
        %1334 = vset.pattern.permute.xlu0 10
        %1335 = vperm.xlu0 %1334, %v423
        %v1336 = vpop.permute.xlu0 %1335
        %1338 = vset.pattern.permute.xlu0 10
        %1339 = vperm.xlu0 %1338, %v424
        %v1340 = vpop.permute.xlu0 %1339
        %1342 = vset.pattern.permute.xlu0 10
        %1343 = vperm.xlu0 %1342, %v425
        %v1344 = vpop.permute.xlu0 %1343
        %1346 = vset.pattern.permute.xlu0 10
        %1347 = vperm.xlu0 %1346, %v426
        %v1348 = vpop.permute.xlu0 %1347
        %v1350 = vmul.f32 %v1326, %v1336
        %v1351 = vmul.f32 %v1327, %v1336
        %v1352 = vmul.f32 %v1328, %v1340
        %v1353 = vmul.f32 %v1329, %v1340
        %v1354 = vmul.f32 %v1330, %v1344
        %v1355 = vmul.f32 %v1331, %v1344
        %v1356 = vmul.f32 %v1332, %v1348
        %v1357 = vmul.f32 %v1333, %v1348
        %v1358 = vadd.f32 %v1281, %v1350
        %v1359 = vadd.f32 %v1282, %v1351
        %v1360 = vadd.f32 %v1283, %v1352
        %v1361 = vadd.f32 %v1284, %v1353
        %v1362 = vadd.f32 %v1285, %v1354
        %v1363 = vadd.f32 %v1286, %v1355
        %v1364 = vadd.f32 %v1287, %v1356
        %v1365 = vadd.f32 %v1288, %v1357
        %1366 = vrot.lane.b32.xlu0 %v412, 31
        %v1367 = vpop.permute.xlu0 %1366
        %1368 = vrot.lane.b32.xlu0 %v414, 31
        %v1369 = vpop.permute.xlu0 %1368
        %1370 = vrot.lane.b32.xlu0 %v416, 31
        %v1371 = vpop.permute.xlu0 %1370
        %1372 = vrot.lane.b32.xlu0 %v418, 31
        %v1373 = vpop.permute.xlu0 %1372
        %1374 = vrot.lane.b32.xlu0 %v413, 31
        %v1375 = vpop.permute.xlu0 %1374
        %1376 = vrot.lane.b32.xlu0 %v415, 31
        %v1377 = vpop.permute.xlu0 %1376
        %1378 = vrot.lane.b32.xlu0 %v417, 31
        %v1379 = vpop.permute.xlu0 %1378
        %1380 = vrot.lane.b32.xlu0 %v419, 31
        %v1381 = vpop.permute.xlu0 %1380
        %vm1382 = vcmp.lt.s32.totalorder %v530, 31
        %v1383 = vsel %vm1382, %v1367, %v1375
        %v1384 = vsel %vm1382, %v1369, %v1377
        %v1385 = vsel %vm1382, %v1371, %v1379
        %v1386 = vsel %vm1382, %v1373, %v1381
        %v1387 = vsel %vm1382, %v1375, %v1367
        %v1388 = vsel %vm1382, %v1377, %v1369
        %v1389 = vsel %vm1382, %v1379, %v1371
        %v1390 = vsel %vm1382, %v1381, %v1373
        %vm1391 = vmand %vm442, %vm468
        %v1392 = vsel %vm1391, 1, 0
        %v1393 = vlaneseq
        %v1394 = vshrl.u32 %v1393, 7
        %v1395 = vsub.s32 0, %v1394
        %v1396 = vrot.slane %v1392, %v1395
        %v1397 = vlaneseq
        %v1398 = vshrl.u32 %v1397, 7
        %v1399 = vsub.s32 1, %v1398
        %v1400 = vrot.slane %v1392, %v1399
        %vm1401 = vcmp.eq.s32.totalorder %v1396, 1
        %vm1402 = vcmp.eq.s32.totalorder %v1400, 1
        %v1403 = vsel %vm1401, %v1387, 0.0
        %v1404 = vsel %vm1402, %v1383, 0.0
        %v1405 = vsel %vm1401, %v1388, 0.0
        %v1406 = vsel %vm1402, %v1384, 0.0
        %v1407 = vsel %vm1401, %v1389, 0.0
        %v1408 = vsel %vm1402, %v1385, 0.0
        %v1409 = vsel %vm1401, %v1390, 0.0
        %v1410 = vsel %vm1402, %v1386, 0.0
        %1411 = vset.pattern.permute.xlu0 11
        %1412 = vperm.xlu0 %1411, %v423
        %v1413 = vpop.permute.xlu0 %1412
        %1415 = vset.pattern.permute.xlu0 11
        %1416 = vperm.xlu0 %1415, %v424
        %v1417 = vpop.permute.xlu0 %1416
        %1419 = vset.pattern.permute.xlu0 11
        %1420 = vperm.xlu0 %1419, %v425
        %v1421 = vpop.permute.xlu0 %1420
        %1423 = vset.pattern.permute.xlu0 11
        %1424 = vperm.xlu0 %1423, %v426
        %v1425 = vpop.permute.xlu0 %1424
        %v1427 = vmul.f32 %v1403, %v1413
        %v1428 = vmul.f32 %v1404, %v1413
        %v1429 = vmul.f32 %v1405, %v1417
        %v1430 = vmul.f32 %v1406, %v1417
        %v1431 = vmul.f32 %v1407, %v1421
        %v1432 = vmul.f32 %v1408, %v1421
        %v1433 = vmul.f32 %v1409, %v1425
        %v1434 = vmul.f32 %v1410, %v1425
        %v1435 = vadd.f32 %v1358, %v1427
        %v1436 = vadd.f32 %v1359, %v1428
        %v1437 = vadd.f32 %v1360, %v1429
        %v1438 = vadd.f32 %v1361, %v1430
        %v1439 = vadd.f32 %v1362, %v1431
        %v1440 = vadd.f32 %v1363, %v1432
        %v1441 = vadd.f32 %v1364, %v1433
        %v1442 = vadd.f32 %v1365, %v1434
        %1443 = vrot.lane.b32.xlu0 %v412, 30
        %v1444 = vpop.permute.xlu0 %1443
        %1445 = vrot.lane.b32.xlu0 %v414, 30
        %v1446 = vpop.permute.xlu0 %1445
        %1447 = vrot.lane.b32.xlu0 %v416, 30
        %v1448 = vpop.permute.xlu0 %1447
        %1449 = vrot.lane.b32.xlu0 %v418, 30
        %v1450 = vpop.permute.xlu0 %1449
        %1451 = vrot.lane.b32.xlu0 %v413, 30
        %v1452 = vpop.permute.xlu0 %1451
        %1453 = vrot.lane.b32.xlu0 %v415, 30
        %v1454 = vpop.permute.xlu0 %1453
        %1455 = vrot.lane.b32.xlu0 %v417, 30
        %v1456 = vpop.permute.xlu0 %1455
        %1457 = vrot.lane.b32.xlu0 %v419, 30
        %v1458 = vpop.permute.xlu0 %1457
        %vm1459 = vcmp.lt.s32.totalorder %v530, 30
        %v1460 = vsel %vm1459, %v1444, %v1452
        %v1461 = vsel %vm1459, %v1446, %v1454
        %v1462 = vsel %vm1459, %v1448, %v1456
        %v1463 = vsel %vm1459, %v1450, %v1458
        %v1464 = vsel %vm1459, %v1452, %v1444
        %v1465 = vsel %vm1459, %v1454, %v1446
        %v1466 = vsel %vm1459, %v1456, %v1448
        %v1467 = vsel %vm1459, %v1458, %v1450
        %vm1468 = vmand %vm442, %vm476
        %v1469 = vsel %vm1468, 1, 0
        %v1470 = vlaneseq
        %v1471 = vshrl.u32 %v1470, 7
        %v1472 = vsub.s32 0, %v1471
        %v1473 = vrot.slane %v1469, %v1472
        %v1474 = vlaneseq
        %v1475 = vshrl.u32 %v1474, 7
        %v1476 = vsub.s32 1, %v1475
        %v1477 = vrot.slane %v1469, %v1476
        %vm1478 = vcmp.eq.s32.totalorder %v1473, 1
        %vm1479 = vcmp.eq.s32.totalorder %v1477, 1
        %v1480 = vsel %vm1478, %v1464, 0.0
        %v1481 = vsel %vm1479, %v1460, 0.0
        %v1482 = vsel %vm1478, %v1465, 0.0
        %v1483 = vsel %vm1479, %v1461, 0.0
        %v1484 = vsel %vm1478, %v1466, 0.0
        %v1485 = vsel %vm1479, %v1462, 0.0
        %v1486 = vsel %vm1478, %v1467, 0.0
        %v1487 = vsel %vm1479, %v1463, 0.0
        %1488 = vset.pattern.permute.xlu0 12
        %1489 = vperm.xlu0 %1488, %v423
        %v1490 = vpop.permute.xlu0 %1489
        %1492 = vset.pattern.permute.xlu0 12
        %1493 = vperm.xlu0 %1492, %v424
        %v1494 = vpop.permute.xlu0 %1493
        %1496 = vset.pattern.permute.xlu0 12
        %1497 = vperm.xlu0 %1496, %v425
        %v1498 = vpop.permute.xlu0 %1497
        %1500 = vset.pattern.permute.xlu0 12
        %1501 = vperm.xlu0 %1500, %v426
        %v1502 = vpop.permute.xlu0 %1501
        %v1504 = vmul.f32 %v1480, %v1490
        %v1505 = vmul.f32 %v1481, %v1490
        %v1506 = vmul.f32 %v1482, %v1494
        %v1507 = vmul.f32 %v1483, %v1494
        %v1508 = vmul.f32 %v1484, %v1498
        %v1509 = vmul.f32 %v1485, %v1498
        %v1510 = vmul.f32 %v1486, %v1502
        %v1511 = vmul.f32 %v1487, %v1502
        %v1512 = vadd.f32 %v1435, %v1504
        %v1513 = vadd.f32 %v1436, %v1505
        %v1514 = vadd.f32 %v1437, %v1506
        %v1515 = vadd.f32 %v1438, %v1507
        %v1516 = vadd.f32 %v1439, %v1508
        %v1517 = vadd.f32 %v1440, %v1509
        %v1518 = vadd.f32 %v1441, %v1510
        %v1519 = vadd.f32 %v1442, %v1511
        %1520 = vrot.lane.b32.xlu0 %v412, 29
        %v1521 = vpop.permute.xlu0 %1520
        %1522 = vrot.lane.b32.xlu0 %v414, 29
        %v1523 = vpop.permute.xlu0 %1522
        %1524 = vrot.lane.b32.xlu0 %v416, 29
        %v1525 = vpop.permute.xlu0 %1524
        %1526 = vrot.lane.b32.xlu0 %v418, 29
        %v1527 = vpop.permute.xlu0 %1526
        %1528 = vrot.lane.b32.xlu0 %v413, 29
        %v1529 = vpop.permute.xlu0 %1528
        %1530 = vrot.lane.b32.xlu0 %v415, 29
        %v1531 = vpop.permute.xlu0 %1530
        %1532 = vrot.lane.b32.xlu0 %v417, 29
        %v1533 = vpop.permute.xlu0 %1532
        %1534 = vrot.lane.b32.xlu0 %v419, 29
        %v1535 = vpop.permute.xlu0 %1534
        %vm1536 = vcmp.lt.s32.totalorder %v530, 29
        %v1537 = vsel %vm1536, %v1521, %v1529
        %v1538 = vsel %vm1536, %v1523, %v1531
        %v1539 = vsel %vm1536, %v1525, %v1533
        %v1540 = vsel %vm1536, %v1527, %v1535
        %v1541 = vsel %vm1536, %v1529, %v1521
        %v1542 = vsel %vm1536, %v1531, %v1523
        %v1543 = vsel %vm1536, %v1533, %v1525
        %v1544 = vsel %vm1536, %v1535, %v1527
        %vm1545 = vmand %vm442, %vm484
        %v1546 = vsel %vm1545, 1, 0
        %v1547 = vlaneseq
        %v1548 = vshrl.u32 %v1547, 7
        %v1549 = vsub.s32 0, %v1548
        %v1550 = vrot.slane %v1546, %v1549
        %v1551 = vlaneseq
        %v1552 = vshrl.u32 %v1551, 7
        %v1553 = vsub.s32 1, %v1552
        %v1554 = vrot.slane %v1546, %v1553
        %vm1555 = vcmp.eq.s32.totalorder %v1550, 1
        %vm1556 = vcmp.eq.s32.totalorder %v1554, 1
        %v1557 = vsel %vm1555, %v1541, 0.0
        %v1558 = vsel %vm1556, %v1537, 0.0
        %v1559 = vsel %vm1555, %v1542, 0.0
        %v1560 = vsel %vm1556, %v1538, 0.0
        %v1561 = vsel %vm1555, %v1543, 0.0
        %v1562 = vsel %vm1556, %v1539, 0.0
        %v1563 = vsel %vm1555, %v1544, 0.0
        %v1564 = vsel %vm1556, %v1540, 0.0
        %1565 = vset.pattern.permute.xlu0 13
        %1566 = vperm.xlu0 %1565, %v423
        %v1567 = vpop.permute.xlu0 %1566
        %1569 = vset.pattern.permute.xlu0 13
        %1570 = vperm.xlu0 %1569, %v424
        %v1571 = vpop.permute.xlu0 %1570
        %1573 = vset.pattern.permute.xlu0 13
        %1574 = vperm.xlu0 %1573, %v425
        %v1575 = vpop.permute.xlu0 %1574
        %1577 = vset.pattern.permute.xlu0 13
        %1578 = vperm.xlu0 %1577, %v426
        %v1579 = vpop.permute.xlu0 %1578
        %v1581 = vmul.f32 %v1557, %v1567
        %v1582 = vmul.f32 %v1558, %v1567
        %v1583 = vmul.f32 %v1559, %v1571
        %v1584 = vmul.f32 %v1560, %v1571
        %v1585 = vmul.f32 %v1561, %v1575
        %v1586 = vmul.f32 %v1562, %v1575
        %v1587 = vmul.f32 %v1563, %v1579
        %v1588 = vmul.f32 %v1564, %v1579
        %v1589 = vadd.f32 %v1512, %v1581
        %v1590 = vadd.f32 %v1513, %v1582
        %v1591 = vadd.f32 %v1514, %v1583
        %v1592 = vadd.f32 %v1515, %v1584
        %v1593 = vadd.f32 %v1516, %v1585
        %v1594 = vadd.f32 %v1517, %v1586
        %v1595 = vadd.f32 %v1518, %v1587
        %v1596 = vadd.f32 %v1519, %v1588
        %1597 = vrot.lane.b32.xlu0 %v412, 19
        %v1598 = vpop.permute.xlu0 %1597
        %1599 = vrot.lane.b32.xlu0 %v414, 19
        %v1600 = vpop.permute.xlu0 %1599
        %1601 = vrot.lane.b32.xlu0 %v416, 19
        %v1602 = vpop.permute.xlu0 %1601
        %1603 = vrot.lane.b32.xlu0 %v418, 19
        %v1604 = vpop.permute.xlu0 %1603
        %1605 = vrot.lane.b32.xlu0 %v413, 19
        %v1606 = vpop.permute.xlu0 %1605
        %1607 = vrot.lane.b32.xlu0 %v415, 19
        %v1608 = vpop.permute.xlu0 %1607
        %1609 = vrot.lane.b32.xlu0 %v417, 19
        %v1610 = vpop.permute.xlu0 %1609
        %1611 = vrot.lane.b32.xlu0 %v419, 19
        %v1612 = vpop.permute.xlu0 %1611
        %vm1613 = vcmp.lt.s32.totalorder %v530, 19
        %v1614 = vsel %vm1613, %v1598, %v1606
        %v1615 = vsel %vm1613, %v1600, %v1608
        %v1616 = vsel %vm1613, %v1602, %v1610
        %v1617 = vsel %vm1613, %v1604, %v1612
        %v1618 = vsel %vm1613, %v1606, %v1598
        %v1619 = vsel %vm1613, %v1608, %v1600
        %v1620 = vsel %vm1613, %v1610, %v1602
        %v1621 = vsel %vm1613, %v1612, %v1604
        %vm1622 = vmand %vm450, %vm438
        %v1623 = vsel %vm1622, 1, 0
        %v1624 = vlaneseq
        %v1625 = vshrl.u32 %v1624, 7
        %v1626 = vsub.s32 0, %v1625
        %v1627 = vrot.slane %v1623, %v1626
        %v1628 = vlaneseq
        %v1629 = vshrl.u32 %v1628, 7
        %v1630 = vsub.s32 1, %v1629
        %v1631 = vrot.slane %v1623, %v1630
        %vm1632 = vcmp.eq.s32.totalorder %v1627, 1
        %vm1633 = vcmp.eq.s32.totalorder %v1631, 1
        %v1634 = vsel %vm1632, %v1618, 0.0
        %v1635 = vsel %vm1633, %v1614, 0.0
        %v1636 = vsel %vm1632, %v1619, 0.0
        %v1637 = vsel %vm1633, %v1615, 0.0
        %v1638 = vsel %vm1632, %v1620, 0.0
        %v1639 = vsel %vm1633, %v1616, 0.0
        %v1640 = vsel %vm1632, %v1621, 0.0
        %v1641 = vsel %vm1633, %v1617, 0.0
        %1642 = vset.pattern.permute.xlu0 14
        %1643 = vperm.xlu0 %1642, %v423
        %v1644 = vpop.permute.xlu0 %1643
        %1646 = vset.pattern.permute.xlu0 14
        %1647 = vperm.xlu0 %1646, %v424
        %v1648 = vpop.permute.xlu0 %1647
        %1650 = vset.pattern.permute.xlu0 14
        %1651 = vperm.xlu0 %1650, %v425
        %v1652 = vpop.permute.xlu0 %1651
        %1654 = vset.pattern.permute.xlu0 14
        %1655 = vperm.xlu0 %1654, %v426
        %v1656 = vpop.permute.xlu0 %1655
        %v1658 = vmul.f32 %v1634, %v1644
        %v1659 = vmul.f32 %v1635, %v1644
        %v1660 = vmul.f32 %v1636, %v1648
        %v1661 = vmul.f32 %v1637, %v1648
        %v1662 = vmul.f32 %v1638, %v1652
        %v1663 = vmul.f32 %v1639, %v1652
        %v1664 = vmul.f32 %v1640, %v1656
        %v1665 = vmul.f32 %v1641, %v1656
        %v1666 = vadd.f32 %v1589, %v1658
        %v1667 = vadd.f32 %v1590, %v1659
        %v1668 = vadd.f32 %v1591, %v1660
        %v1669 = vadd.f32 %v1592, %v1661
        %v1670 = vadd.f32 %v1593, %v1662
        %v1671 = vadd.f32 %v1594, %v1663
        %v1672 = vadd.f32 %v1595, %v1664
        %v1673 = vadd.f32 %v1596, %v1665
        %1674 = vrot.lane.b32.xlu0 %v412, 18
        %v1675 = vpop.permute.xlu0 %1674
        %1676 = vrot.lane.b32.xlu0 %v414, 18
        %v1677 = vpop.permute.xlu0 %1676
        %1678 = vrot.lane.b32.xlu0 %v416, 18
        %v1679 = vpop.permute.xlu0 %1678
        %1680 = vrot.lane.b32.xlu0 %v418, 18
        %v1681 = vpop.permute.xlu0 %1680
        %1682 = vrot.lane.b32.xlu0 %v413, 18
        %v1683 = vpop.permute.xlu0 %1682
        %1684 = vrot.lane.b32.xlu0 %v415, 18
        %v1685 = vpop.permute.xlu0 %1684
        %1686 = vrot.lane.b32.xlu0 %v417, 18
        %v1687 = vpop.permute.xlu0 %1686
        %1688 = vrot.lane.b32.xlu0 %v419, 18
        %v1689 = vpop.permute.xlu0 %1688
        %vm1690 = vcmp.lt.s32.totalorder %v530, 18
        %v1691 = vsel %vm1690, %v1675, %v1683
        %v1692 = vsel %vm1690, %v1677, %v1685
        %v1693 = vsel %vm1690, %v1679, %v1687
        %v1694 = vsel %vm1690, %v1681, %v1689
        %v1695 = vsel %vm1690, %v1683, %v1675
        %v1696 = vsel %vm1690, %v1685, %v1677
        %v1697 = vsel %vm1690, %v1687, %v1679
        %v1698 = vsel %vm1690, %v1689, %v1681
        %vm1699 = vmand %vm450, %vm446
        %v1700 = vsel %vm1699, 1, 0
        %v1701 = vlaneseq
        %v1702 = vshrl.u32 %v1701, 7
        %v1703 = vsub.s32 0, %v1702
        %v1704 = vrot.slane %v1700, %v1703
        %v1705 = vlaneseq
        %v1706 = vshrl.u32 %v1705, 7
        %v1707 = vsub.s32 1, %v1706
        %v1708 = vrot.slane %v1700, %v1707
        %vm1709 = vcmp.eq.s32.totalorder %v1704, 1
        %vm1710 = vcmp.eq.s32.totalorder %v1708, 1
        %v1711 = vsel %vm1709, %v1695, 0.0
        %v1712 = vsel %vm1710, %v1691, 0.0
        %v1713 = vsel %vm1709, %v1696, 0.0
        %v1714 = vsel %vm1710, %v1692, 0.0
        %v1715 = vsel %vm1709, %v1697, 0.0
        %v1716 = vsel %vm1710, %v1693, 0.0
        %v1717 = vsel %vm1709, %v1698, 0.0
        %v1718 = vsel %vm1710, %v1694, 0.0
        %1719 = vset.pattern.permute.xlu0 15
        %1720 = vperm.xlu0 %1719, %v423
        %v1721 = vpop.permute.xlu0 %1720
        %1723 = vset.pattern.permute.xlu0 15
        %1724 = vperm.xlu0 %1723, %v424
        %v1725 = vpop.permute.xlu0 %1724
        %1727 = vset.pattern.permute.xlu0 15
        %1728 = vperm.xlu0 %1727, %v425
        %v1729 = vpop.permute.xlu0 %1728
        %1731 = vset.pattern.permute.xlu0 15
        %1732 = vperm.xlu0 %1731, %v426
        %v1733 = vpop.permute.xlu0 %1732
        %v1735 = vmul.f32 %v1711, %v1721
        %v1736 = vmul.f32 %v1712, %v1721
        %v1737 = vmul.f32 %v1713, %v1725
        %v1738 = vmul.f32 %v1714, %v1725
        %v1739 = vmul.f32 %v1715, %v1729
        %v1740 = vmul.f32 %v1716, %v1729
        %v1741 = vmul.f32 %v1717, %v1733
        %v1742 = vmul.f32 %v1718, %v1733
        %v1743 = vadd.f32 %v1666, %v1735
        %v1744 = vadd.f32 %v1667, %v1736
        %v1745 = vadd.f32 %v1668, %v1737
        %v1746 = vadd.f32 %v1669, %v1738
        %v1747 = vadd.f32 %v1670, %v1739
        %v1748 = vadd.f32 %v1671, %v1740
        %v1749 = vadd.f32 %v1672, %v1741
        %v1750 = vadd.f32 %v1673, %v1742
        %1751 = vrot.lane.b32.xlu0 %v412, 17
        %v1752 = vpop.permute.xlu0 %1751
        %1753 = vrot.lane.b32.xlu0 %v414, 17
        %v1754 = vpop.permute.xlu0 %1753
        %1755 = vrot.lane.b32.xlu0 %v416, 17
        %v1756 = vpop.permute.xlu0 %1755
        %1757 = vrot.lane.b32.xlu0 %v418, 17
        %v1758 = vpop.permute.xlu0 %1757
        %1759 = vrot.lane.b32.xlu0 %v413, 17
        %v1760 = vpop.permute.xlu0 %1759
        %1761 = vrot.lane.b32.xlu0 %v415, 17
        %v1762 = vpop.permute.xlu0 %1761
        %1763 = vrot.lane.b32.xlu0 %v417, 17
        %v1764 = vpop.permute.xlu0 %1763
        %1765 = vrot.lane.b32.xlu0 %v419, 17
        %v1766 = vpop.permute.xlu0 %1765
        %vm1767 = vcmp.lt.s32.totalorder %v530, 17
        %v1768 = vsel %vm1767, %v1752, %v1760
        %v1769 = vsel %vm1767, %v1754, %v1762
        %v1770 = vsel %vm1767, %v1756, %v1764
        %v1771 = vsel %vm1767, %v1758, %v1766
        %v1772 = vsel %vm1767, %v1760, %v1752
        %v1773 = vsel %vm1767, %v1762, %v1754
        %v1774 = vsel %vm1767, %v1764, %v1756
        %v1775 = vsel %vm1767, %v1766, %v1758
        %vm1776 = vmand %vm450, %vm454
        %v1777 = vsel %vm1776, 1, 0
        %v1778 = vlaneseq
        %v1779 = vshrl.u32 %v1778, 7
        %v1780 = vsub.s32 0, %v1779
        %v1781 = vrot.slane %v1777, %v1780
        %v1782 = vlaneseq
        %v1783 = vshrl.u32 %v1782, 7
        %v1784 = vsub.s32 1, %v1783
        %v1785 = vrot.slane %v1777, %v1784
        %vm1786 = vcmp.eq.s32.totalorder %v1781, 1
        %vm1787 = vcmp.eq.s32.totalorder %v1785, 1
        %v1788 = vsel %vm1786, %v1772, 0.0
        %v1789 = vsel %vm1787, %v1768, 0.0
        %v1790 = vsel %vm1786, %v1773, 0.0
        %v1791 = vsel %vm1787, %v1769, 0.0
        %v1792 = vsel %vm1786, %v1774, 0.0
        %v1793 = vsel %vm1787, %v1770, 0.0
        %v1794 = vsel %vm1786, %v1775, 0.0
        %v1795 = vsel %vm1787, %v1771, 0.0
        %1796 = vset.pattern.permute.xlu0 16
        %1797 = vperm.xlu0 %1796, %v423
        %v1798 = vpop.permute.xlu0 %1797
        %1800 = vset.pattern.permute.xlu0 16
        %1801 = vperm.xlu0 %1800, %v424
        %v1802 = vpop.permute.xlu0 %1801
        %1804 = vset.pattern.permute.xlu0 16
        %1805 = vperm.xlu0 %1804, %v425
        %v1806 = vpop.permute.xlu0 %1805
        %1808 = vset.pattern.permute.xlu0 16
        %1809 = vperm.xlu0 %1808, %v426
        %v1810 = vpop.permute.xlu0 %1809
        %v1812 = vmul.f32 %v1788, %v1798
        %v1813 = vmul.f32 %v1789, %v1798
        %v1814 = vmul.f32 %v1790, %v1802
        %v1815 = vmul.f32 %v1791, %v1802
        %v1816 = vmul.f32 %v1792, %v1806
        %v1817 = vmul.f32 %v1793, %v1806
        %v1818 = vmul.f32 %v1794, %v1810
        %v1819 = vmul.f32 %v1795, %v1810
        %v1820 = vadd.f32 %v1743, %v1812
        %v1821 = vadd.f32 %v1744, %v1813
        %v1822 = vadd.f32 %v1745, %v1814
        %v1823 = vadd.f32 %v1746, %v1815
        %v1824 = vadd.f32 %v1747, %v1816
        %v1825 = vadd.f32 %v1748, %v1817
        %v1826 = vadd.f32 %v1749, %v1818
        %v1827 = vadd.f32 %v1750, %v1819
        %1828 = vrot.lane.b32.xlu0 %v412, 16
        %v1829 = vpop.permute.xlu0 %1828
        %1830 = vrot.lane.b32.xlu0 %v414, 16
        %v1831 = vpop.permute.xlu0 %1830
        %1832 = vrot.lane.b32.xlu0 %v416, 16
        %v1833 = vpop.permute.xlu0 %1832
        %1834 = vrot.lane.b32.xlu0 %v418, 16
        %v1835 = vpop.permute.xlu0 %1834
        %1836 = vrot.lane.b32.xlu0 %v413, 16
        %v1837 = vpop.permute.xlu0 %1836
        %1838 = vrot.lane.b32.xlu0 %v415, 16
        %v1839 = vpop.permute.xlu0 %1838
        %1840 = vrot.lane.b32.xlu0 %v417, 16
        %v1841 = vpop.permute.xlu0 %1840
        %1842 = vrot.lane.b32.xlu0 %v419, 16
        %v1843 = vpop.permute.xlu0 %1842
        %vm1844 = vcmp.lt.s32.totalorder %v530, 16
        %v1845 = vsel %vm1844, %v1829, %v1837
        %v1846 = vsel %vm1844, %v1831, %v1839
        %v1847 = vsel %vm1844, %v1833, %v1841
        %v1848 = vsel %vm1844, %v1835, %v1843
        %v1849 = vsel %vm1844, %v1837, %v1829
        %v1850 = vsel %vm1844, %v1839, %v1831
        %v1851 = vsel %vm1844, %v1841, %v1833
        %v1852 = vsel %vm1844, %v1843, %v1835
        %vm1853 = vmand %vm450, %vm460
        %v1854 = vsel %vm1853, 1, 0
        %v1855 = vlaneseq
        %v1856 = vshrl.u32 %v1855, 7
        %v1857 = vsub.s32 0, %v1856
        %v1858 = vrot.slane %v1854, %v1857
        %v1859 = vlaneseq
        %v1860 = vshrl.u32 %v1859, 7
        %v1861 = vsub.s32 1, %v1860
        %v1862 = vrot.slane %v1854, %v1861
        %vm1863 = vcmp.eq.s32.totalorder %v1858, 1
        %vm1864 = vcmp.eq.s32.totalorder %v1862, 1
        %v1865 = vsel %vm1863, %v1849, 0.0
        %v1866 = vsel %vm1864, %v1845, 0.0
        %v1867 = vsel %vm1863, %v1850, 0.0
        %v1868 = vsel %vm1864, %v1846, 0.0
        %v1869 = vsel %vm1863, %v1851, 0.0
        %v1870 = vsel %vm1864, %v1847, 0.0
        %v1871 = vsel %vm1863, %v1852, 0.0
        %v1872 = vsel %vm1864, %v1848, 0.0
        %1873 = vset.pattern.permute.xlu0 17
        %1874 = vperm.xlu0 %1873, %v423
        %v1875 = vpop.permute.xlu0 %1874
        %1877 = vset.pattern.permute.xlu0 17
        %1878 = vperm.xlu0 %1877, %v424
        %v1879 = vpop.permute.xlu0 %1878
        %1881 = vset.pattern.permute.xlu0 17
        %1882 = vperm.xlu0 %1881, %v425
        %v1883 = vpop.permute.xlu0 %1882
        %1885 = vset.pattern.permute.xlu0 17
        %1886 = vperm.xlu0 %1885, %v426
        %v1887 = vpop.permute.xlu0 %1886
        %v1889 = vmul.f32 %v1865, %v1875
        %v1890 = vmul.f32 %v1866, %v1875
        %v1891 = vmul.f32 %v1867, %v1879
        %v1892 = vmul.f32 %v1868, %v1879
        %v1893 = vmul.f32 %v1869, %v1883
        %v1894 = vmul.f32 %v1870, %v1883
        %v1895 = vmul.f32 %v1871, %v1887
        %v1896 = vmul.f32 %v1872, %v1887
        %v1897 = vadd.f32 %v1820, %v1889
        %v1898 = vadd.f32 %v1821, %v1890
        %v1899 = vadd.f32 %v1822, %v1891
        %v1900 = vadd.f32 %v1823, %v1892
        %v1901 = vadd.f32 %v1824, %v1893
        %v1902 = vadd.f32 %v1825, %v1894
        %v1903 = vadd.f32 %v1826, %v1895
        %v1904 = vadd.f32 %v1827, %v1896
        %1905 = vrot.lane.b32.xlu0 %v412, 15
        %v1906 = vpop.permute.xlu0 %1905
        %1907 = vrot.lane.b32.xlu0 %v414, 15
        %v1908 = vpop.permute.xlu0 %1907
        %1909 = vrot.lane.b32.xlu0 %v416, 15
        %v1910 = vpop.permute.xlu0 %1909
        %1911 = vrot.lane.b32.xlu0 %v418, 15
        %v1912 = vpop.permute.xlu0 %1911
        %1913 = vrot.lane.b32.xlu0 %v413, 15
        %v1914 = vpop.permute.xlu0 %1913
        %1915 = vrot.lane.b32.xlu0 %v415, 15
        %v1916 = vpop.permute.xlu0 %1915
        %1917 = vrot.lane.b32.xlu0 %v417, 15
        %v1918 = vpop.permute.xlu0 %1917
        %1919 = vrot.lane.b32.xlu0 %v419, 15
        %v1920 = vpop.permute.xlu0 %1919
        %vm1921 = vcmp.lt.s32.totalorder %v530, 15
        %v1922 = vsel %vm1921, %v1906, %v1914
        %v1923 = vsel %vm1921, %v1908, %v1916
        %v1924 = vsel %vm1921, %v1910, %v1918
        %v1925 = vsel %vm1921, %v1912, %v1920
        %v1926 = vsel %vm1921, %v1914, %v1906
        %v1927 = vsel %vm1921, %v1916, %v1908
        %v1928 = vsel %vm1921, %v1918, %v1910
        %v1929 = vsel %vm1921, %v1920, %v1912
        %vm1930 = vmand %vm450, %vm468
        %v1931 = vsel %vm1930, 1, 0
        %v1932 = vlaneseq
        %v1933 = vshrl.u32 %v1932, 7
        %v1934 = vsub.s32 0, %v1933
        %v1935 = vrot.slane %v1931, %v1934
        %v1936 = vlaneseq
        %v1937 = vshrl.u32 %v1936, 7
        %v1938 = vsub.s32 1, %v1937
        %v1939 = vrot.slane %v1931, %v1938
        %vm1940 = vcmp.eq.s32.totalorder %v1935, 1
        %vm1941 = vcmp.eq.s32.totalorder %v1939, 1
        %v1942 = vsel %vm1940, %v1926, 0.0
        %v1943 = vsel %vm1941, %v1922, 0.0
        %v1944 = vsel %vm1940, %v1927, 0.0
        %v1945 = vsel %vm1941, %v1923, 0.0
        %v1946 = vsel %vm1940, %v1928, 0.0
        %v1947 = vsel %vm1941, %v1924, 0.0
        %v1948 = vsel %vm1940, %v1929, 0.0
        %v1949 = vsel %vm1941, %v1925, 0.0
        %1950 = vset.pattern.permute.xlu0 18
        %1951 = vperm.xlu0 %1950, %v423
        %v1952 = vpop.permute.xlu0 %1951
        %1954 = vset.pattern.permute.xlu0 18
        %1955 = vperm.xlu0 %1954, %v424
        %v1956 = vpop.permute.xlu0 %1955
        %1958 = vset.pattern.permute.xlu0 18
        %1959 = vperm.xlu0 %1958, %v425
        %v1960 = vpop.permute.xlu0 %1959
        %1962 = vset.pattern.permute.xlu0 18
        %1963 = vperm.xlu0 %1962, %v426
        %v1964 = vpop.permute.xlu0 %1963
        %v1966 = vmul.f32 %v1942, %v1952
        %v1967 = vmul.f32 %v1943, %v1952
        %v1968 = vmul.f32 %v1944, %v1956
        %v1969 = vmul.f32 %v1945, %v1956
        %v1970 = vmul.f32 %v1946, %v1960
        %v1971 = vmul.f32 %v1947, %v1960
        %v1972 = vmul.f32 %v1948, %v1964
        %v1973 = vmul.f32 %v1949, %v1964
        %v1974 = vadd.f32 %v1897, %v1966
        %v1975 = vadd.f32 %v1898, %v1967
        %v1976 = vadd.f32 %v1899, %v1968
        %v1977 = vadd.f32 %v1900, %v1969
        %v1978 = vadd.f32 %v1901, %v1970
        %v1979 = vadd.f32 %v1902, %v1971
        %v1980 = vadd.f32 %v1903, %v1972
        %v1981 = vadd.f32 %v1904, %v1973
        %1982 = vrot.lane.b32.xlu0 %v412, 14
        %v1983 = vpop.permute.xlu0 %1982
        %1984 = vrot.lane.b32.xlu0 %v414, 14
        %v1985 = vpop.permute.xlu0 %1984
        %1986 = vrot.lane.b32.xlu0 %v416, 14
        %v1987 = vpop.permute.xlu0 %1986
        %1988 = vrot.lane.b32.xlu0 %v418, 14
        %v1989 = vpop.permute.xlu0 %1988
        %1990 = vrot.lane.b32.xlu0 %v413, 14
        %v1991 = vpop.permute.xlu0 %1990
        %1992 = vrot.lane.b32.xlu0 %v415, 14
        %v1993 = vpop.permute.xlu0 %1992
        %1994 = vrot.lane.b32.xlu0 %v417, 14
        %v1995 = vpop.permute.xlu0 %1994
        %1996 = vrot.lane.b32.xlu0 %v419, 14
        %v1997 = vpop.permute.xlu0 %1996
        %vm1998 = vcmp.lt.s32.totalorder %v530, 14
        %v1999 = vsel %vm1998, %v1983, %v1991
        %v2000 = vsel %vm1998, %v1985, %v1993
        %v2001 = vsel %vm1998, %v1987, %v1995
        %v2002 = vsel %vm1998, %v1989, %v1997
        %v2003 = vsel %vm1998, %v1991, %v1983
        %v2004 = vsel %vm1998, %v1993, %v1985
        %v2005 = vsel %vm1998, %v1995, %v1987
        %v2006 = vsel %vm1998, %v1997, %v1989
        %vm2007 = vmand %vm450, %vm476
        %v2008 = vsel %vm2007, 1, 0
        %v2009 = vlaneseq
        %v2010 = vshrl.u32 %v2009, 7
        %v2011 = vsub.s32 0, %v2010
        %v2012 = vrot.slane %v2008, %v2011
        %v2013 = vlaneseq
        %v2014 = vshrl.u32 %v2013, 7
        %v2015 = vsub.s32 1, %v2014
        %v2016 = vrot.slane %v2008, %v2015
        %vm2017 = vcmp.eq.s32.totalorder %v2012, 1
        %vm2018 = vcmp.eq.s32.totalorder %v2016, 1
        %v2019 = vsel %vm2017, %v2003, 0.0
        %v2020 = vsel %vm2018, %v1999, 0.0
        %v2021 = vsel %vm2017, %v2004, 0.0
        %v2022 = vsel %vm2018, %v2000, 0.0
        %v2023 = vsel %vm2017, %v2005, 0.0
        %v2024 = vsel %vm2018, %v2001, 0.0
        %v2025 = vsel %vm2017, %v2006, 0.0
        %v2026 = vsel %vm2018, %v2002, 0.0
        %2027 = vset.pattern.permute.xlu0 19
        %2028 = vperm.xlu0 %2027, %v423
        %v2029 = vpop.permute.xlu0 %2028
        %2031 = vset.pattern.permute.xlu0 19
        %2032 = vperm.xlu0 %2031, %v424
        %v2033 = vpop.permute.xlu0 %2032
        %2035 = vset.pattern.permute.xlu0 19
        %2036 = vperm.xlu0 %2035, %v425
        %v2037 = vpop.permute.xlu0 %2036
        %2039 = vset.pattern.permute.xlu0 19
        %2040 = vperm.xlu0 %2039, %v426
        %v2041 = vpop.permute.xlu0 %2040
        %v2043 = vmul.f32 %v2019, %v2029
        %v2044 = vmul.f32 %v2020, %v2029
        %v2045 = vmul.f32 %v2021, %v2033
        %v2046 = vmul.f32 %v2022, %v2033
        %v2047 = vmul.f32 %v2023, %v2037
        %v2048 = vmul.f32 %v2024, %v2037
        %v2049 = vmul.f32 %v2025, %v2041
        %v2050 = vmul.f32 %v2026, %v2041
        %v2051 = vadd.f32 %v1974, %v2043
        %v2052 = vadd.f32 %v1975, %v2044
        %v2053 = vadd.f32 %v1976, %v2045
        %v2054 = vadd.f32 %v1977, %v2046
        %v2055 = vadd.f32 %v1978, %v2047
        %v2056 = vadd.f32 %v1979, %v2048
        %v2057 = vadd.f32 %v1980, %v2049
        %v2058 = vadd.f32 %v1981, %v2050
        %2059 = vrot.lane.b32.xlu0 %v412, 13
        %v2060 = vpop.permute.xlu0 %2059
        %2061 = vrot.lane.b32.xlu0 %v414, 13
        %v2062 = vpop.permute.xlu0 %2061
        %2063 = vrot.lane.b32.xlu0 %v416, 13
        %v2064 = vpop.permute.xlu0 %2063
        %2065 = vrot.lane.b32.xlu0 %v418, 13
        %v2066 = vpop.permute.xlu0 %2065
        %2067 = vrot.lane.b32.xlu0 %v413, 13
        %v2068 = vpop.permute.xlu0 %2067
        %2069 = vrot.lane.b32.xlu0 %v415, 13
        %v2070 = vpop.permute.xlu0 %2069
        %2071 = vrot.lane.b32.xlu0 %v417, 13
        %v2072 = vpop.permute.xlu0 %2071
        %2073 = vrot.lane.b32.xlu0 %v419, 13
        %v2074 = vpop.permute.xlu0 %2073
        %vm2075 = vcmp.lt.s32.totalorder %v530, 13
        %v2076 = vsel %vm2075, %v2060, %v2068
        %v2077 = vsel %vm2075, %v2062, %v2070
        %v2078 = vsel %vm2075, %v2064, %v2072
        %v2079 = vsel %vm2075, %v2066, %v2074
        %v2080 = vsel %vm2075, %v2068, %v2060
        %v2081 = vsel %vm2075, %v2070, %v2062
        %v2082 = vsel %vm2075, %v2072, %v2064
        %v2083 = vsel %vm2075, %v2074, %v2066
        %vm2084 = vmand %vm450, %vm484
        %v2085 = vsel %vm2084, 1, 0
        %v2086 = vlaneseq
        %v2087 = vshrl.u32 %v2086, 7
        %v2088 = vsub.s32 0, %v2087
        %v2089 = vrot.slane %v2085, %v2088
        %v2090 = vlaneseq
        %v2091 = vshrl.u32 %v2090, 7
        %v2092 = vsub.s32 1, %v2091
        %v2093 = vrot.slane %v2085, %v2092
        %vm2094 = vcmp.eq.s32.totalorder %v2089, 1
        %vm2095 = vcmp.eq.s32.totalorder %v2093, 1
        %v2096 = vsel %vm2094, %v2080, 0.0
        %v2097 = vsel %vm2095, %v2076, 0.0
        %v2098 = vsel %vm2094, %v2081, 0.0
        %v2099 = vsel %vm2095, %v2077, 0.0
        %v2100 = vsel %vm2094, %v2082, 0.0
        %v2101 = vsel %vm2095, %v2078, 0.0
        %v2102 = vsel %vm2094, %v2083, 0.0
        %v2103 = vsel %vm2095, %v2079, 0.0
        %2104 = vset.pattern.permute.xlu0 20
        %2105 = vperm.xlu0 %2104, %v423
        %v2106 = vpop.permute.xlu0 %2105
        %2108 = vset.pattern.permute.xlu0 20
        %2109 = vperm.xlu0 %2108, %v424
        %v2110 = vpop.permute.xlu0 %2109
        %2112 = vset.pattern.permute.xlu0 20
        %2113 = vperm.xlu0 %2112, %v425
        %v2114 = vpop.permute.xlu0 %2113
        %2116 = vset.pattern.permute.xlu0 20
        %2117 = vperm.xlu0 %2116, %v426
        %v2118 = vpop.permute.xlu0 %2117
        %v2120 = vmul.f32 %v2096, %v2106
        %v2121 = vmul.f32 %v2097, %v2106
        %v2122 = vmul.f32 %v2098, %v2110
        %v2123 = vmul.f32 %v2099, %v2110
        %v2124 = vmul.f32 %v2100, %v2114
        %v2125 = vmul.f32 %v2101, %v2114
        %v2126 = vmul.f32 %v2102, %v2118
        %v2127 = vmul.f32 %v2103, %v2118
        %v2128 = vadd.f32 %v2051, %v2120
        %v2129 = vadd.f32 %v2052, %v2121
        %v2130 = vadd.f32 %v2053, %v2122
        %v2131 = vadd.f32 %v2054, %v2123
        %v2132 = vadd.f32 %v2055, %v2124
        %v2133 = vadd.f32 %v2056, %v2125
        %v2134 = vadd.f32 %v2057, %v2126
        %v2135 = vadd.f32 %v2058, %v2127
        %2136 = vrot.lane.b32.xlu0 %v412, 3
        %v2137 = vpop.permute.xlu0 %2136
        %2138 = vrot.lane.b32.xlu0 %v414, 3
        %v2139 = vpop.permute.xlu0 %2138
        %2140 = vrot.lane.b32.xlu0 %v416, 3
        %v2141 = vpop.permute.xlu0 %2140
        %2142 = vrot.lane.b32.xlu0 %v418, 3
        %v2143 = vpop.permute.xlu0 %2142
        %2144 = vrot.lane.b32.xlu0 %v413, 3
        %v2145 = vpop.permute.xlu0 %2144
        %2146 = vrot.lane.b32.xlu0 %v415, 3
        %v2147 = vpop.permute.xlu0 %2146
        %2148 = vrot.lane.b32.xlu0 %v417, 3
        %v2149 = vpop.permute.xlu0 %2148
        %2150 = vrot.lane.b32.xlu0 %v419, 3
        %v2151 = vpop.permute.xlu0 %2150
        %vm2152 = vcmp.lt.s32.totalorder %v530, 3
        %v2153 = vsel %vm2152, %v2137, %v2145
        %v2154 = vsel %vm2152, %v2139, %v2147
        %v2155 = vsel %vm2152, %v2141, %v2149
        %v2156 = vsel %vm2152, %v2143, %v2151
        %v2157 = vsel %vm2152, %v2145, %v2137
        %v2158 = vsel %vm2152, %v2147, %v2139
        %v2159 = vsel %vm2152, %v2149, %v2141
        %v2160 = vsel %vm2152, %v2151, %v2143
        %vm2161 = vmand %vm457, %vm438
        %v2162 = vsel %vm2161, 1, 0
        %v2163 = vlaneseq
        %v2164 = vshrl.u32 %v2163, 7
        %v2165 = vsub.s32 0, %v2164
        %v2166 = vrot.slane %v2162, %v2165
        %v2167 = vlaneseq
        %v2168 = vshrl.u32 %v2167, 7
        %v2169 = vsub.s32 1, %v2168
        %v2170 = vrot.slane %v2162, %v2169
        %vm2171 = vcmp.eq.s32.totalorder %v2166, 1
        %vm2172 = vcmp.eq.s32.totalorder %v2170, 1
        %v2173 = vsel %vm2171, %v2157, 0.0
        %v2174 = vsel %vm2172, %v2153, 0.0
        %v2175 = vsel %vm2171, %v2158, 0.0
        %v2176 = vsel %vm2172, %v2154, 0.0
        %v2177 = vsel %vm2171, %v2159, 0.0
        %v2178 = vsel %vm2172, %v2155, 0.0
        %v2179 = vsel %vm2171, %v2160, 0.0
        %v2180 = vsel %vm2172, %v2156, 0.0
        %2181 = vset.pattern.permute.xlu0 21
        %2182 = vperm.xlu0 %2181, %v423
        %v2183 = vpop.permute.xlu0 %2182
        %2185 = vset.pattern.permute.xlu0 21
        %2186 = vperm.xlu0 %2185, %v424
        %v2187 = vpop.permute.xlu0 %2186
        %2189 = vset.pattern.permute.xlu0 21
        %2190 = vperm.xlu0 %2189, %v425
        %v2191 = vpop.permute.xlu0 %2190
        %2193 = vset.pattern.permute.xlu0 21
        %2194 = vperm.xlu0 %2193, %v426
        %v2195 = vpop.permute.xlu0 %2194
        %v2197 = vmul.f32 %v2173, %v2183
        %v2198 = vmul.f32 %v2174, %v2183
        %v2199 = vmul.f32 %v2175, %v2187
        %v2200 = vmul.f32 %v2176, %v2187
        %v2201 = vmul.f32 %v2177, %v2191
        %v2202 = vmul.f32 %v2178, %v2191
        %v2203 = vmul.f32 %v2179, %v2195
        %v2204 = vmul.f32 %v2180, %v2195
        %v2205 = vadd.f32 %v2128, %v2197
        %v2206 = vadd.f32 %v2129, %v2198
        %v2207 = vadd.f32 %v2130, %v2199
        %v2208 = vadd.f32 %v2131, %v2200
        %v2209 = vadd.f32 %v2132, %v2201
        %v2210 = vadd.f32 %v2133, %v2202
        %v2211 = vadd.f32 %v2134, %v2203
        %v2212 = vadd.f32 %v2135, %v2204
        %2213 = vrot.lane.b32.xlu0 %v412, 2
        %v2214 = vpop.permute.xlu0 %2213
        %2215 = vrot.lane.b32.xlu0 %v414, 2
        %v2216 = vpop.permute.xlu0 %2215
        %2217 = vrot.lane.b32.xlu0 %v416, 2
        %v2218 = vpop.permute.xlu0 %2217
        %2219 = vrot.lane.b32.xlu0 %v418, 2
        %v2220 = vpop.permute.xlu0 %2219
        %2221 = vrot.lane.b32.xlu0 %v413, 2
        %v2222 = vpop.permute.xlu0 %2221
        %2223 = vrot.lane.b32.xlu0 %v415, 2
        %v2224 = vpop.permute.xlu0 %2223
        %2225 = vrot.lane.b32.xlu0 %v417, 2
        %v2226 = vpop.permute.xlu0 %2225
        %2227 = vrot.lane.b32.xlu0 %v419, 2
        %v2228 = vpop.permute.xlu0 %2227
        %vm2229 = vcmp.lt.s32.totalorder %v530, 2
        %v2230 = vsel %vm2229, %v2214, %v2222
        %v2231 = vsel %vm2229, %v2216, %v2224
        %v2232 = vsel %vm2229, %v2218, %v2226
        %v2233 = vsel %vm2229, %v2220, %v2228
        %v2234 = vsel %vm2229, %v2222, %v2214
        %v2235 = vsel %vm2229, %v2224, %v2216
        %v2236 = vsel %vm2229, %v2226, %v2218
        %v2237 = vsel %vm2229, %v2228, %v2220
        %vm2238 = vmand %vm457, %vm446
        %v2239 = vsel %vm2238, 1, 0
        %v2240 = vlaneseq
        %v2241 = vshrl.u32 %v2240, 7
        %v2242 = vsub.s32 0, %v2241
        %v2243 = vrot.slane %v2239, %v2242
        %v2244 = vlaneseq
        %v2245 = vshrl.u32 %v2244, 7
        %v2246 = vsub.s32 1, %v2245
        %v2247 = vrot.slane %v2239, %v2246
        %vm2248 = vcmp.eq.s32.totalorder %v2243, 1
        %vm2249 = vcmp.eq.s32.totalorder %v2247, 1
        %v2250 = vsel %vm2248, %v2234, 0.0
        %v2251 = vsel %vm2249, %v2230, 0.0
        %v2252 = vsel %vm2248, %v2235, 0.0
        %v2253 = vsel %vm2249, %v2231, 0.0
        %v2254 = vsel %vm2248, %v2236, 0.0
        %v2255 = vsel %vm2249, %v2232, 0.0
        %v2256 = vsel %vm2248, %v2237, 0.0
        %v2257 = vsel %vm2249, %v2233, 0.0
        %2258 = vset.pattern.permute.xlu0 22
        %2259 = vperm.xlu0 %2258, %v423
        %v2260 = vpop.permute.xlu0 %2259
        %2262 = vset.pattern.permute.xlu0 22
        %2263 = vperm.xlu0 %2262, %v424
        %v2264 = vpop.permute.xlu0 %2263
        %2266 = vset.pattern.permute.xlu0 22
        %2267 = vperm.xlu0 %2266, %v425
        %v2268 = vpop.permute.xlu0 %2267
        %2270 = vset.pattern.permute.xlu0 22
        %2271 = vperm.xlu0 %2270, %v426
        %v2272 = vpop.permute.xlu0 %2271
        %v2274 = vmul.f32 %v2250, %v2260
        %v2275 = vmul.f32 %v2251, %v2260
        %v2276 = vmul.f32 %v2252, %v2264
        %v2277 = vmul.f32 %v2253, %v2264
        %v2278 = vmul.f32 %v2254, %v2268
        %v2279 = vmul.f32 %v2255, %v2268
        %v2280 = vmul.f32 %v2256, %v2272
        %v2281 = vmul.f32 %v2257, %v2272
        %v2282 = vadd.f32 %v2205, %v2274
        %v2283 = vadd.f32 %v2206, %v2275
        %v2284 = vadd.f32 %v2207, %v2276
        %v2285 = vadd.f32 %v2208, %v2277
        %v2286 = vadd.f32 %v2209, %v2278
        %v2287 = vadd.f32 %v2210, %v2279
        %v2288 = vadd.f32 %v2211, %v2280
        %v2289 = vadd.f32 %v2212, %v2281
        %2290 = vrot.lane.b32.xlu0 %v412, 1
        %v2291 = vpop.permute.xlu0 %2290
        %2292 = vrot.lane.b32.xlu0 %v414, 1
        %v2293 = vpop.permute.xlu0 %2292
        %2294 = vrot.lane.b32.xlu0 %v416, 1
        %v2295 = vpop.permute.xlu0 %2294
        %2296 = vrot.lane.b32.xlu0 %v418, 1
        %v2297 = vpop.permute.xlu0 %2296
        %2298 = vrot.lane.b32.xlu0 %v413, 1
        %v2299 = vpop.permute.xlu0 %2298
        %2300 = vrot.lane.b32.xlu0 %v415, 1
        %v2301 = vpop.permute.xlu0 %2300
        %2302 = vrot.lane.b32.xlu0 %v417, 1
        %v2303 = vpop.permute.xlu0 %2302
        %2304 = vrot.lane.b32.xlu0 %v419, 1
        %v2305 = vpop.permute.xlu0 %2304
        %vm2306 = vcmp.lt.s32.totalorder %v530, 1
        %v2307 = vsel %vm2306, %v2291, %v2299
        %v2308 = vsel %vm2306, %v2293, %v2301
        %v2309 = vsel %vm2306, %v2295, %v2303
        %v2310 = vsel %vm2306, %v2297, %v2305
        %v2311 = vsel %vm2306, %v2299, %v2291
        %v2312 = vsel %vm2306, %v2301, %v2293
        %v2313 = vsel %vm2306, %v2303, %v2295
        %v2314 = vsel %vm2306, %v2305, %v2297
        %vm2315 = vmand %vm457, %vm454
        %v2316 = vsel %vm2315, 1, 0
        %v2317 = vlaneseq
        %v2318 = vshrl.u32 %v2317, 7
        %v2319 = vsub.s32 0, %v2318
        %v2320 = vrot.slane %v2316, %v2319
        %v2321 = vlaneseq
        %v2322 = vshrl.u32 %v2321, 7
        %v2323 = vsub.s32 1, %v2322
        %v2324 = vrot.slane %v2316, %v2323
        %vm2325 = vcmp.eq.s32.totalorder %v2320, 1
        %vm2326 = vcmp.eq.s32.totalorder %v2324, 1
        %v2327 = vsel %vm2325, %v2311, 0.0
        %v2328 = vsel %vm2326, %v2307, 0.0
        %v2329 = vsel %vm2325, %v2312, 0.0
        %v2330 = vsel %vm2326, %v2308, 0.0
        %v2331 = vsel %vm2325, %v2313, 0.0
        %v2332 = vsel %vm2326, %v2309, 0.0
        %v2333 = vsel %vm2325, %v2314, 0.0
        %v2334 = vsel %vm2326, %v2310, 0.0
        %2335 = vset.pattern.permute.xlu0 23
        %2336 = vperm.xlu0 %2335, %v423
        %v2337 = vpop.permute.xlu0 %2336
        %2339 = vset.pattern.permute.xlu0 23
        %2340 = vperm.xlu0 %2339, %v424
        %v2341 = vpop.permute.xlu0 %2340
        %2343 = vset.pattern.permute.xlu0 23
        %2344 = vperm.xlu0 %2343, %v425
        %v2345 = vpop.permute.xlu0 %2344
        %2347 = vset.pattern.permute.xlu0 23
        %2348 = vperm.xlu0 %2347, %v426
        %v2349 = vpop.permute.xlu0 %2348
        %v2351 = vmul.f32 %v2327, %v2337
        %v2352 = vmul.f32 %v2328, %v2337
        %v2353 = vmul.f32 %v2329, %v2341
        %v2354 = vmul.f32 %v2330, %v2341
        %v2355 = vmul.f32 %v2331, %v2345
        %v2356 = vmul.f32 %v2332, %v2345
        %v2357 = vmul.f32 %v2333, %v2349
        %v2358 = vmul.f32 %v2334, %v2349
        %v2359 = vadd.f32 %v2282, %v2351
        %v2360 = vadd.f32 %v2283, %v2352
        %v2361 = vadd.f32 %v2284, %v2353
        %v2362 = vadd.f32 %v2285, %v2354
        %v2363 = vadd.f32 %v2286, %v2355
        %v2364 = vadd.f32 %v2287, %v2356
        %v2365 = vadd.f32 %v2288, %v2357
        %v2366 = vadd.f32 %v2289, %v2358
        %vm2367 = vmand %vm457, %vm460
        %v2368 = vsel %vm2367, 1, 0
        %v2369 = vlaneseq
        %v2370 = vshrl.u32 %v2369, 7
        %v2371 = vsub.s32 0, %v2370
        %v2372 = vrot.slane %v2368, %v2371
        %v2373 = vlaneseq
        %v2374 = vshrl.u32 %v2373, 7
        %v2375 = vsub.s32 1, %v2374
        %v2376 = vrot.slane %v2368, %v2375
        %vm2377 = vcmp.eq.s32.totalorder %v2372, 1
        %vm2378 = vcmp.eq.s32.totalorder %v2376, 1
        %v2379 = vsel %vm2377, %v412, 0.0
        %v2380 = vsel %vm2378, %v413, 0.0
        %v2381 = vsel %vm2377, %v414, 0.0
        %v2382 = vsel %vm2378, %v415, 0.0
        %v2383 = vsel %vm2377, %v416, 0.0
        %v2384 = vsel %vm2378, %v417, 0.0
        %v2385 = vsel %vm2377, %v418, 0.0
        %v2386 = vsel %vm2378, %v419, 0.0
        %2387 = vset.pattern.permute.xlu0 24
        %2388 = vperm.xlu0 %2387, %v423
        %v2389 = vpop.permute.xlu0 %2388
        %2391 = vset.pattern.permute.xlu0 24
        %2392 = vperm.xlu0 %2391, %v424
        %v2393 = vpop.permute.xlu0 %2392
        %2395 = vset.pattern.permute.xlu0 24
        %2396 = vperm.xlu0 %2395, %v425
        %v2397 = vpop.permute.xlu0 %2396
        %2399 = vset.pattern.permute.xlu0 24
        %2400 = vperm.xlu0 %2399, %v426
        %v2401 = vpop.permute.xlu0 %2400
        %v2403 = vmul.f32 %v2379, %v2389
        %v2404 = vmul.f32 %v2380, %v2389
        %v2405 = vmul.f32 %v2381, %v2393
        %v2406 = vmul.f32 %v2382, %v2393
        %v2407 = vmul.f32 %v2383, %v2397
        %v2408 = vmul.f32 %v2384, %v2397
        %v2409 = vmul.f32 %v2385, %v2401
        %v2410 = vmul.f32 %v2386, %v2401
        %v2411 = vadd.f32 %v2359, %v2403
        %v2412 = vadd.f32 %v2360, %v2404
        %v2413 = vadd.f32 %v2361, %v2405
        %v2414 = vadd.f32 %v2362, %v2406
        %v2415 = vadd.f32 %v2363, %v2407
        %v2416 = vadd.f32 %v2364, %v2408
        %v2417 = vadd.f32 %v2365, %v2409
        %v2418 = vadd.f32 %v2366, %v2410
        %2419 = vrot.lane.b32.xlu0 %v412, 127
        %v2420 = vpop.permute.xlu0 %2419
        %2421 = vrot.lane.b32.xlu0 %v414, 127
        %v2422 = vpop.permute.xlu0 %2421
        %2423 = vrot.lane.b32.xlu0 %v416, 127
        %v2424 = vpop.permute.xlu0 %2423
        %2425 = vrot.lane.b32.xlu0 %v418, 127
        %v2426 = vpop.permute.xlu0 %2425
        %2427 = vrot.lane.b32.xlu0 %v413, 127
        %v2428 = vpop.permute.xlu0 %2427
        %2429 = vrot.lane.b32.xlu0 %v415, 127
        %v2430 = vpop.permute.xlu0 %2429
        %2431 = vrot.lane.b32.xlu0 %v417, 127
        %v2432 = vpop.permute.xlu0 %2431
        %2433 = vrot.lane.b32.xlu0 %v419, 127
        %v2434 = vpop.permute.xlu0 %2433
        %vm2435 = vcmp.lt.s32.totalorder %v530, 127
        %v2436 = vsel %vm2435, %v2420, %v2428
        %v2437 = vsel %vm2435, %v2422, %v2430
        %v2438 = vsel %vm2435, %v2424, %v2432
        %v2439 = vsel %vm2435, %v2426, %v2434
        %v2440 = vsel %vm2435, %v2428, %v2420
        %v2441 = vsel %vm2435, %v2430, %v2422
        %v2442 = vsel %vm2435, %v2432, %v2424
        %v2443 = vsel %vm2435, %v2434, %v2426
        %vm2444 = vmand %vm457, %vm468
        %v2445 = vsel %vm2444, 1, 0
        %v2446 = vlaneseq
        %v2447 = vshrl.u32 %v2446, 7
        %v2448 = vsub.s32 0, %v2447
        %v2449 = vrot.slane %v2445, %v2448
        %v2450 = vlaneseq
        %v2451 = vshrl.u32 %v2450, 7
        %v2452 = vsub.s32 1, %v2451
        %v2453 = vrot.slane %v2445, %v2452
        %vm2454 = vcmp.eq.s32.totalorder %v2449, 1
        %vm2455 = vcmp.eq.s32.totalorder %v2453, 1
        %v2456 = vsel %vm2454, %v2436, 0.0
        %v2457 = vsel %vm2455, %v2440, 0.0
        %v2458 = vsel %vm2454, %v2437, 0.0
        %v2459 = vsel %vm2455, %v2441, 0.0
        %v2460 = vsel %vm2454, %v2438, 0.0
        %v2461 = vsel %vm2455, %v2442, 0.0
        %v2462 = vsel %vm2454, %v2439, 0.0
        %v2463 = vsel %vm2455, %v2443, 0.0
        %2464 = vset.pattern.permute.xlu0 25
        %2465 = vperm.xlu0 %2464, %v423
        %v2466 = vpop.permute.xlu0 %2465
        %2468 = vset.pattern.permute.xlu0 25
        %2469 = vperm.xlu0 %2468, %v424
        %v2470 = vpop.permute.xlu0 %2469
        %2472 = vset.pattern.permute.xlu0 25
        %2473 = vperm.xlu0 %2472, %v425
        %v2474 = vpop.permute.xlu0 %2473
        %2476 = vset.pattern.permute.xlu0 25
        %2477 = vperm.xlu0 %2476, %v426
        %v2478 = vpop.permute.xlu0 %2477
        %v2480 = vmul.f32 %v2456, %v2466
        %v2481 = vmul.f32 %v2457, %v2466
        %v2482 = vmul.f32 %v2458, %v2470
        %v2483 = vmul.f32 %v2459, %v2470
        %v2484 = vmul.f32 %v2460, %v2474
        %v2485 = vmul.f32 %v2461, %v2474
        %v2486 = vmul.f32 %v2462, %v2478
        %v2487 = vmul.f32 %v2463, %v2478
        %v2488 = vadd.f32 %v2411, %v2480
        %v2489 = vadd.f32 %v2412, %v2481
        %v2490 = vadd.f32 %v2413, %v2482
        %v2491 = vadd.f32 %v2414, %v2483
        %v2492 = vadd.f32 %v2415, %v2484
        %v2493 = vadd.f32 %v2416, %v2485
        %v2494 = vadd.f32 %v2417, %v2486
        %v2495 = vadd.f32 %v2418, %v2487
        %2496 = vrot.lane.b32.xlu0 %v412, 126
        %v2497 = vpop.permute.xlu0 %2496
        %2498 = vrot.lane.b32.xlu0 %v414, 126
        %v2499 = vpop.permute.xlu0 %2498
        %2500 = vrot.lane.b32.xlu0 %v416, 126
        %v2501 = vpop.permute.xlu0 %2500
        %2502 = vrot.lane.b32.xlu0 %v418, 126
        %v2503 = vpop.permute.xlu0 %2502
        %2504 = vrot.lane.b32.xlu0 %v413, 126
        %v2505 = vpop.permute.xlu0 %2504
        %2506 = vrot.lane.b32.xlu0 %v415, 126
        %v2507 = vpop.permute.xlu0 %2506
        %2508 = vrot.lane.b32.xlu0 %v417, 126
        %v2509 = vpop.permute.xlu0 %2508
        %2510 = vrot.lane.b32.xlu0 %v419, 126
        %v2511 = vpop.permute.xlu0 %2510
        %vm2512 = vcmp.lt.s32.totalorder %v530, 126
        %v2513 = vsel %vm2512, %v2497, %v2505
        %v2514 = vsel %vm2512, %v2499, %v2507
        %v2515 = vsel %vm2512, %v2501, %v2509
        %v2516 = vsel %vm2512, %v2503, %v2511
        %v2517 = vsel %vm2512, %v2505, %v2497
        %v2518 = vsel %vm2512, %v2507, %v2499
        %v2519 = vsel %vm2512, %v2509, %v2501
        %v2520 = vsel %vm2512, %v2511, %v2503
        %vm2521 = vmand %vm457, %vm476
        %v2522 = vsel %vm2521, 1, 0
        %v2523 = vlaneseq
        %v2524 = vshrl.u32 %v2523, 7
        %v2525 = vsub.s32 0, %v2524
        %v2526 = vrot.slane %v2522, %v2525
        %v2527 = vlaneseq
        %v2528 = vshrl.u32 %v2527, 7
        %v2529 = vsub.s32 1, %v2528
        %v2530 = vrot.slane %v2522, %v2529
        %vm2531 = vcmp.eq.s32.totalorder %v2526, 1
        %vm2532 = vcmp.eq.s32.totalorder %v2530, 1
        %v2533 = vsel %vm2531, %v2513, 0.0
        %v2534 = vsel %vm2532, %v2517, 0.0
        %v2535 = vsel %vm2531, %v2514, 0.0
        %v2536 = vsel %vm2532, %v2518, 0.0
        %v2537 = vsel %vm2531, %v2515, 0.0
        %v2538 = vsel %vm2532, %v2519, 0.0
        %v2539 = vsel %vm2531, %v2516, 0.0
        %v2540 = vsel %vm2532, %v2520, 0.0
        %2541 = vset.pattern.permute.xlu0 26
        %2542 = vperm.xlu0 %2541, %v423
        %v2543 = vpop.permute.xlu0 %2542
        %2545 = vset.pattern.permute.xlu0 26
        %2546 = vperm.xlu0 %2545, %v424
        %v2547 = vpop.permute.xlu0 %2546
        %2549 = vset.pattern.permute.xlu0 26
        %2550 = vperm.xlu0 %2549, %v425
        %v2551 = vpop.permute.xlu0 %2550
        %2553 = vset.pattern.permute.xlu0 26
        %2554 = vperm.xlu0 %2553, %v426
        %v2555 = vpop.permute.xlu0 %2554
        %v2557 = vmul.f32 %v2533, %v2543
        %v2558 = vmul.f32 %v2534, %v2543
        %v2559 = vmul.f32 %v2535, %v2547
        %v2560 = vmul.f32 %v2536, %v2547
        %v2561 = vmul.f32 %v2537, %v2551
        %v2562 = vmul.f32 %v2538, %v2551
        %v2563 = vmul.f32 %v2539, %v2555
        %v2564 = vmul.f32 %v2540, %v2555
        %v2565 = vadd.f32 %v2488, %v2557
        %v2566 = vadd.f32 %v2489, %v2558
        %v2567 = vadd.f32 %v2490, %v2559
        %v2568 = vadd.f32 %v2491, %v2560
        %v2569 = vadd.f32 %v2492, %v2561
        %v2570 = vadd.f32 %v2493, %v2562
        %v2571 = vadd.f32 %v2494, %v2563
        %v2572 = vadd.f32 %v2495, %v2564
        %2573 = vrot.lane.b32.xlu0 %v412, 125
        %v2574 = vpop.permute.xlu0 %2573
        %2575 = vrot.lane.b32.xlu0 %v414, 125
        %v2576 = vpop.permute.xlu0 %2575
        %2577 = vrot.lane.b32.xlu0 %v416, 125
        %v2578 = vpop.permute.xlu0 %2577
        %2579 = vrot.lane.b32.xlu0 %v418, 125
        %v2580 = vpop.permute.xlu0 %2579
        %2581 = vrot.lane.b32.xlu0 %v413, 125
        %v2582 = vpop.permute.xlu0 %2581
        %2583 = vrot.lane.b32.xlu0 %v415, 125
        %v2584 = vpop.permute.xlu0 %2583
        %2585 = vrot.lane.b32.xlu0 %v417, 125
        %v2586 = vpop.permute.xlu0 %2585
        %2587 = vrot.lane.b32.xlu0 %v419, 125
        %v2588 = vpop.permute.xlu0 %2587
        %vm2589 = vcmp.lt.s32.totalorder %v530, 125
        %v2590 = vsel %vm2589, %v2574, %v2582
        %v2591 = vsel %vm2589, %v2576, %v2584
        %v2592 = vsel %vm2589, %v2578, %v2586
        %v2593 = vsel %vm2589, %v2580, %v2588
        %v2594 = vsel %vm2589, %v2582, %v2574
        %v2595 = vsel %vm2589, %v2584, %v2576
        %v2596 = vsel %vm2589, %v2586, %v2578
        %v2597 = vsel %vm2589, %v2588, %v2580
        %vm2598 = vmand %vm457, %vm484
        %v2599 = vsel %vm2598, 1, 0
        %v2600 = vlaneseq
        %v2601 = vshrl.u32 %v2600, 7
        %v2602 = vsub.s32 0, %v2601
        %v2603 = vrot.slane %v2599, %v2602
        %v2604 = vlaneseq
        %v2605 = vshrl.u32 %v2604, 7
        %v2606 = vsub.s32 1, %v2605
        %v2607 = vrot.slane %v2599, %v2606
        %vm2608 = vcmp.eq.s32.totalorder %v2603, 1
        %vm2609 = vcmp.eq.s32.totalorder %v2607, 1
        %v2610 = vsel %vm2608, %v2590, 0.0
        %v2611 = vsel %vm2609, %v2594, 0.0
        %v2612 = vsel %vm2608, %v2591, 0.0
        %v2613 = vsel %vm2609, %v2595, 0.0
        %v2614 = vsel %vm2608, %v2592, 0.0
        %v2615 = vsel %vm2609, %v2596, 0.0
        %v2616 = vsel %vm2608, %v2593, 0.0
        %v2617 = vsel %vm2609, %v2597, 0.0
        %2618 = vset.pattern.permute.xlu0 27
        %2619 = vperm.xlu0 %2618, %v423
        %v2620 = vpop.permute.xlu0 %2619
        %2622 = vset.pattern.permute.xlu0 27
        %2623 = vperm.xlu0 %2622, %v424
        %v2624 = vpop.permute.xlu0 %2623
        %2626 = vset.pattern.permute.xlu0 27
        %2627 = vperm.xlu0 %2626, %v425
        %v2628 = vpop.permute.xlu0 %2627
        %2630 = vset.pattern.permute.xlu0 27
        %2631 = vperm.xlu0 %2630, %v426
        %v2632 = vpop.permute.xlu0 %2631
        %v2634 = vmul.f32 %v2610, %v2620
        %v2635 = vmul.f32 %v2611, %v2620
        %v2636 = vmul.f32 %v2612, %v2624
        %v2637 = vmul.f32 %v2613, %v2624
        %v2638 = vmul.f32 %v2614, %v2628
        %v2639 = vmul.f32 %v2615, %v2628
        %v2640 = vmul.f32 %v2616, %v2632
        %v2641 = vmul.f32 %v2617, %v2632
        %v2642 = vadd.f32 %v2565, %v2634
        %v2643 = vadd.f32 %v2566, %v2635
        %v2644 = vadd.f32 %v2567, %v2636
        %v2645 = vadd.f32 %v2568, %v2637
        %v2646 = vadd.f32 %v2569, %v2638
        %v2647 = vadd.f32 %v2570, %v2639
        %v2648 = vadd.f32 %v2571, %v2640
        %v2649 = vadd.f32 %v2572, %v2641
        %2650 = vrot.lane.b32.xlu0 %v412, 115
        %v2651 = vpop.permute.xlu0 %2650
        %2652 = vrot.lane.b32.xlu0 %v414, 115
        %v2653 = vpop.permute.xlu0 %2652
        %2654 = vrot.lane.b32.xlu0 %v416, 115
        %v2655 = vpop.permute.xlu0 %2654
        %2656 = vrot.lane.b32.xlu0 %v418, 115
        %v2657 = vpop.permute.xlu0 %2656
        %2658 = vrot.lane.b32.xlu0 %v413, 115
        %v2659 = vpop.permute.xlu0 %2658
        %2660 = vrot.lane.b32.xlu0 %v415, 115
        %v2661 = vpop.permute.xlu0 %2660
        %2662 = vrot.lane.b32.xlu0 %v417, 115
        %v2663 = vpop.permute.xlu0 %2662
        %2664 = vrot.lane.b32.xlu0 %v419, 115
        %v2665 = vpop.permute.xlu0 %2664
        %vm2666 = vcmp.lt.s32.totalorder %v530, 115
        %v2667 = vsel %vm2666, %v2651, %v2659
        %v2668 = vsel %vm2666, %v2653, %v2661
        %v2669 = vsel %vm2666, %v2655, %v2663
        %v2670 = vsel %vm2666, %v2657, %v2665
        %v2671 = vsel %vm2666, %v2659, %v2651
        %v2672 = vsel %vm2666, %v2661, %v2653
        %v2673 = vsel %vm2666, %v2663, %v2655
        %v2674 = vsel %vm2666, %v2665, %v2657
        %vm2675 = vmand %vm464, %vm438
        %v2676 = vsel %vm2675, 1, 0
        %v2677 = vlaneseq
        %v2678 = vshrl.u32 %v2677, 7
        %v2679 = vsub.s32 0, %v2678
        %v2680 = vrot.slane %v2676, %v2679
        %v2681 = vlaneseq
        %v2682 = vshrl.u32 %v2681, 7
        %v2683 = vsub.s32 1, %v2682
        %v2684 = vrot.slane %v2676, %v2683
        %vm2685 = vcmp.eq.s32.totalorder %v2680, 1
        %vm2686 = vcmp.eq.s32.totalorder %v2684, 1
        %v2687 = vsel %vm2685, %v2667, 0.0
        %v2688 = vsel %vm2686, %v2671, 0.0
        %v2689 = vsel %vm2685, %v2668, 0.0
        %v2690 = vsel %vm2686, %v2672, 0.0
        %v2691 = vsel %vm2685, %v2669, 0.0
        %v2692 = vsel %vm2686, %v2673, 0.0
        %v2693 = vsel %vm2685, %v2670, 0.0
        %v2694 = vsel %vm2686, %v2674, 0.0
        %2695 = vset.pattern.permute.xlu0 28
        %2696 = vperm.xlu0 %2695, %v423
        %v2697 = vpop.permute.xlu0 %2696
        %2699 = vset.pattern.permute.xlu0 28
        %2700 = vperm.xlu0 %2699, %v424
        %v2701 = vpop.permute.xlu0 %2700
        %2703 = vset.pattern.permute.xlu0 28
        %2704 = vperm.xlu0 %2703, %v425
        %v2705 = vpop.permute.xlu0 %2704
        %2707 = vset.pattern.permute.xlu0 28
        %2708 = vperm.xlu0 %2707, %v426
        %v2709 = vpop.permute.xlu0 %2708
        %v2711 = vmul.f32 %v2687, %v2697
        %v2712 = vmul.f32 %v2688, %v2697
        %v2713 = vmul.f32 %v2689, %v2701
        %v2714 = vmul.f32 %v2690, %v2701
        %v2715 = vmul.f32 %v2691, %v2705
        %v2716 = vmul.f32 %v2692, %v2705
        %v2717 = vmul.f32 %v2693, %v2709
        %v2718 = vmul.f32 %v2694, %v2709
        %v2719 = vadd.f32 %v2642, %v2711
        %v2720 = vadd.f32 %v2643, %v2712
        %v2721 = vadd.f32 %v2644, %v2713
        %v2722 = vadd.f32 %v2645, %v2714
        %v2723 = vadd.f32 %v2646, %v2715
        %v2724 = vadd.f32 %v2647, %v2716
        %v2725 = vadd.f32 %v2648, %v2717
        %v2726 = vadd.f32 %v2649, %v2718
        %2727 = vrot.lane.b32.xlu0 %v412, 114
        %v2728 = vpop.permute.xlu0 %2727
        %2729 = vrot.lane.b32.xlu0 %v414, 114
        %v2730 = vpop.permute.xlu0 %2729
        %2731 = vrot.lane.b32.xlu0 %v416, 114
        %v2732 = vpop.permute.xlu0 %2731
        %2733 = vrot.lane.b32.xlu0 %v418, 114
        %v2734 = vpop.permute.xlu0 %2733
        %2735 = vrot.lane.b32.xlu0 %v413, 114
        %v2736 = vpop.permute.xlu0 %2735
        %2737 = vrot.lane.b32.xlu0 %v415, 114
        %v2738 = vpop.permute.xlu0 %2737
        %2739 = vrot.lane.b32.xlu0 %v417, 114
        %v2740 = vpop.permute.xlu0 %2739
        %2741 = vrot.lane.b32.xlu0 %v419, 114
        %v2742 = vpop.permute.xlu0 %2741
        %vm2743 = vcmp.lt.s32.totalorder %v530, 114
        %v2744 = vsel %vm2743, %v2728, %v2736
        %v2745 = vsel %vm2743, %v2730, %v2738
        %v2746 = vsel %vm2743, %v2732, %v2740
        %v2747 = vsel %vm2743, %v2734, %v2742
        %v2748 = vsel %vm2743, %v2736, %v2728
        %v2749 = vsel %vm2743, %v2738, %v2730
        %v2750 = vsel %vm2743, %v2740, %v2732
        %v2751 = vsel %vm2743, %v2742, %v2734
        %vm2752 = vmand %vm464, %vm446
        %v2753 = vsel %vm2752, 1, 0
        %v2754 = vlaneseq
        %v2755 = vshrl.u32 %v2754, 7
        %v2756 = vsub.s32 0, %v2755
        %v2757 = vrot.slane %v2753, %v2756
        %v2758 = vlaneseq
        %v2759 = vshrl.u32 %v2758, 7
        %v2760 = vsub.s32 1, %v2759
        %v2761 = vrot.slane %v2753, %v2760
        %vm2762 = vcmp.eq.s32.totalorder %v2757, 1
        %vm2763 = vcmp.eq.s32.totalorder %v2761, 1
        %v2764 = vsel %vm2762, %v2744, 0.0
        %v2765 = vsel %vm2763, %v2748, 0.0
        %v2766 = vsel %vm2762, %v2745, 0.0
        %v2767 = vsel %vm2763, %v2749, 0.0
        %v2768 = vsel %vm2762, %v2746, 0.0
        %v2769 = vsel %vm2763, %v2750, 0.0
        %v2770 = vsel %vm2762, %v2747, 0.0
        %v2771 = vsel %vm2763, %v2751, 0.0
        %2772 = vset.pattern.permute.xlu0 29
        %2773 = vperm.xlu0 %2772, %v423
        %v2774 = vpop.permute.xlu0 %2773
        %2776 = vset.pattern.permute.xlu0 29
        %2777 = vperm.xlu0 %2776, %v424
        %v2778 = vpop.permute.xlu0 %2777
        %2780 = vset.pattern.permute.xlu0 29
        %2781 = vperm.xlu0 %2780, %v425
        %v2782 = vpop.permute.xlu0 %2781
        %2784 = vset.pattern.permute.xlu0 29
        %2785 = vperm.xlu0 %2784, %v426
        %v2786 = vpop.permute.xlu0 %2785
        %v2788 = vmul.f32 %v2764, %v2774
        %v2789 = vmul.f32 %v2765, %v2774
        %v2790 = vmul.f32 %v2766, %v2778
        %v2791 = vmul.f32 %v2767, %v2778
        %v2792 = vmul.f32 %v2768, %v2782
        %v2793 = vmul.f32 %v2769, %v2782
        %v2794 = vmul.f32 %v2770, %v2786
        %v2795 = vmul.f32 %v2771, %v2786
        %v2796 = vadd.f32 %v2719, %v2788
        %v2797 = vadd.f32 %v2720, %v2789
        %v2798 = vadd.f32 %v2721, %v2790
        %v2799 = vadd.f32 %v2722, %v2791
        %v2800 = vadd.f32 %v2723, %v2792
        %v2801 = vadd.f32 %v2724, %v2793
        %v2802 = vadd.f32 %v2725, %v2794
        %v2803 = vadd.f32 %v2726, %v2795
        %2804 = vrot.lane.b32.xlu0 %v412, 113
        %v2805 = vpop.permute.xlu0 %2804
        %2806 = vrot.lane.b32.xlu0 %v414, 113
        %v2807 = vpop.permute.xlu0 %2806
        %2808 = vrot.lane.b32.xlu0 %v416, 113
        %v2809 = vpop.permute.xlu0 %2808
        %2810 = vrot.lane.b32.xlu0 %v418, 113
        %v2811 = vpop.permute.xlu0 %2810
        %2812 = vrot.lane.b32.xlu0 %v413, 113
        %v2813 = vpop.permute.xlu0 %2812
        %2814 = vrot.lane.b32.xlu0 %v415, 113
        %v2815 = vpop.permute.xlu0 %2814
        %2816 = vrot.lane.b32.xlu0 %v417, 113
        %v2817 = vpop.permute.xlu0 %2816
        %2818 = vrot.lane.b32.xlu0 %v419, 113
        %v2819 = vpop.permute.xlu0 %2818
        %vm2820 = vcmp.lt.s32.totalorder %v530, 113
        %v2821 = vsel %vm2820, %v2805, %v2813
        %v2822 = vsel %vm2820, %v2807, %v2815
        %v2823 = vsel %vm2820, %v2809, %v2817
        %v2824 = vsel %vm2820, %v2811, %v2819
        %v2825 = vsel %vm2820, %v2813, %v2805
        %v2826 = vsel %vm2820, %v2815, %v2807
        %v2827 = vsel %vm2820, %v2817, %v2809
        %v2828 = vsel %vm2820, %v2819, %v2811
        %vm2829 = vmand %vm464, %vm454
        %v2830 = vsel %vm2829, 1, 0
        %v2831 = vlaneseq
        %v2832 = vshrl.u32 %v2831, 7
        %v2833 = vsub.s32 0, %v2832
        %v2834 = vrot.slane %v2830, %v2833
        %v2835 = vlaneseq
        %v2836 = vshrl.u32 %v2835, 7
        %v2837 = vsub.s32 1, %v2836
        %v2838 = vrot.slane %v2830, %v2837
        %vm2839 = vcmp.eq.s32.totalorder %v2834, 1
        %vm2840 = vcmp.eq.s32.totalorder %v2838, 1
        %v2841 = vsel %vm2839, %v2821, 0.0
        %v2842 = vsel %vm2840, %v2825, 0.0
        %v2843 = vsel %vm2839, %v2822, 0.0
        %v2844 = vsel %vm2840, %v2826, 0.0
        %v2845 = vsel %vm2839, %v2823, 0.0
        %v2846 = vsel %vm2840, %v2827, 0.0
        %v2847 = vsel %vm2839, %v2824, 0.0
        %v2848 = vsel %vm2840, %v2828, 0.0
        %2849 = vset.pattern.permute.xlu0 30
        %2850 = vperm.xlu0 %2849, %v423
        %v2851 = vpop.permute.xlu0 %2850
        %2853 = vset.pattern.permute.xlu0 30
        %2854 = vperm.xlu0 %2853, %v424
        %v2855 = vpop.permute.xlu0 %2854
        %2857 = vset.pattern.permute.xlu0 30
        %2858 = vperm.xlu0 %2857, %v425
        %v2859 = vpop.permute.xlu0 %2858
        %2861 = vset.pattern.permute.xlu0 30
        %2862 = vperm.xlu0 %2861, %v426
        %v2863 = vpop.permute.xlu0 %2862
        %v2865 = vmul.f32 %v2841, %v2851
        %v2866 = vmul.f32 %v2842, %v2851
        %v2867 = vmul.f32 %v2843, %v2855
        %v2868 = vmul.f32 %v2844, %v2855
        %v2869 = vmul.f32 %v2845, %v2859
        %v2870 = vmul.f32 %v2846, %v2859
        %v2871 = vmul.f32 %v2847, %v2863
        %v2872 = vmul.f32 %v2848, %v2863
        %v2873 = vadd.f32 %v2796, %v2865
        %v2874 = vadd.f32 %v2797, %v2866
        %v2875 = vadd.f32 %v2798, %v2867
        %v2876 = vadd.f32 %v2799, %v2868
        %v2877 = vadd.f32 %v2800, %v2869
        %v2878 = vadd.f32 %v2801, %v2870
        %v2879 = vadd.f32 %v2802, %v2871
        %v2880 = vadd.f32 %v2803, %v2872
        %2881 = vrot.lane.b32.xlu0 %v412, 112
        %v2882 = vpop.permute.xlu0 %2881
        %2883 = vrot.lane.b32.xlu0 %v414, 112
        %v2884 = vpop.permute.xlu0 %2883
        %2885 = vrot.lane.b32.xlu0 %v416, 112
        %v2886 = vpop.permute.xlu0 %2885
        %2887 = vrot.lane.b32.xlu0 %v418, 112
        %v2888 = vpop.permute.xlu0 %2887
        %2889 = vrot.lane.b32.xlu0 %v413, 112
        %v2890 = vpop.permute.xlu0 %2889
        %2891 = vrot.lane.b32.xlu0 %v415, 112
        %v2892 = vpop.permute.xlu0 %2891
        %2893 = vrot.lane.b32.xlu0 %v417, 112
        %v2894 = vpop.permute.xlu0 %2893
        %2895 = vrot.lane.b32.xlu0 %v419, 112
        %v2896 = vpop.permute.xlu0 %2895
        %vm2897 = vcmp.lt.s32.totalorder %v530, 112
        %v2898 = vsel %vm2897, %v2882, %v2890
        %v2899 = vsel %vm2897, %v2884, %v2892
        %v2900 = vsel %vm2897, %v2886, %v2894
        %v2901 = vsel %vm2897, %v2888, %v2896
        %v2902 = vsel %vm2897, %v2890, %v2882
        %v2903 = vsel %vm2897, %v2892, %v2884
        %v2904 = vsel %vm2897, %v2894, %v2886
        %v2905 = vsel %vm2897, %v2896, %v2888
        %vm2906 = vmand %vm464, %vm460
        %v2907 = vsel %vm2906, 1, 0
        %v2908 = vlaneseq
        %v2909 = vshrl.u32 %v2908, 7
        %v2910 = vsub.s32 0, %v2909
        %v2911 = vrot.slane %v2907, %v2910
        %v2912 = vlaneseq
        %v2913 = vshrl.u32 %v2912, 7
        %v2914 = vsub.s32 1, %v2913
        %v2915 = vrot.slane %v2907, %v2914
        %vm2916 = vcmp.eq.s32.totalorder %v2911, 1
        %vm2917 = vcmp.eq.s32.totalorder %v2915, 1
        %v2918 = vsel %vm2916, %v2898, 0.0
        %v2919 = vsel %vm2917, %v2902, 0.0
        %v2920 = vsel %vm2916, %v2899, 0.0
        %v2921 = vsel %vm2917, %v2903, 0.0
        %v2922 = vsel %vm2916, %v2900, 0.0
        %v2923 = vsel %vm2917, %v2904, 0.0
        %v2924 = vsel %vm2916, %v2901, 0.0
        %v2925 = vsel %vm2917, %v2905, 0.0
        %2926 = vset.pattern.permute.xlu0 31
        %2927 = vperm.xlu0 %2926, %v423
        %v2928 = vpop.permute.xlu0 %2927
        %2930 = vset.pattern.permute.xlu0 31
        %2931 = vperm.xlu0 %2930, %v424
        %v2932 = vpop.permute.xlu0 %2931
        %2934 = vset.pattern.permute.xlu0 31
        %2935 = vperm.xlu0 %2934, %v425
        %v2936 = vpop.permute.xlu0 %2935
        %2938 = vset.pattern.permute.xlu0 31
        %2939 = vperm.xlu0 %2938, %v426
        %v2940 = vpop.permute.xlu0 %2939
        %v2942 = vmul.f32 %v2918, %v2928
        %v2943 = vmul.f32 %v2919, %v2928
        %v2944 = vmul.f32 %v2920, %v2932
        %v2945 = vmul.f32 %v2921, %v2932
        %v2946 = vmul.f32 %v2922, %v2936
        %v2947 = vmul.f32 %v2923, %v2936
        %v2948 = vmul.f32 %v2924, %v2940
        %v2949 = vmul.f32 %v2925, %v2940
        %v2950 = vadd.f32 %v2873, %v2942
        %v2951 = vadd.f32 %v2874, %v2943
        %v2952 = vadd.f32 %v2875, %v2944
        %v2953 = vadd.f32 %v2876, %v2945
        %v2954 = vadd.f32 %v2877, %v2946
        %v2955 = vadd.f32 %v2878, %v2947
        %v2956 = vadd.f32 %v2879, %v2948
        %v2957 = vadd.f32 %v2880, %v2949
        %2958 = vrot.lane.b32.xlu0 %v412, 111
        %v2959 = vpop.permute.xlu0 %2958
        %2960 = vrot.lane.b32.xlu0 %v414, 111
        %v2961 = vpop.permute.xlu0 %2960
        %2962 = vrot.lane.b32.xlu0 %v416, 111
        %v2963 = vpop.permute.xlu0 %2962
        %2964 = vrot.lane.b32.xlu0 %v418, 111
        %v2965 = vpop.permute.xlu0 %2964
        %2966 = vrot.lane.b32.xlu0 %v413, 111
        %v2967 = vpop.permute.xlu0 %2966
        %2968 = vrot.lane.b32.xlu0 %v415, 111
        %v2969 = vpop.permute.xlu0 %2968
        %2970 = vrot.lane.b32.xlu0 %v417, 111
        %v2971 = vpop.permute.xlu0 %2970
        %2972 = vrot.lane.b32.xlu0 %v419, 111
        %v2973 = vpop.permute.xlu0 %2972
        %vm2974 = vcmp.lt.s32.totalorder %v530, 111
        %v2975 = vsel %vm2974, %v2959, %v2967
        %v2976 = vsel %vm2974, %v2961, %v2969
        %v2977 = vsel %vm2974, %v2963, %v2971
        %v2978 = vsel %vm2974, %v2965, %v2973
        %v2979 = vsel %vm2974, %v2967, %v2959
        %v2980 = vsel %vm2974, %v2969, %v2961
        %v2981 = vsel %vm2974, %v2971, %v2963
        %v2982 = vsel %vm2974, %v2973, %v2965
        %vm2983 = vmand %vm464, %vm468
        %v2984 = vsel %vm2983, 1, 0
        %v2985 = vlaneseq
        %v2986 = vshrl.u32 %v2985, 7
        %v2987 = vsub.s32 0, %v2986
        %v2988 = vrot.slane %v2984, %v2987
        %v2989 = vlaneseq
        %v2990 = vshrl.u32 %v2989, 7
        %v2991 = vsub.s32 1, %v2990
        %v2992 = vrot.slane %v2984, %v2991
        %vm2993 = vcmp.eq.s32.totalorder %v2988, 1
        %vm2994 = vcmp.eq.s32.totalorder %v2992, 1
        %v2995 = vsel %vm2993, %v2975, 0.0
        %v2996 = vsel %vm2994, %v2979, 0.0
        %v2997 = vsel %vm2993, %v2976, 0.0
        %v2998 = vsel %vm2994, %v2980, 0.0
        %v2999 = vsel %vm2993, %v2977, 0.0
        %v3000 = vsel %vm2994, %v2981, 0.0
        %v3001 = vsel %vm2993, %v2978, 0.0
        %v3002 = vsel %vm2994, %v2982, 0.0
        %3003 = vset.pattern.permute.xlu0 32
        %3004 = vperm.xlu0 %3003, %v423
        %v3005 = vpop.permute.xlu0 %3004
        %3007 = vset.pattern.permute.xlu0 32
        %3008 = vperm.xlu0 %3007, %v424
        %v3009 = vpop.permute.xlu0 %3008
        %3011 = vset.pattern.permute.xlu0 32
        %3012 = vperm.xlu0 %3011, %v425
        %v3013 = vpop.permute.xlu0 %3012
        %3015 = vset.pattern.permute.xlu0 32
        %3016 = vperm.xlu0 %3015, %v426
        %v3017 = vpop.permute.xlu0 %3016
        %v3019 = vmul.f32 %v2995, %v3005
        %v3020 = vmul.f32 %v2996, %v3005
        %v3021 = vmul.f32 %v2997, %v3009
        %v3022 = vmul.f32 %v2998, %v3009
        %v3023 = vmul.f32 %v2999, %v3013
        %v3024 = vmul.f32 %v3000, %v3013
        %v3025 = vmul.f32 %v3001, %v3017
        %v3026 = vmul.f32 %v3002, %v3017
        %v3027 = vadd.f32 %v2950, %v3019
        %v3028 = vadd.f32 %v2951, %v3020
        %v3029 = vadd.f32 %v2952, %v3021
        %v3030 = vadd.f32 %v2953, %v3022
        %v3031 = vadd.f32 %v2954, %v3023
        %v3032 = vadd.f32 %v2955, %v3024
        %v3033 = vadd.f32 %v2956, %v3025
        %v3034 = vadd.f32 %v2957, %v3026
        %3035 = vrot.lane.b32.xlu0 %v412, 110
        %v3036 = vpop.permute.xlu0 %3035
        %3037 = vrot.lane.b32.xlu0 %v414, 110
        %v3038 = vpop.permute.xlu0 %3037
        %3039 = vrot.lane.b32.xlu0 %v416, 110
        %v3040 = vpop.permute.xlu0 %3039
        %3041 = vrot.lane.b32.xlu0 %v418, 110
        %v3042 = vpop.permute.xlu0 %3041
        %3043 = vrot.lane.b32.xlu0 %v413, 110
        %v3044 = vpop.permute.xlu0 %3043
        %3045 = vrot.lane.b32.xlu0 %v415, 110
        %v3046 = vpop.permute.xlu0 %3045
        %3047 = vrot.lane.b32.xlu0 %v417, 110
        %v3048 = vpop.permute.xlu0 %3047
        %3049 = vrot.lane.b32.xlu0 %v419, 110
        %v3050 = vpop.permute.xlu0 %3049
        %vm3051 = vcmp.lt.s32.totalorder %v530, 110
        %v3052 = vsel %vm3051, %v3036, %v3044
        %v3053 = vsel %vm3051, %v3038, %v3046
        %v3054 = vsel %vm3051, %v3040, %v3048
        %v3055 = vsel %vm3051, %v3042, %v3050
        %v3056 = vsel %vm3051, %v3044, %v3036
        %v3057 = vsel %vm3051, %v3046, %v3038
        %v3058 = vsel %vm3051, %v3048, %v3040
        %v3059 = vsel %vm3051, %v3050, %v3042
        %vm3060 = vmand %vm464, %vm476
        %v3061 = vsel %vm3060, 1, 0
        %v3062 = vlaneseq
        %v3063 = vshrl.u32 %v3062, 7
        %v3064 = vsub.s32 0, %v3063
        %v3065 = vrot.slane %v3061, %v3064
        %v3066 = vlaneseq
        %v3067 = vshrl.u32 %v3066, 7
        %v3068 = vsub.s32 1, %v3067
        %v3069 = vrot.slane %v3061, %v3068
        %vm3070 = vcmp.eq.s32.totalorder %v3065, 1
        %vm3071 = vcmp.eq.s32.totalorder %v3069, 1
        %v3072 = vsel %vm3070, %v3052, 0.0
        %v3073 = vsel %vm3071, %v3056, 0.0
        %v3074 = vsel %vm3070, %v3053, 0.0
        %v3075 = vsel %vm3071, %v3057, 0.0
        %v3076 = vsel %vm3070, %v3054, 0.0
        %v3077 = vsel %vm3071, %v3058, 0.0
        %v3078 = vsel %vm3070, %v3055, 0.0
        %v3079 = vsel %vm3071, %v3059, 0.0
        %3080 = vset.pattern.permute.xlu0 33
        %3081 = vperm.xlu0 %3080, %v423
        %v3082 = vpop.permute.xlu0 %3081
        %3084 = vset.pattern.permute.xlu0 33
        %3085 = vperm.xlu0 %3084, %v424
        %v3086 = vpop.permute.xlu0 %3085
        %3088 = vset.pattern.permute.xlu0 33
        %3089 = vperm.xlu0 %3088, %v425
        %v3090 = vpop.permute.xlu0 %3089
        %3092 = vset.pattern.permute.xlu0 33
        %3093 = vperm.xlu0 %3092, %v426
        %v3094 = vpop.permute.xlu0 %3093
        %v3096 = vmul.f32 %v3072, %v3082
        %v3097 = vmul.f32 %v3073, %v3082
        %v3098 = vmul.f32 %v3074, %v3086
        %v3099 = vmul.f32 %v3075, %v3086
        %v3100 = vmul.f32 %v3076, %v3090
        %v3101 = vmul.f32 %v3077, %v3090
        %v3102 = vmul.f32 %v3078, %v3094
        %v3103 = vmul.f32 %v3079, %v3094
        %v3104 = vadd.f32 %v3027, %v3096
        %v3105 = vadd.f32 %v3028, %v3097
        %v3106 = vadd.f32 %v3029, %v3098
        %v3107 = vadd.f32 %v3030, %v3099
        %v3108 = vadd.f32 %v3031, %v3100
        %v3109 = vadd.f32 %v3032, %v3101
        %v3110 = vadd.f32 %v3033, %v3102
        %v3111 = vadd.f32 %v3034, %v3103
        %3112 = vrot.lane.b32.xlu0 %v412, 109
        %v3113 = vpop.permute.xlu0 %3112
        %3114 = vrot.lane.b32.xlu0 %v414, 109
        %v3115 = vpop.permute.xlu0 %3114
        %3116 = vrot.lane.b32.xlu0 %v416, 109
        %v3117 = vpop.permute.xlu0 %3116
        %3118 = vrot.lane.b32.xlu0 %v418, 109
        %v3119 = vpop.permute.xlu0 %3118
        %3120 = vrot.lane.b32.xlu0 %v413, 109
        %v3121 = vpop.permute.xlu0 %3120
        %3122 = vrot.lane.b32.xlu0 %v415, 109
        %v3123 = vpop.permute.xlu0 %3122
        %3124 = vrot.lane.b32.xlu0 %v417, 109
        %v3125 = vpop.permute.xlu0 %3124
        %3126 = vrot.lane.b32.xlu0 %v419, 109
        %v3127 = vpop.permute.xlu0 %3126
        %vm3128 = vcmp.lt.s32.totalorder %v530, 109
        %v3129 = vsel %vm3128, %v3113, %v3121
        %v3130 = vsel %vm3128, %v3115, %v3123
        %v3131 = vsel %vm3128, %v3117, %v3125
        %v3132 = vsel %vm3128, %v3119, %v3127
        %v3133 = vsel %vm3128, %v3121, %v3113
        %v3134 = vsel %vm3128, %v3123, %v3115
        %v3135 = vsel %vm3128, %v3125, %v3117
        %v3136 = vsel %vm3128, %v3127, %v3119
        %vm3137 = vmand %vm464, %vm484
        %v3138 = vsel %vm3137, 1, 0
        %v3139 = vlaneseq
        %v3140 = vshrl.u32 %v3139, 7
        %v3141 = vsub.s32 0, %v3140
        %v3142 = vrot.slane %v3138, %v3141
        %v3143 = vlaneseq
        %v3144 = vshrl.u32 %v3143, 7
        %v3145 = vsub.s32 1, %v3144
        %v3146 = vrot.slane %v3138, %v3145
        %vm3147 = vcmp.eq.s32.totalorder %v3142, 1
        %vm3148 = vcmp.eq.s32.totalorder %v3146, 1
        %v3149 = vsel %vm3147, %v3129, 0.0
        %v3150 = vsel %vm3148, %v3133, 0.0
        %v3151 = vsel %vm3147, %v3130, 0.0
        %v3152 = vsel %vm3148, %v3134, 0.0
        %v3153 = vsel %vm3147, %v3131, 0.0
        %v3154 = vsel %vm3148, %v3135, 0.0
        %v3155 = vsel %vm3147, %v3132, 0.0
        %v3156 = vsel %vm3148, %v3136, 0.0
        %3157 = vset.pattern.permute.xlu0 34
        %3158 = vperm.xlu0 %3157, %v423
        %v3159 = vpop.permute.xlu0 %3158
        %3161 = vset.pattern.permute.xlu0 34
        %3162 = vperm.xlu0 %3161, %v424
        %v3163 = vpop.permute.xlu0 %3162
        %3165 = vset.pattern.permute.xlu0 34
        %3166 = vperm.xlu0 %3165, %v425
        %v3167 = vpop.permute.xlu0 %3166
        %3169 = vset.pattern.permute.xlu0 34
        %3170 = vperm.xlu0 %3169, %v426
        %v3171 = vpop.permute.xlu0 %3170
        %v3173 = vmul.f32 %v3149, %v3159
        %v3174 = vmul.f32 %v3150, %v3159
        %v3175 = vmul.f32 %v3151, %v3163
        %v3176 = vmul.f32 %v3152, %v3163
        %v3177 = vmul.f32 %v3153, %v3167
        %v3178 = vmul.f32 %v3154, %v3167
        %v3179 = vmul.f32 %v3155, %v3171
        %v3180 = vmul.f32 %v3156, %v3171
        %v3181 = vadd.f32 %v3104, %v3173
        %v3182 = vadd.f32 %v3105, %v3174
        %v3183 = vadd.f32 %v3106, %v3175
        %v3184 = vadd.f32 %v3107, %v3176
        %v3185 = vadd.f32 %v3108, %v3177
        %v3186 = vadd.f32 %v3109, %v3178
        %v3187 = vadd.f32 %v3110, %v3179
        %v3188 = vadd.f32 %v3111, %v3180
        %3189 = vrot.lane.b32.xlu0 %v412, 99
        %v3190 = vpop.permute.xlu0 %3189
        %3191 = vrot.lane.b32.xlu0 %v414, 99
        %v3192 = vpop.permute.xlu0 %3191
        %3193 = vrot.lane.b32.xlu0 %v416, 99
        %v3194 = vpop.permute.xlu0 %3193
        %3195 = vrot.lane.b32.xlu0 %v418, 99
        %v3196 = vpop.permute.xlu0 %3195
        %3197 = vrot.lane.b32.xlu0 %v413, 99
        %v3198 = vpop.permute.xlu0 %3197
        %3199 = vrot.lane.b32.xlu0 %v415, 99
        %v3200 = vpop.permute.xlu0 %3199
        %3201 = vrot.lane.b32.xlu0 %v417, 99
        %v3202 = vpop.permute.xlu0 %3201
        %3203 = vrot.lane.b32.xlu0 %v419, 99
        %v3204 = vpop.permute.xlu0 %3203
        %vm3205 = vcmp.lt.s32.totalorder %v530, 99
        %v3206 = vsel %vm3205, %v3190, %v3198
        %v3207 = vsel %vm3205, %v3192, %v3200
        %v3208 = vsel %vm3205, %v3194, %v3202
        %v3209 = vsel %vm3205, %v3196, %v3204
        %v3210 = vsel %vm3205, %v3198, %v3190
        %v3211 = vsel %vm3205, %v3200, %v3192
        %v3212 = vsel %vm3205, %v3202, %v3194
        %v3213 = vsel %vm3205, %v3204, %v3196
        %vm3214 = vmand %vm472, %vm438
        %v3215 = vsel %vm3214, 1, 0
        %v3216 = vlaneseq
        %v3217 = vshrl.u32 %v3216, 7
        %v3218 = vsub.s32 0, %v3217
        %v3219 = vrot.slane %v3215, %v3218
        %v3220 = vlaneseq
        %v3221 = vshrl.u32 %v3220, 7
        %v3222 = vsub.s32 1, %v3221
        %v3223 = vrot.slane %v3215, %v3222
        %vm3224 = vcmp.eq.s32.totalorder %v3219, 1
        %vm3225 = vcmp.eq.s32.totalorder %v3223, 1
        %v3226 = vsel %vm3224, %v3206, 0.0
        %v3227 = vsel %vm3225, %v3210, 0.0
        %v3228 = vsel %vm3224, %v3207, 0.0
        %v3229 = vsel %vm3225, %v3211, 0.0
        %v3230 = vsel %vm3224, %v3208, 0.0
        %v3231 = vsel %vm3225, %v3212, 0.0
        %v3232 = vsel %vm3224, %v3209, 0.0
        %v3233 = vsel %vm3225, %v3213, 0.0
        %3234 = vset.pattern.permute.xlu0 35
        %3235 = vperm.xlu0 %3234, %v423
        %v3236 = vpop.permute.xlu0 %3235
        %3238 = vset.pattern.permute.xlu0 35
        %3239 = vperm.xlu0 %3238, %v424
        %v3240 = vpop.permute.xlu0 %3239
        %3242 = vset.pattern.permute.xlu0 35
        %3243 = vperm.xlu0 %3242, %v425
        %v3244 = vpop.permute.xlu0 %3243
        %3246 = vset.pattern.permute.xlu0 35
        %3247 = vperm.xlu0 %3246, %v426
        %v3248 = vpop.permute.xlu0 %3247
        %v3250 = vmul.f32 %v3226, %v3236
        %v3251 = vmul.f32 %v3227, %v3236
        %v3252 = vmul.f32 %v3228, %v3240
        %v3253 = vmul.f32 %v3229, %v3240
        %v3254 = vmul.f32 %v3230, %v3244
        %v3255 = vmul.f32 %v3231, %v3244
        %v3256 = vmul.f32 %v3232, %v3248
        %v3257 = vmul.f32 %v3233, %v3248
        %v3258 = vadd.f32 %v3181, %v3250
        %v3259 = vadd.f32 %v3182, %v3251
        %v3260 = vadd.f32 %v3183, %v3252
        %v3261 = vadd.f32 %v3184, %v3253
        %v3262 = vadd.f32 %v3185, %v3254
        %v3263 = vadd.f32 %v3186, %v3255
        %v3264 = vadd.f32 %v3187, %v3256
        %v3265 = vadd.f32 %v3188, %v3257
        %3266 = vrot.lane.b32.xlu0 %v412, 98
        %v3267 = vpop.permute.xlu0 %3266
        %3268 = vrot.lane.b32.xlu0 %v414, 98
        %v3269 = vpop.permute.xlu0 %3268
        %3270 = vrot.lane.b32.xlu0 %v416, 98
        %v3271 = vpop.permute.xlu0 %3270
        %3272 = vrot.lane.b32.xlu0 %v418, 98
        %v3273 = vpop.permute.xlu0 %3272
        %3274 = vrot.lane.b32.xlu0 %v413, 98
        %v3275 = vpop.permute.xlu0 %3274
        %3276 = vrot.lane.b32.xlu0 %v415, 98
        %v3277 = vpop.permute.xlu0 %3276
        %3278 = vrot.lane.b32.xlu0 %v417, 98
        %v3279 = vpop.permute.xlu0 %3278
        %3280 = vrot.lane.b32.xlu0 %v419, 98
        %v3281 = vpop.permute.xlu0 %3280
        %vm3282 = vcmp.lt.s32.totalorder %v530, 98
        %v3283 = vsel %vm3282, %v3267, %v3275
        %v3284 = vsel %vm3282, %v3269, %v3277
        %v3285 = vsel %vm3282, %v3271, %v3279
        %v3286 = vsel %vm3282, %v3273, %v3281
        %v3287 = vsel %vm3282, %v3275, %v3267
        %v3288 = vsel %vm3282, %v3277, %v3269
        %v3289 = vsel %vm3282, %v3279, %v3271
        %v3290 = vsel %vm3282, %v3281, %v3273
        %vm3291 = vmand %vm472, %vm446
        %v3292 = vsel %vm3291, 1, 0
        %v3293 = vlaneseq
        %v3294 = vshrl.u32 %v3293, 7
        %v3295 = vsub.s32 0, %v3294
        %v3296 = vrot.slane %v3292, %v3295
        %v3297 = vlaneseq
        %v3298 = vshrl.u32 %v3297, 7
        %v3299 = vsub.s32 1, %v3298
        %v3300 = vrot.slane %v3292, %v3299
        %vm3301 = vcmp.eq.s32.totalorder %v3296, 1
        %vm3302 = vcmp.eq.s32.totalorder %v3300, 1
        %v3303 = vsel %vm3301, %v3283, 0.0
        %v3304 = vsel %vm3302, %v3287, 0.0
        %v3305 = vsel %vm3301, %v3284, 0.0
        %v3306 = vsel %vm3302, %v3288, 0.0
        %v3307 = vsel %vm3301, %v3285, 0.0
        %v3308 = vsel %vm3302, %v3289, 0.0
        %v3309 = vsel %vm3301, %v3286, 0.0
        %v3310 = vsel %vm3302, %v3290, 0.0
        %3311 = vset.pattern.permute.xlu0 36
        %3312 = vperm.xlu0 %3311, %v423
        %v3313 = vpop.permute.xlu0 %3312
        %3315 = vset.pattern.permute.xlu0 36
        %3316 = vperm.xlu0 %3315, %v424
        %v3317 = vpop.permute.xlu0 %3316
        %3319 = vset.pattern.permute.xlu0 36
        %3320 = vperm.xlu0 %3319, %v425
        %v3321 = vpop.permute.xlu0 %3320
        %3323 = vset.pattern.permute.xlu0 36
        %3324 = vperm.xlu0 %3323, %v426
        %v3325 = vpop.permute.xlu0 %3324
        %v3327 = vmul.f32 %v3303, %v3313
        %v3328 = vmul.f32 %v3304, %v3313
        %v3329 = vmul.f32 %v3305, %v3317
        %v3330 = vmul.f32 %v3306, %v3317
        %v3331 = vmul.f32 %v3307, %v3321
        %v3332 = vmul.f32 %v3308, %v3321
        %v3333 = vmul.f32 %v3309, %v3325
        %v3334 = vmul.f32 %v3310, %v3325
        %v3335 = vadd.f32 %v3258, %v3327
        %v3336 = vadd.f32 %v3259, %v3328
        %v3337 = vadd.f32 %v3260, %v3329
        %v3338 = vadd.f32 %v3261, %v3330
        %v3339 = vadd.f32 %v3262, %v3331
        %v3340 = vadd.f32 %v3263, %v3332
        %v3341 = vadd.f32 %v3264, %v3333
        %v3342 = vadd.f32 %v3265, %v3334
        %3343 = vrot.lane.b32.xlu0 %v412, 97
        %v3344 = vpop.permute.xlu0 %3343
        %3345 = vrot.lane.b32.xlu0 %v414, 97
        %v3346 = vpop.permute.xlu0 %3345
        %3347 = vrot.lane.b32.xlu0 %v416, 97
        %v3348 = vpop.permute.xlu0 %3347
        %3349 = vrot.lane.b32.xlu0 %v418, 97
        %v3350 = vpop.permute.xlu0 %3349
        %3351 = vrot.lane.b32.xlu0 %v413, 97
        %v3352 = vpop.permute.xlu0 %3351
        %3353 = vrot.lane.b32.xlu0 %v415, 97
        %v3354 = vpop.permute.xlu0 %3353
        %3355 = vrot.lane.b32.xlu0 %v417, 97
        %v3356 = vpop.permute.xlu0 %3355
        %3357 = vrot.lane.b32.xlu0 %v419, 97
        %v3358 = vpop.permute.xlu0 %3357
        %vm3359 = vcmp.lt.s32.totalorder %v530, 97
        %v3360 = vsel %vm3359, %v3344, %v3352
        %v3361 = vsel %vm3359, %v3346, %v3354
        %v3362 = vsel %vm3359, %v3348, %v3356
        %v3363 = vsel %vm3359, %v3350, %v3358
        %v3364 = vsel %vm3359, %v3352, %v3344
        %v3365 = vsel %vm3359, %v3354, %v3346
        %v3366 = vsel %vm3359, %v3356, %v3348
        %v3367 = vsel %vm3359, %v3358, %v3350
        %vm3368 = vmand %vm472, %vm454
        %v3369 = vsel %vm3368, 1, 0
        %v3370 = vlaneseq
        %v3371 = vshrl.u32 %v3370, 7
        %v3372 = vsub.s32 0, %v3371
        %v3373 = vrot.slane %v3369, %v3372
        %v3374 = vlaneseq
        %v3375 = vshrl.u32 %v3374, 7
        %v3376 = vsub.s32 1, %v3375
        %v3377 = vrot.slane %v3369, %v3376
        %vm3378 = vcmp.eq.s32.totalorder %v3373, 1
        %vm3379 = vcmp.eq.s32.totalorder %v3377, 1
        %v3380 = vsel %vm3378, %v3360, 0.0
        %v3381 = vsel %vm3379, %v3364, 0.0
        %v3382 = vsel %vm3378, %v3361, 0.0
        %v3383 = vsel %vm3379, %v3365, 0.0
        %v3384 = vsel %vm3378, %v3362, 0.0
        %v3385 = vsel %vm3379, %v3366, 0.0
        %v3386 = vsel %vm3378, %v3363, 0.0
        %v3387 = vsel %vm3379, %v3367, 0.0
        %3388 = vset.pattern.permute.xlu0 37
        %3389 = vperm.xlu0 %3388, %v423
        %v3390 = vpop.permute.xlu0 %3389
        %3392 = vset.pattern.permute.xlu0 37
        %3393 = vperm.xlu0 %3392, %v424
        %v3394 = vpop.permute.xlu0 %3393
        %3396 = vset.pattern.permute.xlu0 37
        %3397 = vperm.xlu0 %3396, %v425
        %v3398 = vpop.permute.xlu0 %3397
        %3400 = vset.pattern.permute.xlu0 37
        %3401 = vperm.xlu0 %3400, %v426
        %v3402 = vpop.permute.xlu0 %3401
        %v3404 = vmul.f32 %v3380, %v3390
        %v3405 = vmul.f32 %v3381, %v3390
        %v3406 = vmul.f32 %v3382, %v3394
        %v3407 = vmul.f32 %v3383, %v3394
        %v3408 = vmul.f32 %v3384, %v3398
        %v3409 = vmul.f32 %v3385, %v3398
        %v3410 = vmul.f32 %v3386, %v3402
        %v3411 = vmul.f32 %v3387, %v3402
        %v3412 = vadd.f32 %v3335, %v3404
        %v3413 = vadd.f32 %v3336, %v3405
        %v3414 = vadd.f32 %v3337, %v3406
        %v3415 = vadd.f32 %v3338, %v3407
        %v3416 = vadd.f32 %v3339, %v3408
        %v3417 = vadd.f32 %v3340, %v3409
        %v3418 = vadd.f32 %v3341, %v3410
        %v3419 = vadd.f32 %v3342, %v3411
        %3420 = vrot.lane.b32.xlu0 %v412, 96
        %v3421 = vpop.permute.xlu0 %3420
        %3422 = vrot.lane.b32.xlu0 %v414, 96
        %v3423 = vpop.permute.xlu0 %3422
        %3424 = vrot.lane.b32.xlu0 %v416, 96
        %v3425 = vpop.permute.xlu0 %3424
        %3426 = vrot.lane.b32.xlu0 %v418, 96
        %v3427 = vpop.permute.xlu0 %3426
        %3428 = vrot.lane.b32.xlu0 %v413, 96
        %v3429 = vpop.permute.xlu0 %3428
        %3430 = vrot.lane.b32.xlu0 %v415, 96
        %v3431 = vpop.permute.xlu0 %3430
        %3432 = vrot.lane.b32.xlu0 %v417, 96
        %v3433 = vpop.permute.xlu0 %3432
        %3434 = vrot.lane.b32.xlu0 %v419, 96
        %v3435 = vpop.permute.xlu0 %3434
        %vm3436 = vcmp.lt.s32.totalorder %v530, 96
        %v3437 = vsel %vm3436, %v3421, %v3429
        %v3438 = vsel %vm3436, %v3423, %v3431
        %v3439 = vsel %vm3436, %v3425, %v3433
        %v3440 = vsel %vm3436, %v3427, %v3435
        %v3441 = vsel %vm3436, %v3429, %v3421
        %v3442 = vsel %vm3436, %v3431, %v3423
        %v3443 = vsel %vm3436, %v3433, %v3425
        %v3444 = vsel %vm3436, %v3435, %v3427
        %vm3445 = vmand %vm472, %vm460
        %v3446 = vsel %vm3445, 1, 0
        %v3447 = vlaneseq
        %v3448 = vshrl.u32 %v3447, 7
        %v3449 = vsub.s32 0, %v3448
        %v3450 = vrot.slane %v3446, %v3449
        %v3451 = vlaneseq
        %v3452 = vshrl.u32 %v3451, 7
        %v3453 = vsub.s32 1, %v3452
        %v3454 = vrot.slane %v3446, %v3453
        %vm3455 = vcmp.eq.s32.totalorder %v3450, 1
        %vm3456 = vcmp.eq.s32.totalorder %v3454, 1
        %v3457 = vsel %vm3455, %v3437, 0.0
        %v3458 = vsel %vm3456, %v3441, 0.0
        %v3459 = vsel %vm3455, %v3438, 0.0
        %v3460 = vsel %vm3456, %v3442, 0.0
        %v3461 = vsel %vm3455, %v3439, 0.0
        %v3462 = vsel %vm3456, %v3443, 0.0
        %v3463 = vsel %vm3455, %v3440, 0.0
        %v3464 = vsel %vm3456, %v3444, 0.0
        %3465 = vset.pattern.permute.xlu0 38
        %3466 = vperm.xlu0 %3465, %v423
        %v3467 = vpop.permute.xlu0 %3466
        %3469 = vset.pattern.permute.xlu0 38
        %3470 = vperm.xlu0 %3469, %v424
        %v3471 = vpop.permute.xlu0 %3470
        %3473 = vset.pattern.permute.xlu0 38
        %3474 = vperm.xlu0 %3473, %v425
        %v3475 = vpop.permute.xlu0 %3474
        %3477 = vset.pattern.permute.xlu0 38
        %3478 = vperm.xlu0 %3477, %v426
        %v3479 = vpop.permute.xlu0 %3478
        %v3481 = vmul.f32 %v3457, %v3467
        %v3482 = vmul.f32 %v3458, %v3467
        %v3483 = vmul.f32 %v3459, %v3471
        %v3484 = vmul.f32 %v3460, %v3471
        %v3485 = vmul.f32 %v3461, %v3475
        %v3486 = vmul.f32 %v3462, %v3475
        %v3487 = vmul.f32 %v3463, %v3479
        %v3488 = vmul.f32 %v3464, %v3479
        %v3489 = vadd.f32 %v3412, %v3481
        %v3490 = vadd.f32 %v3413, %v3482
        %v3491 = vadd.f32 %v3414, %v3483
        %v3492 = vadd.f32 %v3415, %v3484
        %v3493 = vadd.f32 %v3416, %v3485
        %v3494 = vadd.f32 %v3417, %v3486
        %v3495 = vadd.f32 %v3418, %v3487
        %v3496 = vadd.f32 %v3419, %v3488
        %3497 = vrot.lane.b32.xlu0 %v412, 95
        %v3498 = vpop.permute.xlu0 %3497
        %3499 = vrot.lane.b32.xlu0 %v414, 95
        %v3500 = vpop.permute.xlu0 %3499
        %3501 = vrot.lane.b32.xlu0 %v416, 95
        %v3502 = vpop.permute.xlu0 %3501
        %3503 = vrot.lane.b32.xlu0 %v418, 95
        %v3504 = vpop.permute.xlu0 %3503
        %3505 = vrot.lane.b32.xlu0 %v413, 95
        %v3506 = vpop.permute.xlu0 %3505
        %3507 = vrot.lane.b32.xlu0 %v415, 95
        %v3508 = vpop.permute.xlu0 %3507
        %3509 = vrot.lane.b32.xlu0 %v417, 95
        %v3510 = vpop.permute.xlu0 %3509
        %3511 = vrot.lane.b32.xlu0 %v419, 95
        %v3512 = vpop.permute.xlu0 %3511
        %vm3513 = vcmp.lt.s32.totalorder %v530, 95
        %v3514 = vsel %vm3513, %v3498, %v3506
        %v3515 = vsel %vm3513, %v3500, %v3508
        %v3516 = vsel %vm3513, %v3502, %v3510
        %v3517 = vsel %vm3513, %v3504, %v3512
        %v3518 = vsel %vm3513, %v3506, %v3498
        %v3519 = vsel %vm3513, %v3508, %v3500
        %v3520 = vsel %vm3513, %v3510, %v3502
        %v3521 = vsel %vm3513, %v3512, %v3504
        %vm3522 = vmand %vm472, %vm468
        %v3523 = vsel %vm3522, 1, 0
        %v3524 = vlaneseq
        %v3525 = vshrl.u32 %v3524, 7
        %v3526 = vsub.s32 0, %v3525
        %v3527 = vrot.slane %v3523, %v3526
        %v3528 = vlaneseq
        %v3529 = vshrl.u32 %v3528, 7
        %v3530 = vsub.s32 1, %v3529
        %v3531 = vrot.slane %v3523, %v3530
        %vm3532 = vcmp.eq.s32.totalorder %v3527, 1
        %vm3533 = vcmp.eq.s32.totalorder %v3531, 1
        %v3534 = vsel %vm3532, %v3514, 0.0
        %v3535 = vsel %vm3533, %v3518, 0.0
        %v3536 = vsel %vm3532, %v3515, 0.0
        %v3537 = vsel %vm3533, %v3519, 0.0
        %v3538 = vsel %vm3532, %v3516, 0.0
        %v3539 = vsel %vm3533, %v3520, 0.0
        %v3540 = vsel %vm3532, %v3517, 0.0
        %v3541 = vsel %vm3533, %v3521, 0.0
        %3542 = vset.pattern.permute.xlu0 39
        %3543 = vperm.xlu0 %3542, %v423
        %v3544 = vpop.permute.xlu0 %3543
        %3546 = vset.pattern.permute.xlu0 39
        %3547 = vperm.xlu0 %3546, %v424
        %v3548 = vpop.permute.xlu0 %3547
        %3550 = vset.pattern.permute.xlu0 39
        %3551 = vperm.xlu0 %3550, %v425
        %v3552 = vpop.permute.xlu0 %3551
        %3554 = vset.pattern.permute.xlu0 39
        %3555 = vperm.xlu0 %3554, %v426
        %v3556 = vpop.permute.xlu0 %3555
        %v3558 = vmul.f32 %v3534, %v3544
        %v3559 = vmul.f32 %v3535, %v3544
        %v3560 = vmul.f32 %v3536, %v3548
        %v3561 = vmul.f32 %v3537, %v3548
        %v3562 = vmul.f32 %v3538, %v3552
        %v3563 = vmul.f32 %v3539, %v3552
        %v3564 = vmul.f32 %v3540, %v3556
        %v3565 = vmul.f32 %v3541, %v3556
        %v3566 = vadd.f32 %v3489, %v3558
        %v3567 = vadd.f32 %v3490, %v3559
        %v3568 = vadd.f32 %v3491, %v3560
        %v3569 = vadd.f32 %v3492, %v3561
        %v3570 = vadd.f32 %v3493, %v3562
        %v3571 = vadd.f32 %v3494, %v3563
        %v3572 = vadd.f32 %v3495, %v3564
        %v3573 = vadd.f32 %v3496, %v3565
        %3574 = vrot.lane.b32.xlu0 %v412, 94
        %v3575 = vpop.permute.xlu0 %3574
        %3576 = vrot.lane.b32.xlu0 %v414, 94
        %v3577 = vpop.permute.xlu0 %3576
        %3578 = vrot.lane.b32.xlu0 %v416, 94
        %v3579 = vpop.permute.xlu0 %3578
        %3580 = vrot.lane.b32.xlu0 %v418, 94
        %v3581 = vpop.permute.xlu0 %3580
        %3582 = vrot.lane.b32.xlu0 %v413, 94
        %v3583 = vpop.permute.xlu0 %3582
        %3584 = vrot.lane.b32.xlu0 %v415, 94
        %v3585 = vpop.permute.xlu0 %3584
        %3586 = vrot.lane.b32.xlu0 %v417, 94
        %v3587 = vpop.permute.xlu0 %3586
        %3588 = vrot.lane.b32.xlu0 %v419, 94
        %v3589 = vpop.permute.xlu0 %3588
        %vm3590 = vcmp.lt.s32.totalorder %v530, 94
        %v3591 = vsel %vm3590, %v3575, %v3583
        %v3592 = vsel %vm3590, %v3577, %v3585
        %v3593 = vsel %vm3590, %v3579, %v3587
        %v3594 = vsel %vm3590, %v3581, %v3589
        %v3595 = vsel %vm3590, %v3583, %v3575
        %v3596 = vsel %vm3590, %v3585, %v3577
        %v3597 = vsel %vm3590, %v3587, %v3579
        %v3598 = vsel %vm3590, %v3589, %v3581
        %vm3599 = vmand %vm472, %vm476
        %v3600 = vsel %vm3599, 1, 0
        %v3601 = vlaneseq
        %v3602 = vshrl.u32 %v3601, 7
        %v3603 = vsub.s32 0, %v3602
        %v3604 = vrot.slane %v3600, %v3603
        %v3605 = vlaneseq
        %v3606 = vshrl.u32 %v3605, 7
        %v3607 = vsub.s32 1, %v3606
        %v3608 = vrot.slane %v3600, %v3607
        %vm3609 = vcmp.eq.s32.totalorder %v3604, 1
        %vm3610 = vcmp.eq.s32.totalorder %v3608, 1
        %v3611 = vsel %vm3609, %v3591, 0.0
        %v3612 = vsel %vm3610, %v3595, 0.0
        %v3613 = vsel %vm3609, %v3592, 0.0
        %v3614 = vsel %vm3610, %v3596, 0.0
        %v3615 = vsel %vm3609, %v3593, 0.0
        %v3616 = vsel %vm3610, %v3597, 0.0
        %v3617 = vsel %vm3609, %v3594, 0.0
        %v3618 = vsel %vm3610, %v3598, 0.0
        %3619 = vset.pattern.permute.xlu0 40
        %3620 = vperm.xlu0 %3619, %v423
        %v3621 = vpop.permute.xlu0 %3620
        %3623 = vset.pattern.permute.xlu0 40
        %3624 = vperm.xlu0 %3623, %v424
        %v3625 = vpop.permute.xlu0 %3624
        %3627 = vset.pattern.permute.xlu0 40
        %3628 = vperm.xlu0 %3627, %v425
        %v3629 = vpop.permute.xlu0 %3628
        %3631 = vset.pattern.permute.xlu0 40
        %3632 = vperm.xlu0 %3631, %v426
        %v3633 = vpop.permute.xlu0 %3632
        %v3635 = vmul.f32 %v3611, %v3621
        %v3636 = vmul.f32 %v3612, %v3621
        %v3637 = vmul.f32 %v3613, %v3625
        %v3638 = vmul.f32 %v3614, %v3625
        %v3639 = vmul.f32 %v3615, %v3629
        %v3640 = vmul.f32 %v3616, %v3629
        %v3641 = vmul.f32 %v3617, %v3633
        %v3642 = vmul.f32 %v3618, %v3633
        %v3643 = vadd.f32 %v3566, %v3635
        %v3644 = vadd.f32 %v3567, %v3636
        %v3645 = vadd.f32 %v3568, %v3637
        %v3646 = vadd.f32 %v3569, %v3638
        %v3647 = vadd.f32 %v3570, %v3639
        %v3648 = vadd.f32 %v3571, %v3640
        %v3649 = vadd.f32 %v3572, %v3641
        %v3650 = vadd.f32 %v3573, %v3642
        %3651 = vrot.lane.b32.xlu0 %v412, 93
        %v3652 = vpop.permute.xlu0 %3651
        %3653 = vrot.lane.b32.xlu0 %v414, 93
        %v3654 = vpop.permute.xlu0 %3653
        %3655 = vrot.lane.b32.xlu0 %v416, 93
        %v3656 = vpop.permute.xlu0 %3655
        %3657 = vrot.lane.b32.xlu0 %v418, 93
        %v3658 = vpop.permute.xlu0 %3657
        %3659 = vrot.lane.b32.xlu0 %v413, 93
        %v3660 = vpop.permute.xlu0 %3659
        %3661 = vrot.lane.b32.xlu0 %v415, 93
        %v3662 = vpop.permute.xlu0 %3661
        %3663 = vrot.lane.b32.xlu0 %v417, 93
        %v3664 = vpop.permute.xlu0 %3663
        %3665 = vrot.lane.b32.xlu0 %v419, 93
        %v3666 = vpop.permute.xlu0 %3665
        %vm3667 = vcmp.lt.s32.totalorder %v530, 93
        %v3668 = vsel %vm3667, %v3652, %v3660
        %v3669 = vsel %vm3667, %v3654, %v3662
        %v3670 = vsel %vm3667, %v3656, %v3664
        %v3671 = vsel %vm3667, %v3658, %v3666
        %v3672 = vsel %vm3667, %v3660, %v3652
        %v3673 = vsel %vm3667, %v3662, %v3654
        %v3674 = vsel %vm3667, %v3664, %v3656
        %v3675 = vsel %vm3667, %v3666, %v3658
        %vm3676 = vmand %vm472, %vm484
        %v3677 = vsel %vm3676, 1, 0
        %v3678 = vlaneseq
        %v3679 = vshrl.u32 %v3678, 7
        %v3680 = vsub.s32 0, %v3679
        %v3681 = vrot.slane %v3677, %v3680
        %v3682 = vlaneseq
        %v3683 = vshrl.u32 %v3682, 7
        %v3684 = vsub.s32 1, %v3683
        %v3685 = vrot.slane %v3677, %v3684
        %vm3686 = vcmp.eq.s32.totalorder %v3681, 1
        %vm3687 = vcmp.eq.s32.totalorder %v3685, 1
        %v3688 = vsel %vm3686, %v3668, 0.0
        %v3689 = vsel %vm3687, %v3672, 0.0
        %v3690 = vsel %vm3686, %v3669, 0.0
        %v3691 = vsel %vm3687, %v3673, 0.0
        %v3692 = vsel %vm3686, %v3670, 0.0
        %v3693 = vsel %vm3687, %v3674, 0.0
        %v3694 = vsel %vm3686, %v3671, 0.0
        %v3695 = vsel %vm3687, %v3675, 0.0
        %3696 = vset.pattern.permute.xlu0 41
        %3697 = vperm.xlu0 %3696, %v423
        %v3698 = vpop.permute.xlu0 %3697
        %3700 = vset.pattern.permute.xlu0 41
        %3701 = vperm.xlu0 %3700, %v424
        %v3702 = vpop.permute.xlu0 %3701
        %3704 = vset.pattern.permute.xlu0 41
        %3705 = vperm.xlu0 %3704, %v425
        %v3706 = vpop.permute.xlu0 %3705
        %3708 = vset.pattern.permute.xlu0 41
        %3709 = vperm.xlu0 %3708, %v426
        %v3710 = vpop.permute.xlu0 %3709
        %v3712 = vmul.f32 %v3688, %v3698
        %v3713 = vmul.f32 %v3689, %v3698
        %v3714 = vmul.f32 %v3690, %v3702
        %v3715 = vmul.f32 %v3691, %v3702
        %v3716 = vmul.f32 %v3692, %v3706
        %v3717 = vmul.f32 %v3693, %v3706
        %v3718 = vmul.f32 %v3694, %v3710
        %v3719 = vmul.f32 %v3695, %v3710
        %v3720 = vadd.f32 %v3643, %v3712
        %v3721 = vadd.f32 %v3644, %v3713
        %v3722 = vadd.f32 %v3645, %v3714
        %v3723 = vadd.f32 %v3646, %v3715
        %v3724 = vadd.f32 %v3647, %v3716
        %v3725 = vadd.f32 %v3648, %v3717
        %v3726 = vadd.f32 %v3649, %v3718
        %v3727 = vadd.f32 %v3650, %v3719
        %3728 = vrot.lane.b32.xlu0 %v412, 83
        %v3729 = vpop.permute.xlu0 %3728
        %3730 = vrot.lane.b32.xlu0 %v414, 83
        %v3731 = vpop.permute.xlu0 %3730
        %3732 = vrot.lane.b32.xlu0 %v416, 83
        %v3733 = vpop.permute.xlu0 %3732
        %3734 = vrot.lane.b32.xlu0 %v418, 83
        %v3735 = vpop.permute.xlu0 %3734
        %3736 = vrot.lane.b32.xlu0 %v413, 83
        %v3737 = vpop.permute.xlu0 %3736
        %3738 = vrot.lane.b32.xlu0 %v415, 83
        %v3739 = vpop.permute.xlu0 %3738
        %3740 = vrot.lane.b32.xlu0 %v417, 83
        %v3741 = vpop.permute.xlu0 %3740
        %3742 = vrot.lane.b32.xlu0 %v419, 83
        %v3743 = vpop.permute.xlu0 %3742
        %vm3744 = vcmp.lt.s32.totalorder %v530, 83
        %v3745 = vsel %vm3744, %v3729, %v3737
        %v3746 = vsel %vm3744, %v3731, %v3739
        %v3747 = vsel %vm3744, %v3733, %v3741
        %v3748 = vsel %vm3744, %v3735, %v3743
        %v3749 = vsel %vm3744, %v3737, %v3729
        %v3750 = vsel %vm3744, %v3739, %v3731
        %v3751 = vsel %vm3744, %v3741, %v3733
        %v3752 = vsel %vm3744, %v3743, %v3735
        %vm3753 = vmand %vm480, %vm438
        %v3754 = vsel %vm3753, 1, 0
        %v3755 = vlaneseq
        %v3756 = vshrl.u32 %v3755, 7
        %v3757 = vsub.s32 0, %v3756
        %v3758 = vrot.slane %v3754, %v3757
        %v3759 = vlaneseq
        %v3760 = vshrl.u32 %v3759, 7
        %v3761 = vsub.s32 1, %v3760
        %v3762 = vrot.slane %v3754, %v3761
        %vm3763 = vcmp.eq.s32.totalorder %v3758, 1
        %vm3764 = vcmp.eq.s32.totalorder %v3762, 1
        %v3765 = vsel %vm3763, %v3745, 0.0
        %v3766 = vsel %vm3764, %v3749, 0.0
        %v3767 = vsel %vm3763, %v3746, 0.0
        %v3768 = vsel %vm3764, %v3750, 0.0
        %v3769 = vsel %vm3763, %v3747, 0.0
        %v3770 = vsel %vm3764, %v3751, 0.0
        %v3771 = vsel %vm3763, %v3748, 0.0
        %v3772 = vsel %vm3764, %v3752, 0.0
        %3773 = vset.pattern.permute.xlu0 42
        %3774 = vperm.xlu0 %3773, %v423
        %v3775 = vpop.permute.xlu0 %3774
        %3777 = vset.pattern.permute.xlu0 42
        %3778 = vperm.xlu0 %3777, %v424
        %v3779 = vpop.permute.xlu0 %3778
        %3781 = vset.pattern.permute.xlu0 42
        %3782 = vperm.xlu0 %3781, %v425
        %v3783 = vpop.permute.xlu0 %3782
        %3785 = vset.pattern.permute.xlu0 42
        %3786 = vperm.xlu0 %3785, %v426
        %v3787 = vpop.permute.xlu0 %3786
        %v3789 = vmul.f32 %v3765, %v3775
        %v3790 = vmul.f32 %v3766, %v3775
        %v3791 = vmul.f32 %v3767, %v3779
        %v3792 = vmul.f32 %v3768, %v3779
        %v3793 = vmul.f32 %v3769, %v3783
        %v3794 = vmul.f32 %v3770, %v3783
        %v3795 = vmul.f32 %v3771, %v3787
        %v3796 = vmul.f32 %v3772, %v3787
        %v3797 = vadd.f32 %v3720, %v3789
        %v3798 = vadd.f32 %v3721, %v3790
        %v3799 = vadd.f32 %v3722, %v3791
        %v3800 = vadd.f32 %v3723, %v3792
        %v3801 = vadd.f32 %v3724, %v3793
        %v3802 = vadd.f32 %v3725, %v3794
        %v3803 = vadd.f32 %v3726, %v3795
        %v3804 = vadd.f32 %v3727, %v3796
        %3805 = vrot.lane.b32.xlu0 %v412, 82
        %v3806 = vpop.permute.xlu0 %3805
        %3807 = vrot.lane.b32.xlu0 %v414, 82
        %v3808 = vpop.permute.xlu0 %3807
        %3809 = vrot.lane.b32.xlu0 %v416, 82
        %v3810 = vpop.permute.xlu0 %3809
        %3811 = vrot.lane.b32.xlu0 %v418, 82
        %v3812 = vpop.permute.xlu0 %3811
        %3813 = vrot.lane.b32.xlu0 %v413, 82
        %v3814 = vpop.permute.xlu0 %3813
        %3815 = vrot.lane.b32.xlu0 %v415, 82
        %v3816 = vpop.permute.xlu0 %3815
        %3817 = vrot.lane.b32.xlu0 %v417, 82
        %v3818 = vpop.permute.xlu0 %3817
        %3819 = vrot.lane.b32.xlu0 %v419, 82
        %v3820 = vpop.permute.xlu0 %3819
        %vm3821 = vcmp.lt.s32.totalorder %v530, 82
        %v3822 = vsel %vm3821, %v3806, %v3814
        %v3823 = vsel %vm3821, %v3808, %v3816
        %v3824 = vsel %vm3821, %v3810, %v3818
        %v3825 = vsel %vm3821, %v3812, %v3820
        %v3826 = vsel %vm3821, %v3814, %v3806
        %v3827 = vsel %vm3821, %v3816, %v3808
        %v3828 = vsel %vm3821, %v3818, %v3810
        %v3829 = vsel %vm3821, %v3820, %v3812
        %vm3830 = vmand %vm480, %vm446
        %v3831 = vsel %vm3830, 1, 0
        %v3832 = vlaneseq
        %v3833 = vshrl.u32 %v3832, 7
        %v3834 = vsub.s32 0, %v3833
        %v3835 = vrot.slane %v3831, %v3834
        %v3836 = vlaneseq
        %v3837 = vshrl.u32 %v3836, 7
        %v3838 = vsub.s32 1, %v3837
        %v3839 = vrot.slane %v3831, %v3838
        %vm3840 = vcmp.eq.s32.totalorder %v3835, 1
        %vm3841 = vcmp.eq.s32.totalorder %v3839, 1
        %v3842 = vsel %vm3840, %v3822, 0.0
        %v3843 = vsel %vm3841, %v3826, 0.0
        %v3844 = vsel %vm3840, %v3823, 0.0
        %v3845 = vsel %vm3841, %v3827, 0.0
        %v3846 = vsel %vm3840, %v3824, 0.0
        %v3847 = vsel %vm3841, %v3828, 0.0
        %v3848 = vsel %vm3840, %v3825, 0.0
        %v3849 = vsel %vm3841, %v3829, 0.0
        %3850 = vset.pattern.permute.xlu0 43
        %3851 = vperm.xlu0 %3850, %v423
        %v3852 = vpop.permute.xlu0 %3851
        %3854 = vset.pattern.permute.xlu0 43
        %3855 = vperm.xlu0 %3854, %v424
        %v3856 = vpop.permute.xlu0 %3855
        %3858 = vset.pattern.permute.xlu0 43
        %3859 = vperm.xlu0 %3858, %v425
        %v3860 = vpop.permute.xlu0 %3859
        %3862 = vset.pattern.permute.xlu0 43
        %3863 = vperm.xlu0 %3862, %v426
        %v3864 = vpop.permute.xlu0 %3863
        %v3866 = vmul.f32 %v3842, %v3852
        %v3867 = vmul.f32 %v3843, %v3852
        %v3868 = vmul.f32 %v3844, %v3856
        %v3869 = vmul.f32 %v3845, %v3856
        %v3870 = vmul.f32 %v3846, %v3860
        %v3871 = vmul.f32 %v3847, %v3860
        %v3872 = vmul.f32 %v3848, %v3864
        %v3873 = vmul.f32 %v3849, %v3864
        %v3874 = vadd.f32 %v3797, %v3866
        %v3875 = vadd.f32 %v3798, %v3867
        %v3876 = vadd.f32 %v3799, %v3868
        %v3877 = vadd.f32 %v3800, %v3869
        %v3878 = vadd.f32 %v3801, %v3870
        %v3879 = vadd.f32 %v3802, %v3871
        %v3880 = vadd.f32 %v3803, %v3872
        %v3881 = vadd.f32 %v3804, %v3873
        %3882 = vrot.lane.b32.xlu0 %v412, 81
        %v3883 = vpop.permute.xlu0 %3882
        %3884 = vrot.lane.b32.xlu0 %v414, 81
        %v3885 = vpop.permute.xlu0 %3884
        %3886 = vrot.lane.b32.xlu0 %v416, 81
        %v3887 = vpop.permute.xlu0 %3886
        %3888 = vrot.lane.b32.xlu0 %v418, 81
        %v3889 = vpop.permute.xlu0 %3888
        %3890 = vrot.lane.b32.xlu0 %v413, 81
        %v3891 = vpop.permute.xlu0 %3890
        %3892 = vrot.lane.b32.xlu0 %v415, 81
        %v3893 = vpop.permute.xlu0 %3892
        %3894 = vrot.lane.b32.xlu0 %v417, 81
        %v3895 = vpop.permute.xlu0 %3894
        %3896 = vrot.lane.b32.xlu0 %v419, 81
        %v3897 = vpop.permute.xlu0 %3896
        %vm3898 = vcmp.lt.s32.totalorder %v530, 81
        %v3899 = vsel %vm3898, %v3883, %v3891
        %v3900 = vsel %vm3898, %v3885, %v3893
        %v3901 = vsel %vm3898, %v3887, %v3895
        %v3902 = vsel %vm3898, %v3889, %v3897
        %v3903 = vsel %vm3898, %v3891, %v3883
        %v3904 = vsel %vm3898, %v3893, %v3885
        %v3905 = vsel %vm3898, %v3895, %v3887
        %v3906 = vsel %vm3898, %v3897, %v3889
        %vm3907 = vmand %vm480, %vm454
        %v3908 = vsel %vm3907, 1, 0
        %v3909 = vlaneseq
        %v3910 = vshrl.u32 %v3909, 7
        %v3911 = vsub.s32 0, %v3910
        %v3912 = vrot.slane %v3908, %v3911
        %v3913 = vlaneseq
        %v3914 = vshrl.u32 %v3913, 7
        %v3915 = vsub.s32 1, %v3914
        %v3916 = vrot.slane %v3908, %v3915
        %vm3917 = vcmp.eq.s32.totalorder %v3912, 1
        %vm3918 = vcmp.eq.s32.totalorder %v3916, 1
        %v3919 = vsel %vm3917, %v3899, 0.0
        %v3920 = vsel %vm3918, %v3903, 0.0
        %v3921 = vsel %vm3917, %v3900, 0.0
        %v3922 = vsel %vm3918, %v3904, 0.0
        %v3923 = vsel %vm3917, %v3901, 0.0
        %v3924 = vsel %vm3918, %v3905, 0.0
        %v3925 = vsel %vm3917, %v3902, 0.0
        %v3926 = vsel %vm3918, %v3906, 0.0
        %3927 = vset.pattern.permute.xlu0 44
        %3928 = vperm.xlu0 %3927, %v423
        %v3929 = vpop.permute.xlu0 %3928
        %3931 = vset.pattern.permute.xlu0 44
        %3932 = vperm.xlu0 %3931, %v424
        %v3933 = vpop.permute.xlu0 %3932
        %3935 = vset.pattern.permute.xlu0 44
        %3936 = vperm.xlu0 %3935, %v425
        %v3937 = vpop.permute.xlu0 %3936
        %3939 = vset.pattern.permute.xlu0 44
        %3940 = vperm.xlu0 %3939, %v426
        %v3941 = vpop.permute.xlu0 %3940
        %v3943 = vmul.f32 %v3919, %v3929
        %v3944 = vmul.f32 %v3920, %v3929
        %v3945 = vmul.f32 %v3921, %v3933
        %v3946 = vmul.f32 %v3922, %v3933
        %v3947 = vmul.f32 %v3923, %v3937
        %v3948 = vmul.f32 %v3924, %v3937
        %v3949 = vmul.f32 %v3925, %v3941
        %v3950 = vmul.f32 %v3926, %v3941
        %v3951 = vadd.f32 %v3874, %v3943
        %v3952 = vadd.f32 %v3875, %v3944
        %v3953 = vadd.f32 %v3876, %v3945
        %v3954 = vadd.f32 %v3877, %v3946
        %v3955 = vadd.f32 %v3878, %v3947
        %v3956 = vadd.f32 %v3879, %v3948
        %v3957 = vadd.f32 %v3880, %v3949
        %v3958 = vadd.f32 %v3881, %v3950
        %3959 = vrot.lane.b32.xlu0 %v412, 80
        %v3960 = vpop.permute.xlu0 %3959
        %3961 = vrot.lane.b32.xlu0 %v414, 80
        %v3962 = vpop.permute.xlu0 %3961
        %3963 = vrot.lane.b32.xlu0 %v416, 80
        %v3964 = vpop.permute.xlu0 %3963
        %3965 = vrot.lane.b32.xlu0 %v418, 80
        %v3966 = vpop.permute.xlu0 %3965
        %3967 = vrot.lane.b32.xlu0 %v413, 80
        %v3968 = vpop.permute.xlu0 %3967
        %3969 = vrot.lane.b32.xlu0 %v415, 80
        %v3970 = vpop.permute.xlu0 %3969
        %3971 = vrot.lane.b32.xlu0 %v417, 80
        %v3972 = vpop.permute.xlu0 %3971
        %3973 = vrot.lane.b32.xlu0 %v419, 80
        %v3974 = vpop.permute.xlu0 %3973
        %vm3975 = vcmp.lt.s32.totalorder %v530, 80
        %v3976 = vsel %vm3975, %v3960, %v3968
        %v3977 = vsel %vm3975, %v3962, %v3970
        %v3978 = vsel %vm3975, %v3964, %v3972
        %v3979 = vsel %vm3975, %v3966, %v3974
        %v3980 = vsel %vm3975, %v3968, %v3960
        %v3981 = vsel %vm3975, %v3970, %v3962
        %v3982 = vsel %vm3975, %v3972, %v3964
        %v3983 = vsel %vm3975, %v3974, %v3966
        %vm3984 = vmand %vm480, %vm460
        %v3985 = vsel %vm3984, 1, 0
        %v3986 = vlaneseq
        %v3987 = vshrl.u32 %v3986, 7
        %v3988 = vsub.s32 0, %v3987
        %v3989 = vrot.slane %v3985, %v3988
        %v3990 = vlaneseq
        %v3991 = vshrl.u32 %v3990, 7
        %v3992 = vsub.s32 1, %v3991
        %v3993 = vrot.slane %v3985, %v3992
        %vm3994 = vcmp.eq.s32.totalorder %v3989, 1
        %vm3995 = vcmp.eq.s32.totalorder %v3993, 1
        %v3996 = vsel %vm3994, %v3976, 0.0
        %v3997 = vsel %vm3995, %v3980, 0.0
        %v3998 = vsel %vm3994, %v3977, 0.0
        %v3999 = vsel %vm3995, %v3981, 0.0
        %v4000 = vsel %vm3994, %v3978, 0.0
        %v4001 = vsel %vm3995, %v3982, 0.0
        %v4002 = vsel %vm3994, %v3979, 0.0
        %v4003 = vsel %vm3995, %v3983, 0.0
        %4004 = vset.pattern.permute.xlu0 45
        %4005 = vperm.xlu0 %4004, %v423
        %v4006 = vpop.permute.xlu0 %4005
        %4008 = vset.pattern.permute.xlu0 45
        %4009 = vperm.xlu0 %4008, %v424
        %v4010 = vpop.permute.xlu0 %4009
        %4012 = vset.pattern.permute.xlu0 45
        %4013 = vperm.xlu0 %4012, %v425
        %v4014 = vpop.permute.xlu0 %4013
        %4016 = vset.pattern.permute.xlu0 45
        %4017 = vperm.xlu0 %4016, %v426
        %v4018 = vpop.permute.xlu0 %4017
        %v4020 = vmul.f32 %v3996, %v4006
        %v4021 = vmul.f32 %v3997, %v4006
        %v4022 = vmul.f32 %v3998, %v4010
        %v4023 = vmul.f32 %v3999, %v4010
        %v4024 = vmul.f32 %v4000, %v4014
        %v4025 = vmul.f32 %v4001, %v4014
        %v4026 = vmul.f32 %v4002, %v4018
        %v4027 = vmul.f32 %v4003, %v4018
        %v4028 = vadd.f32 %v3951, %v4020
        %v4029 = vadd.f32 %v3952, %v4021
        %v4030 = vadd.f32 %v3953, %v4022
        %v4031 = vadd.f32 %v3954, %v4023
        %v4032 = vadd.f32 %v3955, %v4024
        %v4033 = vadd.f32 %v3956, %v4025
        %v4034 = vadd.f32 %v3957, %v4026
        %v4035 = vadd.f32 %v3958, %v4027
        %4036 = vrot.lane.b32.xlu0 %v412, 79
        %v4037 = vpop.permute.xlu0 %4036
        %4038 = vrot.lane.b32.xlu0 %v414, 79
        %v4039 = vpop.permute.xlu0 %4038
        %4040 = vrot.lane.b32.xlu0 %v416, 79
        %v4041 = vpop.permute.xlu0 %4040
        %4042 = vrot.lane.b32.xlu0 %v418, 79
        %v4043 = vpop.permute.xlu0 %4042
        %4044 = vrot.lane.b32.xlu0 %v413, 79
        %v4045 = vpop.permute.xlu0 %4044
        %4046 = vrot.lane.b32.xlu0 %v415, 79
        %v4047 = vpop.permute.xlu0 %4046
        %4048 = vrot.lane.b32.xlu0 %v417, 79
        %v4049 = vpop.permute.xlu0 %4048
        %4050 = vrot.lane.b32.xlu0 %v419, 79
        %v4051 = vpop.permute.xlu0 %4050
        %vm4052 = vcmp.lt.s32.totalorder %v530, 79
        %v4053 = vsel %vm4052, %v4037, %v4045
        %v4054 = vsel %vm4052, %v4039, %v4047
        %v4055 = vsel %vm4052, %v4041, %v4049
        %v4056 = vsel %vm4052, %v4043, %v4051
        %v4057 = vsel %vm4052, %v4045, %v4037
        %v4058 = vsel %vm4052, %v4047, %v4039
        %v4059 = vsel %vm4052, %v4049, %v4041
        %v4060 = vsel %vm4052, %v4051, %v4043
        %vm4061 = vmand %vm480, %vm468
        %v4062 = vsel %vm4061, 1, 0
        %v4063 = vlaneseq
        %v4064 = vshrl.u32 %v4063, 7
        %v4065 = vsub.s32 0, %v4064
        %v4066 = vrot.slane %v4062, %v4065
        %v4067 = vlaneseq
        %v4068 = vshrl.u32 %v4067, 7
        %v4069 = vsub.s32 1, %v4068
        %v4070 = vrot.slane %v4062, %v4069
        %vm4071 = vcmp.eq.s32.totalorder %v4066, 1
        %vm4072 = vcmp.eq.s32.totalorder %v4070, 1
        %v4073 = vsel %vm4071, %v4053, 0.0
        %v4074 = vsel %vm4072, %v4057, 0.0
        %v4075 = vsel %vm4071, %v4054, 0.0
        %v4076 = vsel %vm4072, %v4058, 0.0
        %v4077 = vsel %vm4071, %v4055, 0.0
        %v4078 = vsel %vm4072, %v4059, 0.0
        %v4079 = vsel %vm4071, %v4056, 0.0
        %v4080 = vsel %vm4072, %v4060, 0.0
        %4081 = vset.pattern.permute.xlu0 46
        %4082 = vperm.xlu0 %4081, %v423
        %v4083 = vpop.permute.xlu0 %4082
        %4085 = vset.pattern.permute.xlu0 46
        %4086 = vperm.xlu0 %4085, %v424
        %v4087 = vpop.permute.xlu0 %4086
        %4089 = vset.pattern.permute.xlu0 46
        %4090 = vperm.xlu0 %4089, %v425
        %v4091 = vpop.permute.xlu0 %4090
        %4093 = vset.pattern.permute.xlu0 46
        %4094 = vperm.xlu0 %4093, %v426
        %v4095 = vpop.permute.xlu0 %4094
        %v4097 = vmul.f32 %v4073, %v4083
        %v4098 = vmul.f32 %v4074, %v4083
        %v4099 = vmul.f32 %v4075, %v4087
        %v4100 = vmul.f32 %v4076, %v4087
        %v4101 = vmul.f32 %v4077, %v4091
        %v4102 = vmul.f32 %v4078, %v4091
        %v4103 = vmul.f32 %v4079, %v4095
        %v4104 = vmul.f32 %v4080, %v4095
        %v4105 = vadd.f32 %v4028, %v4097
        %v4106 = vadd.f32 %v4029, %v4098
        %v4107 = vadd.f32 %v4030, %v4099
        %v4108 = vadd.f32 %v4031, %v4100
        %v4109 = vadd.f32 %v4032, %v4101
        %v4110 = vadd.f32 %v4033, %v4102
        %v4111 = vadd.f32 %v4034, %v4103
        %v4112 = vadd.f32 %v4035, %v4104
        %4113 = vrot.lane.b32.xlu0 %v412, 78
        %v4114 = vpop.permute.xlu0 %4113
        %4115 = vrot.lane.b32.xlu0 %v414, 78
        %v4116 = vpop.permute.xlu0 %4115
        %4117 = vrot.lane.b32.xlu0 %v416, 78
        %v4118 = vpop.permute.xlu0 %4117
        %4119 = vrot.lane.b32.xlu0 %v418, 78
        %v4120 = vpop.permute.xlu0 %4119
        %4121 = vrot.lane.b32.xlu0 %v413, 78
        %v4122 = vpop.permute.xlu0 %4121
        %4123 = vrot.lane.b32.xlu0 %v415, 78
        %v4124 = vpop.permute.xlu0 %4123
        %4125 = vrot.lane.b32.xlu0 %v417, 78
        %v4126 = vpop.permute.xlu0 %4125
        %4127 = vrot.lane.b32.xlu0 %v419, 78
        %v4128 = vpop.permute.xlu0 %4127
        %vm4129 = vcmp.lt.s32.totalorder %v530, 78
        %v4130 = vsel %vm4129, %v4114, %v4122
        %v4131 = vsel %vm4129, %v4116, %v4124
        %v4132 = vsel %vm4129, %v4118, %v4126
        %v4133 = vsel %vm4129, %v4120, %v4128
        %v4134 = vsel %vm4129, %v4122, %v4114
        %v4135 = vsel %vm4129, %v4124, %v4116
        %v4136 = vsel %vm4129, %v4126, %v4118
        %v4137 = vsel %vm4129, %v4128, %v4120
        %vm4138 = vmand %vm480, %vm476
        %v4139 = vsel %vm4138, 1, 0
        %v4140 = vlaneseq
        %v4141 = vshrl.u32 %v4140, 7
        %v4142 = vsub.s32 0, %v4141
        %v4143 = vrot.slane %v4139, %v4142
        %v4144 = vlaneseq
        %v4145 = vshrl.u32 %v4144, 7
        %v4146 = vsub.s32 1, %v4145
        %v4147 = vrot.slane %v4139, %v4146
        %vm4148 = vcmp.eq.s32.totalorder %v4143, 1
        %vm4149 = vcmp.eq.s32.totalorder %v4147, 1
        %v4150 = vsel %vm4148, %v4130, 0.0
        %v4151 = vsel %vm4149, %v4134, 0.0
        %v4152 = vsel %vm4148, %v4131, 0.0
        %v4153 = vsel %vm4149, %v4135, 0.0
        %v4154 = vsel %vm4148, %v4132, 0.0
        %v4155 = vsel %vm4149, %v4136, 0.0
        %v4156 = vsel %vm4148, %v4133, 0.0
        %v4157 = vsel %vm4149, %v4137, 0.0
        %4158 = vset.pattern.permute.xlu0 47
        %4159 = vperm.xlu0 %4158, %v423
        %v4160 = vpop.permute.xlu0 %4159
        %4162 = vset.pattern.permute.xlu0 47
        %4163 = vperm.xlu0 %4162, %v424
        %v4164 = vpop.permute.xlu0 %4163
        %4166 = vset.pattern.permute.xlu0 47
        %4167 = vperm.xlu0 %4166, %v425
        %v4168 = vpop.permute.xlu0 %4167
        %4170 = vset.pattern.permute.xlu0 47
        %4171 = vperm.xlu0 %4170, %v426
        %v4172 = vpop.permute.xlu0 %4171
        %v4174 = vmul.f32 %v4150, %v4160
        %v4175 = vmul.f32 %v4151, %v4160
        %v4176 = vmul.f32 %v4152, %v4164
        %v4177 = vmul.f32 %v4153, %v4164
        %v4178 = vmul.f32 %v4154, %v4168
        %v4179 = vmul.f32 %v4155, %v4168
        %v4180 = vmul.f32 %v4156, %v4172
        %v4181 = vmul.f32 %v4157, %v4172
        %v4182 = vadd.f32 %v4105, %v4174
        %v4183 = vadd.f32 %v4106, %v4175
        %v4184 = vadd.f32 %v4107, %v4176
        %v4185 = vadd.f32 %v4108, %v4177
        %v4186 = vadd.f32 %v4109, %v4178
        %v4187 = vadd.f32 %v4110, %v4179
        %v4188 = vadd.f32 %v4111, %v4180
        %v4189 = vadd.f32 %v4112, %v4181
        %4190 = vrot.lane.b32.xlu0 %v412, 77
        %v4191 = vpop.permute.xlu0 %4190
        %4192 = vrot.lane.b32.xlu0 %v414, 77
        %v4193 = vpop.permute.xlu0 %4192
        %4194 = vrot.lane.b32.xlu0 %v416, 77
        %v4195 = vpop.permute.xlu0 %4194
        %4196 = vrot.lane.b32.xlu0 %v418, 77
        %v4197 = vpop.permute.xlu0 %4196
        %4198 = vrot.lane.b32.xlu0 %v413, 77
        %v4199 = vpop.permute.xlu0 %4198
        %4200 = vrot.lane.b32.xlu0 %v415, 77
        %v4201 = vpop.permute.xlu0 %4200
        %4202 = vrot.lane.b32.xlu0 %v417, 77
        %v4203 = vpop.permute.xlu0 %4202
        %4204 = vrot.lane.b32.xlu0 %v419, 77
        %v4205 = vpop.permute.xlu0 %4204
        %vm4206 = vcmp.lt.s32.totalorder %v530, 77
        %v4207 = vsel %vm4206, %v4191, %v4199
        %v4208 = vsel %vm4206, %v4193, %v4201
        %v4209 = vsel %vm4206, %v4195, %v4203
        %v4210 = vsel %vm4206, %v4197, %v4205
        %v4211 = vsel %vm4206, %v4199, %v4191
        %v4212 = vsel %vm4206, %v4201, %v4193
        %v4213 = vsel %vm4206, %v4203, %v4195
        %v4214 = vsel %vm4206, %v4205, %v4197
        %vm4215 = vmand %vm480, %vm484
        %v4216 = vsel %vm4215, 1, 0
        %v4217 = vlaneseq
        %v4218 = vshrl.u32 %v4217, 7
        %v4219 = vsub.s32 0, %v4218
        %v4220 = vrot.slane %v4216, %v4219
        %v4221 = vlaneseq
        %v4222 = vshrl.u32 %v4221, 7
        %v4223 = vsub.s32 1, %v4222
        %v4224 = vrot.slane %v4216, %v4223
        %vm4225 = vcmp.eq.s32.totalorder %v4220, 1
        %vm4226 = vcmp.eq.s32.totalorder %v4224, 1
        %v4227 = vsel %vm4225, %v4207, 0.0
        %v4228 = vsel %vm4226, %v4211, 0.0
        %v4229 = vsel %vm4225, %v4208, 0.0
        %v4230 = vsel %vm4226, %v4212, 0.0
        %v4231 = vsel %vm4225, %v4209, 0.0
        %v4232 = vsel %vm4226, %v4213, 0.0
        %v4233 = vsel %vm4225, %v4210, 0.0
        %v4234 = vsel %vm4226, %v4214, 0.0
        %4235 = vset.pattern.permute.xlu0 48
        %4236 = vperm.xlu0 %4235, %v423
        %v4237 = vpop.permute.xlu0 %4236
        %4239 = vset.pattern.permute.xlu0 48
        %4240 = vperm.xlu0 %4239, %v424
        %v4241 = vpop.permute.xlu0 %4240
        %4243 = vset.pattern.permute.xlu0 48
        %4244 = vperm.xlu0 %4243, %v425
        %v4245 = vpop.permute.xlu0 %4244
        %4247 = vset.pattern.permute.xlu0 48
        %4248 = vperm.xlu0 %4247, %v426
        %v4249 = vpop.permute.xlu0 %4248
        %v4251 = vmul.f32 %v4227, %v4237
        %v4252 = vmul.f32 %v4228, %v4237
        %v4253 = vmul.f32 %v4229, %v4241
        %v4254 = vmul.f32 %v4230, %v4241
        %v4255 = vmul.f32 %v4231, %v4245
        %v4256 = vmul.f32 %v4232, %v4245
        %v4257 = vmul.f32 %v4233, %v4249
        %v4258 = vmul.f32 %v4234, %v4249
        %v4259 = vadd.f32 %v4182, %v4251
        %v4260 = vadd.f32 %v4183, %v4252
        %v4261 = vadd.f32 %v4184, %v4253
        %v4262 = vadd.f32 %v4185, %v4254
        %v4263 = vadd.f32 %v4186, %v4255
        %v4264 = vadd.f32 %v4187, %v4256
        %v4265 = vadd.f32 %v4188, %v4257
        %v4266 = vadd.f32 %v4189, %v4258
        %v4267 = vld [vmem:[%s3] sm:$0xff]
        %v4268 = vld [vmem:[%s3 + $0x8] sm:$0xff]
        %v4269 = vld [vmem:[%s3 + $0x10] sm:$0xff]
        %v4270 = vld [vmem:[%s3 + $0x18] sm:$0xff]
        %v4271 = vld [vmem:[%s4] sm:$0xff]
        %v4272 = vld [vmem:[%s4 + $0x8] sm:$0xff]
        %v4273 = vld [vmem:[%s4 + $0x10] sm:$0xff]
        %v4274 = vld [vmem:[%s4 + $0x18] sm:$0xff]
        %v4275 = vadd.s32 %v420, 4294967287
        %vm4276 = vcmp.ge.s32.totalorder %v4275, 0
        %vm4277 = vcmp.lt.s32.totalorder %v4275, 16
        %vm4278 = vmand %vm4276, %vm4277
        %v4279 = vadd.s32 %v422, 4294967287
        %vm4280 = vcmp.ge.s32.totalorder %v4279, 0
        %vm4281 = vcmp.lt.s32.totalorder %v4279, 16
        %vm4282 = vmand %vm4280, %vm4281
        %v4283 = vadd.s32 %v420, 4294967290
        %vm4284 = vcmp.ge.s32.totalorder %v4283, 0
        %vm4285 = vcmp.lt.s32.totalorder %v4283, 16
        %vm4286 = vmand %vm4284, %vm4285
        %v4287 = vadd.s32 %v422, 4294967290
        %vm4288 = vcmp.ge.s32.totalorder %v4287, 0
        %vm4289 = vcmp.lt.s32.totalorder %v4287, 16
        %vm4290 = vmand %vm4288, %vm4289
        %v4291 = vadd.s32 %v420, 6
        %vm4292 = vcmp.ge.s32.totalorder %v4291, 0
        %vm4293 = vcmp.lt.s32.totalorder %v4291, 16
        %vm4294 = vmand %vm4292, %vm4293
        %v4295 = vadd.s32 %v422, 6
        %vm4296 = vcmp.ge.s32.totalorder %v4295, 0
        %vm4297 = vcmp.lt.s32.totalorder %v4295, 16
        %vm4298 = vmand %vm4296, %vm4297
        %v4299 = vadd.s32 %v420, 9
        %vm4300 = vcmp.ge.s32.totalorder %v4299, 0
        %vm4301 = vcmp.lt.s32.totalorder %v4299, 16
        %vm4302 = vmand %vm4300, %vm4301
        %v4303 = vadd.s32 %v422, 9
        %vm4304 = vcmp.ge.s32.totalorder %v4303, 0
        %vm4305 = vcmp.lt.s32.totalorder %v4303, 16
        %vm4306 = vmand %vm4304, %vm4305
        %4308 = vset.pattern.permute.xlu0 0
        %4309 = vperm.xlu0 %4308, %v4271
        %v4310 = vpop.permute.xlu0 %4309
        %4313 = vset.pattern.permute.xlu0 0
        %4314 = vperm.xlu0 %4313, %v4272
        %v4315 = vpop.permute.xlu0 %4314
        %4318 = vset.pattern.permute.xlu0 0
        %4319 = vperm.xlu0 %4318, %v4273
        %v4320 = vpop.permute.xlu0 %4319
        %4323 = vset.pattern.permute.xlu0 0
        %4324 = vperm.xlu0 %4323, %v4274
        %v4325 = vpop.permute.xlu0 %4324
        %v4327 = vadd.f32 %v4259, %v4310
        %v4328 = vadd.f32 %v4260, %v4310
        %v4329 = vadd.f32 %v4261, %v4315
        %v4330 = vadd.f32 %v4262, %v4315
        %v4331 = vadd.f32 %v4263, %v4320
        %v4332 = vadd.f32 %v4264, %v4320
        %v4333 = vadd.f32 %v4265, %v4325
        %v4334 = vadd.f32 %v4266, %v4325
        %4335 = vrot.lane.b32.xlu0 %v4259, 25
        %v4336 = vpop.permute.xlu0 %4335
        %4337 = vrot.lane.b32.xlu0 %v4261, 25
        %v4338 = vpop.permute.xlu0 %4337
        %4339 = vrot.lane.b32.xlu0 %v4263, 25
        %v4340 = vpop.permute.xlu0 %4339
        %4341 = vrot.lane.b32.xlu0 %v4265, 25
        %v4342 = vpop.permute.xlu0 %4341
        %4343 = vrot.lane.b32.xlu0 %v4260, 25
        %v4344 = vpop.permute.xlu0 %4343
        %4345 = vrot.lane.b32.xlu0 %v4262, 25
        %v4346 = vpop.permute.xlu0 %4345
        %4347 = vrot.lane.b32.xlu0 %v4264, 25
        %v4348 = vpop.permute.xlu0 %4347
        %4349 = vrot.lane.b32.xlu0 %v4266, 25
        %v4350 = vpop.permute.xlu0 %4349
        %vm4351 = vcmp.lt.s32.totalorder %v530, 25
        %v4352 = vsel %vm4351, %v4336, %v4344
        %v4353 = vsel %vm4351, %v4338, %v4346
        %v4354 = vsel %vm4351, %v4340, %v4348
        %v4355 = vsel %vm4351, %v4342, %v4350
        %v4356 = vsel %vm4351, %v4344, %v4336
        %v4357 = vsel %vm4351, %v4346, %v4338
        %v4358 = vsel %vm4351, %v4348, %v4340
        %v4359 = vsel %vm4351, %v4350, %v4342
        %vm4360 = vmand %vm4278, %vm4282
        %v4361 = vsel %vm4360, 1, 0
        %v4362 = vlaneseq
        %v4363 = vshrl.u32 %v4362, 7
        %v4364 = vsub.s32 0, %v4363
        %v4365 = vrot.slane %v4361, %v4364
        %v4366 = vlaneseq
        %v4367 = vshrl.u32 %v4366, 7
        %v4368 = vsub.s32 1, %v4367
        %v4369 = vrot.slane %v4361, %v4368
        %vm4370 = vcmp.eq.s32.totalorder %v4365, 1
        %vm4371 = vcmp.eq.s32.totalorder %v4369, 1
        %v4372 = vsel %vm4370, %v4352, 0.0
        %v4373 = vsel %vm4371, %v4356, 0.0
        %v4374 = vsel %vm4370, %v4353, 0.0
        %v4375 = vsel %vm4371, %v4357, 0.0
        %v4376 = vsel %vm4370, %v4354, 0.0
        %v4377 = vsel %vm4371, %v4358, 0.0
        %v4378 = vsel %vm4370, %v4355, 0.0
        %v4379 = vsel %vm4371, %v4359, 0.0
        %4381 = vset.pattern.permute.xlu0 0
        %4382 = vperm.xlu0 %4381, %v4267
        %v4383 = vpop.permute.xlu0 %4382
        %4386 = vset.pattern.permute.xlu0 0
        %4387 = vperm.xlu0 %4386, %v4268
        %v4388 = vpop.permute.xlu0 %4387
        %4391 = vset.pattern.permute.xlu0 0
        %4392 = vperm.xlu0 %4391, %v4269
        %v4393 = vpop.permute.xlu0 %4392
        %4396 = vset.pattern.permute.xlu0 0
        %4397 = vperm.xlu0 %4396, %v4270
        %v4398 = vpop.permute.xlu0 %4397
        %v4400 = vmul.f32 %v4372, %v4383
        %v4401 = vmul.f32 %v4373, %v4383
        %v4402 = vmul.f32 %v4374, %v4388
        %v4403 = vmul.f32 %v4375, %v4388
        %v4404 = vmul.f32 %v4376, %v4393
        %v4405 = vmul.f32 %v4377, %v4393
        %v4406 = vmul.f32 %v4378, %v4398
        %v4407 = vmul.f32 %v4379, %v4398
        %v4408 = vadd.f32 %v4327, %v4400
        %v4409 = vadd.f32 %v4328, %v4401
        %v4410 = vadd.f32 %v4329, %v4402
        %v4411 = vadd.f32 %v4330, %v4403
        %v4412 = vadd.f32 %v4331, %v4404
        %v4413 = vadd.f32 %v4332, %v4405
        %v4414 = vadd.f32 %v4333, %v4406
        %v4415 = vadd.f32 %v4334, %v4407
        %4416 = vrot.lane.b32.xlu0 %v4259, 22
        %v4417 = vpop.permute.xlu0 %4416
        %4418 = vrot.lane.b32.xlu0 %v4261, 22
        %v4419 = vpop.permute.xlu0 %4418
        %4420 = vrot.lane.b32.xlu0 %v4263, 22
        %v4421 = vpop.permute.xlu0 %4420
        %4422 = vrot.lane.b32.xlu0 %v4265, 22
        %v4423 = vpop.permute.xlu0 %4422
        %4424 = vrot.lane.b32.xlu0 %v4260, 22
        %v4425 = vpop.permute.xlu0 %4424
        %4426 = vrot.lane.b32.xlu0 %v4262, 22
        %v4427 = vpop.permute.xlu0 %4426
        %4428 = vrot.lane.b32.xlu0 %v4264, 22
        %v4429 = vpop.permute.xlu0 %4428
        %4430 = vrot.lane.b32.xlu0 %v4266, 22
        %v4431 = vpop.permute.xlu0 %4430
        %vm4432 = vcmp.lt.s32.totalorder %v530, 22
        %v4433 = vsel %vm4432, %v4417, %v4425
        %v4434 = vsel %vm4432, %v4419, %v4427
        %v4435 = vsel %vm4432, %v4421, %v4429
        %v4436 = vsel %vm4432, %v4423, %v4431
        %v4437 = vsel %vm4432, %v4425, %v4417
        %v4438 = vsel %vm4432, %v4427, %v4419
        %v4439 = vsel %vm4432, %v4429, %v4421
        %v4440 = vsel %vm4432, %v4431, %v4423
        %vm4441 = vmand %vm4278, %vm4290
        %v4442 = vsel %vm4441, 1, 0
        %v4443 = vlaneseq
        %v4444 = vshrl.u32 %v4443, 7
        %v4445 = vsub.s32 0, %v4444
        %v4446 = vrot.slane %v4442, %v4445
        %v4447 = vlaneseq
        %v4448 = vshrl.u32 %v4447, 7
        %v4449 = vsub.s32 1, %v4448
        %v4450 = vrot.slane %v4442, %v4449
        %vm4451 = vcmp.eq.s32.totalorder %v4446, 1
        %vm4452 = vcmp.eq.s32.totalorder %v4450, 1
        %v4453 = vsel %vm4451, %v4433, 0.0
        %v4454 = vsel %vm4452, %v4437, 0.0
        %v4455 = vsel %vm4451, %v4434, 0.0
        %v4456 = vsel %vm4452, %v4438, 0.0
        %v4457 = vsel %vm4451, %v4435, 0.0
        %v4458 = vsel %vm4452, %v4439, 0.0
        %v4459 = vsel %vm4451, %v4436, 0.0
        %v4460 = vsel %vm4452, %v4440, 0.0
        %4461 = vset.pattern.permute.xlu0 1
        %4462 = vperm.xlu0 %4461, %v4267
        %v4463 = vpop.permute.xlu0 %4462
        %4465 = vset.pattern.permute.xlu0 1
        %4466 = vperm.xlu0 %4465, %v4268
        %v4467 = vpop.permute.xlu0 %4466
        %4469 = vset.pattern.permute.xlu0 1
        %4470 = vperm.xlu0 %4469, %v4269
        %v4471 = vpop.permute.xlu0 %4470
        %4473 = vset.pattern.permute.xlu0 1
        %4474 = vperm.xlu0 %4473, %v4270
        %v4475 = vpop.permute.xlu0 %4474
        %v4477 = vmul.f32 %v4453, %v4463
        %v4478 = vmul.f32 %v4454, %v4463
        %v4479 = vmul.f32 %v4455, %v4467
        %v4480 = vmul.f32 %v4456, %v4467
        %v4481 = vmul.f32 %v4457, %v4471
        %v4482 = vmul.f32 %v4458, %v4471
        %v4483 = vmul.f32 %v4459, %v4475
        %v4484 = vmul.f32 %v4460, %v4475
        %v4485 = vadd.f32 %v4408, %v4477
        %v4486 = vadd.f32 %v4409, %v4478
        %v4487 = vadd.f32 %v4410, %v4479
        %v4488 = vadd.f32 %v4411, %v4480
        %v4489 = vadd.f32 %v4412, %v4481
        %v4490 = vadd.f32 %v4413, %v4482
        %v4491 = vadd.f32 %v4414, %v4483
        %v4492 = vadd.f32 %v4415, %v4484
        %4493 = vrot.lane.b32.xlu0 %v4259, 19
        %v4494 = vpop.permute.xlu0 %4493
        %4495 = vrot.lane.b32.xlu0 %v4261, 19
        %v4496 = vpop.permute.xlu0 %4495
        %4497 = vrot.lane.b32.xlu0 %v4263, 19
        %v4498 = vpop.permute.xlu0 %4497
        %4499 = vrot.lane.b32.xlu0 %v4265, 19
        %v4500 = vpop.permute.xlu0 %4499
        %4501 = vrot.lane.b32.xlu0 %v4260, 19
        %v4502 = vpop.permute.xlu0 %4501
        %4503 = vrot.lane.b32.xlu0 %v4262, 19
        %v4504 = vpop.permute.xlu0 %4503
        %4505 = vrot.lane.b32.xlu0 %v4264, 19
        %v4506 = vpop.permute.xlu0 %4505
        %4507 = vrot.lane.b32.xlu0 %v4266, 19
        %v4508 = vpop.permute.xlu0 %4507
        %v4509 = vsel %vm1613, %v4494, %v4502
        %v4510 = vsel %vm1613, %v4496, %v4504
        %v4511 = vsel %vm1613, %v4498, %v4506
        %v4512 = vsel %vm1613, %v4500, %v4508
        %v4513 = vsel %vm1613, %v4502, %v4494
        %v4514 = vsel %vm1613, %v4504, %v4496
        %v4515 = vsel %vm1613, %v4506, %v4498
        %v4516 = vsel %vm1613, %v4508, %v4500
        %vm4517 = vmand %vm4278, %vm438
        %v4518 = vsel %vm4517, 1, 0
        %v4519 = vlaneseq
        %v4520 = vshrl.u32 %v4519, 7
        %v4521 = vsub.s32 0, %v4520
        %v4522 = vrot.slane %v4518, %v4521
        %v4523 = vlaneseq
        %v4524 = vshrl.u32 %v4523, 7
        %v4525 = vsub.s32 1, %v4524
        %v4526 = vrot.slane %v4518, %v4525
        %vm4527 = vcmp.eq.s32.totalorder %v4522, 1
        %vm4528 = vcmp.eq.s32.totalorder %v4526, 1
        %v4529 = vsel %vm4527, %v4509, 0.0
        %v4530 = vsel %vm4528, %v4513, 0.0
        %v4531 = vsel %vm4527, %v4510, 0.0
        %v4532 = vsel %vm4528, %v4514, 0.0
        %v4533 = vsel %vm4527, %v4511, 0.0
        %v4534 = vsel %vm4528, %v4515, 0.0
        %v4535 = vsel %vm4527, %v4512, 0.0
        %v4536 = vsel %vm4528, %v4516, 0.0
        %4537 = vset.pattern.permute.xlu0 2
        %4538 = vperm.xlu0 %4537, %v4267
        %v4539 = vpop.permute.xlu0 %4538
        %4541 = vset.pattern.permute.xlu0 2
        %4542 = vperm.xlu0 %4541, %v4268
        %v4543 = vpop.permute.xlu0 %4542
        %4545 = vset.pattern.permute.xlu0 2
        %4546 = vperm.xlu0 %4545, %v4269
        %v4547 = vpop.permute.xlu0 %4546
        %4549 = vset.pattern.permute.xlu0 2
        %4550 = vperm.xlu0 %4549, %v4270
        %v4551 = vpop.permute.xlu0 %4550
        %v4553 = vmul.f32 %v4529, %v4539
        %v4554 = vmul.f32 %v4530, %v4539
        %v4555 = vmul.f32 %v4531, %v4543
        %v4556 = vmul.f32 %v4532, %v4543
        %v4557 = vmul.f32 %v4533, %v4547
        %v4558 = vmul.f32 %v4534, %v4547
        %v4559 = vmul.f32 %v4535, %v4551
        %v4560 = vmul.f32 %v4536, %v4551
        %v4561 = vadd.f32 %v4485, %v4553
        %v4562 = vadd.f32 %v4486, %v4554
        %v4563 = vadd.f32 %v4487, %v4555
        %v4564 = vadd.f32 %v4488, %v4556
        %v4565 = vadd.f32 %v4489, %v4557
        %v4566 = vadd.f32 %v4490, %v4558
        %v4567 = vadd.f32 %v4491, %v4559
        %v4568 = vadd.f32 %v4492, %v4560
        %4569 = vrot.lane.b32.xlu0 %v4259, 16
        %v4570 = vpop.permute.xlu0 %4569
        %4571 = vrot.lane.b32.xlu0 %v4261, 16
        %v4572 = vpop.permute.xlu0 %4571
        %4573 = vrot.lane.b32.xlu0 %v4263, 16
        %v4574 = vpop.permute.xlu0 %4573
        %4575 = vrot.lane.b32.xlu0 %v4265, 16
        %v4576 = vpop.permute.xlu0 %4575
        %4577 = vrot.lane.b32.xlu0 %v4260, 16
        %v4578 = vpop.permute.xlu0 %4577
        %4579 = vrot.lane.b32.xlu0 %v4262, 16
        %v4580 = vpop.permute.xlu0 %4579
        %4581 = vrot.lane.b32.xlu0 %v4264, 16
        %v4582 = vpop.permute.xlu0 %4581
        %4583 = vrot.lane.b32.xlu0 %v4266, 16
        %v4584 = vpop.permute.xlu0 %4583
        %v4585 = vsel %vm1844, %v4570, %v4578
        %v4586 = vsel %vm1844, %v4572, %v4580
        %v4587 = vsel %vm1844, %v4574, %v4582
        %v4588 = vsel %vm1844, %v4576, %v4584
        %v4589 = vsel %vm1844, %v4578, %v4570
        %v4590 = vsel %vm1844, %v4580, %v4572
        %v4591 = vsel %vm1844, %v4582, %v4574
        %v4592 = vsel %vm1844, %v4584, %v4576
        %vm4593 = vmand %vm4278, %vm460
        %v4594 = vsel %vm4593, 1, 0
        %v4595 = vlaneseq
        %v4596 = vshrl.u32 %v4595, 7
        %v4597 = vsub.s32 0, %v4596
        %v4598 = vrot.slane %v4594, %v4597
        %v4599 = vlaneseq
        %v4600 = vshrl.u32 %v4599, 7
        %v4601 = vsub.s32 1, %v4600
        %v4602 = vrot.slane %v4594, %v4601
        %vm4603 = vcmp.eq.s32.totalorder %v4598, 1
        %vm4604 = vcmp.eq.s32.totalorder %v4602, 1
        %v4605 = vsel %vm4603, %v4585, 0.0
        %v4606 = vsel %vm4604, %v4589, 0.0
        %v4607 = vsel %vm4603, %v4586, 0.0
        %v4608 = vsel %vm4604, %v4590, 0.0
        %v4609 = vsel %vm4603, %v4587, 0.0
        %v4610 = vsel %vm4604, %v4591, 0.0
        %v4611 = vsel %vm4603, %v4588, 0.0
        %v4612 = vsel %vm4604, %v4592, 0.0
        %4613 = vset.pattern.permute.xlu0 3
        %4614 = vperm.xlu0 %4613, %v4267
        %v4615 = vpop.permute.xlu0 %4614
        %4617 = vset.pattern.permute.xlu0 3
        %4618 = vperm.xlu0 %4617, %v4268
        %v4619 = vpop.permute.xlu0 %4618
        %4621 = vset.pattern.permute.xlu0 3
        %4622 = vperm.xlu0 %4621, %v4269
        %v4623 = vpop.permute.xlu0 %4622
        %4625 = vset.pattern.permute.xlu0 3
        %4626 = vperm.xlu0 %4625, %v4270
        %v4627 = vpop.permute.xlu0 %4626
        %v4629 = vmul.f32 %v4605, %v4615
        %v4630 = vmul.f32 %v4606, %v4615
        %v4631 = vmul.f32 %v4607, %v4619
        %v4632 = vmul.f32 %v4608, %v4619
        %v4633 = vmul.f32 %v4609, %v4623
        %v4634 = vmul.f32 %v4610, %v4623
        %v4635 = vmul.f32 %v4611, %v4627
        %v4636 = vmul.f32 %v4612, %v4627
        %v4637 = vadd.f32 %v4561, %v4629
        %v4638 = vadd.f32 %v4562, %v4630
        %v4639 = vadd.f32 %v4563, %v4631
        %v4640 = vadd.f32 %v4564, %v4632
        %v4641 = vadd.f32 %v4565, %v4633
        %v4642 = vadd.f32 %v4566, %v4634
        %v4643 = vadd.f32 %v4567, %v4635
        %v4644 = vadd.f32 %v4568, %v4636
        %4645 = vrot.lane.b32.xlu0 %v4259, 13
        %v4646 = vpop.permute.xlu0 %4645
        %4647 = vrot.lane.b32.xlu0 %v4261, 13
        %v4648 = vpop.permute.xlu0 %4647
        %4649 = vrot.lane.b32.xlu0 %v4263, 13
        %v4650 = vpop.permute.xlu0 %4649
        %4651 = vrot.lane.b32.xlu0 %v4265, 13
        %v4652 = vpop.permute.xlu0 %4651
        %4653 = vrot.lane.b32.xlu0 %v4260, 13
        %v4654 = vpop.permute.xlu0 %4653
        %4655 = vrot.lane.b32.xlu0 %v4262, 13
        %v4656 = vpop.permute.xlu0 %4655
        %4657 = vrot.lane.b32.xlu0 %v4264, 13
        %v4658 = vpop.permute.xlu0 %4657
        %4659 = vrot.lane.b32.xlu0 %v4266, 13
        %v4660 = vpop.permute.xlu0 %4659
        %v4661 = vsel %vm2075, %v4646, %v4654
        %v4662 = vsel %vm2075, %v4648, %v4656
        %v4663 = vsel %vm2075, %v4650, %v4658
        %v4664 = vsel %vm2075, %v4652, %v4660
        %v4665 = vsel %vm2075, %v4654, %v4646
        %v4666 = vsel %vm2075, %v4656, %v4648
        %v4667 = vsel %vm2075, %v4658, %v4650
        %v4668 = vsel %vm2075, %v4660, %v4652
        %vm4669 = vmand %vm4278, %vm484
        %v4670 = vsel %vm4669, 1, 0
        %v4671 = vlaneseq
        %v4672 = vshrl.u32 %v4671, 7
        %v4673 = vsub.s32 0, %v4672
        %v4674 = vrot.slane %v4670, %v4673
        %v4675 = vlaneseq
        %v4676 = vshrl.u32 %v4675, 7
        %v4677 = vsub.s32 1, %v4676
        %v4678 = vrot.slane %v4670, %v4677
        %vm4679 = vcmp.eq.s32.totalorder %v4674, 1
        %vm4680 = vcmp.eq.s32.totalorder %v4678, 1
        %v4681 = vsel %vm4679, %v4661, 0.0
        %v4682 = vsel %vm4680, %v4665, 0.0
        %v4683 = vsel %vm4679, %v4662, 0.0
        %v4684 = vsel %vm4680, %v4666, 0.0
        %v4685 = vsel %vm4679, %v4663, 0.0
        %v4686 = vsel %vm4680, %v4667, 0.0
        %v4687 = vsel %vm4679, %v4664, 0.0
        %v4688 = vsel %vm4680, %v4668, 0.0
        %4689 = vset.pattern.permute.xlu0 4
        %4690 = vperm.xlu0 %4689, %v4267
        %v4691 = vpop.permute.xlu0 %4690
        %4693 = vset.pattern.permute.xlu0 4
        %4694 = vperm.xlu0 %4693, %v4268
        %v4695 = vpop.permute.xlu0 %4694
        %4697 = vset.pattern.permute.xlu0 4
        %4698 = vperm.xlu0 %4697, %v4269
        %v4699 = vpop.permute.xlu0 %4698
        %4701 = vset.pattern.permute.xlu0 4
        %4702 = vperm.xlu0 %4701, %v4270
        %v4703 = vpop.permute.xlu0 %4702
        %v4705 = vmul.f32 %v4681, %v4691
        %v4706 = vmul.f32 %v4682, %v4691
        %v4707 = vmul.f32 %v4683, %v4695
        %v4708 = vmul.f32 %v4684, %v4695
        %v4709 = vmul.f32 %v4685, %v4699
        %v4710 = vmul.f32 %v4686, %v4699
        %v4711 = vmul.f32 %v4687, %v4703
        %v4712 = vmul.f32 %v4688, %v4703
        %v4713 = vadd.f32 %v4637, %v4705
        %v4714 = vadd.f32 %v4638, %v4706
        %v4715 = vadd.f32 %v4639, %v4707
        %v4716 = vadd.f32 %v4640, %v4708
        %v4717 = vadd.f32 %v4641, %v4709
        %v4718 = vadd.f32 %v4642, %v4710
        %v4719 = vadd.f32 %v4643, %v4711
        %v4720 = vadd.f32 %v4644, %v4712
        %4721 = vrot.lane.b32.xlu0 %v4259, 10
        %v4722 = vpop.permute.xlu0 %4721
        %4723 = vrot.lane.b32.xlu0 %v4261, 10
        %v4724 = vpop.permute.xlu0 %4723
        %4725 = vrot.lane.b32.xlu0 %v4263, 10
        %v4726 = vpop.permute.xlu0 %4725
        %4727 = vrot.lane.b32.xlu0 %v4265, 10
        %v4728 = vpop.permute.xlu0 %4727
        %4729 = vrot.lane.b32.xlu0 %v4260, 10
        %v4730 = vpop.permute.xlu0 %4729
        %4731 = vrot.lane.b32.xlu0 %v4262, 10
        %v4732 = vpop.permute.xlu0 %4731
        %4733 = vrot.lane.b32.xlu0 %v4264, 10
        %v4734 = vpop.permute.xlu0 %4733
        %4735 = vrot.lane.b32.xlu0 %v4266, 10
        %v4736 = vpop.permute.xlu0 %4735
        %vm4737 = vcmp.lt.s32.totalorder %v530, 10
        %v4738 = vsel %vm4737, %v4722, %v4730
        %v4739 = vsel %vm4737, %v4724, %v4732
        %v4740 = vsel %vm4737, %v4726, %v4734
        %v4741 = vsel %vm4737, %v4728, %v4736
        %v4742 = vsel %vm4737, %v4730, %v4722
        %v4743 = vsel %vm4737, %v4732, %v4724
        %v4744 = vsel %vm4737, %v4734, %v4726
        %v4745 = vsel %vm4737, %v4736, %v4728
        %vm4746 = vmand %vm4278, %vm4298
        %v4747 = vsel %vm4746, 1, 0
        %v4748 = vlaneseq
        %v4749 = vshrl.u32 %v4748, 7
        %v4750 = vsub.s32 0, %v4749
        %v4751 = vrot.slane %v4747, %v4750
        %v4752 = vlaneseq
        %v4753 = vshrl.u32 %v4752, 7
        %v4754 = vsub.s32 1, %v4753
        %v4755 = vrot.slane %v4747, %v4754
        %vm4756 = vcmp.eq.s32.totalorder %v4751, 1
        %vm4757 = vcmp.eq.s32.totalorder %v4755, 1
        %v4758 = vsel %vm4756, %v4738, 0.0
        %v4759 = vsel %vm4757, %v4742, 0.0
        %v4760 = vsel %vm4756, %v4739, 0.0
        %v4761 = vsel %vm4757, %v4743, 0.0
        %v4762 = vsel %vm4756, %v4740, 0.0
        %v4763 = vsel %vm4757, %v4744, 0.0
        %v4764 = vsel %vm4756, %v4741, 0.0
        %v4765 = vsel %vm4757, %v4745, 0.0
        %4766 = vset.pattern.permute.xlu0 5
        %4767 = vperm.xlu0 %4766, %v4267
        %v4768 = vpop.permute.xlu0 %4767
        %4770 = vset.pattern.permute.xlu0 5
        %4771 = vperm.xlu0 %4770, %v4268
        %v4772 = vpop.permute.xlu0 %4771
        %4774 = vset.pattern.permute.xlu0 5
        %4775 = vperm.xlu0 %4774, %v4269
        %v4776 = vpop.permute.xlu0 %4775
        %4778 = vset.pattern.permute.xlu0 5
        %4779 = vperm.xlu0 %4778, %v4270
        %v4780 = vpop.permute.xlu0 %4779
        %v4782 = vmul.f32 %v4758, %v4768
        %v4783 = vmul.f32 %v4759, %v4768
        %v4784 = vmul.f32 %v4760, %v4772
        %v4785 = vmul.f32 %v4761, %v4772
        %v4786 = vmul.f32 %v4762, %v4776
        %v4787 = vmul.f32 %v4763, %v4776
        %v4788 = vmul.f32 %v4764, %v4780
        %v4789 = vmul.f32 %v4765, %v4780
        %v4790 = vadd.f32 %v4713, %v4782
        %v4791 = vadd.f32 %v4714, %v4783
        %v4792 = vadd.f32 %v4715, %v4784
        %v4793 = vadd.f32 %v4716, %v4785
        %v4794 = vadd.f32 %v4717, %v4786
        %v4795 = vadd.f32 %v4718, %v4787
        %v4796 = vadd.f32 %v4719, %v4788
        %v4797 = vadd.f32 %v4720, %v4789
        %4798 = vrot.lane.b32.xlu0 %v4259, 7
        %v4799 = vpop.permute.xlu0 %4798
        %4800 = vrot.lane.b32.xlu0 %v4261, 7
        %v4801 = vpop.permute.xlu0 %4800
        %4802 = vrot.lane.b32.xlu0 %v4263, 7
        %v4803 = vpop.permute.xlu0 %4802
        %4804 = vrot.lane.b32.xlu0 %v4265, 7
        %v4805 = vpop.permute.xlu0 %4804
        %4806 = vrot.lane.b32.xlu0 %v4260, 7
        %v4807 = vpop.permute.xlu0 %4806
        %4808 = vrot.lane.b32.xlu0 %v4262, 7
        %v4809 = vpop.permute.xlu0 %4808
        %4810 = vrot.lane.b32.xlu0 %v4264, 7
        %v4811 = vpop.permute.xlu0 %4810
        %4812 = vrot.lane.b32.xlu0 %v4266, 7
        %v4813 = vpop.permute.xlu0 %4812
        %vm4814 = vcmp.lt.s32.totalorder %v530, 7
        %v4815 = vsel %vm4814, %v4799, %v4807
        %v4816 = vsel %vm4814, %v4801, %v4809
        %v4817 = vsel %vm4814, %v4803, %v4811
        %v4818 = vsel %vm4814, %v4805, %v4813
        %v4819 = vsel %vm4814, %v4807, %v4799
        %v4820 = vsel %vm4814, %v4809, %v4801
        %v4821 = vsel %vm4814, %v4811, %v4803
        %v4822 = vsel %vm4814, %v4813, %v4805
        %vm4823 = vmand %vm4278, %vm4306
        %v4824 = vsel %vm4823, 1, 0
        %v4825 = vlaneseq
        %v4826 = vshrl.u32 %v4825, 7
        %v4827 = vsub.s32 0, %v4826
        %v4828 = vrot.slane %v4824, %v4827
        %v4829 = vlaneseq
        %v4830 = vshrl.u32 %v4829, 7
        %v4831 = vsub.s32 1, %v4830
        %v4832 = vrot.slane %v4824, %v4831
        %vm4833 = vcmp.eq.s32.totalorder %v4828, 1
        %vm4834 = vcmp.eq.s32.totalorder %v4832, 1
        %v4835 = vsel %vm4833, %v4815, 0.0
        %v4836 = vsel %vm4834, %v4819, 0.0
        %v4837 = vsel %vm4833, %v4816, 0.0
        %v4838 = vsel %vm4834, %v4820, 0.0
        %v4839 = vsel %vm4833, %v4817, 0.0
        %v4840 = vsel %vm4834, %v4821, 0.0
        %v4841 = vsel %vm4833, %v4818, 0.0
        %v4842 = vsel %vm4834, %v4822, 0.0
        %4843 = vset.pattern.permute.xlu0 6
        %4844 = vperm.xlu0 %4843, %v4267
        %v4845 = vpop.permute.xlu0 %4844
        %4847 = vset.pattern.permute.xlu0 6
        %4848 = vperm.xlu0 %4847, %v4268
        %v4849 = vpop.permute.xlu0 %4848
        %4851 = vset.pattern.permute.xlu0 6
        %4852 = vperm.xlu0 %4851, %v4269
        %v4853 = vpop.permute.xlu0 %4852
        %4855 = vset.pattern.permute.xlu0 6
        %4856 = vperm.xlu0 %4855, %v4270
        %v4857 = vpop.permute.xlu0 %4856
        %v4859 = vmul.f32 %v4835, %v4845
        %v4860 = vmul.f32 %v4836, %v4845
        %v4861 = vmul.f32 %v4837, %v4849
        %v4862 = vmul.f32 %v4838, %v4849
        %v4863 = vmul.f32 %v4839, %v4853
        %v4864 = vmul.f32 %v4840, %v4853
        %v4865 = vmul.f32 %v4841, %v4857
        %v4866 = vmul.f32 %v4842, %v4857
        %v4867 = vadd.f32 %v4790, %v4859
        %v4868 = vadd.f32 %v4791, %v4860
        %v4869 = vadd.f32 %v4792, %v4861
        %v4870 = vadd.f32 %v4793, %v4862
        %v4871 = vadd.f32 %v4794, %v4863
        %v4872 = vadd.f32 %v4795, %v4864
        %v4873 = vadd.f32 %v4796, %v4865
        %v4874 = vadd.f32 %v4797, %v4866
        %4875 = vrot.lane.b32.xlu0 %v4259, 105
        %v4876 = vpop.permute.xlu0 %4875
        %4877 = vrot.lane.b32.xlu0 %v4261, 105
        %v4878 = vpop.permute.xlu0 %4877
        %4879 = vrot.lane.b32.xlu0 %v4263, 105
        %v4880 = vpop.permute.xlu0 %4879
        %4881 = vrot.lane.b32.xlu0 %v4265, 105
        %v4882 = vpop.permute.xlu0 %4881
        %4883 = vrot.lane.b32.xlu0 %v4260, 105
        %v4884 = vpop.permute.xlu0 %4883
        %4885 = vrot.lane.b32.xlu0 %v4262, 105
        %v4886 = vpop.permute.xlu0 %4885
        %4887 = vrot.lane.b32.xlu0 %v4264, 105
        %v4888 = vpop.permute.xlu0 %4887
        %4889 = vrot.lane.b32.xlu0 %v4266, 105
        %v4890 = vpop.permute.xlu0 %4889
        %vm4891 = vcmp.lt.s32.totalorder %v530, 105
        %v4892 = vsel %vm4891, %v4876, %v4884
        %v4893 = vsel %vm4891, %v4878, %v4886
        %v4894 = vsel %vm4891, %v4880, %v4888
        %v4895 = vsel %vm4891, %v4882, %v4890
        %v4896 = vsel %vm4891, %v4884, %v4876
        %v4897 = vsel %vm4891, %v4886, %v4878
        %v4898 = vsel %vm4891, %v4888, %v4880
        %v4899 = vsel %vm4891, %v4890, %v4882
        %vm4900 = vmand %vm4286, %vm4282
        %v4901 = vsel %vm4900, 1, 0
        %v4902 = vlaneseq
        %v4903 = vshrl.u32 %v4902, 7
        %v4904 = vsub.s32 0, %v4903
        %v4905 = vrot.slane %v4901, %v4904
        %v4906 = vlaneseq
        %v4907 = vshrl.u32 %v4906, 7
        %v4908 = vsub.s32 1, %v4907
        %v4909 = vrot.slane %v4901, %v4908
        %vm4910 = vcmp.eq.s32.totalorder %v4905, 1
        %vm4911 = vcmp.eq.s32.totalorder %v4909, 1
        %v4912 = vsel %vm4910, %v4896, 0.0
        %v4913 = vsel %vm4911, %v4892, 0.0
        %v4914 = vsel %vm4910, %v4897, 0.0
        %v4915 = vsel %vm4911, %v4893, 0.0
        %v4916 = vsel %vm4910, %v4898, 0.0
        %v4917 = vsel %vm4911, %v4894, 0.0
        %v4918 = vsel %vm4910, %v4899, 0.0
        %v4919 = vsel %vm4911, %v4895, 0.0
        %4920 = vset.pattern.permute.xlu0 7
        %4921 = vperm.xlu0 %4920, %v4267
        %v4922 = vpop.permute.xlu0 %4921
        %4924 = vset.pattern.permute.xlu0 7
        %4925 = vperm.xlu0 %4924, %v4268
        %v4926 = vpop.permute.xlu0 %4925
        %4928 = vset.pattern.permute.xlu0 7
        %4929 = vperm.xlu0 %4928, %v4269
        %v4930 = vpop.permute.xlu0 %4929
        %4932 = vset.pattern.permute.xlu0 7
        %4933 = vperm.xlu0 %4932, %v4270
        %v4934 = vpop.permute.xlu0 %4933
        %v4936 = vmul.f32 %v4912, %v4922
        %v4937 = vmul.f32 %v4913, %v4922
        %v4938 = vmul.f32 %v4914, %v4926
        %v4939 = vmul.f32 %v4915, %v4926
        %v4940 = vmul.f32 %v4916, %v4930
        %v4941 = vmul.f32 %v4917, %v4930
        %v4942 = vmul.f32 %v4918, %v4934
        %v4943 = vmul.f32 %v4919, %v4934
        %v4944 = vadd.f32 %v4867, %v4936
        %v4945 = vadd.f32 %v4868, %v4937
        %v4946 = vadd.f32 %v4869, %v4938
        %v4947 = vadd.f32 %v4870, %v4939
        %v4948 = vadd.f32 %v4871, %v4940
        %v4949 = vadd.f32 %v4872, %v4941
        %v4950 = vadd.f32 %v4873, %v4942
        %v4951 = vadd.f32 %v4874, %v4943
        %4952 = vrot.lane.b32.xlu0 %v4259, 102
        %v4953 = vpop.permute.xlu0 %4952
        %4954 = vrot.lane.b32.xlu0 %v4261, 102
        %v4955 = vpop.permute.xlu0 %4954
        %4956 = vrot.lane.b32.xlu0 %v4263, 102
        %v4957 = vpop.permute.xlu0 %4956
        %4958 = vrot.lane.b32.xlu0 %v4265, 102
        %v4959 = vpop.permute.xlu0 %4958
        %4960 = vrot.lane.b32.xlu0 %v4260, 102
        %v4961 = vpop.permute.xlu0 %4960
        %4962 = vrot.lane.b32.xlu0 %v4262, 102
        %v4963 = vpop.permute.xlu0 %4962
        %4964 = vrot.lane.b32.xlu0 %v4264, 102
        %v4965 = vpop.permute.xlu0 %4964
        %4966 = vrot.lane.b32.xlu0 %v4266, 102
        %v4967 = vpop.permute.xlu0 %4966
        %vm4968 = vcmp.lt.s32.totalorder %v530, 102
        %v4969 = vsel %vm4968, %v4953, %v4961
        %v4970 = vsel %vm4968, %v4955, %v4963
        %v4971 = vsel %vm4968, %v4957, %v4965
        %v4972 = vsel %vm4968, %v4959, %v4967
        %v4973 = vsel %vm4968, %v4961, %v4953
        %v4974 = vsel %vm4968, %v4963, %v4955
        %v4975 = vsel %vm4968, %v4965, %v4957
        %v4976 = vsel %vm4968, %v4967, %v4959
        %vm4977 = vmand %vm4286, %vm4290
        %v4978 = vsel %vm4977, 1, 0
        %v4979 = vlaneseq
        %v4980 = vshrl.u32 %v4979, 7
        %v4981 = vsub.s32 0, %v4980
        %v4982 = vrot.slane %v4978, %v4981
        %v4983 = vlaneseq
        %v4984 = vshrl.u32 %v4983, 7
        %v4985 = vsub.s32 1, %v4984
        %v4986 = vrot.slane %v4978, %v4985
        %vm4987 = vcmp.eq.s32.totalorder %v4982, 1
        %vm4988 = vcmp.eq.s32.totalorder %v4986, 1
        %v4989 = vsel %vm4987, %v4973, 0.0
        %v4990 = vsel %vm4988, %v4969, 0.0
        %v4991 = vsel %vm4987, %v4974, 0.0
        %v4992 = vsel %vm4988, %v4970, 0.0
        %v4993 = vsel %vm4987, %v4975, 0.0
        %v4994 = vsel %vm4988, %v4971, 0.0
        %v4995 = vsel %vm4987, %v4976, 0.0
        %v4996 = vsel %vm4988, %v4972, 0.0
        %4997 = vset.pattern.permute.xlu0 8
        %4998 = vperm.xlu0 %4997, %v4267
        %v4999 = vpop.permute.xlu0 %4998
        %5001 = vset.pattern.permute.xlu0 8
        %5002 = vperm.xlu0 %5001, %v4268
        %v5003 = vpop.permute.xlu0 %5002
        %5005 = vset.pattern.permute.xlu0 8
        %5006 = vperm.xlu0 %5005, %v4269
        %v5007 = vpop.permute.xlu0 %5006
        %5009 = vset.pattern.permute.xlu0 8
        %5010 = vperm.xlu0 %5009, %v4270
        %v5011 = vpop.permute.xlu0 %5010
        %v5013 = vmul.f32 %v4989, %v4999
        %v5014 = vmul.f32 %v4990, %v4999
        %v5015 = vmul.f32 %v4991, %v5003
        %v5016 = vmul.f32 %v4992, %v5003
        %v5017 = vmul.f32 %v4993, %v5007
        %v5018 = vmul.f32 %v4994, %v5007
        %v5019 = vmul.f32 %v4995, %v5011
        %v5020 = vmul.f32 %v4996, %v5011
        %v5021 = vadd.f32 %v4944, %v5013
        %v5022 = vadd.f32 %v4945, %v5014
        %v5023 = vadd.f32 %v4946, %v5015
        %v5024 = vadd.f32 %v4947, %v5016
        %v5025 = vadd.f32 %v4948, %v5017
        %v5026 = vadd.f32 %v4949, %v5018
        %v5027 = vadd.f32 %v4950, %v5019
        %v5028 = vadd.f32 %v4951, %v5020
        %5029 = vrot.lane.b32.xlu0 %v4259, 99
        %v5030 = vpop.permute.xlu0 %5029
        %5031 = vrot.lane.b32.xlu0 %v4261, 99
        %v5032 = vpop.permute.xlu0 %5031
        %5033 = vrot.lane.b32.xlu0 %v4263, 99
        %v5034 = vpop.permute.xlu0 %5033
        %5035 = vrot.lane.b32.xlu0 %v4265, 99
        %v5036 = vpop.permute.xlu0 %5035
        %5037 = vrot.lane.b32.xlu0 %v4260, 99
        %v5038 = vpop.permute.xlu0 %5037
        %5039 = vrot.lane.b32.xlu0 %v4262, 99
        %v5040 = vpop.permute.xlu0 %5039
        %5041 = vrot.lane.b32.xlu0 %v4264, 99
        %v5042 = vpop.permute.xlu0 %5041
        %5043 = vrot.lane.b32.xlu0 %v4266, 99
        %v5044 = vpop.permute.xlu0 %5043
        %v5045 = vsel %vm3205, %v5030, %v5038
        %v5046 = vsel %vm3205, %v5032, %v5040
        %v5047 = vsel %vm3205, %v5034, %v5042
        %v5048 = vsel %vm3205, %v5036, %v5044
        %v5049 = vsel %vm3205, %v5038, %v5030
        %v5050 = vsel %vm3205, %v5040, %v5032
        %v5051 = vsel %vm3205, %v5042, %v5034
        %v5052 = vsel %vm3205, %v5044, %v5036
        %vm5053 = vmand %vm4286, %vm438
        %v5054 = vsel %vm5053, 1, 0
        %v5055 = vlaneseq
        %v5056 = vshrl.u32 %v5055, 7
        %v5057 = vsub.s32 0, %v5056
        %v5058 = vrot.slane %v5054, %v5057
        %v5059 = vlaneseq
        %v5060 = vshrl.u32 %v5059, 7
        %v5061 = vsub.s32 1, %v5060
        %v5062 = vrot.slane %v5054, %v5061
        %vm5063 = vcmp.eq.s32.totalorder %v5058, 1
        %vm5064 = vcmp.eq.s32.totalorder %v5062, 1
        %v5065 = vsel %vm5063, %v5049, 0.0
        %v5066 = vsel %vm5064, %v5045, 0.0
        %v5067 = vsel %vm5063, %v5050, 0.0
        %v5068 = vsel %vm5064, %v5046, 0.0
        %v5069 = vsel %vm5063, %v5051, 0.0
        %v5070 = vsel %vm5064, %v5047, 0.0
        %v5071 = vsel %vm5063, %v5052, 0.0
        %v5072 = vsel %vm5064, %v5048, 0.0
        %5073 = vset.pattern.permute.xlu0 9
        %5074 = vperm.xlu0 %5073, %v4267
        %v5075 = vpop.permute.xlu0 %5074
        %5077 = vset.pattern.permute.xlu0 9
        %5078 = vperm.xlu0 %5077, %v4268
        %v5079 = vpop.permute.xlu0 %5078
        %5081 = vset.pattern.permute.xlu0 9
        %5082 = vperm.xlu0 %5081, %v4269
        %v5083 = vpop.permute.xlu0 %5082
        %5085 = vset.pattern.permute.xlu0 9
        %5086 = vperm.xlu0 %5085, %v4270
        %v5087 = vpop.permute.xlu0 %5086
        %v5089 = vmul.f32 %v5065, %v5075
        %v5090 = vmul.f32 %v5066, %v5075
        %v5091 = vmul.f32 %v5067, %v5079
        %v5092 = vmul.f32 %v5068, %v5079
        %v5093 = vmul.f32 %v5069, %v5083
        %v5094 = vmul.f32 %v5070, %v5083
        %v5095 = vmul.f32 %v5071, %v5087
        %v5096 = vmul.f32 %v5072, %v5087
        %v5097 = vadd.f32 %v5021, %v5089
        %v5098 = vadd.f32 %v5022, %v5090
        %v5099 = vadd.f32 %v5023, %v5091
        %v5100 = vadd.f32 %v5024, %v5092
        %v5101 = vadd.f32 %v5025, %v5093
        %v5102 = vadd.f32 %v5026, %v5094
        %v5103 = vadd.f32 %v5027, %v5095
        %v5104 = vadd.f32 %v5028, %v5096
        %5105 = vrot.lane.b32.xlu0 %v4259, 96
        %v5106 = vpop.permute.xlu0 %5105
        %5107 = vrot.lane.b32.xlu0 %v4261, 96
        %v5108 = vpop.permute.xlu0 %5107
        %5109 = vrot.lane.b32.xlu0 %v4263, 96
        %v5110 = vpop.permute.xlu0 %5109
        %5111 = vrot.lane.b32.xlu0 %v4265, 96
        %v5112 = vpop.permute.xlu0 %5111
        %5113 = vrot.lane.b32.xlu0 %v4260, 96
        %v5114 = vpop.permute.xlu0 %5113
        %5115 = vrot.lane.b32.xlu0 %v4262, 96
        %v5116 = vpop.permute.xlu0 %5115
        %5117 = vrot.lane.b32.xlu0 %v4264, 96
        %v5118 = vpop.permute.xlu0 %5117
        %5119 = vrot.lane.b32.xlu0 %v4266, 96
        %v5120 = vpop.permute.xlu0 %5119
        %v5121 = vsel %vm3436, %v5106, %v5114
        %v5122 = vsel %vm3436, %v5108, %v5116
        %v5123 = vsel %vm3436, %v5110, %v5118
        %v5124 = vsel %vm3436, %v5112, %v5120
        %v5125 = vsel %vm3436, %v5114, %v5106
        %v5126 = vsel %vm3436, %v5116, %v5108
        %v5127 = vsel %vm3436, %v5118, %v5110
        %v5128 = vsel %vm3436, %v5120, %v5112
        %vm5129 = vmand %vm4286, %vm460
        %v5130 = vsel %vm5129, 1, 0
        %v5131 = vlaneseq
        %v5132 = vshrl.u32 %v5131, 7
        %v5133 = vsub.s32 0, %v5132
        %v5134 = vrot.slane %v5130, %v5133
        %v5135 = vlaneseq
        %v5136 = vshrl.u32 %v5135, 7
        %v5137 = vsub.s32 1, %v5136
        %v5138 = vrot.slane %v5130, %v5137
        %vm5139 = vcmp.eq.s32.totalorder %v5134, 1
        %vm5140 = vcmp.eq.s32.totalorder %v5138, 1
        %v5141 = vsel %vm5139, %v5125, 0.0
        %v5142 = vsel %vm5140, %v5121, 0.0
        %v5143 = vsel %vm5139, %v5126, 0.0
        %v5144 = vsel %vm5140, %v5122, 0.0
        %v5145 = vsel %vm5139, %v5127, 0.0
        %v5146 = vsel %vm5140, %v5123, 0.0
        %v5147 = vsel %vm5139, %v5128, 0.0
        %v5148 = vsel %vm5140, %v5124, 0.0
        %5149 = vset.pattern.permute.xlu0 10
        %5150 = vperm.xlu0 %5149, %v4267
        %v5151 = vpop.permute.xlu0 %5150
        %5153 = vset.pattern.permute.xlu0 10
        %5154 = vperm.xlu0 %5153, %v4268
        %v5155 = vpop.permute.xlu0 %5154
        %5157 = vset.pattern.permute.xlu0 10
        %5158 = vperm.xlu0 %5157, %v4269
        %v5159 = vpop.permute.xlu0 %5158
        %5161 = vset.pattern.permute.xlu0 10
        %5162 = vperm.xlu0 %5161, %v4270
        %v5163 = vpop.permute.xlu0 %5162
        %v5165 = vmul.f32 %v5141, %v5151
        %v5166 = vmul.f32 %v5142, %v5151
        %v5167 = vmul.f32 %v5143, %v5155
        %v5168 = vmul.f32 %v5144, %v5155
        %v5169 = vmul.f32 %v5145, %v5159
        %v5170 = vmul.f32 %v5146, %v5159
        %v5171 = vmul.f32 %v5147, %v5163
        %v5172 = vmul.f32 %v5148, %v5163
        %v5173 = vadd.f32 %v5097, %v5165
        %v5174 = vadd.f32 %v5098, %v5166
        %v5175 = vadd.f32 %v5099, %v5167
        %v5176 = vadd.f32 %v5100, %v5168
        %v5177 = vadd.f32 %v5101, %v5169
        %v5178 = vadd.f32 %v5102, %v5170
        %v5179 = vadd.f32 %v5103, %v5171
        %v5180 = vadd.f32 %v5104, %v5172
        %5181 = vrot.lane.b32.xlu0 %v4259, 93
        %v5182 = vpop.permute.xlu0 %5181
        %5183 = vrot.lane.b32.xlu0 %v4261, 93
        %v5184 = vpop.permute.xlu0 %5183
        %5185 = vrot.lane.b32.xlu0 %v4263, 93
        %v5186 = vpop.permute.xlu0 %5185
        %5187 = vrot.lane.b32.xlu0 %v4265, 93
        %v5188 = vpop.permute.xlu0 %5187
        %5189 = vrot.lane.b32.xlu0 %v4260, 93
        %v5190 = vpop.permute.xlu0 %5189
        %5191 = vrot.lane.b32.xlu0 %v4262, 93
        %v5192 = vpop.permute.xlu0 %5191
        %5193 = vrot.lane.b32.xlu0 %v4264, 93
        %v5194 = vpop.permute.xlu0 %5193
        %5195 = vrot.lane.b32.xlu0 %v4266, 93
        %v5196 = vpop.permute.xlu0 %5195
        %v5197 = vsel %vm3667, %v5182, %v5190
        %v5198 = vsel %vm3667, %v5184, %v5192
        %v5199 = vsel %vm3667, %v5186, %v5194
        %v5200 = vsel %vm3667, %v5188, %v5196
        %v5201 = vsel %vm3667, %v5190, %v5182
        %v5202 = vsel %vm3667, %v5192, %v5184
        %v5203 = vsel %vm3667, %v5194, %v5186
        %v5204 = vsel %vm3667, %v5196, %v5188
        %vm5205 = vmand %vm4286, %vm484
        %v5206 = vsel %vm5205, 1, 0
        %v5207 = vlaneseq
        %v5208 = vshrl.u32 %v5207, 7
        %v5209 = vsub.s32 0, %v5208
        %v5210 = vrot.slane %v5206, %v5209
        %v5211 = vlaneseq
        %v5212 = vshrl.u32 %v5211, 7
        %v5213 = vsub.s32 1, %v5212
        %v5214 = vrot.slane %v5206, %v5213
        %vm5215 = vcmp.eq.s32.totalorder %v5210, 1
        %vm5216 = vcmp.eq.s32.totalorder %v5214, 1
        %v5217 = vsel %vm5215, %v5201, 0.0
        %v5218 = vsel %vm5216, %v5197, 0.0
        %v5219 = vsel %vm5215, %v5202, 0.0
        %v5220 = vsel %vm5216, %v5198, 0.0
        %v5221 = vsel %vm5215, %v5203, 0.0
        %v5222 = vsel %vm5216, %v5199, 0.0
        %v5223 = vsel %vm5215, %v5204, 0.0
        %v5224 = vsel %vm5216, %v5200, 0.0
        %5225 = vset.pattern.permute.xlu0 11
        %5226 = vperm.xlu0 %5225, %v4267
        %v5227 = vpop.permute.xlu0 %5226
        %5229 = vset.pattern.permute.xlu0 11
        %5230 = vperm.xlu0 %5229, %v4268
        %v5231 = vpop.permute.xlu0 %5230
        %5233 = vset.pattern.permute.xlu0 11
        %5234 = vperm.xlu0 %5233, %v4269
        %v5235 = vpop.permute.xlu0 %5234
        %5237 = vset.pattern.permute.xlu0 11
        %5238 = vperm.xlu0 %5237, %v4270
        %v5239 = vpop.permute.xlu0 %5238
        %v5241 = vmul.f32 %v5217, %v5227
        %v5242 = vmul.f32 %v5218, %v5227
        %v5243 = vmul.f32 %v5219, %v5231
        %v5244 = vmul.f32 %v5220, %v5231
        %v5245 = vmul.f32 %v5221, %v5235
        %v5246 = vmul.f32 %v5222, %v5235
        %v5247 = vmul.f32 %v5223, %v5239
        %v5248 = vmul.f32 %v5224, %v5239
        %v5249 = vadd.f32 %v5173, %v5241
        %v5250 = vadd.f32 %v5174, %v5242
        %v5251 = vadd.f32 %v5175, %v5243
        %v5252 = vadd.f32 %v5176, %v5244
        %v5253 = vadd.f32 %v5177, %v5245
        %v5254 = vadd.f32 %v5178, %v5246
        %v5255 = vadd.f32 %v5179, %v5247
        %v5256 = vadd.f32 %v5180, %v5248
        %5257 = vrot.lane.b32.xlu0 %v4259, 90
        %v5258 = vpop.permute.xlu0 %5257
        %5259 = vrot.lane.b32.xlu0 %v4261, 90
        %v5260 = vpop.permute.xlu0 %5259
        %5261 = vrot.lane.b32.xlu0 %v4263, 90
        %v5262 = vpop.permute.xlu0 %5261
        %5263 = vrot.lane.b32.xlu0 %v4265, 90
        %v5264 = vpop.permute.xlu0 %5263
        %5265 = vrot.lane.b32.xlu0 %v4260, 90
        %v5266 = vpop.permute.xlu0 %5265
        %5267 = vrot.lane.b32.xlu0 %v4262, 90
        %v5268 = vpop.permute.xlu0 %5267
        %5269 = vrot.lane.b32.xlu0 %v4264, 90
        %v5270 = vpop.permute.xlu0 %5269
        %5271 = vrot.lane.b32.xlu0 %v4266, 90
        %v5272 = vpop.permute.xlu0 %5271
        %vm5273 = vcmp.lt.s32.totalorder %v530, 90
        %v5274 = vsel %vm5273, %v5258, %v5266
        %v5275 = vsel %vm5273, %v5260, %v5268
        %v5276 = vsel %vm5273, %v5262, %v5270
        %v5277 = vsel %vm5273, %v5264, %v5272
        %v5278 = vsel %vm5273, %v5266, %v5258
        %v5279 = vsel %vm5273, %v5268, %v5260
        %v5280 = vsel %vm5273, %v5270, %v5262
        %v5281 = vsel %vm5273, %v5272, %v5264
        %vm5282 = vmand %vm4286, %vm4298
        %v5283 = vsel %vm5282, 1, 0
        %v5284 = vlaneseq
        %v5285 = vshrl.u32 %v5284, 7
        %v5286 = vsub.s32 0, %v5285
        %v5287 = vrot.slane %v5283, %v5286
        %v5288 = vlaneseq
        %v5289 = vshrl.u32 %v5288, 7
        %v5290 = vsub.s32 1, %v5289
        %v5291 = vrot.slane %v5283, %v5290
        %vm5292 = vcmp.eq.s32.totalorder %v5287, 1
        %vm5293 = vcmp.eq.s32.totalorder %v5291, 1
        %v5294 = vsel %vm5292, %v5278, 0.0
        %v5295 = vsel %vm5293, %v5274, 0.0
        %v5296 = vsel %vm5292, %v5279, 0.0
        %v5297 = vsel %vm5293, %v5275, 0.0
        %v5298 = vsel %vm5292, %v5280, 0.0
        %v5299 = vsel %vm5293, %v5276, 0.0
        %v5300 = vsel %vm5292, %v5281, 0.0
        %v5301 = vsel %vm5293, %v5277, 0.0
        %5302 = vset.pattern.permute.xlu0 12
        %5303 = vperm.xlu0 %5302, %v4267
        %v5304 = vpop.permute.xlu0 %5303
        %5306 = vset.pattern.permute.xlu0 12
        %5307 = vperm.xlu0 %5306, %v4268
        %v5308 = vpop.permute.xlu0 %5307
        %5310 = vset.pattern.permute.xlu0 12
        %5311 = vperm.xlu0 %5310, %v4269
        %v5312 = vpop.permute.xlu0 %5311
        %5314 = vset.pattern.permute.xlu0 12
        %5315 = vperm.xlu0 %5314, %v4270
        %v5316 = vpop.permute.xlu0 %5315
        %v5318 = vmul.f32 %v5294, %v5304
        %v5319 = vmul.f32 %v5295, %v5304
        %v5320 = vmul.f32 %v5296, %v5308
        %v5321 = vmul.f32 %v5297, %v5308
        %v5322 = vmul.f32 %v5298, %v5312
        %v5323 = vmul.f32 %v5299, %v5312
        %v5324 = vmul.f32 %v5300, %v5316
        %v5325 = vmul.f32 %v5301, %v5316
        %v5326 = vadd.f32 %v5249, %v5318
        %v5327 = vadd.f32 %v5250, %v5319
        %v5328 = vadd.f32 %v5251, %v5320
        %v5329 = vadd.f32 %v5252, %v5321
        %v5330 = vadd.f32 %v5253, %v5322
        %v5331 = vadd.f32 %v5254, %v5323
        %v5332 = vadd.f32 %v5255, %v5324
        %v5333 = vadd.f32 %v5256, %v5325
        %5334 = vrot.lane.b32.xlu0 %v4259, 87
        %v5335 = vpop.permute.xlu0 %5334
        %5336 = vrot.lane.b32.xlu0 %v4261, 87
        %v5337 = vpop.permute.xlu0 %5336
        %5338 = vrot.lane.b32.xlu0 %v4263, 87
        %v5339 = vpop.permute.xlu0 %5338
        %5340 = vrot.lane.b32.xlu0 %v4265, 87
        %v5341 = vpop.permute.xlu0 %5340
        %5342 = vrot.lane.b32.xlu0 %v4260, 87
        %v5343 = vpop.permute.xlu0 %5342
        %5344 = vrot.lane.b32.xlu0 %v4262, 87
        %v5345 = vpop.permute.xlu0 %5344
        %5346 = vrot.lane.b32.xlu0 %v4264, 87
        %v5347 = vpop.permute.xlu0 %5346
        %5348 = vrot.lane.b32.xlu0 %v4266, 87
        %v5349 = vpop.permute.xlu0 %5348
        %vm5350 = vcmp.lt.s32.totalorder %v530, 87
        %v5351 = vsel %vm5350, %v5335, %v5343
        %v5352 = vsel %vm5350, %v5337, %v5345
        %v5353 = vsel %vm5350, %v5339, %v5347
        %v5354 = vsel %vm5350, %v5341, %v5349
        %v5355 = vsel %vm5350, %v5343, %v5335
        %v5356 = vsel %vm5350, %v5345, %v5337
        %v5357 = vsel %vm5350, %v5347, %v5339
        %v5358 = vsel %vm5350, %v5349, %v5341
        %vm5359 = vmand %vm4286, %vm4306
        %v5360 = vsel %vm5359, 1, 0
        %v5361 = vlaneseq
        %v5362 = vshrl.u32 %v5361, 7
        %v5363 = vsub.s32 0, %v5362
        %v5364 = vrot.slane %v5360, %v5363
        %v5365 = vlaneseq
        %v5366 = vshrl.u32 %v5365, 7
        %v5367 = vsub.s32 1, %v5366
        %v5368 = vrot.slane %v5360, %v5367
        %vm5369 = vcmp.eq.s32.totalorder %v5364, 1
        %vm5370 = vcmp.eq.s32.totalorder %v5368, 1
        %v5371 = vsel %vm5369, %v5355, 0.0
        %v5372 = vsel %vm5370, %v5351, 0.0
        %v5373 = vsel %vm5369, %v5356, 0.0
        %v5374 = vsel %vm5370, %v5352, 0.0
        %v5375 = vsel %vm5369, %v5357, 0.0
        %v5376 = vsel %vm5370, %v5353, 0.0
        %v5377 = vsel %vm5369, %v5358, 0.0
        %v5378 = vsel %vm5370, %v5354, 0.0
        %5379 = vset.pattern.permute.xlu0 13
        %5380 = vperm.xlu0 %5379, %v4267
        %v5381 = vpop.permute.xlu0 %5380
        %5383 = vset.pattern.permute.xlu0 13
        %5384 = vperm.xlu0 %5383, %v4268
        %v5385 = vpop.permute.xlu0 %5384
        %5387 = vset.pattern.permute.xlu0 13
        %5388 = vperm.xlu0 %5387, %v4269
        %v5389 = vpop.permute.xlu0 %5388
        %5391 = vset.pattern.permute.xlu0 13
        %5392 = vperm.xlu0 %5391, %v4270
        %v5393 = vpop.permute.xlu0 %5392
        %v5395 = vmul.f32 %v5371, %v5381
        %v5396 = vmul.f32 %v5372, %v5381
        %v5397 = vmul.f32 %v5373, %v5385
        %v5398 = vmul.f32 %v5374, %v5385
        %v5399 = vmul.f32 %v5375, %v5389
        %v5400 = vmul.f32 %v5376, %v5389
        %v5401 = vmul.f32 %v5377, %v5393
        %v5402 = vmul.f32 %v5378, %v5393
        %v5403 = vadd.f32 %v5326, %v5395
        %v5404 = vadd.f32 %v5327, %v5396
        %v5405 = vadd.f32 %v5328, %v5397
        %v5406 = vadd.f32 %v5329, %v5398
        %v5407 = vadd.f32 %v5330, %v5399
        %v5408 = vadd.f32 %v5331, %v5400
        %v5409 = vadd.f32 %v5332, %v5401
        %v5410 = vadd.f32 %v5333, %v5402
        %5411 = vrot.lane.b32.xlu0 %v4259, 57
        %v5412 = vpop.permute.xlu0 %5411
        %5413 = vrot.lane.b32.xlu0 %v4261, 57
        %v5414 = vpop.permute.xlu0 %5413
        %5415 = vrot.lane.b32.xlu0 %v4263, 57
        %v5416 = vpop.permute.xlu0 %5415
        %5417 = vrot.lane.b32.xlu0 %v4265, 57
        %v5418 = vpop.permute.xlu0 %5417
        %5419 = vrot.lane.b32.xlu0 %v4260, 57
        %v5420 = vpop.permute.xlu0 %5419
        %5421 = vrot.lane.b32.xlu0 %v4262, 57
        %v5422 = vpop.permute.xlu0 %5421
        %5423 = vrot.lane.b32.xlu0 %v4264, 57
        %v5424 = vpop.permute.xlu0 %5423
        %5425 = vrot.lane.b32.xlu0 %v4266, 57
        %v5426 = vpop.permute.xlu0 %5425
        %vm5427 = vcmp.lt.s32.totalorder %v530, 57
        %v5428 = vsel %vm5427, %v5412, %v5420
        %v5429 = vsel %vm5427, %v5414, %v5422
        %v5430 = vsel %vm5427, %v5416, %v5424
        %v5431 = vsel %vm5427, %v5418, %v5426
        %v5432 = vsel %vm5427, %v5420, %v5412
        %v5433 = vsel %vm5427, %v5422, %v5414
        %v5434 = vsel %vm5427, %v5424, %v5416
        %v5435 = vsel %vm5427, %v5426, %v5418
        %vm5436 = vmand %vm434, %vm4282
        %v5437 = vsel %vm5436, 1, 0
        %v5438 = vlaneseq
        %v5439 = vshrl.u32 %v5438, 7
        %v5440 = vsub.s32 0, %v5439
        %v5441 = vrot.slane %v5437, %v5440
        %v5442 = vlaneseq
        %v5443 = vshrl.u32 %v5442, 7
        %v5444 = vsub.s32 1, %v5443
        %v5445 = vrot.slane %v5437, %v5444
        %vm5446 = vcmp.eq.s32.totalorder %v5441, 1
        %vm5447 = vcmp.eq.s32.totalorder %v5445, 1
        %v5448 = vsel %vm5446, %v5432, 0.0
        %v5449 = vsel %vm5447, %v5428, 0.0
        %v5450 = vsel %vm5446, %v5433, 0.0
        %v5451 = vsel %vm5447, %v5429, 0.0
        %v5452 = vsel %vm5446, %v5434, 0.0
        %v5453 = vsel %vm5447, %v5430, 0.0
        %v5454 = vsel %vm5446, %v5435, 0.0
        %v5455 = vsel %vm5447, %v5431, 0.0
        %5456 = vset.pattern.permute.xlu0 14
        %5457 = vperm.xlu0 %5456, %v4267
        %v5458 = vpop.permute.xlu0 %5457
        %5460 = vset.pattern.permute.xlu0 14
        %5461 = vperm.xlu0 %5460, %v4268
        %v5462 = vpop.permute.xlu0 %5461
        %5464 = vset.pattern.permute.xlu0 14
        %5465 = vperm.xlu0 %5464, %v4269
        %v5466 = vpop.permute.xlu0 %5465
        %5468 = vset.pattern.permute.xlu0 14
        %5469 = vperm.xlu0 %5468, %v4270
        %v5470 = vpop.permute.xlu0 %5469
        %v5472 = vmul.f32 %v5448, %v5458
        %v5473 = vmul.f32 %v5449, %v5458
        %v5474 = vmul.f32 %v5450, %v5462
        %v5475 = vmul.f32 %v5451, %v5462
        %v5476 = vmul.f32 %v5452, %v5466
        %v5477 = vmul.f32 %v5453, %v5466
        %v5478 = vmul.f32 %v5454, %v5470
        %v5479 = vmul.f32 %v5455, %v5470
        %v5480 = vadd.f32 %v5403, %v5472
        %v5481 = vadd.f32 %v5404, %v5473
        %v5482 = vadd.f32 %v5405, %v5474
        %v5483 = vadd.f32 %v5406, %v5475
        %v5484 = vadd.f32 %v5407, %v5476
        %v5485 = vadd.f32 %v5408, %v5477
        %v5486 = vadd.f32 %v5409, %v5478
        %v5487 = vadd.f32 %v5410, %v5479
        %5488 = vrot.lane.b32.xlu0 %v4259, 54
        %v5489 = vpop.permute.xlu0 %5488
        %5490 = vrot.lane.b32.xlu0 %v4261, 54
        %v5491 = vpop.permute.xlu0 %5490
        %5492 = vrot.lane.b32.xlu0 %v4263, 54
        %v5493 = vpop.permute.xlu0 %5492
        %5494 = vrot.lane.b32.xlu0 %v4265, 54
        %v5495 = vpop.permute.xlu0 %5494
        %5496 = vrot.lane.b32.xlu0 %v4260, 54
        %v5497 = vpop.permute.xlu0 %5496
        %5498 = vrot.lane.b32.xlu0 %v4262, 54
        %v5499 = vpop.permute.xlu0 %5498
        %5500 = vrot.lane.b32.xlu0 %v4264, 54
        %v5501 = vpop.permute.xlu0 %5500
        %5502 = vrot.lane.b32.xlu0 %v4266, 54
        %v5503 = vpop.permute.xlu0 %5502
        %vm5504 = vcmp.lt.s32.totalorder %v530, 54
        %v5505 = vsel %vm5504, %v5489, %v5497
        %v5506 = vsel %vm5504, %v5491, %v5499
        %v5507 = vsel %vm5504, %v5493, %v5501
        %v5508 = vsel %vm5504, %v5495, %v5503
        %v5509 = vsel %vm5504, %v5497, %v5489
        %v5510 = vsel %vm5504, %v5499, %v5491
        %v5511 = vsel %vm5504, %v5501, %v5493
        %v5512 = vsel %vm5504, %v5503, %v5495
        %vm5513 = vmand %vm434, %vm4290
        %v5514 = vsel %vm5513, 1, 0
        %v5515 = vlaneseq
        %v5516 = vshrl.u32 %v5515, 7
        %v5517 = vsub.s32 0, %v5516
        %v5518 = vrot.slane %v5514, %v5517
        %v5519 = vlaneseq
        %v5520 = vshrl.u32 %v5519, 7
        %v5521 = vsub.s32 1, %v5520
        %v5522 = vrot.slane %v5514, %v5521
        %vm5523 = vcmp.eq.s32.totalorder %v5518, 1
        %vm5524 = vcmp.eq.s32.totalorder %v5522, 1
        %v5525 = vsel %vm5523, %v5509, 0.0
        %v5526 = vsel %vm5524, %v5505, 0.0
        %v5527 = vsel %vm5523, %v5510, 0.0
        %v5528 = vsel %vm5524, %v5506, 0.0
        %v5529 = vsel %vm5523, %v5511, 0.0
        %v5530 = vsel %vm5524, %v5507, 0.0
        %v5531 = vsel %vm5523, %v5512, 0.0
        %v5532 = vsel %vm5524, %v5508, 0.0
        %5533 = vset.pattern.permute.xlu0 15
        %5534 = vperm.xlu0 %5533, %v4267
        %v5535 = vpop.permute.xlu0 %5534
        %5537 = vset.pattern.permute.xlu0 15
        %5538 = vperm.xlu0 %5537, %v4268
        %v5539 = vpop.permute.xlu0 %5538
        %5541 = vset.pattern.permute.xlu0 15
        %5542 = vperm.xlu0 %5541, %v4269
        %v5543 = vpop.permute.xlu0 %5542
        %5545 = vset.pattern.permute.xlu0 15
        %5546 = vperm.xlu0 %5545, %v4270
        %v5547 = vpop.permute.xlu0 %5546
        %v5549 = vmul.f32 %v5525, %v5535
        %v5550 = vmul.f32 %v5526, %v5535
        %v5551 = vmul.f32 %v5527, %v5539
        %v5552 = vmul.f32 %v5528, %v5539
        %v5553 = vmul.f32 %v5529, %v5543
        %v5554 = vmul.f32 %v5530, %v5543
        %v5555 = vmul.f32 %v5531, %v5547
        %v5556 = vmul.f32 %v5532, %v5547
        %v5557 = vadd.f32 %v5480, %v5549
        %v5558 = vadd.f32 %v5481, %v5550
        %v5559 = vadd.f32 %v5482, %v5551
        %v5560 = vadd.f32 %v5483, %v5552
        %v5561 = vadd.f32 %v5484, %v5553
        %v5562 = vadd.f32 %v5485, %v5554
        %v5563 = vadd.f32 %v5486, %v5555
        %v5564 = vadd.f32 %v5487, %v5556
        %5565 = vrot.lane.b32.xlu0 %v4259, 51
        %v5566 = vpop.permute.xlu0 %5565
        %5567 = vrot.lane.b32.xlu0 %v4261, 51
        %v5568 = vpop.permute.xlu0 %5567
        %5569 = vrot.lane.b32.xlu0 %v4263, 51
        %v5570 = vpop.permute.xlu0 %5569
        %5571 = vrot.lane.b32.xlu0 %v4265, 51
        %v5572 = vpop.permute.xlu0 %5571
        %5573 = vrot.lane.b32.xlu0 %v4260, 51
        %v5574 = vpop.permute.xlu0 %5573
        %5575 = vrot.lane.b32.xlu0 %v4262, 51
        %v5576 = vpop.permute.xlu0 %5575
        %5577 = vrot.lane.b32.xlu0 %v4264, 51
        %v5578 = vpop.permute.xlu0 %5577
        %5579 = vrot.lane.b32.xlu0 %v4266, 51
        %v5580 = vpop.permute.xlu0 %5579
        %v5581 = vsel %vm531, %v5566, %v5574
        %v5582 = vsel %vm531, %v5568, %v5576
        %v5583 = vsel %vm531, %v5570, %v5578
        %v5584 = vsel %vm531, %v5572, %v5580
        %v5585 = vsel %vm531, %v5574, %v5566
        %v5586 = vsel %vm531, %v5576, %v5568
        %v5587 = vsel %vm531, %v5578, %v5570
        %v5588 = vsel %vm531, %v5580, %v5572
        %v5589 = vsel %vm550, %v5585, 0.0
        %v5590 = vsel %vm551, %v5581, 0.0
        %v5591 = vsel %vm550, %v5586, 0.0
        %v5592 = vsel %vm551, %v5582, 0.0
        %v5593 = vsel %vm550, %v5587, 0.0
        %v5594 = vsel %vm551, %v5583, 0.0
        %v5595 = vsel %vm550, %v5588, 0.0
        %v5596 = vsel %vm551, %v5584, 0.0
        %5597 = vset.pattern.permute.xlu0 16
        %5598 = vperm.xlu0 %5597, %v4267
        %v5599 = vpop.permute.xlu0 %5598
        %5601 = vset.pattern.permute.xlu0 16
        %5602 = vperm.xlu0 %5601, %v4268
        %v5603 = vpop.permute.xlu0 %5602
        %5605 = vset.pattern.permute.xlu0 16
        %5606 = vperm.xlu0 %5605, %v4269
        %v5607 = vpop.permute.xlu0 %5606
        %5609 = vset.pattern.permute.xlu0 16
        %5610 = vperm.xlu0 %5609, %v4270
        %v5611 = vpop.permute.xlu0 %5610
        %v5613 = vmul.f32 %v5589, %v5599
        %v5614 = vmul.f32 %v5590, %v5599
        %v5615 = vmul.f32 %v5591, %v5603
        %v5616 = vmul.f32 %v5592, %v5603
        %v5617 = vmul.f32 %v5593, %v5607
        %v5618 = vmul.f32 %v5594, %v5607
        %v5619 = vmul.f32 %v5595, %v5611
        %v5620 = vmul.f32 %v5596, %v5611
        %v5621 = vadd.f32 %v5557, %v5613
        %v5622 = vadd.f32 %v5558, %v5614
        %v5623 = vadd.f32 %v5559, %v5615
        %v5624 = vadd.f32 %v5560, %v5616
        %v5625 = vadd.f32 %v5561, %v5617
        %v5626 = vadd.f32 %v5562, %v5618
        %v5627 = vadd.f32 %v5563, %v5619
        %v5628 = vadd.f32 %v5564, %v5620
        %5629 = vrot.lane.b32.xlu0 %v4259, 48
        %v5630 = vpop.permute.xlu0 %5629
        %5631 = vrot.lane.b32.xlu0 %v4261, 48
        %v5632 = vpop.permute.xlu0 %5631
        %5633 = vrot.lane.b32.xlu0 %v4263, 48
        %v5634 = vpop.permute.xlu0 %5633
        %5635 = vrot.lane.b32.xlu0 %v4265, 48
        %v5636 = vpop.permute.xlu0 %5635
        %5637 = vrot.lane.b32.xlu0 %v4260, 48
        %v5638 = vpop.permute.xlu0 %5637
        %5639 = vrot.lane.b32.xlu0 %v4262, 48
        %v5640 = vpop.permute.xlu0 %5639
        %5641 = vrot.lane.b32.xlu0 %v4264, 48
        %v5642 = vpop.permute.xlu0 %5641
        %5643 = vrot.lane.b32.xlu0 %v4266, 48
        %v5644 = vpop.permute.xlu0 %5643
        %v5645 = vsel %vm766, %v5630, %v5638
        %v5646 = vsel %vm766, %v5632, %v5640
        %v5647 = vsel %vm766, %v5634, %v5642
        %v5648 = vsel %vm766, %v5636, %v5644
        %v5649 = vsel %vm766, %v5638, %v5630
        %v5650 = vsel %vm766, %v5640, %v5632
        %v5651 = vsel %vm766, %v5642, %v5634
        %v5652 = vsel %vm766, %v5644, %v5636
        %v5653 = vsel %vm785, %v5649, 0.0
        %v5654 = vsel %vm786, %v5645, 0.0
        %v5655 = vsel %vm785, %v5650, 0.0
        %v5656 = vsel %vm786, %v5646, 0.0
        %v5657 = vsel %vm785, %v5651, 0.0
        %v5658 = vsel %vm786, %v5647, 0.0
        %v5659 = vsel %vm785, %v5652, 0.0
        %v5660 = vsel %vm786, %v5648, 0.0
        %5661 = vset.pattern.permute.xlu0 17
        %5662 = vperm.xlu0 %5661, %v4267
        %v5663 = vpop.permute.xlu0 %5662
        %5665 = vset.pattern.permute.xlu0 17
        %5666 = vperm.xlu0 %5665, %v4268
        %v5667 = vpop.permute.xlu0 %5666
        %5669 = vset.pattern.permute.xlu0 17
        %5670 = vperm.xlu0 %5669, %v4269
        %v5671 = vpop.permute.xlu0 %5670
        %5673 = vset.pattern.permute.xlu0 17
        %5674 = vperm.xlu0 %5673, %v4270
        %v5675 = vpop.permute.xlu0 %5674
        %v5677 = vmul.f32 %v5653, %v5663
        %v5678 = vmul.f32 %v5654, %v5663
        %v5679 = vmul.f32 %v5655, %v5667
        %v5680 = vmul.f32 %v5656, %v5667
        %v5681 = vmul.f32 %v5657, %v5671
        %v5682 = vmul.f32 %v5658, %v5671
        %v5683 = vmul.f32 %v5659, %v5675
        %v5684 = vmul.f32 %v5660, %v5675
        %v5685 = vadd.f32 %v5621, %v5677
        %v5686 = vadd.f32 %v5622, %v5678
        %v5687 = vadd.f32 %v5623, %v5679
        %v5688 = vadd.f32 %v5624, %v5680
        %v5689 = vadd.f32 %v5625, %v5681
        %v5690 = vadd.f32 %v5626, %v5682
        %v5691 = vadd.f32 %v5627, %v5683
        %v5692 = vadd.f32 %v5628, %v5684
        %5693 = vrot.lane.b32.xlu0 %v4259, 45
        %v5694 = vpop.permute.xlu0 %5693
        %5695 = vrot.lane.b32.xlu0 %v4261, 45
        %v5696 = vpop.permute.xlu0 %5695
        %5697 = vrot.lane.b32.xlu0 %v4263, 45
        %v5698 = vpop.permute.xlu0 %5697
        %5699 = vrot.lane.b32.xlu0 %v4265, 45
        %v5700 = vpop.permute.xlu0 %5699
        %5701 = vrot.lane.b32.xlu0 %v4260, 45
        %v5702 = vpop.permute.xlu0 %5701
        %5703 = vrot.lane.b32.xlu0 %v4262, 45
        %v5704 = vpop.permute.xlu0 %5703
        %5705 = vrot.lane.b32.xlu0 %v4264, 45
        %v5706 = vpop.permute.xlu0 %5705
        %5707 = vrot.lane.b32.xlu0 %v4266, 45
        %v5708 = vpop.permute.xlu0 %5707
        %v5709 = vsel %vm997, %v5694, %v5702
        %v5710 = vsel %vm997, %v5696, %v5704
        %v5711 = vsel %vm997, %v5698, %v5706
        %v5712 = vsel %vm997, %v5700, %v5708
        %v5713 = vsel %vm997, %v5702, %v5694
        %v5714 = vsel %vm997, %v5704, %v5696
        %v5715 = vsel %vm997, %v5706, %v5698
        %v5716 = vsel %vm997, %v5708, %v5700
        %v5717 = vsel %vm1016, %v5713, 0.0
        %v5718 = vsel %vm1017, %v5709, 0.0
        %v5719 = vsel %vm1016, %v5714, 0.0
        %v5720 = vsel %vm1017, %v5710, 0.0
        %v5721 = vsel %vm1016, %v5715, 0.0
        %v5722 = vsel %vm1017, %v5711, 0.0
        %v5723 = vsel %vm1016, %v5716, 0.0
        %v5724 = vsel %vm1017, %v5712, 0.0
        %5725 = vset.pattern.permute.xlu0 18
        %5726 = vperm.xlu0 %5725, %v4267
        %v5727 = vpop.permute.xlu0 %5726
        %5729 = vset.pattern.permute.xlu0 18
        %5730 = vperm.xlu0 %5729, %v4268
        %v5731 = vpop.permute.xlu0 %5730
        %5733 = vset.pattern.permute.xlu0 18
        %5734 = vperm.xlu0 %5733, %v4269
        %v5735 = vpop.permute.xlu0 %5734
        %5737 = vset.pattern.permute.xlu0 18
        %5738 = vperm.xlu0 %5737, %v4270
        %v5739 = vpop.permute.xlu0 %5738
        %v5741 = vmul.f32 %v5717, %v5727
        %v5742 = vmul.f32 %v5718, %v5727
        %v5743 = vmul.f32 %v5719, %v5731
        %v5744 = vmul.f32 %v5720, %v5731
        %v5745 = vmul.f32 %v5721, %v5735
        %v5746 = vmul.f32 %v5722, %v5735
        %v5747 = vmul.f32 %v5723, %v5739
        %v5748 = vmul.f32 %v5724, %v5739
        %v5749 = vadd.f32 %v5685, %v5741
        %v5750 = vadd.f32 %v5686, %v5742
        %v5751 = vadd.f32 %v5687, %v5743
        %v5752 = vadd.f32 %v5688, %v5744
        %v5753 = vadd.f32 %v5689, %v5745
        %v5754 = vadd.f32 %v5690, %v5746
        %v5755 = vadd.f32 %v5691, %v5747
        %v5756 = vadd.f32 %v5692, %v5748
        %5757 = vrot.lane.b32.xlu0 %v4259, 42
        %v5758 = vpop.permute.xlu0 %5757
        %5759 = vrot.lane.b32.xlu0 %v4261, 42
        %v5760 = vpop.permute.xlu0 %5759
        %5761 = vrot.lane.b32.xlu0 %v4263, 42
        %v5762 = vpop.permute.xlu0 %5761
        %5763 = vrot.lane.b32.xlu0 %v4265, 42
        %v5764 = vpop.permute.xlu0 %5763
        %5765 = vrot.lane.b32.xlu0 %v4260, 42
        %v5766 = vpop.permute.xlu0 %5765
        %5767 = vrot.lane.b32.xlu0 %v4262, 42
        %v5768 = vpop.permute.xlu0 %5767
        %5769 = vrot.lane.b32.xlu0 %v4264, 42
        %v5770 = vpop.permute.xlu0 %5769
        %5771 = vrot.lane.b32.xlu0 %v4266, 42
        %v5772 = vpop.permute.xlu0 %5771
        %vm5773 = vcmp.lt.s32.totalorder %v530, 42
        %v5774 = vsel %vm5773, %v5758, %v5766
        %v5775 = vsel %vm5773, %v5760, %v5768
        %v5776 = vsel %vm5773, %v5762, %v5770
        %v5777 = vsel %vm5773, %v5764, %v5772
        %v5778 = vsel %vm5773, %v5766, %v5758
        %v5779 = vsel %vm5773, %v5768, %v5760
        %v5780 = vsel %vm5773, %v5770, %v5762
        %v5781 = vsel %vm5773, %v5772, %v5764
        %vm5782 = vmand %vm434, %vm4298
        %v5783 = vsel %vm5782, 1, 0
        %v5784 = vlaneseq
        %v5785 = vshrl.u32 %v5784, 7
        %v5786 = vsub.s32 0, %v5785
        %v5787 = vrot.slane %v5783, %v5786
        %v5788 = vlaneseq
        %v5789 = vshrl.u32 %v5788, 7
        %v5790 = vsub.s32 1, %v5789
        %v5791 = vrot.slane %v5783, %v5790
        %vm5792 = vcmp.eq.s32.totalorder %v5787, 1
        %vm5793 = vcmp.eq.s32.totalorder %v5791, 1
        %v5794 = vsel %vm5792, %v5778, 0.0
        %v5795 = vsel %vm5793, %v5774, 0.0
        %v5796 = vsel %vm5792, %v5779, 0.0
        %v5797 = vsel %vm5793, %v5775, 0.0
        %v5798 = vsel %vm5792, %v5780, 0.0
        %v5799 = vsel %vm5793, %v5776, 0.0
        %v5800 = vsel %vm5792, %v5781, 0.0
        %v5801 = vsel %vm5793, %v5777, 0.0
        %5802 = vset.pattern.permute.xlu0 19
        %5803 = vperm.xlu0 %5802, %v4267
        %v5804 = vpop.permute.xlu0 %5803
        %5806 = vset.pattern.permute.xlu0 19
        %5807 = vperm.xlu0 %5806, %v4268
        %v5808 = vpop.permute.xlu0 %5807
        %5810 = vset.pattern.permute.xlu0 19
        %5811 = vperm.xlu0 %5810, %v4269
        %v5812 = vpop.permute.xlu0 %5811
        %5814 = vset.pattern.permute.xlu0 19
        %5815 = vperm.xlu0 %5814, %v4270
        %v5816 = vpop.permute.xlu0 %5815
        %v5818 = vmul.f32 %v5794, %v5804
        %v5819 = vmul.f32 %v5795, %v5804
        %v5820 = vmul.f32 %v5796, %v5808
        %v5821 = vmul.f32 %v5797, %v5808
        %v5822 = vmul.f32 %v5798, %v5812
        %v5823 = vmul.f32 %v5799, %v5812
        %v5824 = vmul.f32 %v5800, %v5816
        %v5825 = vmul.f32 %v5801, %v5816
        %v5826 = vadd.f32 %v5749, %v5818
        %v5827 = vadd.f32 %v5750, %v5819
        %v5828 = vadd.f32 %v5751, %v5820
        %v5829 = vadd.f32 %v5752, %v5821
        %v5830 = vadd.f32 %v5753, %v5822
        %v5831 = vadd.f32 %v5754, %v5823
        %v5832 = vadd.f32 %v5755, %v5824
        %v5833 = vadd.f32 %v5756, %v5825
        %5834 = vrot.lane.b32.xlu0 %v4259, 39
        %v5835 = vpop.permute.xlu0 %5834
        %5836 = vrot.lane.b32.xlu0 %v4261, 39
        %v5837 = vpop.permute.xlu0 %5836
        %5838 = vrot.lane.b32.xlu0 %v4263, 39
        %v5839 = vpop.permute.xlu0 %5838
        %5840 = vrot.lane.b32.xlu0 %v4265, 39
        %v5841 = vpop.permute.xlu0 %5840
        %5842 = vrot.lane.b32.xlu0 %v4260, 39
        %v5843 = vpop.permute.xlu0 %5842
        %5844 = vrot.lane.b32.xlu0 %v4262, 39
        %v5845 = vpop.permute.xlu0 %5844
        %5846 = vrot.lane.b32.xlu0 %v4264, 39
        %v5847 = vpop.permute.xlu0 %5846
        %5848 = vrot.lane.b32.xlu0 %v4266, 39
        %v5849 = vpop.permute.xlu0 %5848
        %vm5850 = vcmp.lt.s32.totalorder %v530, 39
        %v5851 = vsel %vm5850, %v5835, %v5843
        %v5852 = vsel %vm5850, %v5837, %v5845
        %v5853 = vsel %vm5850, %v5839, %v5847
        %v5854 = vsel %vm5850, %v5841, %v5849
        %v5855 = vsel %vm5850, %v5843, %v5835
        %v5856 = vsel %vm5850, %v5845, %v5837
        %v5857 = vsel %vm5850, %v5847, %v5839
        %v5858 = vsel %vm5850, %v5849, %v5841
        %vm5859 = vmand %vm434, %vm4306
        %v5860 = vsel %vm5859, 1, 0
        %v5861 = vlaneseq
        %v5862 = vshrl.u32 %v5861, 7
        %v5863 = vsub.s32 0, %v5862
        %v5864 = vrot.slane %v5860, %v5863
        %v5865 = vlaneseq
        %v5866 = vshrl.u32 %v5865, 7
        %v5867 = vsub.s32 1, %v5866
        %v5868 = vrot.slane %v5860, %v5867
        %vm5869 = vcmp.eq.s32.totalorder %v5864, 1
        %vm5870 = vcmp.eq.s32.totalorder %v5868, 1
        %v5871 = vsel %vm5869, %v5855, 0.0
        %v5872 = vsel %vm5870, %v5851, 0.0
        %v5873 = vsel %vm5869, %v5856, 0.0
        %v5874 = vsel %vm5870, %v5852, 0.0
        %v5875 = vsel %vm5869, %v5857, 0.0
        %v5876 = vsel %vm5870, %v5853, 0.0
        %v5877 = vsel %vm5869, %v5858, 0.0
        %v5878 = vsel %vm5870, %v5854, 0.0
        %5879 = vset.pattern.permute.xlu0 20
        %5880 = vperm.xlu0 %5879, %v4267
        %v5881 = vpop.permute.xlu0 %5880
        %5883 = vset.pattern.permute.xlu0 20
        %5884 = vperm.xlu0 %5883, %v4268
        %v5885 = vpop.permute.xlu0 %5884
        %5887 = vset.pattern.permute.xlu0 20
        %5888 = vperm.xlu0 %5887, %v4269
        %v5889 = vpop.permute.xlu0 %5888
        %5891 = vset.pattern.permute.xlu0 20
        %5892 = vperm.xlu0 %5891, %v4270
        %v5893 = vpop.permute.xlu0 %5892
        %v5895 = vmul.f32 %v5871, %v5881
        %v5896 = vmul.f32 %v5872, %v5881
        %v5897 = vmul.f32 %v5873, %v5885
        %v5898 = vmul.f32 %v5874, %v5885
        %v5899 = vmul.f32 %v5875, %v5889
        %v5900 = vmul.f32 %v5876, %v5889
        %v5901 = vmul.f32 %v5877, %v5893
        %v5902 = vmul.f32 %v5878, %v5893
        %v5903 = vadd.f32 %v5826, %v5895
        %v5904 = vadd.f32 %v5827, %v5896
        %v5905 = vadd.f32 %v5828, %v5897
        %v5906 = vadd.f32 %v5829, %v5898
        %v5907 = vadd.f32 %v5830, %v5899
        %v5908 = vadd.f32 %v5831, %v5900
        %v5909 = vadd.f32 %v5832, %v5901
        %v5910 = vadd.f32 %v5833, %v5902
        %5911 = vrot.lane.b32.xlu0 %v4259, 9
        %v5912 = vpop.permute.xlu0 %5911
        %5913 = vrot.lane.b32.xlu0 %v4261, 9
        %v5914 = vpop.permute.xlu0 %5913
        %5915 = vrot.lane.b32.xlu0 %v4263, 9
        %v5916 = vpop.permute.xlu0 %5915
        %5917 = vrot.lane.b32.xlu0 %v4265, 9
        %v5918 = vpop.permute.xlu0 %5917
        %5919 = vrot.lane.b32.xlu0 %v4260, 9
        %v5920 = vpop.permute.xlu0 %5919
        %5921 = vrot.lane.b32.xlu0 %v4262, 9
        %v5922 = vpop.permute.xlu0 %5921
        %5923 = vrot.lane.b32.xlu0 %v4264, 9
        %v5924 = vpop.permute.xlu0 %5923
        %5925 = vrot.lane.b32.xlu0 %v4266, 9
        %v5926 = vpop.permute.xlu0 %5925
        %vm5927 = vcmp.lt.s32.totalorder %v530, 9
        %v5928 = vsel %vm5927, %v5912, %v5920
        %v5929 = vsel %vm5927, %v5914, %v5922
        %v5930 = vsel %vm5927, %v5916, %v5924
        %v5931 = vsel %vm5927, %v5918, %v5926
        %v5932 = vsel %vm5927, %v5920, %v5912
        %v5933 = vsel %vm5927, %v5922, %v5914
        %v5934 = vsel %vm5927, %v5924, %v5916
        %v5935 = vsel %vm5927, %v5926, %v5918
        %vm5936 = vmand %vm457, %vm4282
        %v5937 = vsel %vm5936, 1, 0
        %v5938 = vlaneseq
        %v5939 = vshrl.u32 %v5938, 7
        %v5940 = vsub.s32 0, %v5939
        %v5941 = vrot.slane %v5937, %v5940
        %v5942 = vlaneseq
        %v5943 = vshrl.u32 %v5942, 7
        %v5944 = vsub.s32 1, %v5943
        %v5945 = vrot.slane %v5937, %v5944
        %vm5946 = vcmp.eq.s32.totalorder %v5941, 1
        %vm5947 = vcmp.eq.s32.totalorder %v5945, 1
        %v5948 = vsel %vm5946, %v5932, 0.0
        %v5949 = vsel %vm5947, %v5928, 0.0
        %v5950 = vsel %vm5946, %v5933, 0.0
        %v5951 = vsel %vm5947, %v5929, 0.0
        %v5952 = vsel %vm5946, %v5934, 0.0
        %v5953 = vsel %vm5947, %v5930, 0.0
        %v5954 = vsel %vm5946, %v5935, 0.0
        %v5955 = vsel %vm5947, %v5931, 0.0
        %5956 = vset.pattern.permute.xlu0 21
        %5957 = vperm.xlu0 %5956, %v4267
        %v5958 = vpop.permute.xlu0 %5957
        %5960 = vset.pattern.permute.xlu0 21
        %5961 = vperm.xlu0 %5960, %v4268
        %v5962 = vpop.permute.xlu0 %5961
        %5964 = vset.pattern.permute.xlu0 21
        %5965 = vperm.xlu0 %5964, %v4269
        %v5966 = vpop.permute.xlu0 %5965
        %5968 = vset.pattern.permute.xlu0 21
        %5969 = vperm.xlu0 %5968, %v4270
        %v5970 = vpop.permute.xlu0 %5969
        %v5972 = vmul.f32 %v5948, %v5958
        %v5973 = vmul.f32 %v5949, %v5958
        %v5974 = vmul.f32 %v5950, %v5962
        %v5975 = vmul.f32 %v5951, %v5962
        %v5976 = vmul.f32 %v5952, %v5966
        %v5977 = vmul.f32 %v5953, %v5966
        %v5978 = vmul.f32 %v5954, %v5970
        %v5979 = vmul.f32 %v5955, %v5970
        %v5980 = vadd.f32 %v5903, %v5972
        %v5981 = vadd.f32 %v5904, %v5973
        %v5982 = vadd.f32 %v5905, %v5974
        %v5983 = vadd.f32 %v5906, %v5975
        %v5984 = vadd.f32 %v5907, %v5976
        %v5985 = vadd.f32 %v5908, %v5977
        %v5986 = vadd.f32 %v5909, %v5978
        %v5987 = vadd.f32 %v5910, %v5979
        %5988 = vrot.lane.b32.xlu0 %v4259, 6
        %v5989 = vpop.permute.xlu0 %5988
        %5990 = vrot.lane.b32.xlu0 %v4261, 6
        %v5991 = vpop.permute.xlu0 %5990
        %5992 = vrot.lane.b32.xlu0 %v4263, 6
        %v5993 = vpop.permute.xlu0 %5992
        %5994 = vrot.lane.b32.xlu0 %v4265, 6
        %v5995 = vpop.permute.xlu0 %5994
        %5996 = vrot.lane.b32.xlu0 %v4260, 6
        %v5997 = vpop.permute.xlu0 %5996
        %5998 = vrot.lane.b32.xlu0 %v4262, 6
        %v5999 = vpop.permute.xlu0 %5998
        %6000 = vrot.lane.b32.xlu0 %v4264, 6
        %v6001 = vpop.permute.xlu0 %6000
        %6002 = vrot.lane.b32.xlu0 %v4266, 6
        %v6003 = vpop.permute.xlu0 %6002
        %vm6004 = vcmp.lt.s32.totalorder %v530, 6
        %v6005 = vsel %vm6004, %v5989, %v5997
        %v6006 = vsel %vm6004, %v5991, %v5999
        %v6007 = vsel %vm6004, %v5993, %v6001
        %v6008 = vsel %vm6004, %v5995, %v6003
        %v6009 = vsel %vm6004, %v5997, %v5989
        %v6010 = vsel %vm6004, %v5999, %v5991
        %v6011 = vsel %vm6004, %v6001, %v5993
        %v6012 = vsel %vm6004, %v6003, %v5995
        %vm6013 = vmand %vm457, %vm4290
        %v6014 = vsel %vm6013, 1, 0
        %v6015 = vlaneseq
        %v6016 = vshrl.u32 %v6015, 7
        %v6017 = vsub.s32 0, %v6016
        %v6018 = vrot.slane %v6014, %v6017
        %v6019 = vlaneseq
        %v6020 = vshrl.u32 %v6019, 7
        %v6021 = vsub.s32 1, %v6020
        %v6022 = vrot.slane %v6014, %v6021
        %vm6023 = vcmp.eq.s32.totalorder %v6018, 1
        %vm6024 = vcmp.eq.s32.totalorder %v6022, 1
        %v6025 = vsel %vm6023, %v6009, 0.0
        %v6026 = vsel %vm6024, %v6005, 0.0
        %v6027 = vsel %vm6023, %v6010, 0.0
        %v6028 = vsel %vm6024, %v6006, 0.0
        %v6029 = vsel %vm6023, %v6011, 0.0
        %v6030 = vsel %vm6024, %v6007, 0.0
        %v6031 = vsel %vm6023, %v6012, 0.0
        %v6032 = vsel %vm6024, %v6008, 0.0
        %6033 = vset.pattern.permute.xlu0 22
        %6034 = vperm.xlu0 %6033, %v4267
        %v6035 = vpop.permute.xlu0 %6034
        %6037 = vset.pattern.permute.xlu0 22
        %6038 = vperm.xlu0 %6037, %v4268
        %v6039 = vpop.permute.xlu0 %6038
        %6041 = vset.pattern.permute.xlu0 22
        %6042 = vperm.xlu0 %6041, %v4269
        %v6043 = vpop.permute.xlu0 %6042
        %6045 = vset.pattern.permute.xlu0 22
        %6046 = vperm.xlu0 %6045, %v4270
        %v6047 = vpop.permute.xlu0 %6046
        %v6049 = vmul.f32 %v6025, %v6035
        %v6050 = vmul.f32 %v6026, %v6035
        %v6051 = vmul.f32 %v6027, %v6039
        %v6052 = vmul.f32 %v6028, %v6039
        %v6053 = vmul.f32 %v6029, %v6043
        %v6054 = vmul.f32 %v6030, %v6043
        %v6055 = vmul.f32 %v6031, %v6047
        %v6056 = vmul.f32 %v6032, %v6047
        %v6057 = vadd.f32 %v5980, %v6049
        %v6058 = vadd.f32 %v5981, %v6050
        %v6059 = vadd.f32 %v5982, %v6051
        %v6060 = vadd.f32 %v5983, %v6052
        %v6061 = vadd.f32 %v5984, %v6053
        %v6062 = vadd.f32 %v5985, %v6054
        %v6063 = vadd.f32 %v5986, %v6055
        %v6064 = vadd.f32 %v5987, %v6056
        %6065 = vrot.lane.b32.xlu0 %v4259, 3
        %v6066 = vpop.permute.xlu0 %6065
        %6067 = vrot.lane.b32.xlu0 %v4261, 3
        %v6068 = vpop.permute.xlu0 %6067
        %6069 = vrot.lane.b32.xlu0 %v4263, 3
        %v6070 = vpop.permute.xlu0 %6069
        %6071 = vrot.lane.b32.xlu0 %v4265, 3
        %v6072 = vpop.permute.xlu0 %6071
        %6073 = vrot.lane.b32.xlu0 %v4260, 3
        %v6074 = vpop.permute.xlu0 %6073
        %6075 = vrot.lane.b32.xlu0 %v4262, 3
        %v6076 = vpop.permute.xlu0 %6075
        %6077 = vrot.lane.b32.xlu0 %v4264, 3
        %v6078 = vpop.permute.xlu0 %6077
        %6079 = vrot.lane.b32.xlu0 %v4266, 3
        %v6080 = vpop.permute.xlu0 %6079
        %v6081 = vsel %vm2152, %v6066, %v6074
        %v6082 = vsel %vm2152, %v6068, %v6076
        %v6083 = vsel %vm2152, %v6070, %v6078
        %v6084 = vsel %vm2152, %v6072, %v6080
        %v6085 = vsel %vm2152, %v6074, %v6066
        %v6086 = vsel %vm2152, %v6076, %v6068
        %v6087 = vsel %vm2152, %v6078, %v6070
        %v6088 = vsel %vm2152, %v6080, %v6072
        %v6089 = vsel %vm2171, %v6085, 0.0
        %v6090 = vsel %vm2172, %v6081, 0.0
        %v6091 = vsel %vm2171, %v6086, 0.0
        %v6092 = vsel %vm2172, %v6082, 0.0
        %v6093 = vsel %vm2171, %v6087, 0.0
        %v6094 = vsel %vm2172, %v6083, 0.0
        %v6095 = vsel %vm2171, %v6088, 0.0
        %v6096 = vsel %vm2172, %v6084, 0.0
        %6097 = vset.pattern.permute.xlu0 23
        %6098 = vperm.xlu0 %6097, %v4267
        %v6099 = vpop.permute.xlu0 %6098
        %6101 = vset.pattern.permute.xlu0 23
        %6102 = vperm.xlu0 %6101, %v4268
        %v6103 = vpop.permute.xlu0 %6102
        %6105 = vset.pattern.permute.xlu0 23
        %6106 = vperm.xlu0 %6105, %v4269
        %v6107 = vpop.permute.xlu0 %6106
        %6109 = vset.pattern.permute.xlu0 23
        %6110 = vperm.xlu0 %6109, %v4270
        %v6111 = vpop.permute.xlu0 %6110
        %v6113 = vmul.f32 %v6089, %v6099
        %v6114 = vmul.f32 %v6090, %v6099
        %v6115 = vmul.f32 %v6091, %v6103
        %v6116 = vmul.f32 %v6092, %v6103
        %v6117 = vmul.f32 %v6093, %v6107
        %v6118 = vmul.f32 %v6094, %v6107
        %v6119 = vmul.f32 %v6095, %v6111
        %v6120 = vmul.f32 %v6096, %v6111
        %v6121 = vadd.f32 %v6057, %v6113
        %v6122 = vadd.f32 %v6058, %v6114
        %v6123 = vadd.f32 %v6059, %v6115
        %v6124 = vadd.f32 %v6060, %v6116
        %v6125 = vadd.f32 %v6061, %v6117
        %v6126 = vadd.f32 %v6062, %v6118
        %v6127 = vadd.f32 %v6063, %v6119
        %v6128 = vadd.f32 %v6064, %v6120
        %v6129 = vsel %vm2377, %v4259, 0.0
        %v6130 = vsel %vm2378, %v4260, 0.0
        %v6131 = vsel %vm2377, %v4261, 0.0
        %v6132 = vsel %vm2378, %v4262, 0.0
        %v6133 = vsel %vm2377, %v4263, 0.0
        %v6134 = vsel %vm2378, %v4264, 0.0
        %v6135 = vsel %vm2377, %v4265, 0.0
        %v6136 = vsel %vm2378, %v4266, 0.0
        %6137 = vset.pattern.permute.xlu0 24
        %6138 = vperm.xlu0 %6137, %v4267
        %v6139 = vpop.permute.xlu0 %6138
        %6141 = vset.pattern.permute.xlu0 24
        %6142 = vperm.xlu0 %6141, %v4268
        %v6143 = vpop.permute.xlu0 %6142
        %6145 = vset.pattern.permute.xlu0 24
        %6146 = vperm.xlu0 %6145, %v4269
        %v6147 = vpop.permute.xlu0 %6146
        %6149 = vset.pattern.permute.xlu0 24
        %6150 = vperm.xlu0 %6149, %v4270
        %v6151 = vpop.permute.xlu0 %6150
        %v6153 = vmul.f32 %v6129, %v6139
        %v6154 = vmul.f32 %v6130, %v6139
        %v6155 = vmul.f32 %v6131, %v6143
        %v6156 = vmul.f32 %v6132, %v6143
        %v6157 = vmul.f32 %v6133, %v6147
        %v6158 = vmul.f32 %v6134, %v6147
        %v6159 = vmul.f32 %v6135, %v6151
        %v6160 = vmul.f32 %v6136, %v6151
        %v6161 = vadd.f32 %v6121, %v6153
        %v6162 = vadd.f32 %v6122, %v6154
        %v6163 = vadd.f32 %v6123, %v6155
        %v6164 = vadd.f32 %v6124, %v6156
        %v6165 = vadd.f32 %v6125, %v6157
        %v6166 = vadd.f32 %v6126, %v6158
        %v6167 = vadd.f32 %v6127, %v6159
        %v6168 = vadd.f32 %v6128, %v6160
        %6169 = vrot.lane.b32.xlu0 %v4259, 125
        %v6170 = vpop.permute.xlu0 %6169
        %6171 = vrot.lane.b32.xlu0 %v4261, 125
        %v6172 = vpop.permute.xlu0 %6171
        %6173 = vrot.lane.b32.xlu0 %v4263, 125
        %v6174 = vpop.permute.xlu0 %6173
        %6175 = vrot.lane.b32.xlu0 %v4265, 125
        %v6176 = vpop.permute.xlu0 %6175
        %6177 = vrot.lane.b32.xlu0 %v4260, 125
        %v6178 = vpop.permute.xlu0 %6177
        %6179 = vrot.lane.b32.xlu0 %v4262, 125
        %v6180 = vpop.permute.xlu0 %6179
        %6181 = vrot.lane.b32.xlu0 %v4264, 125
        %v6182 = vpop.permute.xlu0 %6181
        %6183 = vrot.lane.b32.xlu0 %v4266, 125
        %v6184 = vpop.permute.xlu0 %6183
        %v6185 = vsel %vm2589, %v6170, %v6178
        %v6186 = vsel %vm2589, %v6172, %v6180
        %v6187 = vsel %vm2589, %v6174, %v6182
        %v6188 = vsel %vm2589, %v6176, %v6184
        %v6189 = vsel %vm2589, %v6178, %v6170
        %v6190 = vsel %vm2589, %v6180, %v6172
        %v6191 = vsel %vm2589, %v6182, %v6174
        %v6192 = vsel %vm2589, %v6184, %v6176
        %v6193 = vsel %vm2608, %v6185, 0.0
        %v6194 = vsel %vm2609, %v6189, 0.0
        %v6195 = vsel %vm2608, %v6186, 0.0
        %v6196 = vsel %vm2609, %v6190, 0.0
        %v6197 = vsel %vm2608, %v6187, 0.0
        %v6198 = vsel %vm2609, %v6191, 0.0
        %v6199 = vsel %vm2608, %v6188, 0.0
        %v6200 = vsel %vm2609, %v6192, 0.0
        %6201 = vset.pattern.permute.xlu0 25
        %6202 = vperm.xlu0 %6201, %v4267
        %v6203 = vpop.permute.xlu0 %6202
        %6205 = vset.pattern.permute.xlu0 25
        %6206 = vperm.xlu0 %6205, %v4268
        %v6207 = vpop.permute.xlu0 %6206
        %6209 = vset.pattern.permute.xlu0 25
        %6210 = vperm.xlu0 %6209, %v4269
        %v6211 = vpop.permute.xlu0 %6210
        %6213 = vset.pattern.permute.xlu0 25
        %6214 = vperm.xlu0 %6213, %v4270
        %v6215 = vpop.permute.xlu0 %6214
        %v6217 = vmul.f32 %v6193, %v6203
        %v6218 = vmul.f32 %v6194, %v6203
        %v6219 = vmul.f32 %v6195, %v6207
        %v6220 = vmul.f32 %v6196, %v6207
        %v6221 = vmul.f32 %v6197, %v6211
        %v6222 = vmul.f32 %v6198, %v6211
        %v6223 = vmul.f32 %v6199, %v6215
        %v6224 = vmul.f32 %v6200, %v6215
        %v6225 = vadd.f32 %v6161, %v6217
        %v6226 = vadd.f32 %v6162, %v6218
        %v6227 = vadd.f32 %v6163, %v6219
        %v6228 = vadd.f32 %v6164, %v6220
        %v6229 = vadd.f32 %v6165, %v6221
        %v6230 = vadd.f32 %v6166, %v6222
        %v6231 = vadd.f32 %v6167, %v6223
        %v6232 = vadd.f32 %v6168, %v6224
        %6233 = vrot.lane.b32.xlu0 %v4259, 122
        %v6234 = vpop.permute.xlu0 %6233
        %6235 = vrot.lane.b32.xlu0 %v4261, 122
        %v6236 = vpop.permute.xlu0 %6235
        %6237 = vrot.lane.b32.xlu0 %v4263, 122
        %v6238 = vpop.permute.xlu0 %6237
        %6239 = vrot.lane.b32.xlu0 %v4265, 122
        %v6240 = vpop.permute.xlu0 %6239
        %6241 = vrot.lane.b32.xlu0 %v4260, 122
        %v6242 = vpop.permute.xlu0 %6241
        %6243 = vrot.lane.b32.xlu0 %v4262, 122
        %v6244 = vpop.permute.xlu0 %6243
        %6245 = vrot.lane.b32.xlu0 %v4264, 122
        %v6246 = vpop.permute.xlu0 %6245
        %6247 = vrot.lane.b32.xlu0 %v4266, 122
        %v6248 = vpop.permute.xlu0 %6247
        %vm6249 = vcmp.lt.s32.totalorder %v530, 122
        %v6250 = vsel %vm6249, %v6234, %v6242
        %v6251 = vsel %vm6249, %v6236, %v6244
        %v6252 = vsel %vm6249, %v6238, %v6246
        %v6253 = vsel %vm6249, %v6240, %v6248
        %v6254 = vsel %vm6249, %v6242, %v6234
        %v6255 = vsel %vm6249, %v6244, %v6236
        %v6256 = vsel %vm6249, %v6246, %v6238
        %v6257 = vsel %vm6249, %v6248, %v6240
        %vm6258 = vmand %vm457, %vm4298
        %v6259 = vsel %vm6258, 1, 0
        %v6260 = vlaneseq
        %v6261 = vshrl.u32 %v6260, 7
        %v6262 = vsub.s32 0, %v6261
        %v6263 = vrot.slane %v6259, %v6262
        %v6264 = vlaneseq
        %v6265 = vshrl.u32 %v6264, 7
        %v6266 = vsub.s32 1, %v6265
        %v6267 = vrot.slane %v6259, %v6266
        %vm6268 = vcmp.eq.s32.totalorder %v6263, 1
        %vm6269 = vcmp.eq.s32.totalorder %v6267, 1
        %v6270 = vsel %vm6268, %v6250, 0.0
        %v6271 = vsel %vm6269, %v6254, 0.0
        %v6272 = vsel %vm6268, %v6251, 0.0
        %v6273 = vsel %vm6269, %v6255, 0.0
        %v6274 = vsel %vm6268, %v6252, 0.0
        %v6275 = vsel %vm6269, %v6256, 0.0
        %v6276 = vsel %vm6268, %v6253, 0.0
        %v6277 = vsel %vm6269, %v6257, 0.0
        %6278 = vset.pattern.permute.xlu0 26
        %6279 = vperm.xlu0 %6278, %v4267
        %v6280 = vpop.permute.xlu0 %6279
        %6282 = vset.pattern.permute.xlu0 26
        %6283 = vperm.xlu0 %6282, %v4268
        %v6284 = vpop.permute.xlu0 %6283
        %6286 = vset.pattern.permute.xlu0 26
        %6287 = vperm.xlu0 %6286, %v4269
        %v6288 = vpop.permute.xlu0 %6287
        %6290 = vset.pattern.permute.xlu0 26
        %6291 = vperm.xlu0 %6290, %v4270
        %v6292 = vpop.permute.xlu0 %6291
        %v6294 = vmul.f32 %v6270, %v6280
        %v6295 = vmul.f32 %v6271, %v6280
        %v6296 = vmul.f32 %v6272, %v6284
        %v6297 = vmul.f32 %v6273, %v6284
        %v6298 = vmul.f32 %v6274, %v6288
        %v6299 = vmul.f32 %v6275, %v6288
        %v6300 = vmul.f32 %v6276, %v6292
        %v6301 = vmul.f32 %v6277, %v6292
        %v6302 = vadd.f32 %v6225, %v6294
        %v6303 = vadd.f32 %v6226, %v6295
        %v6304 = vadd.f32 %v6227, %v6296
        %v6305 = vadd.f32 %v6228, %v6297
        %v6306 = vadd.f32 %v6229, %v6298
        %v6307 = vadd.f32 %v6230, %v6299
        %v6308 = vadd.f32 %v6231, %v6300
        %v6309 = vadd.f32 %v6232, %v6301
        %6310 = vrot.lane.b32.xlu0 %v4259, 119
        %v6311 = vpop.permute.xlu0 %6310
        %6312 = vrot.lane.b32.xlu0 %v4261, 119
        %v6313 = vpop.permute.xlu0 %6312
        %6314 = vrot.lane.b32.xlu0 %v4263, 119
        %v6315 = vpop.permute.xlu0 %6314
        %6316 = vrot.lane.b32.xlu0 %v4265, 119
        %v6317 = vpop.permute.xlu0 %6316
        %6318 = vrot.lane.b32.xlu0 %v4260, 119
        %v6319 = vpop.permute.xlu0 %6318
        %6320 = vrot.lane.b32.xlu0 %v4262, 119
        %v6321 = vpop.permute.xlu0 %6320
        %6322 = vrot.lane.b32.xlu0 %v4264, 119
        %v6323 = vpop.permute.xlu0 %6322
        %6324 = vrot.lane.b32.xlu0 %v4266, 119
        %v6325 = vpop.permute.xlu0 %6324
        %vm6326 = vcmp.lt.s32.totalorder %v530, 119
        %v6327 = vsel %vm6326, %v6311, %v6319
        %v6328 = vsel %vm6326, %v6313, %v6321
        %v6329 = vsel %vm6326, %v6315, %v6323
        %v6330 = vsel %vm6326, %v6317, %v6325
        %v6331 = vsel %vm6326, %v6319, %v6311
        %v6332 = vsel %vm6326, %v6321, %v6313
        %v6333 = vsel %vm6326, %v6323, %v6315
        %v6334 = vsel %vm6326, %v6325, %v6317
        %vm6335 = vmand %vm457, %vm4306
        %v6336 = vsel %vm6335, 1, 0
        %v6337 = vlaneseq
        %v6338 = vshrl.u32 %v6337, 7
        %v6339 = vsub.s32 0, %v6338
        %v6340 = vrot.slane %v6336, %v6339
        %v6341 = vlaneseq
        %v6342 = vshrl.u32 %v6341, 7
        %v6343 = vsub.s32 1, %v6342
        %v6344 = vrot.slane %v6336, %v6343
        %vm6345 = vcmp.eq.s32.totalorder %v6340, 1
        %vm6346 = vcmp.eq.s32.totalorder %v6344, 1
        %v6347 = vsel %vm6345, %v6327, 0.0
        %v6348 = vsel %vm6346, %v6331, 0.0
        %v6349 = vsel %vm6345, %v6328, 0.0
        %v6350 = vsel %vm6346, %v6332, 0.0
        %v6351 = vsel %vm6345, %v6329, 0.0
        %v6352 = vsel %vm6346, %v6333, 0.0
        %v6353 = vsel %vm6345, %v6330, 0.0
        %v6354 = vsel %vm6346, %v6334, 0.0
        %6355 = vset.pattern.permute.xlu0 27
        %6356 = vperm.xlu0 %6355, %v4267
        %v6357 = vpop.permute.xlu0 %6356
        %6359 = vset.pattern.permute.xlu0 27
        %6360 = vperm.xlu0 %6359, %v4268
        %v6361 = vpop.permute.xlu0 %6360
        %6363 = vset.pattern.permute.xlu0 27
        %6364 = vperm.xlu0 %6363, %v4269
        %v6365 = vpop.permute.xlu0 %6364
        %6367 = vset.pattern.permute.xlu0 27
        %6368 = vperm.xlu0 %6367, %v4270
        %v6369 = vpop.permute.xlu0 %6368
        %v6371 = vmul.f32 %v6347, %v6357
        %v6372 = vmul.f32 %v6348, %v6357
        %v6373 = vmul.f32 %v6349, %v6361
        %v6374 = vmul.f32 %v6350, %v6361
        %v6375 = vmul.f32 %v6351, %v6365
        %v6376 = vmul.f32 %v6352, %v6365
        %v6377 = vmul.f32 %v6353, %v6369
        %v6378 = vmul.f32 %v6354, %v6369
        %v6379 = vadd.f32 %v6302, %v6371
        %v6380 = vadd.f32 %v6303, %v6372
        %v6381 = vadd.f32 %v6304, %v6373
        %v6382 = vadd.f32 %v6305, %v6374
        %v6383 = vadd.f32 %v6306, %v6375
        %v6384 = vadd.f32 %v6307, %v6376
        %v6385 = vadd.f32 %v6308, %v6377
        %v6386 = vadd.f32 %v6309, %v6378
        %6387 = vrot.lane.b32.xlu0 %v4259, 89
        %v6388 = vpop.permute.xlu0 %6387
        %6389 = vrot.lane.b32.xlu0 %v4261, 89
        %v6390 = vpop.permute.xlu0 %6389
        %6391 = vrot.lane.b32.xlu0 %v4263, 89
        %v6392 = vpop.permute.xlu0 %6391
        %6393 = vrot.lane.b32.xlu0 %v4265, 89
        %v6394 = vpop.permute.xlu0 %6393
        %6395 = vrot.lane.b32.xlu0 %v4260, 89
        %v6396 = vpop.permute.xlu0 %6395
        %6397 = vrot.lane.b32.xlu0 %v4262, 89
        %v6398 = vpop.permute.xlu0 %6397
        %6399 = vrot.lane.b32.xlu0 %v4264, 89
        %v6400 = vpop.permute.xlu0 %6399
        %6401 = vrot.lane.b32.xlu0 %v4266, 89
        %v6402 = vpop.permute.xlu0 %6401
        %vm6403 = vcmp.lt.s32.totalorder %v530, 89
        %v6404 = vsel %vm6403, %v6388, %v6396
        %v6405 = vsel %vm6403, %v6390, %v6398
        %v6406 = vsel %vm6403, %v6392, %v6400
        %v6407 = vsel %vm6403, %v6394, %v6402
        %v6408 = vsel %vm6403, %v6396, %v6388
        %v6409 = vsel %vm6403, %v6398, %v6390
        %v6410 = vsel %vm6403, %v6400, %v6392
        %v6411 = vsel %vm6403, %v6402, %v6394
        %vm6412 = vmand %vm480, %vm4282
        %v6413 = vsel %vm6412, 1, 0
        %v6414 = vlaneseq
        %v6415 = vshrl.u32 %v6414, 7
        %v6416 = vsub.s32 0, %v6415
        %v6417 = vrot.slane %v6413, %v6416
        %v6418 = vlaneseq
        %v6419 = vshrl.u32 %v6418, 7
        %v6420 = vsub.s32 1, %v6419
        %v6421 = vrot.slane %v6413, %v6420
        %vm6422 = vcmp.eq.s32.totalorder %v6417, 1
        %vm6423 = vcmp.eq.s32.totalorder %v6421, 1
        %v6424 = vsel %vm6422, %v6404, 0.0
        %v6425 = vsel %vm6423, %v6408, 0.0
        %v6426 = vsel %vm6422, %v6405, 0.0
        %v6427 = vsel %vm6423, %v6409, 0.0
        %v6428 = vsel %vm6422, %v6406, 0.0
        %v6429 = vsel %vm6423, %v6410, 0.0
        %v6430 = vsel %vm6422, %v6407, 0.0
        %v6431 = vsel %vm6423, %v6411, 0.0
        %6432 = vset.pattern.permute.xlu0 28
        %6433 = vperm.xlu0 %6432, %v4267
        %v6434 = vpop.permute.xlu0 %6433
        %6436 = vset.pattern.permute.xlu0 28
        %6437 = vperm.xlu0 %6436, %v4268
        %v6438 = vpop.permute.xlu0 %6437
        %6440 = vset.pattern.permute.xlu0 28
        %6441 = vperm.xlu0 %6440, %v4269
        %v6442 = vpop.permute.xlu0 %6441
        %6444 = vset.pattern.permute.xlu0 28
        %6445 = vperm.xlu0 %6444, %v4270
        %v6446 = vpop.permute.xlu0 %6445
        %v6448 = vmul.f32 %v6424, %v6434
        %v6449 = vmul.f32 %v6425, %v6434
        %v6450 = vmul.f32 %v6426, %v6438
        %v6451 = vmul.f32 %v6427, %v6438
        %v6452 = vmul.f32 %v6428, %v6442
        %v6453 = vmul.f32 %v6429, %v6442
        %v6454 = vmul.f32 %v6430, %v6446
        %v6455 = vmul.f32 %v6431, %v6446
        %v6456 = vadd.f32 %v6379, %v6448
        %v6457 = vadd.f32 %v6380, %v6449
        %v6458 = vadd.f32 %v6381, %v6450
        %v6459 = vadd.f32 %v6382, %v6451
        %v6460 = vadd.f32 %v6383, %v6452
        %v6461 = vadd.f32 %v6384, %v6453
        %v6462 = vadd.f32 %v6385, %v6454
        %v6463 = vadd.f32 %v6386, %v6455
        %6464 = vrot.lane.b32.xlu0 %v4259, 86
        %v6465 = vpop.permute.xlu0 %6464
        %6466 = vrot.lane.b32.xlu0 %v4261, 86
        %v6467 = vpop.permute.xlu0 %6466
        %6468 = vrot.lane.b32.xlu0 %v4263, 86
        %v6469 = vpop.permute.xlu0 %6468
        %6470 = vrot.lane.b32.xlu0 %v4265, 86
        %v6471 = vpop.permute.xlu0 %6470
        %6472 = vrot.lane.b32.xlu0 %v4260, 86
        %v6473 = vpop.permute.xlu0 %6472
        %6474 = vrot.lane.b32.xlu0 %v4262, 86
        %v6475 = vpop.permute.xlu0 %6474
        %6476 = vrot.lane.b32.xlu0 %v4264, 86
        %v6477 = vpop.permute.xlu0 %6476
        %6478 = vrot.lane.b32.xlu0 %v4266, 86
        %v6479 = vpop.permute.xlu0 %6478
        %vm6480 = vcmp.lt.s32.totalorder %v530, 86
        %v6481 = vsel %vm6480, %v6465, %v6473
        %v6482 = vsel %vm6480, %v6467, %v6475
        %v6483 = vsel %vm6480, %v6469, %v6477
        %v6484 = vsel %vm6480, %v6471, %v6479
        %v6485 = vsel %vm6480, %v6473, %v6465
        %v6486 = vsel %vm6480, %v6475, %v6467
        %v6487 = vsel %vm6480, %v6477, %v6469
        %v6488 = vsel %vm6480, %v6479, %v6471
        %vm6489 = vmand %vm480, %vm4290
        %v6490 = vsel %vm6489, 1, 0
        %v6491 = vlaneseq
        %v6492 = vshrl.u32 %v6491, 7
        %v6493 = vsub.s32 0, %v6492
        %v6494 = vrot.slane %v6490, %v6493
        %v6495 = vlaneseq
        %v6496 = vshrl.u32 %v6495, 7
        %v6497 = vsub.s32 1, %v6496
        %v6498 = vrot.slane %v6490, %v6497
        %vm6499 = vcmp.eq.s32.totalorder %v6494, 1
        %vm6500 = vcmp.eq.s32.totalorder %v6498, 1
        %v6501 = vsel %vm6499, %v6481, 0.0
        %v6502 = vsel %vm6500, %v6485, 0.0
        %v6503 = vsel %vm6499, %v6482, 0.0
        %v6504 = vsel %vm6500, %v6486, 0.0
        %v6505 = vsel %vm6499, %v6483, 0.0
        %v6506 = vsel %vm6500, %v6487, 0.0
        %v6507 = vsel %vm6499, %v6484, 0.0
        %v6508 = vsel %vm6500, %v6488, 0.0
        %6509 = vset.pattern.permute.xlu0 29
        %6510 = vperm.xlu0 %6509, %v4267
        %v6511 = vpop.permute.xlu0 %6510
        %6513 = vset.pattern.permute.xlu0 29
        %6514 = vperm.xlu0 %6513, %v4268
        %v6515 = vpop.permute.xlu0 %6514
        %6517 = vset.pattern.permute.xlu0 29
        %6518 = vperm.xlu0 %6517, %v4269
        %v6519 = vpop.permute.xlu0 %6518
        %6521 = vset.pattern.permute.xlu0 29
        %6522 = vperm.xlu0 %6521, %v4270
        %v6523 = vpop.permute.xlu0 %6522
        %v6525 = vmul.f32 %v6501, %v6511
        %v6526 = vmul.f32 %v6502, %v6511
        %v6527 = vmul.f32 %v6503, %v6515
        %v6528 = vmul.f32 %v6504, %v6515
        %v6529 = vmul.f32 %v6505, %v6519
        %v6530 = vmul.f32 %v6506, %v6519
        %v6531 = vmul.f32 %v6507, %v6523
        %v6532 = vmul.f32 %v6508, %v6523
        %v6533 = vadd.f32 %v6456, %v6525
        %v6534 = vadd.f32 %v6457, %v6526
        %v6535 = vadd.f32 %v6458, %v6527
        %v6536 = vadd.f32 %v6459, %v6528
        %v6537 = vadd.f32 %v6460, %v6529
        %v6538 = vadd.f32 %v6461, %v6530
        %v6539 = vadd.f32 %v6462, %v6531
        %v6540 = vadd.f32 %v6463, %v6532
        %6541 = vrot.lane.b32.xlu0 %v4259, 83
        %v6542 = vpop.permute.xlu0 %6541
        %6543 = vrot.lane.b32.xlu0 %v4261, 83
        %v6544 = vpop.permute.xlu0 %6543
        %6545 = vrot.lane.b32.xlu0 %v4263, 83
        %v6546 = vpop.permute.xlu0 %6545
        %6547 = vrot.lane.b32.xlu0 %v4265, 83
        %v6548 = vpop.permute.xlu0 %6547
        %6549 = vrot.lane.b32.xlu0 %v4260, 83
        %v6550 = vpop.permute.xlu0 %6549
        %6551 = vrot.lane.b32.xlu0 %v4262, 83
        %v6552 = vpop.permute.xlu0 %6551
        %6553 = vrot.lane.b32.xlu0 %v4264, 83
        %v6554 = vpop.permute.xlu0 %6553
        %6555 = vrot.lane.b32.xlu0 %v4266, 83
        %v6556 = vpop.permute.xlu0 %6555
        %v6557 = vsel %vm3744, %v6542, %v6550
        %v6558 = vsel %vm3744, %v6544, %v6552
        %v6559 = vsel %vm3744, %v6546, %v6554
        %v6560 = vsel %vm3744, %v6548, %v6556
        %v6561 = vsel %vm3744, %v6550, %v6542
        %v6562 = vsel %vm3744, %v6552, %v6544
        %v6563 = vsel %vm3744, %v6554, %v6546
        %v6564 = vsel %vm3744, %v6556, %v6548
        %v6565 = vsel %vm3763, %v6557, 0.0
        %v6566 = vsel %vm3764, %v6561, 0.0
        %v6567 = vsel %vm3763, %v6558, 0.0
        %v6568 = vsel %vm3764, %v6562, 0.0
        %v6569 = vsel %vm3763, %v6559, 0.0
        %v6570 = vsel %vm3764, %v6563, 0.0
        %v6571 = vsel %vm3763, %v6560, 0.0
        %v6572 = vsel %vm3764, %v6564, 0.0
        %6573 = vset.pattern.permute.xlu0 30
        %6574 = vperm.xlu0 %6573, %v4267
        %v6575 = vpop.permute.xlu0 %6574
        %6577 = vset.pattern.permute.xlu0 30
        %6578 = vperm.xlu0 %6577, %v4268
        %v6579 = vpop.permute.xlu0 %6578
        %6581 = vset.pattern.permute.xlu0 30
        %6582 = vperm.xlu0 %6581, %v4269
        %v6583 = vpop.permute.xlu0 %6582
        %6585 = vset.pattern.permute.xlu0 30
        %6586 = vperm.xlu0 %6585, %v4270
        %v6587 = vpop.permute.xlu0 %6586
        %v6589 = vmul.f32 %v6565, %v6575
        %v6590 = vmul.f32 %v6566, %v6575
        %v6591 = vmul.f32 %v6567, %v6579
        %v6592 = vmul.f32 %v6568, %v6579
        %v6593 = vmul.f32 %v6569, %v6583
        %v6594 = vmul.f32 %v6570, %v6583
        %v6595 = vmul.f32 %v6571, %v6587
        %v6596 = vmul.f32 %v6572, %v6587
        %v6597 = vadd.f32 %v6533, %v6589
        %v6598 = vadd.f32 %v6534, %v6590
        %v6599 = vadd.f32 %v6535, %v6591
        %v6600 = vadd.f32 %v6536, %v6592
        %v6601 = vadd.f32 %v6537, %v6593
        %v6602 = vadd.f32 %v6538, %v6594
        %v6603 = vadd.f32 %v6539, %v6595
        %v6604 = vadd.f32 %v6540, %v6596
        %6605 = vrot.lane.b32.xlu0 %v4259, 80
        %v6606 = vpop.permute.xlu0 %6605
        %6607 = vrot.lane.b32.xlu0 %v4261, 80
        %v6608 = vpop.permute.xlu0 %6607
        %6609 = vrot.lane.b32.xlu0 %v4263, 80
        %v6610 = vpop.permute.xlu0 %6609
        %6611 = vrot.lane.b32.xlu0 %v4265, 80
        %v6612 = vpop.permute.xlu0 %6611
        %6613 = vrot.lane.b32.xlu0 %v4260, 80
        %v6614 = vpop.permute.xlu0 %6613
        %6615 = vrot.lane.b32.xlu0 %v4262, 80
        %v6616 = vpop.permute.xlu0 %6615
        %6617 = vrot.lane.b32.xlu0 %v4264, 80
        %v6618 = vpop.permute.xlu0 %6617
        %6619 = vrot.lane.b32.xlu0 %v4266, 80
        %v6620 = vpop.permute.xlu0 %6619
        %v6621 = vsel %vm3975, %v6606, %v6614
        %v6622 = vsel %vm3975, %v6608, %v6616
        %v6623 = vsel %vm3975, %v6610, %v6618
        %v6624 = vsel %vm3975, %v6612, %v6620
        %v6625 = vsel %vm3975, %v6614, %v6606
        %v6626 = vsel %vm3975, %v6616, %v6608
        %v6627 = vsel %vm3975, %v6618, %v6610
        %v6628 = vsel %vm3975, %v6620, %v6612
        %v6629 = vsel %vm3994, %v6621, 0.0
        %v6630 = vsel %vm3995, %v6625, 0.0
        %v6631 = vsel %vm3994, %v6622, 0.0
        %v6632 = vsel %vm3995, %v6626, 0.0
        %v6633 = vsel %vm3994, %v6623, 0.0
        %v6634 = vsel %vm3995, %v6627, 0.0
        %v6635 = vsel %vm3994, %v6624, 0.0
        %v6636 = vsel %vm3995, %v6628, 0.0
        %6637 = vset.pattern.permute.xlu0 31
        %6638 = vperm.xlu0 %6637, %v4267
        %v6639 = vpop.permute.xlu0 %6638
        %6641 = vset.pattern.permute.xlu0 31
        %6642 = vperm.xlu0 %6641, %v4268
        %v6643 = vpop.permute.xlu0 %6642
        %6645 = vset.pattern.permute.xlu0 31
        %6646 = vperm.xlu0 %6645, %v4269
        %v6647 = vpop.permute.xlu0 %6646
        %6649 = vset.pattern.permute.xlu0 31
        %6650 = vperm.xlu0 %6649, %v4270
        %v6651 = vpop.permute.xlu0 %6650
        %v6653 = vmul.f32 %v6629, %v6639
        %v6654 = vmul.f32 %v6630, %v6639
        %v6655 = vmul.f32 %v6631, %v6643
        %v6656 = vmul.f32 %v6632, %v6643
        %v6657 = vmul.f32 %v6633, %v6647
        %v6658 = vmul.f32 %v6634, %v6647
        %v6659 = vmul.f32 %v6635, %v6651
        %v6660 = vmul.f32 %v6636, %v6651
        %v6661 = vadd.f32 %v6597, %v6653
        %v6662 = vadd.f32 %v6598, %v6654
        %v6663 = vadd.f32 %v6599, %v6655
        %v6664 = vadd.f32 %v6600, %v6656
        %v6665 = vadd.f32 %v6601, %v6657
        %v6666 = vadd.f32 %v6602, %v6658
        %v6667 = vadd.f32 %v6603, %v6659
        %v6668 = vadd.f32 %v6604, %v6660
        %6669 = vrot.lane.b32.xlu0 %v4259, 77
        %v6670 = vpop.permute.xlu0 %6669
        %6671 = vrot.lane.b32.xlu0 %v4261, 77
        %v6672 = vpop.permute.xlu0 %6671
        %6673 = vrot.lane.b32.xlu0 %v4263, 77
        %v6674 = vpop.permute.xlu0 %6673
        %6675 = vrot.lane.b32.xlu0 %v4265, 77
        %v6676 = vpop.permute.xlu0 %6675
        %6677 = vrot.lane.b32.xlu0 %v4260, 77
        %v6678 = vpop.permute.xlu0 %6677
        %6679 = vrot.lane.b32.xlu0 %v4262, 77
        %v6680 = vpop.permute.xlu0 %6679
        %6681 = vrot.lane.b32.xlu0 %v4264, 77
        %v6682 = vpop.permute.xlu0 %6681
        %6683 = vrot.lane.b32.xlu0 %v4266, 77
        %v6684 = vpop.permute.xlu0 %6683
        %v6685 = vsel %vm4206, %v6670, %v6678
        %v6686 = vsel %vm4206, %v6672, %v6680
        %v6687 = vsel %vm4206, %v6674, %v6682
        %v6688 = vsel %vm4206, %v6676, %v6684
        %v6689 = vsel %vm4206, %v6678, %v6670
        %v6690 = vsel %vm4206, %v6680, %v6672
        %v6691 = vsel %vm4206, %v6682, %v6674
        %v6692 = vsel %vm4206, %v6684, %v6676
        %v6693 = vsel %vm4225, %v6685, 0.0
        %v6694 = vsel %vm4226, %v6689, 0.0
        %v6695 = vsel %vm4225, %v6686, 0.0
        %v6696 = vsel %vm4226, %v6690, 0.0
        %v6697 = vsel %vm4225, %v6687, 0.0
        %v6698 = vsel %vm4226, %v6691, 0.0
        %v6699 = vsel %vm4225, %v6688, 0.0
        %v6700 = vsel %vm4226, %v6692, 0.0
        %6701 = vset.pattern.permute.xlu0 32
        %6702 = vperm.xlu0 %6701, %v4267
        %v6703 = vpop.permute.xlu0 %6702
        %6705 = vset.pattern.permute.xlu0 32
        %6706 = vperm.xlu0 %6705, %v4268
        %v6707 = vpop.permute.xlu0 %6706
        %6709 = vset.pattern.permute.xlu0 32
        %6710 = vperm.xlu0 %6709, %v4269
        %v6711 = vpop.permute.xlu0 %6710
        %6713 = vset.pattern.permute.xlu0 32
        %6714 = vperm.xlu0 %6713, %v4270
        %v6715 = vpop.permute.xlu0 %6714
        %v6717 = vmul.f32 %v6693, %v6703
        %v6718 = vmul.f32 %v6694, %v6703
        %v6719 = vmul.f32 %v6695, %v6707
        %v6720 = vmul.f32 %v6696, %v6707
        %v6721 = vmul.f32 %v6697, %v6711
        %v6722 = vmul.f32 %v6698, %v6711
        %v6723 = vmul.f32 %v6699, %v6715
        %v6724 = vmul.f32 %v6700, %v6715
        %v6725 = vadd.f32 %v6661, %v6717
        %v6726 = vadd.f32 %v6662, %v6718
        %v6727 = vadd.f32 %v6663, %v6719
        %v6728 = vadd.f32 %v6664, %v6720
        %v6729 = vadd.f32 %v6665, %v6721
        %v6730 = vadd.f32 %v6666, %v6722
        %v6731 = vadd.f32 %v6667, %v6723
        %v6732 = vadd.f32 %v6668, %v6724
        %6733 = vrot.lane.b32.xlu0 %v4259, 74
        %v6734 = vpop.permute.xlu0 %6733
        %6735 = vrot.lane.b32.xlu0 %v4261, 74
        %v6736 = vpop.permute.xlu0 %6735
        %6737 = vrot.lane.b32.xlu0 %v4263, 74
        %v6738 = vpop.permute.xlu0 %6737
        %6739 = vrot.lane.b32.xlu0 %v4265, 74
        %v6740 = vpop.permute.xlu0 %6739
        %6741 = vrot.lane.b32.xlu0 %v4260, 74
        %v6742 = vpop.permute.xlu0 %6741
        %6743 = vrot.lane.b32.xlu0 %v4262, 74
        %v6744 = vpop.permute.xlu0 %6743
        %6745 = vrot.lane.b32.xlu0 %v4264, 74
        %v6746 = vpop.permute.xlu0 %6745
        %6747 = vrot.lane.b32.xlu0 %v4266, 74
        %v6748 = vpop.permute.xlu0 %6747
        %vm6749 = vcmp.lt.s32.totalorder %v530, 74
        %v6750 = vsel %vm6749, %v6734, %v6742
        %v6751 = vsel %vm6749, %v6736, %v6744
        %v6752 = vsel %vm6749, %v6738, %v6746
        %v6753 = vsel %vm6749, %v6740, %v6748
        %v6754 = vsel %vm6749, %v6742, %v6734
        %v6755 = vsel %vm6749, %v6744, %v6736
        %v6756 = vsel %vm6749, %v6746, %v6738
        %v6757 = vsel %vm6749, %v6748, %v6740
        %vm6758 = vmand %vm480, %vm4298
        %v6759 = vsel %vm6758, 1, 0
        %v6760 = vlaneseq
        %v6761 = vshrl.u32 %v6760, 7
        %v6762 = vsub.s32 0, %v6761
        %v6763 = vrot.slane %v6759, %v6762
        %v6764 = vlaneseq
        %v6765 = vshrl.u32 %v6764, 7
        %v6766 = vsub.s32 1, %v6765
        %v6767 = vrot.slane %v6759, %v6766
        %vm6768 = vcmp.eq.s32.totalorder %v6763, 1
        %vm6769 = vcmp.eq.s32.totalorder %v6767, 1
        %v6770 = vsel %vm6768, %v6750, 0.0
        %v6771 = vsel %vm6769, %v6754, 0.0
        %v6772 = vsel %vm6768, %v6751, 0.0
        %v6773 = vsel %vm6769, %v6755, 0.0
        %v6774 = vsel %vm6768, %v6752, 0.0
        %v6775 = vsel %vm6769, %v6756, 0.0
        %v6776 = vsel %vm6768, %v6753, 0.0
        %v6777 = vsel %vm6769, %v6757, 0.0
        %6778 = vset.pattern.permute.xlu0 33
        %6779 = vperm.xlu0 %6778, %v4267
        %v6780 = vpop.permute.xlu0 %6779
        %6782 = vset.pattern.permute.xlu0 33
        %6783 = vperm.xlu0 %6782, %v4268
        %v6784 = vpop.permute.xlu0 %6783
        %6786 = vset.pattern.permute.xlu0 33
        %6787 = vperm.xlu0 %6786, %v4269
        %v6788 = vpop.permute.xlu0 %6787
        %6790 = vset.pattern.permute.xlu0 33
        %6791 = vperm.xlu0 %6790, %v4270
        %v6792 = vpop.permute.xlu0 %6791
        %v6794 = vmul.f32 %v6770, %v6780
        %v6795 = vmul.f32 %v6771, %v6780
        %v6796 = vmul.f32 %v6772, %v6784
        %v6797 = vmul.f32 %v6773, %v6784
        %v6798 = vmul.f32 %v6774, %v6788
        %v6799 = vmul.f32 %v6775, %v6788
        %v6800 = vmul.f32 %v6776, %v6792
        %v6801 = vmul.f32 %v6777, %v6792
        %v6802 = vadd.f32 %v6725, %v6794
        %v6803 = vadd.f32 %v6726, %v6795
        %v6804 = vadd.f32 %v6727, %v6796
        %v6805 = vadd.f32 %v6728, %v6797
        %v6806 = vadd.f32 %v6729, %v6798
        %v6807 = vadd.f32 %v6730, %v6799
        %v6808 = vadd.f32 %v6731, %v6800
        %v6809 = vadd.f32 %v6732, %v6801
        %6810 = vrot.lane.b32.xlu0 %v4259, 71
        %v6811 = vpop.permute.xlu0 %6810
        %6812 = vrot.lane.b32.xlu0 %v4261, 71
        %v6813 = vpop.permute.xlu0 %6812
        %6814 = vrot.lane.b32.xlu0 %v4263, 71
        %v6815 = vpop.permute.xlu0 %6814
        %6816 = vrot.lane.b32.xlu0 %v4265, 71
        %v6817 = vpop.permute.xlu0 %6816
        %6818 = vrot.lane.b32.xlu0 %v4260, 71
        %v6819 = vpop.permute.xlu0 %6818
        %6820 = vrot.lane.b32.xlu0 %v4262, 71
        %v6821 = vpop.permute.xlu0 %6820
        %6822 = vrot.lane.b32.xlu0 %v4264, 71
        %v6823 = vpop.permute.xlu0 %6822
        %6824 = vrot.lane.b32.xlu0 %v4266, 71
        %v6825 = vpop.permute.xlu0 %6824
        %vm6826 = vcmp.lt.s32.totalorder %v530, 71
        %v6827 = vsel %vm6826, %v6811, %v6819
        %v6828 = vsel %vm6826, %v6813, %v6821
        %v6829 = vsel %vm6826, %v6815, %v6823
        %v6830 = vsel %vm6826, %v6817, %v6825
        %v6831 = vsel %vm6826, %v6819, %v6811
        %v6832 = vsel %vm6826, %v6821, %v6813
        %v6833 = vsel %vm6826, %v6823, %v6815
        %v6834 = vsel %vm6826, %v6825, %v6817
        %vm6835 = vmand %vm480, %vm4306
        %v6836 = vsel %vm6835, 1, 0
        %v6837 = vlaneseq
        %v6838 = vshrl.u32 %v6837, 7
        %v6839 = vsub.s32 0, %v6838
        %v6840 = vrot.slane %v6836, %v6839
        %v6841 = vlaneseq
        %v6842 = vshrl.u32 %v6841, 7
        %v6843 = vsub.s32 1, %v6842
        %v6844 = vrot.slane %v6836, %v6843
        %vm6845 = vcmp.eq.s32.totalorder %v6840, 1
        %vm6846 = vcmp.eq.s32.totalorder %v6844, 1
        %v6847 = vsel %vm6845, %v6827, 0.0
        %v6848 = vsel %vm6846, %v6831, 0.0
        %v6849 = vsel %vm6845, %v6828, 0.0
        %v6850 = vsel %vm6846, %v6832, 0.0
        %v6851 = vsel %vm6845, %v6829, 0.0
        %v6852 = vsel %vm6846, %v6833, 0.0
        %v6853 = vsel %vm6845, %v6830, 0.0
        %v6854 = vsel %vm6846, %v6834, 0.0
        %6855 = vset.pattern.permute.xlu0 34
        %6856 = vperm.xlu0 %6855, %v4267
        %v6857 = vpop.permute.xlu0 %6856
        %6859 = vset.pattern.permute.xlu0 34
        %6860 = vperm.xlu0 %6859, %v4268
        %v6861 = vpop.permute.xlu0 %6860
        %6863 = vset.pattern.permute.xlu0 34
        %6864 = vperm.xlu0 %6863, %v4269
        %v6865 = vpop.permute.xlu0 %6864
        %6867 = vset.pattern.permute.xlu0 34
        %6868 = vperm.xlu0 %6867, %v4270
        %v6869 = vpop.permute.xlu0 %6868
        %v6871 = vmul.f32 %v6847, %v6857
        %v6872 = vmul.f32 %v6848, %v6857
        %v6873 = vmul.f32 %v6849, %v6861
        %v6874 = vmul.f32 %v6850, %v6861
        %v6875 = vmul.f32 %v6851, %v6865
        %v6876 = vmul.f32 %v6852, %v6865
        %v6877 = vmul.f32 %v6853, %v6869
        %v6878 = vmul.f32 %v6854, %v6869
        %v6879 = vadd.f32 %v6802, %v6871
        %v6880 = vadd.f32 %v6803, %v6872
        %v6881 = vadd.f32 %v6804, %v6873
        %v6882 = vadd.f32 %v6805, %v6874
        %v6883 = vadd.f32 %v6806, %v6875
        %v6884 = vadd.f32 %v6807, %v6876
        %v6885 = vadd.f32 %v6808, %v6877
        %v6886 = vadd.f32 %v6809, %v6878
        %6887 = vrot.lane.b32.xlu0 %v4259, 41
        %v6888 = vpop.permute.xlu0 %6887
        %6889 = vrot.lane.b32.xlu0 %v4261, 41
        %v6890 = vpop.permute.xlu0 %6889
        %6891 = vrot.lane.b32.xlu0 %v4263, 41
        %v6892 = vpop.permute.xlu0 %6891
        %6893 = vrot.lane.b32.xlu0 %v4265, 41
        %v6894 = vpop.permute.xlu0 %6893
        %6895 = vrot.lane.b32.xlu0 %v4260, 41
        %v6896 = vpop.permute.xlu0 %6895
        %6897 = vrot.lane.b32.xlu0 %v4262, 41
        %v6898 = vpop.permute.xlu0 %6897
        %6899 = vrot.lane.b32.xlu0 %v4264, 41
        %v6900 = vpop.permute.xlu0 %6899
        %6901 = vrot.lane.b32.xlu0 %v4266, 41
        %v6902 = vpop.permute.xlu0 %6901
        %vm6903 = vcmp.lt.s32.totalorder %v530, 41
        %v6904 = vsel %vm6903, %v6888, %v6896
        %v6905 = vsel %vm6903, %v6890, %v6898
        %v6906 = vsel %vm6903, %v6892, %v6900
        %v6907 = vsel %vm6903, %v6894, %v6902
        %v6908 = vsel %vm6903, %v6896, %v6888
        %v6909 = vsel %vm6903, %v6898, %v6890
        %v6910 = vsel %vm6903, %v6900, %v6892
        %v6911 = vsel %vm6903, %v6902, %v6894
        %vm6912 = vmand %vm4294, %vm4282
        %v6913 = vsel %vm6912, 1, 0
        %v6914 = vlaneseq
        %v6915 = vshrl.u32 %v6914, 7
        %v6916 = vsub.s32 0, %v6915
        %v6917 = vrot.slane %v6913, %v6916
        %v6918 = vlaneseq
        %v6919 = vshrl.u32 %v6918, 7
        %v6920 = vsub.s32 1, %v6919
        %v6921 = vrot.slane %v6913, %v6920
        %vm6922 = vcmp.eq.s32.totalorder %v6917, 1
        %vm6923 = vcmp.eq.s32.totalorder %v6921, 1
        %v6924 = vsel %vm6922, %v6904, 0.0
        %v6925 = vsel %vm6923, %v6908, 0.0
        %v6926 = vsel %vm6922, %v6905, 0.0
        %v6927 = vsel %vm6923, %v6909, 0.0
        %v6928 = vsel %vm6922, %v6906, 0.0
        %v6929 = vsel %vm6923, %v6910, 0.0
        %v6930 = vsel %vm6922, %v6907, 0.0
        %v6931 = vsel %vm6923, %v6911, 0.0
        %6932 = vset.pattern.permute.xlu0 35
        %6933 = vperm.xlu0 %6932, %v4267
        %v6934 = vpop.permute.xlu0 %6933
        %6936 = vset.pattern.permute.xlu0 35
        %6937 = vperm.xlu0 %6936, %v4268
        %v6938 = vpop.permute.xlu0 %6937
        %6940 = vset.pattern.permute.xlu0 35
        %6941 = vperm.xlu0 %6940, %v4269
        %v6942 = vpop.permute.xlu0 %6941
        %6944 = vset.pattern.permute.xlu0 35
        %6945 = vperm.xlu0 %6944, %v4270
        %v6946 = vpop.permute.xlu0 %6945
        %v6948 = vmul.f32 %v6924, %v6934
        %v6949 = vmul.f32 %v6925, %v6934
        %v6950 = vmul.f32 %v6926, %v6938
        %v6951 = vmul.f32 %v6927, %v6938
        %v6952 = vmul.f32 %v6928, %v6942
        %v6953 = vmul.f32 %v6929, %v6942
        %v6954 = vmul.f32 %v6930, %v6946
        %v6955 = vmul.f32 %v6931, %v6946
        %v6956 = vadd.f32 %v6879, %v6948
        %v6957 = vadd.f32 %v6880, %v6949
        %v6958 = vadd.f32 %v6881, %v6950
        %v6959 = vadd.f32 %v6882, %v6951
        %v6960 = vadd.f32 %v6883, %v6952
        %v6961 = vadd.f32 %v6884, %v6953
        %v6962 = vadd.f32 %v6885, %v6954
        %v6963 = vadd.f32 %v6886, %v6955
        %6964 = vrot.lane.b32.xlu0 %v4259, 38
        %v6965 = vpop.permute.xlu0 %6964
        %6966 = vrot.lane.b32.xlu0 %v4261, 38
        %v6967 = vpop.permute.xlu0 %6966
        %6968 = vrot.lane.b32.xlu0 %v4263, 38
        %v6969 = vpop.permute.xlu0 %6968
        %6970 = vrot.lane.b32.xlu0 %v4265, 38
        %v6971 = vpop.permute.xlu0 %6970
        %6972 = vrot.lane.b32.xlu0 %v4260, 38
        %v6973 = vpop.permute.xlu0 %6972
        %6974 = vrot.lane.b32.xlu0 %v4262, 38
        %v6975 = vpop.permute.xlu0 %6974
        %6976 = vrot.lane.b32.xlu0 %v4264, 38
        %v6977 = vpop.permute.xlu0 %6976
        %6978 = vrot.lane.b32.xlu0 %v4266, 38
        %v6979 = vpop.permute.xlu0 %6978
        %vm6980 = vcmp.lt.s32.totalorder %v530, 38
        %v6981 = vsel %vm6980, %v6965, %v6973
        %v6982 = vsel %vm6980, %v6967, %v6975
        %v6983 = vsel %vm6980, %v6969, %v6977
        %v6984 = vsel %vm6980, %v6971, %v6979
        %v6985 = vsel %vm6980, %v6973, %v6965
        %v6986 = vsel %vm6980, %v6975, %v6967
        %v6987 = vsel %vm6980, %v6977, %v6969
        %v6988 = vsel %vm6980, %v6979, %v6971
        %vm6989 = vmand %vm4294, %vm4290
        %v6990 = vsel %vm6989, 1, 0
        %v6991 = vlaneseq
        %v6992 = vshrl.u32 %v6991, 7
        %v6993 = vsub.s32 0, %v6992
        %v6994 = vrot.slane %v6990, %v6993
        %v6995 = vlaneseq
        %v6996 = vshrl.u32 %v6995, 7
        %v6997 = vsub.s32 1, %v6996
        %v6998 = vrot.slane %v6990, %v6997
        %vm6999 = vcmp.eq.s32.totalorder %v6994, 1
        %vm7000 = vcmp.eq.s32.totalorder %v6998, 1
        %v7001 = vsel %vm6999, %v6981, 0.0
        %v7002 = vsel %vm7000, %v6985, 0.0
        %v7003 = vsel %vm6999, %v6982, 0.0
        %v7004 = vsel %vm7000, %v6986, 0.0
        %v7005 = vsel %vm6999, %v6983, 0.0
        %v7006 = vsel %vm7000, %v6987, 0.0
        %v7007 = vsel %vm6999, %v6984, 0.0
        %v7008 = vsel %vm7000, %v6988, 0.0
        %7009 = vset.pattern.permute.xlu0 36
        %7010 = vperm.xlu0 %7009, %v4267
        %v7011 = vpop.permute.xlu0 %7010
        %7013 = vset.pattern.permute.xlu0 36
        %7014 = vperm.xlu0 %7013, %v4268
        %v7015 = vpop.permute.xlu0 %7014
        %7017 = vset.pattern.permute.xlu0 36
        %7018 = vperm.xlu0 %7017, %v4269
        %v7019 = vpop.permute.xlu0 %7018
        %7021 = vset.pattern.permute.xlu0 36
        %7022 = vperm.xlu0 %7021, %v4270
        %v7023 = vpop.permute.xlu0 %7022
        %v7025 = vmul.f32 %v7001, %v7011
        %v7026 = vmul.f32 %v7002, %v7011
        %v7027 = vmul.f32 %v7003, %v7015
        %v7028 = vmul.f32 %v7004, %v7015
        %v7029 = vmul.f32 %v7005, %v7019
        %v7030 = vmul.f32 %v7006, %v7019
        %v7031 = vmul.f32 %v7007, %v7023
        %v7032 = vmul.f32 %v7008, %v7023
        %v7033 = vadd.f32 %v6956, %v7025
        %v7034 = vadd.f32 %v6957, %v7026
        %v7035 = vadd.f32 %v6958, %v7027
        %v7036 = vadd.f32 %v6959, %v7028
        %v7037 = vadd.f32 %v6960, %v7029
        %v7038 = vadd.f32 %v6961, %v7030
        %v7039 = vadd.f32 %v6962, %v7031
        %v7040 = vadd.f32 %v6963, %v7032
        %7041 = vrot.lane.b32.xlu0 %v4259, 35
        %v7042 = vpop.permute.xlu0 %7041
        %7043 = vrot.lane.b32.xlu0 %v4261, 35
        %v7044 = vpop.permute.xlu0 %7043
        %7045 = vrot.lane.b32.xlu0 %v4263, 35
        %v7046 = vpop.permute.xlu0 %7045
        %7047 = vrot.lane.b32.xlu0 %v4265, 35
        %v7048 = vpop.permute.xlu0 %7047
        %7049 = vrot.lane.b32.xlu0 %v4260, 35
        %v7050 = vpop.permute.xlu0 %7049
        %7051 = vrot.lane.b32.xlu0 %v4262, 35
        %v7052 = vpop.permute.xlu0 %7051
        %7053 = vrot.lane.b32.xlu0 %v4264, 35
        %v7054 = vpop.permute.xlu0 %7053
        %7055 = vrot.lane.b32.xlu0 %v4266, 35
        %v7056 = vpop.permute.xlu0 %7055
        %v7057 = vsel %vm1074, %v7042, %v7050
        %v7058 = vsel %vm1074, %v7044, %v7052
        %v7059 = vsel %vm1074, %v7046, %v7054
        %v7060 = vsel %vm1074, %v7048, %v7056
        %v7061 = vsel %vm1074, %v7050, %v7042
        %v7062 = vsel %vm1074, %v7052, %v7044
        %v7063 = vsel %vm1074, %v7054, %v7046
        %v7064 = vsel %vm1074, %v7056, %v7048
        %vm7065 = vmand %vm4294, %vm438
        %v7066 = vsel %vm7065, 1, 0
        %v7067 = vlaneseq
        %v7068 = vshrl.u32 %v7067, 7
        %v7069 = vsub.s32 0, %v7068
        %v7070 = vrot.slane %v7066, %v7069
        %v7071 = vlaneseq
        %v7072 = vshrl.u32 %v7071, 7
        %v7073 = vsub.s32 1, %v7072
        %v7074 = vrot.slane %v7066, %v7073
        %vm7075 = vcmp.eq.s32.totalorder %v7070, 1
        %vm7076 = vcmp.eq.s32.totalorder %v7074, 1
        %v7077 = vsel %vm7075, %v7057, 0.0
        %v7078 = vsel %vm7076, %v7061, 0.0
        %v7079 = vsel %vm7075, %v7058, 0.0
        %v7080 = vsel %vm7076, %v7062, 0.0
        %v7081 = vsel %vm7075, %v7059, 0.0
        %v7082 = vsel %vm7076, %v7063, 0.0
        %v7083 = vsel %vm7075, %v7060, 0.0
        %v7084 = vsel %vm7076, %v7064, 0.0
        %7085 = vset.pattern.permute.xlu0 37
        %7086 = vperm.xlu0 %7085, %v4267
        %v7087 = vpop.permute.xlu0 %7086
        %7089 = vset.pattern.permute.xlu0 37
        %7090 = vperm.xlu0 %7089, %v4268
        %v7091 = vpop.permute.xlu0 %7090
        %7093 = vset.pattern.permute.xlu0 37
        %7094 = vperm.xlu0 %7093, %v4269
        %v7095 = vpop.permute.xlu0 %7094
        %7097 = vset.pattern.permute.xlu0 37
        %7098 = vperm.xlu0 %7097, %v4270
        %v7099 = vpop.permute.xlu0 %7098
        %v7101 = vmul.f32 %v7077, %v7087
        %v7102 = vmul.f32 %v7078, %v7087
        %v7103 = vmul.f32 %v7079, %v7091
        %v7104 = vmul.f32 %v7080, %v7091
        %v7105 = vmul.f32 %v7081, %v7095
        %v7106 = vmul.f32 %v7082, %v7095
        %v7107 = vmul.f32 %v7083, %v7099
        %v7108 = vmul.f32 %v7084, %v7099
        %v7109 = vadd.f32 %v7033, %v7101
        %v7110 = vadd.f32 %v7034, %v7102
        %v7111 = vadd.f32 %v7035, %v7103
        %v7112 = vadd.f32 %v7036, %v7104
        %v7113 = vadd.f32 %v7037, %v7105
        %v7114 = vadd.f32 %v7038, %v7106
        %v7115 = vadd.f32 %v7039, %v7107
        %v7116 = vadd.f32 %v7040, %v7108
        %7117 = vrot.lane.b32.xlu0 %v4259, 32
        %v7118 = vpop.permute.xlu0 %7117
        %7119 = vrot.lane.b32.xlu0 %v4261, 32
        %v7120 = vpop.permute.xlu0 %7119
        %7121 = vrot.lane.b32.xlu0 %v4263, 32
        %v7122 = vpop.permute.xlu0 %7121
        %7123 = vrot.lane.b32.xlu0 %v4265, 32
        %v7124 = vpop.permute.xlu0 %7123
        %7125 = vrot.lane.b32.xlu0 %v4260, 32
        %v7126 = vpop.permute.xlu0 %7125
        %7127 = vrot.lane.b32.xlu0 %v4262, 32
        %v7128 = vpop.permute.xlu0 %7127
        %7129 = vrot.lane.b32.xlu0 %v4264, 32
        %v7130 = vpop.permute.xlu0 %7129
        %7131 = vrot.lane.b32.xlu0 %v4266, 32
        %v7132 = vpop.permute.xlu0 %7131
        %v7133 = vsel %vm1305, %v7118, %v7126
        %v7134 = vsel %vm1305, %v7120, %v7128
        %v7135 = vsel %vm1305, %v7122, %v7130
        %v7136 = vsel %vm1305, %v7124, %v7132
        %v7137 = vsel %vm1305, %v7126, %v7118
        %v7138 = vsel %vm1305, %v7128, %v7120
        %v7139 = vsel %vm1305, %v7130, %v7122
        %v7140 = vsel %vm1305, %v7132, %v7124
        %vm7141 = vmand %vm4294, %vm460
        %v7142 = vsel %vm7141, 1, 0
        %v7143 = vlaneseq
        %v7144 = vshrl.u32 %v7143, 7
        %v7145 = vsub.s32 0, %v7144
        %v7146 = vrot.slane %v7142, %v7145
        %v7147 = vlaneseq
        %v7148 = vshrl.u32 %v7147, 7
        %v7149 = vsub.s32 1, %v7148
        %v7150 = vrot.slane %v7142, %v7149
        %vm7151 = vcmp.eq.s32.totalorder %v7146, 1
        %vm7152 = vcmp.eq.s32.totalorder %v7150, 1
        %v7153 = vsel %vm7151, %v7133, 0.0
        %v7154 = vsel %vm7152, %v7137, 0.0
        %v7155 = vsel %vm7151, %v7134, 0.0
        %v7156 = vsel %vm7152, %v7138, 0.0
        %v7157 = vsel %vm7151, %v7135, 0.0
        %v7158 = vsel %vm7152, %v7139, 0.0
        %v7159 = vsel %vm7151, %v7136, 0.0
        %v7160 = vsel %vm7152, %v7140, 0.0
        %7161 = vset.pattern.permute.xlu0 38
        %7162 = vperm.xlu0 %7161, %v4267
        %v7163 = vpop.permute.xlu0 %7162
        %7165 = vset.pattern.permute.xlu0 38
        %7166 = vperm.xlu0 %7165, %v4268
        %v7167 = vpop.permute.xlu0 %7166
        %7169 = vset.pattern.permute.xlu0 38
        %7170 = vperm.xlu0 %7169, %v4269
        %v7171 = vpop.permute.xlu0 %7170
        %7173 = vset.pattern.permute.xlu0 38
        %7174 = vperm.xlu0 %7173, %v4270
        %v7175 = vpop.permute.xlu0 %7174
        %v7177 = vmul.f32 %v7153, %v7163
        %v7178 = vmul.f32 %v7154, %v7163
        %v7179 = vmul.f32 %v7155, %v7167
        %v7180 = vmul.f32 %v7156, %v7167
        %v7181 = vmul.f32 %v7157, %v7171
        %v7182 = vmul.f32 %v7158, %v7171
        %v7183 = vmul.f32 %v7159, %v7175
        %v7184 = vmul.f32 %v7160, %v7175
        %v7185 = vadd.f32 %v7109, %v7177
        %v7186 = vadd.f32 %v7110, %v7178
        %v7187 = vadd.f32 %v7111, %v7179
        %v7188 = vadd.f32 %v7112, %v7180
        %v7189 = vadd.f32 %v7113, %v7181
        %v7190 = vadd.f32 %v7114, %v7182
        %v7191 = vadd.f32 %v7115, %v7183
        %v7192 = vadd.f32 %v7116, %v7184
        %7193 = vrot.lane.b32.xlu0 %v4259, 29
        %v7194 = vpop.permute.xlu0 %7193
        %7195 = vrot.lane.b32.xlu0 %v4261, 29
        %v7196 = vpop.permute.xlu0 %7195
        %7197 = vrot.lane.b32.xlu0 %v4263, 29
        %v7198 = vpop.permute.xlu0 %7197
        %7199 = vrot.lane.b32.xlu0 %v4265, 29
        %v7200 = vpop.permute.xlu0 %7199
        %7201 = vrot.lane.b32.xlu0 %v4260, 29
        %v7202 = vpop.permute.xlu0 %7201
        %7203 = vrot.lane.b32.xlu0 %v4262, 29
        %v7204 = vpop.permute.xlu0 %7203
        %7205 = vrot.lane.b32.xlu0 %v4264, 29
        %v7206 = vpop.permute.xlu0 %7205
        %7207 = vrot.lane.b32.xlu0 %v4266, 29
        %v7208 = vpop.permute.xlu0 %7207
        %v7209 = vsel %vm1536, %v7194, %v7202
        %v7210 = vsel %vm1536, %v7196, %v7204
        %v7211 = vsel %vm1536, %v7198, %v7206
        %v7212 = vsel %vm1536, %v7200, %v7208
        %v7213 = vsel %vm1536, %v7202, %v7194
        %v7214 = vsel %vm1536, %v7204, %v7196
        %v7215 = vsel %vm1536, %v7206, %v7198
        %v7216 = vsel %vm1536, %v7208, %v7200
        %vm7217 = vmand %vm4294, %vm484
        %v7218 = vsel %vm7217, 1, 0
        %v7219 = vlaneseq
        %v7220 = vshrl.u32 %v7219, 7
        %v7221 = vsub.s32 0, %v7220
        %v7222 = vrot.slane %v7218, %v7221
        %v7223 = vlaneseq
        %v7224 = vshrl.u32 %v7223, 7
        %v7225 = vsub.s32 1, %v7224
        %v7226 = vrot.slane %v7218, %v7225
        %vm7227 = vcmp.eq.s32.totalorder %v7222, 1
        %vm7228 = vcmp.eq.s32.totalorder %v7226, 1
        %v7229 = vsel %vm7227, %v7209, 0.0
        %v7230 = vsel %vm7228, %v7213, 0.0
        %v7231 = vsel %vm7227, %v7210, 0.0
        %v7232 = vsel %vm7228, %v7214, 0.0
        %v7233 = vsel %vm7227, %v7211, 0.0
        %v7234 = vsel %vm7228, %v7215, 0.0
        %v7235 = vsel %vm7227, %v7212, 0.0
        %v7236 = vsel %vm7228, %v7216, 0.0
        %7237 = vset.pattern.permute.xlu0 39
        %7238 = vperm.xlu0 %7237, %v4267
        %v7239 = vpop.permute.xlu0 %7238
        %7241 = vset.pattern.permute.xlu0 39
        %7242 = vperm.xlu0 %7241, %v4268
        %v7243 = vpop.permute.xlu0 %7242
        %7245 = vset.pattern.permute.xlu0 39
        %7246 = vperm.xlu0 %7245, %v4269
        %v7247 = vpop.permute.xlu0 %7246
        %7249 = vset.pattern.permute.xlu0 39
        %7250 = vperm.xlu0 %7249, %v4270
        %v7251 = vpop.permute.xlu0 %7250
        %v7253 = vmul.f32 %v7229, %v7239
        %v7254 = vmul.f32 %v7230, %v7239
        %v7255 = vmul.f32 %v7231, %v7243
        %v7256 = vmul.f32 %v7232, %v7243
        %v7257 = vmul.f32 %v7233, %v7247
        %v7258 = vmul.f32 %v7234, %v7247
        %v7259 = vmul.f32 %v7235, %v7251
        %v7260 = vmul.f32 %v7236, %v7251
        %v7261 = vadd.f32 %v7185, %v7253
        %v7262 = vadd.f32 %v7186, %v7254
        %v7263 = vadd.f32 %v7187, %v7255
        %v7264 = vadd.f32 %v7188, %v7256
        %v7265 = vadd.f32 %v7189, %v7257
        %v7266 = vadd.f32 %v7190, %v7258
        %v7267 = vadd.f32 %v7191, %v7259
        %v7268 = vadd.f32 %v7192, %v7260
        %7269 = vrot.lane.b32.xlu0 %v4259, 26
        %v7270 = vpop.permute.xlu0 %7269
        %7271 = vrot.lane.b32.xlu0 %v4261, 26
        %v7272 = vpop.permute.xlu0 %7271
        %7273 = vrot.lane.b32.xlu0 %v4263, 26
        %v7274 = vpop.permute.xlu0 %7273
        %7275 = vrot.lane.b32.xlu0 %v4265, 26
        %v7276 = vpop.permute.xlu0 %7275
        %7277 = vrot.lane.b32.xlu0 %v4260, 26
        %v7278 = vpop.permute.xlu0 %7277
        %7279 = vrot.lane.b32.xlu0 %v4262, 26
        %v7280 = vpop.permute.xlu0 %7279
        %7281 = vrot.lane.b32.xlu0 %v4264, 26
        %v7282 = vpop.permute.xlu0 %7281
        %7283 = vrot.lane.b32.xlu0 %v4266, 26
        %v7284 = vpop.permute.xlu0 %7283
        %vm7285 = vcmp.lt.s32.totalorder %v530, 26
        %v7286 = vsel %vm7285, %v7270, %v7278
        %v7287 = vsel %vm7285, %v7272, %v7280
        %v7288 = vsel %vm7285, %v7274, %v7282
        %v7289 = vsel %vm7285, %v7276, %v7284
        %v7290 = vsel %vm7285, %v7278, %v7270
        %v7291 = vsel %vm7285, %v7280, %v7272
        %v7292 = vsel %vm7285, %v7282, %v7274
        %v7293 = vsel %vm7285, %v7284, %v7276
        %vm7294 = vmand %vm4294, %vm4298
        %v7295 = vsel %vm7294, 1, 0
        %v7296 = vlaneseq
        %v7297 = vshrl.u32 %v7296, 7
        %v7298 = vsub.s32 0, %v7297
        %v7299 = vrot.slane %v7295, %v7298
        %v7300 = vlaneseq
        %v7301 = vshrl.u32 %v7300, 7
        %v7302 = vsub.s32 1, %v7301
        %v7303 = vrot.slane %v7295, %v7302
        %vm7304 = vcmp.eq.s32.totalorder %v7299, 1
        %vm7305 = vcmp.eq.s32.totalorder %v7303, 1
        %v7306 = vsel %vm7304, %v7286, 0.0
        %v7307 = vsel %vm7305, %v7290, 0.0
        %v7308 = vsel %vm7304, %v7287, 0.0
        %v7309 = vsel %vm7305, %v7291, 0.0
        %v7310 = vsel %vm7304, %v7288, 0.0
        %v7311 = vsel %vm7305, %v7292, 0.0
        %v7312 = vsel %vm7304, %v7289, 0.0
        %v7313 = vsel %vm7305, %v7293, 0.0
        %7314 = vset.pattern.permute.xlu0 40
        %7315 = vperm.xlu0 %7314, %v4267
        %v7316 = vpop.permute.xlu0 %7315
        %7318 = vset.pattern.permute.xlu0 40
        %7319 = vperm.xlu0 %7318, %v4268
        %v7320 = vpop.permute.xlu0 %7319
        %7322 = vset.pattern.permute.xlu0 40
        %7323 = vperm.xlu0 %7322, %v4269
        %v7324 = vpop.permute.xlu0 %7323
        %7326 = vset.pattern.permute.xlu0 40
        %7327 = vperm.xlu0 %7326, %v4270
        %v7328 = vpop.permute.xlu0 %7327
        %v7330 = vmul.f32 %v7306, %v7316
        %v7331 = vmul.f32 %v7307, %v7316
        %v7332 = vmul.f32 %v7308, %v7320
        %v7333 = vmul.f32 %v7309, %v7320
        %v7334 = vmul.f32 %v7310, %v7324
        %v7335 = vmul.f32 %v7311, %v7324
        %v7336 = vmul.f32 %v7312, %v7328
        %v7337 = vmul.f32 %v7313, %v7328
        %v7338 = vadd.f32 %v7261, %v7330
        %v7339 = vadd.f32 %v7262, %v7331
        %v7340 = vadd.f32 %v7263, %v7332
        %v7341 = vadd.f32 %v7264, %v7333
        %v7342 = vadd.f32 %v7265, %v7334
        %v7343 = vadd.f32 %v7266, %v7335
        %v7344 = vadd.f32 %v7267, %v7336
        %v7345 = vadd.f32 %v7268, %v7337
        %7346 = vrot.lane.b32.xlu0 %v4259, 23
        %v7347 = vpop.permute.xlu0 %7346
        %7348 = vrot.lane.b32.xlu0 %v4261, 23
        %v7349 = vpop.permute.xlu0 %7348
        %7350 = vrot.lane.b32.xlu0 %v4263, 23
        %v7351 = vpop.permute.xlu0 %7350
        %7352 = vrot.lane.b32.xlu0 %v4265, 23
        %v7353 = vpop.permute.xlu0 %7352
        %7354 = vrot.lane.b32.xlu0 %v4260, 23
        %v7355 = vpop.permute.xlu0 %7354
        %7356 = vrot.lane.b32.xlu0 %v4262, 23
        %v7357 = vpop.permute.xlu0 %7356
        %7358 = vrot.lane.b32.xlu0 %v4264, 23
        %v7359 = vpop.permute.xlu0 %7358
        %7360 = vrot.lane.b32.xlu0 %v4266, 23
        %v7361 = vpop.permute.xlu0 %7360
        %vm7362 = vcmp.lt.s32.totalorder %v530, 23
        %v7363 = vsel %vm7362, %v7347, %v7355
        %v7364 = vsel %vm7362, %v7349, %v7357
        %v7365 = vsel %vm7362, %v7351, %v7359
        %v7366 = vsel %vm7362, %v7353, %v7361
        %v7367 = vsel %vm7362, %v7355, %v7347
        %v7368 = vsel %vm7362, %v7357, %v7349
        %v7369 = vsel %vm7362, %v7359, %v7351
        %v7370 = vsel %vm7362, %v7361, %v7353
        %vm7371 = vmand %vm4294, %vm4306
        %v7372 = vsel %vm7371, 1, 0
        %v7373 = vlaneseq
        %v7374 = vshrl.u32 %v7373, 7
        %v7375 = vsub.s32 0, %v7374
        %v7376 = vrot.slane %v7372, %v7375
        %v7377 = vlaneseq
        %v7378 = vshrl.u32 %v7377, 7
        %v7379 = vsub.s32 1, %v7378
        %v7380 = vrot.slane %v7372, %v7379
        %vm7381 = vcmp.eq.s32.totalorder %v7376, 1
        %vm7382 = vcmp.eq.s32.totalorder %v7380, 1
        %v7383 = vsel %vm7381, %v7363, 0.0
        %v7384 = vsel %vm7382, %v7367, 0.0
        %v7385 = vsel %vm7381, %v7364, 0.0
        %v7386 = vsel %vm7382, %v7368, 0.0
        %v7387 = vsel %vm7381, %v7365, 0.0
        %v7388 = vsel %vm7382, %v7369, 0.0
        %v7389 = vsel %vm7381, %v7366, 0.0
        %v7390 = vsel %vm7382, %v7370, 0.0
        %7391 = vset.pattern.permute.xlu0 41
        %7392 = vperm.xlu0 %7391, %v4267
        %v7393 = vpop.permute.xlu0 %7392
        %7395 = vset.pattern.permute.xlu0 41
        %7396 = vperm.xlu0 %7395, %v4268
        %v7397 = vpop.permute.xlu0 %7396
        %7399 = vset.pattern.permute.xlu0 41
        %7400 = vperm.xlu0 %7399, %v4269
        %v7401 = vpop.permute.xlu0 %7400
        %7403 = vset.pattern.permute.xlu0 41
        %7404 = vperm.xlu0 %7403, %v4270
        %v7405 = vpop.permute.xlu0 %7404
        %v7407 = vmul.f32 %v7383, %v7393
        %v7408 = vmul.f32 %v7384, %v7393
        %v7409 = vmul.f32 %v7385, %v7397
        %v7410 = vmul.f32 %v7386, %v7397
        %v7411 = vmul.f32 %v7387, %v7401
        %v7412 = vmul.f32 %v7388, %v7401
        %v7413 = vmul.f32 %v7389, %v7405
        %v7414 = vmul.f32 %v7390, %v7405
        %v7415 = vadd.f32 %v7338, %v7407
        %v7416 = vadd.f32 %v7339, %v7408
        %v7417 = vadd.f32 %v7340, %v7409
        %v7418 = vadd.f32 %v7341, %v7410
        %v7419 = vadd.f32 %v7342, %v7411
        %v7420 = vadd.f32 %v7343, %v7412
        %v7421 = vadd.f32 %v7344, %v7413
        %v7422 = vadd.f32 %v7345, %v7414
        %7423 = vrot.lane.b32.xlu0 %v4259, 121
        %v7424 = vpop.permute.xlu0 %7423
        %7425 = vrot.lane.b32.xlu0 %v4261, 121
        %v7426 = vpop.permute.xlu0 %7425
        %7427 = vrot.lane.b32.xlu0 %v4263, 121
        %v7428 = vpop.permute.xlu0 %7427
        %7429 = vrot.lane.b32.xlu0 %v4265, 121
        %v7430 = vpop.permute.xlu0 %7429
        %7431 = vrot.lane.b32.xlu0 %v4260, 121
        %v7432 = vpop.permute.xlu0 %7431
        %7433 = vrot.lane.b32.xlu0 %v4262, 121
        %v7434 = vpop.permute.xlu0 %7433
        %7435 = vrot.lane.b32.xlu0 %v4264, 121
        %v7436 = vpop.permute.xlu0 %7435
        %7437 = vrot.lane.b32.xlu0 %v4266, 121
        %v7438 = vpop.permute.xlu0 %7437
        %vm7439 = vcmp.lt.s32.totalorder %v530, 121
        %v7440 = vsel %vm7439, %v7424, %v7432
        %v7441 = vsel %vm7439, %v7426, %v7434
        %v7442 = vsel %vm7439, %v7428, %v7436
        %v7443 = vsel %vm7439, %v7430, %v7438
        %v7444 = vsel %vm7439, %v7432, %v7424
        %v7445 = vsel %vm7439, %v7434, %v7426
        %v7446 = vsel %vm7439, %v7436, %v7428
        %v7447 = vsel %vm7439, %v7438, %v7430
        %vm7448 = vmand %vm4302, %vm4282
        %v7449 = vsel %vm7448, 1, 0
        %v7450 = vlaneseq
        %v7451 = vshrl.u32 %v7450, 7
        %v7452 = vsub.s32 0, %v7451
        %v7453 = vrot.slane %v7449, %v7452
        %v7454 = vlaneseq
        %v7455 = vshrl.u32 %v7454, 7
        %v7456 = vsub.s32 1, %v7455
        %v7457 = vrot.slane %v7449, %v7456
        %vm7458 = vcmp.eq.s32.totalorder %v7453, 1
        %vm7459 = vcmp.eq.s32.totalorder %v7457, 1
        %v7460 = vsel %vm7458, %v7444, 0.0
        %v7461 = vsel %vm7459, %v7440, 0.0
        %v7462 = vsel %vm7458, %v7445, 0.0
        %v7463 = vsel %vm7459, %v7441, 0.0
        %v7464 = vsel %vm7458, %v7446, 0.0
        %v7465 = vsel %vm7459, %v7442, 0.0
        %v7466 = vsel %vm7458, %v7447, 0.0
        %v7467 = vsel %vm7459, %v7443, 0.0
        %7468 = vset.pattern.permute.xlu0 42
        %7469 = vperm.xlu0 %7468, %v4267
        %v7470 = vpop.permute.xlu0 %7469
        %7472 = vset.pattern.permute.xlu0 42
        %7473 = vperm.xlu0 %7472, %v4268
        %v7474 = vpop.permute.xlu0 %7473
        %7476 = vset.pattern.permute.xlu0 42
        %7477 = vperm.xlu0 %7476, %v4269
        %v7478 = vpop.permute.xlu0 %7477
        %7480 = vset.pattern.permute.xlu0 42
        %7481 = vperm.xlu0 %7480, %v4270
        %v7482 = vpop.permute.xlu0 %7481
        %v7484 = vmul.f32 %v7460, %v7470
        %v7485 = vmul.f32 %v7461, %v7470
        %v7486 = vmul.f32 %v7462, %v7474
        %v7487 = vmul.f32 %v7463, %v7474
        %v7488 = vmul.f32 %v7464, %v7478
        %v7489 = vmul.f32 %v7465, %v7478
        %v7490 = vmul.f32 %v7466, %v7482
        %v7491 = vmul.f32 %v7467, %v7482
        %v7492 = vadd.f32 %v7415, %v7484
        %v7493 = vadd.f32 %v7416, %v7485
        %v7494 = vadd.f32 %v7417, %v7486
        %v7495 = vadd.f32 %v7418, %v7487
        %v7496 = vadd.f32 %v7419, %v7488
        %v7497 = vadd.f32 %v7420, %v7489
        %v7498 = vadd.f32 %v7421, %v7490
        %v7499 = vadd.f32 %v7422, %v7491
        %7500 = vrot.lane.b32.xlu0 %v4259, 118
        %v7501 = vpop.permute.xlu0 %7500
        %7502 = vrot.lane.b32.xlu0 %v4261, 118
        %v7503 = vpop.permute.xlu0 %7502
        %7504 = vrot.lane.b32.xlu0 %v4263, 118
        %v7505 = vpop.permute.xlu0 %7504
        %7506 = vrot.lane.b32.xlu0 %v4265, 118
        %v7507 = vpop.permute.xlu0 %7506
        %7508 = vrot.lane.b32.xlu0 %v4260, 118
        %v7509 = vpop.permute.xlu0 %7508
        %7510 = vrot.lane.b32.xlu0 %v4262, 118
        %v7511 = vpop.permute.xlu0 %7510
        %7512 = vrot.lane.b32.xlu0 %v4264, 118
        %v7513 = vpop.permute.xlu0 %7512
        %7514 = vrot.lane.b32.xlu0 %v4266, 118
        %v7515 = vpop.permute.xlu0 %7514
        %vm7516 = vcmp.lt.s32.totalorder %v530, 118
        %v7517 = vsel %vm7516, %v7501, %v7509
        %v7518 = vsel %vm7516, %v7503, %v7511
        %v7519 = vsel %vm7516, %v7505, %v7513
        %v7520 = vsel %vm7516, %v7507, %v7515
        %v7521 = vsel %vm7516, %v7509, %v7501
        %v7522 = vsel %vm7516, %v7511, %v7503
        %v7523 = vsel %vm7516, %v7513, %v7505
        %v7524 = vsel %vm7516, %v7515, %v7507
        %vm7525 = vmand %vm4302, %vm4290
        %v7526 = vsel %vm7525, 1, 0
        %v7527 = vlaneseq
        %v7528 = vshrl.u32 %v7527, 7
        %v7529 = vsub.s32 0, %v7528
        %v7530 = vrot.slane %v7526, %v7529
        %v7531 = vlaneseq
        %v7532 = vshrl.u32 %v7531, 7
        %v7533 = vsub.s32 1, %v7532
        %v7534 = vrot.slane %v7526, %v7533
        %vm7535 = vcmp.eq.s32.totalorder %v7530, 1
        %vm7536 = vcmp.eq.s32.totalorder %v7534, 1
        %v7537 = vsel %vm7535, %v7521, 0.0
        %v7538 = vsel %vm7536, %v7517, 0.0
        %v7539 = vsel %vm7535, %v7522, 0.0
        %v7540 = vsel %vm7536, %v7518, 0.0
        %v7541 = vsel %vm7535, %v7523, 0.0
        %v7542 = vsel %vm7536, %v7519, 0.0
        %v7543 = vsel %vm7535, %v7524, 0.0
        %v7544 = vsel %vm7536, %v7520, 0.0
        %7545 = vset.pattern.permute.xlu0 43
        %7546 = vperm.xlu0 %7545, %v4267
        %v7547 = vpop.permute.xlu0 %7546
        %7549 = vset.pattern.permute.xlu0 43
        %7550 = vperm.xlu0 %7549, %v4268
        %v7551 = vpop.permute.xlu0 %7550
        %7553 = vset.pattern.permute.xlu0 43
        %7554 = vperm.xlu0 %7553, %v4269
        %v7555 = vpop.permute.xlu0 %7554
        %7557 = vset.pattern.permute.xlu0 43
        %7558 = vperm.xlu0 %7557, %v4270
        %v7559 = vpop.permute.xlu0 %7558
        %v7561 = vmul.f32 %v7537, %v7547
        %v7562 = vmul.f32 %v7538, %v7547
        %v7563 = vmul.f32 %v7539, %v7551
        %v7564 = vmul.f32 %v7540, %v7551
        %v7565 = vmul.f32 %v7541, %v7555
        %v7566 = vmul.f32 %v7542, %v7555
        %v7567 = vmul.f32 %v7543, %v7559
        %v7568 = vmul.f32 %v7544, %v7559
        %v7569 = vadd.f32 %v7492, %v7561
        %v7570 = vadd.f32 %v7493, %v7562
        %v7571 = vadd.f32 %v7494, %v7563
        %v7572 = vadd.f32 %v7495, %v7564
        %v7573 = vadd.f32 %v7496, %v7565
        %v7574 = vadd.f32 %v7497, %v7566
        %v7575 = vadd.f32 %v7498, %v7567
        %v7576 = vadd.f32 %v7499, %v7568
        %7577 = vrot.lane.b32.xlu0 %v4259, 115
        %v7578 = vpop.permute.xlu0 %7577
        %7579 = vrot.lane.b32.xlu0 %v4261, 115
        %v7580 = vpop.permute.xlu0 %7579
        %7581 = vrot.lane.b32.xlu0 %v4263, 115
        %v7582 = vpop.permute.xlu0 %7581
        %7583 = vrot.lane.b32.xlu0 %v4265, 115
        %v7584 = vpop.permute.xlu0 %7583
        %7585 = vrot.lane.b32.xlu0 %v4260, 115
        %v7586 = vpop.permute.xlu0 %7585
        %7587 = vrot.lane.b32.xlu0 %v4262, 115
        %v7588 = vpop.permute.xlu0 %7587
        %7589 = vrot.lane.b32.xlu0 %v4264, 115
        %v7590 = vpop.permute.xlu0 %7589
        %7591 = vrot.lane.b32.xlu0 %v4266, 115
        %v7592 = vpop.permute.xlu0 %7591
        %v7593 = vsel %vm2666, %v7578, %v7586
        %v7594 = vsel %vm2666, %v7580, %v7588
        %v7595 = vsel %vm2666, %v7582, %v7590
        %v7596 = vsel %vm2666, %v7584, %v7592
        %v7597 = vsel %vm2666, %v7586, %v7578
        %v7598 = vsel %vm2666, %v7588, %v7580
        %v7599 = vsel %vm2666, %v7590, %v7582
        %v7600 = vsel %vm2666, %v7592, %v7584
        %vm7601 = vmand %vm4302, %vm438
        %v7602 = vsel %vm7601, 1, 0
        %v7603 = vlaneseq
        %v7604 = vshrl.u32 %v7603, 7
        %v7605 = vsub.s32 0, %v7604
        %v7606 = vrot.slane %v7602, %v7605
        %v7607 = vlaneseq
        %v7608 = vshrl.u32 %v7607, 7
        %v7609 = vsub.s32 1, %v7608
        %v7610 = vrot.slane %v7602, %v7609
        %vm7611 = vcmp.eq.s32.totalorder %v7606, 1
        %vm7612 = vcmp.eq.s32.totalorder %v7610, 1
        %v7613 = vsel %vm7611, %v7597, 0.0
        %v7614 = vsel %vm7612, %v7593, 0.0
        %v7615 = vsel %vm7611, %v7598, 0.0
        %v7616 = vsel %vm7612, %v7594, 0.0
        %v7617 = vsel %vm7611, %v7599, 0.0
        %v7618 = vsel %vm7612, %v7595, 0.0
        %v7619 = vsel %vm7611, %v7600, 0.0
        %v7620 = vsel %vm7612, %v7596, 0.0
        %7621 = vset.pattern.permute.xlu0 44
        %7622 = vperm.xlu0 %7621, %v4267
        %v7623 = vpop.permute.xlu0 %7622
        %7625 = vset.pattern.permute.xlu0 44
        %7626 = vperm.xlu0 %7625, %v4268
        %v7627 = vpop.permute.xlu0 %7626
        %7629 = vset.pattern.permute.xlu0 44
        %7630 = vperm.xlu0 %7629, %v4269
        %v7631 = vpop.permute.xlu0 %7630
        %7633 = vset.pattern.permute.xlu0 44
        %7634 = vperm.xlu0 %7633, %v4270
        %v7635 = vpop.permute.xlu0 %7634
        %v7637 = vmul.f32 %v7613, %v7623
        %v7638 = vmul.f32 %v7614, %v7623
        %v7639 = vmul.f32 %v7615, %v7627
        %v7640 = vmul.f32 %v7616, %v7627
        %v7641 = vmul.f32 %v7617, %v7631
        %v7642 = vmul.f32 %v7618, %v7631
        %v7643 = vmul.f32 %v7619, %v7635
        %v7644 = vmul.f32 %v7620, %v7635
        %v7645 = vadd.f32 %v7569, %v7637
        %v7646 = vadd.f32 %v7570, %v7638
        %v7647 = vadd.f32 %v7571, %v7639
        %v7648 = vadd.f32 %v7572, %v7640
        %v7649 = vadd.f32 %v7573, %v7641
        %v7650 = vadd.f32 %v7574, %v7642
        %v7651 = vadd.f32 %v7575, %v7643
        %v7652 = vadd.f32 %v7576, %v7644
        %7653 = vrot.lane.b32.xlu0 %v4259, 112
        %v7654 = vpop.permute.xlu0 %7653
        %7655 = vrot.lane.b32.xlu0 %v4261, 112
        %v7656 = vpop.permute.xlu0 %7655
        %7657 = vrot.lane.b32.xlu0 %v4263, 112
        %v7658 = vpop.permute.xlu0 %7657
        %7659 = vrot.lane.b32.xlu0 %v4265, 112
        %v7660 = vpop.permute.xlu0 %7659
        %7661 = vrot.lane.b32.xlu0 %v4260, 112
        %v7662 = vpop.permute.xlu0 %7661
        %7663 = vrot.lane.b32.xlu0 %v4262, 112
        %v7664 = vpop.permute.xlu0 %7663
        %7665 = vrot.lane.b32.xlu0 %v4264, 112
        %v7666 = vpop.permute.xlu0 %7665
        %7667 = vrot.lane.b32.xlu0 %v4266, 112
        %v7668 = vpop.permute.xlu0 %7667
        %v7669 = vsel %vm2897, %v7654, %v7662
        %v7670 = vsel %vm2897, %v7656, %v7664
        %v7671 = vsel %vm2897, %v7658, %v7666
        %v7672 = vsel %vm2897, %v7660, %v7668
        %v7673 = vsel %vm2897, %v7662, %v7654
        %v7674 = vsel %vm2897, %v7664, %v7656
        %v7675 = vsel %vm2897, %v7666, %v7658
        %v7676 = vsel %vm2897, %v7668, %v7660
        %vm7677 = vmand %vm4302, %vm460
        %v7678 = vsel %vm7677, 1, 0
        %v7679 = vlaneseq
        %v7680 = vshrl.u32 %v7679, 7
        %v7681 = vsub.s32 0, %v7680
        %v7682 = vrot.slane %v7678, %v7681
        %v7683 = vlaneseq
        %v7684 = vshrl.u32 %v7683, 7
        %v7685 = vsub.s32 1, %v7684
        %v7686 = vrot.slane %v7678, %v7685
        %vm7687 = vcmp.eq.s32.totalorder %v7682, 1
        %vm7688 = vcmp.eq.s32.totalorder %v7686, 1
        %v7689 = vsel %vm7687, %v7673, 0.0
        %v7690 = vsel %vm7688, %v7669, 0.0
        %v7691 = vsel %vm7687, %v7674, 0.0
        %v7692 = vsel %vm7688, %v7670, 0.0
        %v7693 = vsel %vm7687, %v7675, 0.0
        %v7694 = vsel %vm7688, %v7671, 0.0
        %v7695 = vsel %vm7687, %v7676, 0.0
        %v7696 = vsel %vm7688, %v7672, 0.0
        %7697 = vset.pattern.permute.xlu0 45
        %7698 = vperm.xlu0 %7697, %v4267
        %v7699 = vpop.permute.xlu0 %7698
        %7701 = vset.pattern.permute.xlu0 45
        %7702 = vperm.xlu0 %7701, %v4268
        %v7703 = vpop.permute.xlu0 %7702
        %7705 = vset.pattern.permute.xlu0 45
        %7706 = vperm.xlu0 %7705, %v4269
        %v7707 = vpop.permute.xlu0 %7706
        %7709 = vset.pattern.permute.xlu0 45
        %7710 = vperm.xlu0 %7709, %v4270
        %v7711 = vpop.permute.xlu0 %7710
        %v7713 = vmul.f32 %v7689, %v7699
        %v7714 = vmul.f32 %v7690, %v7699
        %v7715 = vmul.f32 %v7691, %v7703
        %v7716 = vmul.f32 %v7692, %v7703
        %v7717 = vmul.f32 %v7693, %v7707
        %v7718 = vmul.f32 %v7694, %v7707
        %v7719 = vmul.f32 %v7695, %v7711
        %v7720 = vmul.f32 %v7696, %v7711
        %v7721 = vadd.f32 %v7645, %v7713
        %v7722 = vadd.f32 %v7646, %v7714
        %v7723 = vadd.f32 %v7647, %v7715
        %v7724 = vadd.f32 %v7648, %v7716
        %v7725 = vadd.f32 %v7649, %v7717
        %v7726 = vadd.f32 %v7650, %v7718
        %v7727 = vadd.f32 %v7651, %v7719
        %v7728 = vadd.f32 %v7652, %v7720
        %7729 = vrot.lane.b32.xlu0 %v4259, 109
        %v7730 = vpop.permute.xlu0 %7729
        %7731 = vrot.lane.b32.xlu0 %v4261, 109
        %v7732 = vpop.permute.xlu0 %7731
        %7733 = vrot.lane.b32.xlu0 %v4263, 109
        %v7734 = vpop.permute.xlu0 %7733
        %7735 = vrot.lane.b32.xlu0 %v4265, 109
        %v7736 = vpop.permute.xlu0 %7735
        %7737 = vrot.lane.b32.xlu0 %v4260, 109
        %v7738 = vpop.permute.xlu0 %7737
        %7739 = vrot.lane.b32.xlu0 %v4262, 109
        %v7740 = vpop.permute.xlu0 %7739
        %7741 = vrot.lane.b32.xlu0 %v4264, 109
        %v7742 = vpop.permute.xlu0 %7741
        %7743 = vrot.lane.b32.xlu0 %v4266, 109
        %v7744 = vpop.permute.xlu0 %7743
        %v7745 = vsel %vm3128, %v7730, %v7738
        %v7746 = vsel %vm3128, %v7732, %v7740
        %v7747 = vsel %vm3128, %v7734, %v7742
        %v7748 = vsel %vm3128, %v7736, %v7744
        %v7749 = vsel %vm3128, %v7738, %v7730
        %v7750 = vsel %vm3128, %v7740, %v7732
        %v7751 = vsel %vm3128, %v7742, %v7734
        %v7752 = vsel %vm3128, %v7744, %v7736
        %vm7753 = vmand %vm4302, %vm484
        %v7754 = vsel %vm7753, 1, 0
        %v7755 = vlaneseq
        %v7756 = vshrl.u32 %v7755, 7
        %v7757 = vsub.s32 0, %v7756
        %v7758 = vrot.slane %v7754, %v7757
        %v7759 = vlaneseq
        %v7760 = vshrl.u32 %v7759, 7
        %v7761 = vsub.s32 1, %v7760
        %v7762 = vrot.slane %v7754, %v7761
        %vm7763 = vcmp.eq.s32.totalorder %v7758, 1
        %vm7764 = vcmp.eq.s32.totalorder %v7762, 1
        %v7765 = vsel %vm7763, %v7749, 0.0
        %v7766 = vsel %vm7764, %v7745, 0.0
        %v7767 = vsel %vm7763, %v7750, 0.0
        %v7768 = vsel %vm7764, %v7746, 0.0
        %v7769 = vsel %vm7763, %v7751, 0.0
        %v7770 = vsel %vm7764, %v7747, 0.0
        %v7771 = vsel %vm7763, %v7752, 0.0
        %v7772 = vsel %vm7764, %v7748, 0.0
        %7773 = vset.pattern.permute.xlu0 46
        %7774 = vperm.xlu0 %7773, %v4267
        %v7775 = vpop.permute.xlu0 %7774
        %7777 = vset.pattern.permute.xlu0 46
        %7778 = vperm.xlu0 %7777, %v4268
        %v7779 = vpop.permute.xlu0 %7778
        %7781 = vset.pattern.permute.xlu0 46
        %7782 = vperm.xlu0 %7781, %v4269
        %v7783 = vpop.permute.xlu0 %7782
        %7785 = vset.pattern.permute.xlu0 46
        %7786 = vperm.xlu0 %7785, %v4270
        %v7787 = vpop.permute.xlu0 %7786
        %v7789 = vmul.f32 %v7765, %v7775
        %v7790 = vmul.f32 %v7766, %v7775
        %v7791 = vmul.f32 %v7767, %v7779
        %v7792 = vmul.f32 %v7768, %v7779
        %v7793 = vmul.f32 %v7769, %v7783
        %v7794 = vmul.f32 %v7770, %v7783
        %v7795 = vmul.f32 %v7771, %v7787
        %v7796 = vmul.f32 %v7772, %v7787
        %v7797 = vadd.f32 %v7721, %v7789
        %v7798 = vadd.f32 %v7722, %v7790
        %v7799 = vadd.f32 %v7723, %v7791
        %v7800 = vadd.f32 %v7724, %v7792
        %v7801 = vadd.f32 %v7725, %v7793
        %v7802 = vadd.f32 %v7726, %v7794
        %v7803 = vadd.f32 %v7727, %v7795
        %v7804 = vadd.f32 %v7728, %v7796
        %7805 = vrot.lane.b32.xlu0 %v4259, 106
        %v7806 = vpop.permute.xlu0 %7805
        %7807 = vrot.lane.b32.xlu0 %v4261, 106
        %v7808 = vpop.permute.xlu0 %7807
        %7809 = vrot.lane.b32.xlu0 %v4263, 106
        %v7810 = vpop.permute.xlu0 %7809
        %7811 = vrot.lane.b32.xlu0 %v4265, 106
        %v7812 = vpop.permute.xlu0 %7811
        %7813 = vrot.lane.b32.xlu0 %v4260, 106
        %v7814 = vpop.permute.xlu0 %7813
        %7815 = vrot.lane.b32.xlu0 %v4262, 106
        %v7816 = vpop.permute.xlu0 %7815
        %7817 = vrot.lane.b32.xlu0 %v4264, 106
        %v7818 = vpop.permute.xlu0 %7817
        %7819 = vrot.lane.b32.xlu0 %v4266, 106
        %v7820 = vpop.permute.xlu0 %7819
        %vm7821 = vcmp.lt.s32.totalorder %v530, 106
        %v7822 = vsel %vm7821, %v7806, %v7814
        %v7823 = vsel %vm7821, %v7808, %v7816
        %v7824 = vsel %vm7821, %v7810, %v7818
        %v7825 = vsel %vm7821, %v7812, %v7820
        %v7826 = vsel %vm7821, %v7814, %v7806
        %v7827 = vsel %vm7821, %v7816, %v7808
        %v7828 = vsel %vm7821, %v7818, %v7810
        %v7829 = vsel %vm7821, %v7820, %v7812
        %vm7830 = vmand %vm4302, %vm4298
        %v7831 = vsel %vm7830, 1, 0
        %v7832 = vlaneseq
        %v7833 = vshrl.u32 %v7832, 7
        %v7834 = vsub.s32 0, %v7833
        %v7835 = vrot.slane %v7831, %v7834
        %v7836 = vlaneseq
        %v7837 = vshrl.u32 %v7836, 7
        %v7838 = vsub.s32 1, %v7837
        %v7839 = vrot.slane %v7831, %v7838
        %vm7840 = vcmp.eq.s32.totalorder %v7835, 1
        %vm7841 = vcmp.eq.s32.totalorder %v7839, 1
        %v7842 = vsel %vm7840, %v7826, 0.0
        %v7843 = vsel %vm7841, %v7822, 0.0
        %v7844 = vsel %vm7840, %v7827, 0.0
        %v7845 = vsel %vm7841, %v7823, 0.0
        %v7846 = vsel %vm7840, %v7828, 0.0
        %v7847 = vsel %vm7841, %v7824, 0.0
        %v7848 = vsel %vm7840, %v7829, 0.0
        %v7849 = vsel %vm7841, %v7825, 0.0
        %7850 = vset.pattern.permute.xlu0 47
        %7851 = vperm.xlu0 %7850, %v4267
        %v7852 = vpop.permute.xlu0 %7851
        %7854 = vset.pattern.permute.xlu0 47
        %7855 = vperm.xlu0 %7854, %v4268
        %v7856 = vpop.permute.xlu0 %7855
        %7858 = vset.pattern.permute.xlu0 47
        %7859 = vperm.xlu0 %7858, %v4269
        %v7860 = vpop.permute.xlu0 %7859
        %7862 = vset.pattern.permute.xlu0 47
        %7863 = vperm.xlu0 %7862, %v4270
        %v7864 = vpop.permute.xlu0 %7863
        %v7866 = vmul.f32 %v7842, %v7852
        %v7867 = vmul.f32 %v7843, %v7852
        %v7868 = vmul.f32 %v7844, %v7856
        %v7869 = vmul.f32 %v7845, %v7856
        %v7870 = vmul.f32 %v7846, %v7860
        %v7871 = vmul.f32 %v7847, %v7860
        %v7872 = vmul.f32 %v7848, %v7864
        %v7873 = vmul.f32 %v7849, %v7864
        %v7874 = vadd.f32 %v7797, %v7866
        %v7875 = vadd.f32 %v7798, %v7867
        %v7876 = vadd.f32 %v7799, %v7868
        %v7877 = vadd.f32 %v7800, %v7869
        %v7878 = vadd.f32 %v7801, %v7870
        %v7879 = vadd.f32 %v7802, %v7871
        %v7880 = vadd.f32 %v7803, %v7872
        %v7881 = vadd.f32 %v7804, %v7873
        %7882 = vrot.lane.b32.xlu0 %v4259, 103
        %v7883 = vpop.permute.xlu0 %7882
        %7884 = vrot.lane.b32.xlu0 %v4261, 103
        %v7885 = vpop.permute.xlu0 %7884
        %7886 = vrot.lane.b32.xlu0 %v4263, 103
        %v7887 = vpop.permute.xlu0 %7886
        %7888 = vrot.lane.b32.xlu0 %v4265, 103
        %v7889 = vpop.permute.xlu0 %7888
        %7890 = vrot.lane.b32.xlu0 %v4260, 103
        %v7891 = vpop.permute.xlu0 %7890
        %7892 = vrot.lane.b32.xlu0 %v4262, 103
        %v7893 = vpop.permute.xlu0 %7892
        %7894 = vrot.lane.b32.xlu0 %v4264, 103
        %v7895 = vpop.permute.xlu0 %7894
        %7896 = vrot.lane.b32.xlu0 %v4266, 103
        %v7897 = vpop.permute.xlu0 %7896
        %vm7898 = vcmp.lt.s32.totalorder %v530, 103
        %v7899 = vsel %vm7898, %v7883, %v7891
        %v7900 = vsel %vm7898, %v7885, %v7893
        %v7901 = vsel %vm7898, %v7887, %v7895
        %v7902 = vsel %vm7898, %v7889, %v7897
        %v7903 = vsel %vm7898, %v7891, %v7883
        %v7904 = vsel %vm7898, %v7893, %v7885
        %v7905 = vsel %vm7898, %v7895, %v7887
        %v7906 = vsel %vm7898, %v7897, %v7889
        %vm7907 = vmand %vm4302, %vm4306
        %v7908 = vsel %vm7907, 1, 0
        %v7909 = vlaneseq
        %v7910 = vshrl.u32 %v7909, 7
        %v7911 = vsub.s32 0, %v7910
        %v7912 = vrot.slane %v7908, %v7911
        %v7913 = vlaneseq
        %v7914 = vshrl.u32 %v7913, 7
        %v7915 = vsub.s32 1, %v7914
        %v7916 = vrot.slane %v7908, %v7915
        %vm7917 = vcmp.eq.s32.totalorder %v7912, 1
        %vm7918 = vcmp.eq.s32.totalorder %v7916, 1
        %v7919 = vsel %vm7917, %v7903, 0.0
        %v7920 = vsel %vm7918, %v7899, 0.0
        %v7921 = vsel %vm7917, %v7904, 0.0
        %v7922 = vsel %vm7918, %v7900, 0.0
        %v7923 = vsel %vm7917, %v7905, 0.0
        %v7924 = vsel %vm7918, %v7901, 0.0
        %v7925 = vsel %vm7917, %v7906, 0.0
        %v7926 = vsel %vm7918, %v7902, 0.0
        %7927 = vset.pattern.permute.xlu0 48
        %7928 = vperm.xlu0 %7927, %v4267
        %v7929 = vpop.permute.xlu0 %7928
        %7931 = vset.pattern.permute.xlu0 48
        %7932 = vperm.xlu0 %7931, %v4268
        %v7933 = vpop.permute.xlu0 %7932
        %7935 = vset.pattern.permute.xlu0 48
        %7936 = vperm.xlu0 %7935, %v4269
        %v7937 = vpop.permute.xlu0 %7936
        %7939 = vset.pattern.permute.xlu0 48
        %7940 = vperm.xlu0 %7939, %v4270
        %v7941 = vpop.permute.xlu0 %7940
        %v7943 = vmul.f32 %v7919, %v7929
        %v7944 = vmul.f32 %v7920, %v7929
        %v7945 = vmul.f32 %v7921, %v7933
        %v7946 = vmul.f32 %v7922, %v7933
        %v7947 = vmul.f32 %v7923, %v7937
        %v7948 = vmul.f32 %v7924, %v7937
        %v7949 = vmul.f32 %v7925, %v7941
        %v7950 = vmul.f32 %v7926, %v7941
        %v7951 = vadd.f32 %v7874, %v7943
        %v7952 = vadd.f32 %v7875, %v7944
        %v7953 = vadd.f32 %v7876, %v7945
        %v7954 = vadd.f32 %v7877, %v7946
        %v7955 = vadd.f32 %v7878, %v7947
        %v7956 = vadd.f32 %v7879, %v7948
        %v7957 = vadd.f32 %v7880, %v7949
        %v7958 = vadd.f32 %v7881, %v7950
        %v7959 = vadd.f32 %v7951, %v7953
        %v7960 = vadd.f32 %v7959, %v7955
        %v7961 = vadd.f32 %v7960, %v7957
        %v7962 = vrot.slane %v7961, 4
        %v7963 = vadd.f32 %v7961, %v7962
        %v7964 = vrot.slane %v7963, 2
        %v7965 = vadd.f32 %v7963, %v7964
        %v7966 = vrot.slane %v7965, 1
        %v7967 = vadd.f32 %v7965, %v7966
        %v7968 = vadd.f32 %v7952, %v7954
        %v7969 = vadd.f32 %v7968, %v7956
        %v7970 = vadd.f32 %v7969, %v7958
        %v7971 = vrot.slane %v7970, 4
        %v7972 = vadd.f32 %v7970, %v7971
        %v7973 = vrot.slane %v7972, 2
        %v7974 = vadd.f32 %v7972, %v7973
        %v7975 = vrot.slane %v7974, 1
        %v7976 = vadd.f32 %v7974, %v7975
        %v7977 = vrcp.pop 32.0
        %v7978 = vmul.f32 %v7967, %v7977
        %v7979 = vmul.f32 %v7976, %v7977
        %v7980 = vsub.f32 %v7951, %v7978
        %v7981 = vsub.f32 %v7952, %v7979
        %v7982 = vsub.f32 %v7953, %v7978
        %v7983 = vsub.f32 %v7954, %v7979
        %v7984 = vsub.f32 %v7955, %v7978
        %v7985 = vsub.f32 %v7956, %v7979
        %v7986 = vsub.f32 %v7957, %v7978
        %v7987 = vsub.f32 %v7958, %v7979
        %v7988 = vmul.f32 %v7980, %v7980
        %v7989 = vmul.f32 %v7981, %v7981
        %v7990 = vmul.f32 %v7982, %v7982
        %v7991 = vmul.f32 %v7983, %v7983
        %v7992 = vmul.f32 %v7984, %v7984
        %v7993 = vmul.f32 %v7985, %v7985
        %v7994 = vmul.f32 %v7986, %v7986
        %v7995 = vmul.f32 %v7987, %v7987
        %v7996 = vadd.f32 %v7988, %v7990
        %v7997 = vadd.f32 %v7996, %v7992
        %v7998 = vadd.f32 %v7997, %v7994
        %v7999 = vrot.slane %v7998, 4
        %v8000 = vadd.f32 %v7998, %v7999
        %v8001 = vrot.slane %v8000, 2
        %v8002 = vadd.f32 %v8000, %v8001
        %v8003 = vrot.slane %v8002, 1
        %v8004 = vadd.f32 %v8002, %v8003
        %v8005 = vadd.f32 %v7989, %v7991
        %v8006 = vadd.f32 %v8005, %v7993
        %v8007 = vadd.f32 %v8006, %v7995
        %v8008 = vrot.slane %v8007, 4
        %v8009 = vadd.f32 %v8007, %v8008
        %v8010 = vrot.slane %v8009, 2
        %v8011 = vadd.f32 %v8009, %v8010
        %v8012 = vrot.slane %v8011, 1
        %v8013 = vadd.f32 %v8011, %v8012
        %v8014 = vmul.f32 %v8004, %v7977
        %v8015 = vmul.f32 %v8013, %v7977
        %v8016 = vadd.f32 %v8014, 1e-06
        %v8017 = vadd.f32 %v8015, 1e-06
        %v8018 = vrsqrt.pop %v8016
        %v8019 = vrsqrt.pop %v8017
        %v8020 = vmul.f32 %v7980, %v8018
        %v8021 = vmul.f32 %v7981, %v8019
        %v8022 = vmul.f32 %v7982, %v8018
        %v8023 = vmul.f32 %v7983, %v8019
        %v8024 = vmul.f32 %v7984, %v8018
        %v8025 = vmul.f32 %v7985, %v8019
        %v8026 = vmul.f32 %v7986, %v8018
        %v8027 = vmul.f32 %v7987, %v8019
        %v8028 = vld [vmem:[%s5] sm:$0xff]
        %v8029 = vld [vmem:[%s5 + $0x8] sm:$0xff]
        %v8030 = vld [vmem:[%s5 + $0x10] sm:$0xff]
        %v8031 = vld [vmem:[%s5 + $0x18] sm:$0xff]
        %8033 = vset.pattern.permute.xlu0 0
        %8034 = vperm.xlu0 %8033, %v8028
        %v8035 = vpop.permute.xlu0 %8034
        %8038 = vset.pattern.permute.xlu0 0
        %8039 = vperm.xlu0 %8038, %v8029
        %v8040 = vpop.permute.xlu0 %8039
        %8043 = vset.pattern.permute.xlu0 0
        %8044 = vperm.xlu0 %8043, %v8030
        %v8045 = vpop.permute.xlu0 %8044
        %8048 = vset.pattern.permute.xlu0 0
        %8049 = vperm.xlu0 %8048, %v8031
        %v8050 = vpop.permute.xlu0 %8049
        %v8052 = vmul.f32 %v8020, %v8035
        %v8053 = vmul.f32 %v8021, %v8035
        %v8054 = vmul.f32 %v8022, %v8040
        %v8055 = vmul.f32 %v8023, %v8040
        %v8056 = vmul.f32 %v8024, %v8045
        %v8057 = vmul.f32 %v8025, %v8045
        %v8058 = vmul.f32 %v8026, %v8050
        %v8059 = vmul.f32 %v8027, %v8050
        %v8060 = vld [vmem:[%s6] sm:$0xff]
        %v8061 = vld [vmem:[%s6 + $0x8] sm:$0xff]
        %v8062 = vld [vmem:[%s6 + $0x10] sm:$0xff]
        %v8063 = vld [vmem:[%s6 + $0x18] sm:$0xff]
        %8065 = vset.pattern.permute.xlu0 0
        %8066 = vperm.xlu0 %8065, %v8060
        %v8067 = vpop.permute.xlu0 %8066
        %8070 = vset.pattern.permute.xlu0 0
        %8071 = vperm.xlu0 %8070, %v8061
        %v8072 = vpop.permute.xlu0 %8071
        %8075 = vset.pattern.permute.xlu0 0
        %8076 = vperm.xlu0 %8075, %v8062
        %v8077 = vpop.permute.xlu0 %8076
        %8080 = vset.pattern.permute.xlu0 0
        %8081 = vperm.xlu0 %8080, %v8063
        %v8082 = vpop.permute.xlu0 %8081
        %v8084 = vadd.f32 %v8052, %v8067
        %v8085 = vadd.f32 %v8053, %v8067
        %v8086 = vadd.f32 %v8054, %v8072
        %v8087 = vadd.f32 %v8055, %v8072
        %v8088 = vadd.f32 %v8056, %v8077
        %v8089 = vadd.f32 %v8057, %v8077
        %v8090 = vadd.f32 %v8058, %v8082
        %v8091 = vadd.f32 %v8059, %v8082
        %v8092 = vld [vmem:[%s7] sm:$0xff]
        %v8093 = vld [vmem:[%s7 + $0x8] sm:$0xff]
        %v8094 = vld [vmem:[%s7 + $0x10] sm:$0xff]
        %v8095 = vld [vmem:[%s7 + $0x18] sm:$0xff]
        %v8096 = vld [vmem:[%s7 + $0x20] sm:$0xff]
        %v8097 = vld [vmem:[%s7 + $0x28] sm:$0xff]
        %v8098 = vld [vmem:[%s7 + $0x30] sm:$0xff]
        %v8099 = vld [vmem:[%s7 + $0x38] sm:$0xff]
        %v8100 = vld [vmem:[%s7 + $0x40] sm:$0xff]
        %v8101 = vld [vmem:[%s7 + $0x48] sm:$0xff]
        %v8102 = vld [vmem:[%s7 + $0x50] sm:$0xff]
        %v8103 = vld [vmem:[%s7 + $0x58] sm:$0xff]
        %v8104 = vld [vmem:[%s7 + $0x60] sm:$0xff]
        %v8105 = vld [vmem:[%s7 + $0x68] sm:$0xff]
        %v8106 = vld [vmem:[%s7 + $0x70] sm:$0xff]
        %v8107 = vld [vmem:[%s7 + $0x78] sm:$0xff]
        %v8108 = vld [vmem:[%s8] sm:$0xff]
        %v8109 = vld [vmem:[%s8 + $0x8] sm:$0xff]
        %v8110 = vld [vmem:[%s8 + $0x10] sm:$0xff]
        %v8111 = vld [vmem:[%s8 + $0x18] sm:$0xff]
        %v8112 = vld [vmem:[%s8 + $0x20] sm:$0xff]
        %v8113 = vld [vmem:[%s8 + $0x28] sm:$0xff]
        %v8114 = vld [vmem:[%s8 + $0x30] sm:$0xff]
        %v8115 = vld [vmem:[%s8 + $0x38] sm:$0xff]
        %v8116 = vld [vmem:[%s8 + $0x40] sm:$0xff]
        %v8117 = vld [vmem:[%s8 + $0x48] sm:$0xff]
        %v8118 = vld [vmem:[%s8 + $0x50] sm:$0xff]
        %v8119 = vld [vmem:[%s8 + $0x58] sm:$0xff]
        %v8120 = vld [vmem:[%s8 + $0x60] sm:$0xff]
        %v8121 = vld [vmem:[%s8 + $0x68] sm:$0xff]
        %v8122 = vld [vmem:[%s8 + $0x70] sm:$0xff]
        %v8123 = vld [vmem:[%s8 + $0x78] sm:$0xff]
        %8125 = vset.pattern.permute.xlu0 0
        %8126 = vperm.xlu0 %8125, %v8108
        %v8127 = vpop.permute.xlu0 %8126
        %8130 = vset.pattern.permute.xlu0 0
        %8131 = vperm.xlu0 %8130, %v8109
        %v8132 = vpop.permute.xlu0 %8131
        %8135 = vset.pattern.permute.xlu0 0
        %8136 = vperm.xlu0 %8135, %v8110
        %v8137 = vpop.permute.xlu0 %8136
        %8140 = vset.pattern.permute.xlu0 0
        %8141 = vperm.xlu0 %8140, %v8111
        %v8142 = vpop.permute.xlu0 %8141
        %8145 = vset.pattern.permute.xlu0 0
        %8146 = vperm.xlu0 %8145, %v8112
        %v8147 = vpop.permute.xlu0 %8146
        %8150 = vset.pattern.permute.xlu0 0
        %8151 = vperm.xlu0 %8150, %v8113
        %v8152 = vpop.permute.xlu0 %8151
        %8155 = vset.pattern.permute.xlu0 0
        %8156 = vperm.xlu0 %8155, %v8114
        %v8157 = vpop.permute.xlu0 %8156
        %8160 = vset.pattern.permute.xlu0 0
        %8161 = vperm.xlu0 %8160, %v8115
        %v8162 = vpop.permute.xlu0 %8161
        %8165 = vset.pattern.permute.xlu0 0
        %8166 = vperm.xlu0 %8165, %v8116
        %v8167 = vpop.permute.xlu0 %8166
        %8170 = vset.pattern.permute.xlu0 0
        %8171 = vperm.xlu0 %8170, %v8117
        %v8172 = vpop.permute.xlu0 %8171
        %8175 = vset.pattern.permute.xlu0 0
        %8176 = vperm.xlu0 %8175, %v8118
        %v8177 = vpop.permute.xlu0 %8176
        %8180 = vset.pattern.permute.xlu0 0
        %8181 = vperm.xlu0 %8180, %v8119
        %v8182 = vpop.permute.xlu0 %8181
        %8185 = vset.pattern.permute.xlu0 0
        %8186 = vperm.xlu0 %8185, %v8120
        %v8187 = vpop.permute.xlu0 %8186
        %8190 = vset.pattern.permute.xlu0 0
        %8191 = vperm.xlu0 %8190, %v8121
        %v8192 = vpop.permute.xlu0 %8191
        %8195 = vset.pattern.permute.xlu0 0
        %8196 = vperm.xlu0 %8195, %v8122
        %v8197 = vpop.permute.xlu0 %8196
        %8200 = vset.pattern.permute.xlu0 0
        %8201 = vperm.xlu0 %8200, %v8123
        %v8202 = vpop.permute.xlu0 %8201
        %vm8204 = vcmask 261120
        %v8206 = vsel %vm8204, %v8092, 0
        %v8209 = vsel %vm8204, %v8093, 0
        %v8212 = vsel %vm8204, %v8094, 0
        %v8215 = vsel %vm8204, %v8095, 0
        %v8218 = vsel %vm8204, %v8096, 0
        %v8221 = vsel %vm8204, %v8097, 0
        %v8224 = vsel %vm8204, %v8098, 0
        %v8227 = vsel %vm8204, %v8099, 0
        %v8230 = vsel %vm8204, %v8100, 0
        %v8233 = vsel %vm8204, %v8101, 0
        %v8236 = vsel %vm8204, %v8102, 0
        %v8239 = vsel %vm8204, %v8103, 0
        %v8242 = vsel %vm8204, %v8104, 0
        %v8245 = vsel %vm8204, %v8105, 0
        %v8248 = vsel %vm8204, %v8106, 0
        %v8251 = vsel %vm8204, %v8107, 0
        %8253 = vmatprep.subr.mxu0 %v8085
        %8254 = vmatpush1.msra.mxu0 %v8084
        %8255 = vmatprep.subr.mxu0 %v8087
        %8256 = vmatpush1.msra.mxu0 %v8086
        %8257 = vmatprep.subr.mxu0 %v8089
        %8258 = vmatpush1.msra.mxu0 %v8088
        %8259 = vmatprep.subr.mxu0 %v8091
        %8260 = vmatpush1.msra.mxu0 %v8090
        %8261 = vmatprep.subr.mxu0 0.0
        %8262 = vmatpush1.msra.mxu0 0.0
        %8263 = vmatprep.subr.mxu0 0.0
        %8264 = vmatpush1.msra.mxu0 0.0
        %8265 = vmatprep.subr.mxu0 0.0
        %8266 = vmatpush1.msra.mxu0 0.0
        %8267 = vmatprep.subr.mxu0 0.0
        %8268 = vmatpush1.msra.mxu0 0.0
        %8269 = vmatprep.subr.mxu0 0.0
        %8270 = vmatpush1.msra.mxu0 0.0
        %8271 = vmatprep.subr.mxu0 0.0
        %8272 = vmatpush1.msra.mxu0 0.0
        %8273 = vmatprep.subr.mxu0 0.0
        %8274 = vmatpush1.msra.mxu0 0.0
        %8275 = vmatprep.subr.mxu0 0.0
        %8276 = vmatpush1.msra.mxu0 0.0
        %8277 = vmatprep.subr.mxu0 0.0
        %8278 = vmatpush1.msra.mxu0 0.0
        %8279 = vmatprep.subr.mxu0 0.0
        %8280 = vmatpush1.msra.mxu0 0.0
        %8281 = vmatprep.subr.mxu0 0.0
        %8282 = vmatpush1.msra.mxu0 0.0
        %8283 = vmatprep.subr.mxu0 0.0
        %8284 = vmatpush1.msra.mxu0 0.0
        %8285 = vmatprep.subr.mxu0 0.0
        %8286 = vmatpush1.msra.mxu0 0.0
        %8287 = vmatprep.subr.mxu0 0.0
        %8288 = vmatpush1.msra.mxu0 0.0
        %8289 = vmatprep.subr.mxu0 0.0
        %8290 = vmatpush1.msra.mxu0 0.0
        %8291 = vmatprep.subr.mxu0 0.0
        %8292 = vmatpush1.msra.mxu0 0.0
        %8293 = vmatprep.subr.mxu0 0.0
        %8294 = vmatpush1.msra.mxu0 0.0
        %8295 = vmatprep.subr.mxu0 0.0
        %8296 = vmatpush1.msra.mxu0 0.0
        %8297 = vmatprep.subr.mxu0 0.0
        %8298 = vmatpush1.msra.mxu0 0.0
        %8299 = vmatprep.subr.mxu0 0.0
        %8300 = vmatpush1.msra.mxu0 0.0
        %8301 = vmatprep.subr.mxu0 0.0
        %8302 = vmatpush1.msra.mxu0 0.0
        %8303 = vmatprep.subr.mxu0 0.0
        %8304 = vmatpush1.msra.mxu0 0.0
        %8305 = vmatprep.subr.mxu0 0.0
        %8306 = vmatpush1.msra.mxu0 0.0
        %8307 = vmatprep.subr.mxu0 0.0
        %8308 = vmatpush1.msra.mxu0 0.0
        %8309 = vmatprep.subr.mxu0 0.0
        %8310 = vmatpush1.msra.mxu0 0.0
        %8311 = vmatprep.subr.mxu0 0.0
        %8312 = vmatpush1.msra.mxu0 0.0
        %8313 = vmatprep.subr.mxu0 0.0
        %8314 = vmatpush1.msra.mxu0 0.0
        %8315 = vmatprep.subr.mxu0 0.0
        %8316 = vmatpush1.msra.mxu0 0.0
        %8317 = vmatprep.mubr.f32.mxu0 0.0
        %8318 = vmatmul.mubr.f32.gmra.mrb[0].mxu0 %v8206
        %v8319 = vpop.f32.mrb[0].mxu0
        %v8320 = vadd.f32 %v8127, %v8319
        %v8321 = vpop.f32.mrb[0].mxu0
        %v8322 = vadd.f32 %v8127, %v8321
        %8323 = vmatprep.mubr.f32.mxu0 0.0
        %8324 = vmatmul.mubr.f32.gmra.mrb[0].mxu0 %v8209
        %v8325 = vpop.f32.mrb[0].mxu0
        %v8326 = vadd.f32 %v8132, %v8325
        %v8327 = vpop.f32.mrb[0].mxu0
        %v8328 = vadd.f32 %v8132, %v8327
        %8329 = vmatprep.mubr.f32.mxu0 0.0
        %8330 = vmatmul.mubr.f32.gmra.mrb[0].mxu0 %v8212
        %v8331 = vpop.f32.mrb[0].mxu0
        %v8332 = vadd.f32 %v8137, %v8331
        %v8333 = vpop.f32.mrb[0].mxu0
        %v8334 = vadd.f32 %v8137, %v8333
        %8335 = vmatprep.mubr.f32.mxu0 0.0
        %8336 = vmatmul.mubr.f32.gmra.mrb[0].mxu0 %v8215
        %v8337 = vpop.f32.mrb[0].mxu0
        %v8338 = vadd.f32 %v8142, %v8337
        %v8339 = vpop.f32.mrb[0].mxu0
        %v8340 = vadd.f32 %v8142, %v8339
        %8341 = vmatprep.mubr.f32.mxu0 0.0
        %8342 = vmatmul.mubr.f32.gmra.mrb[0].mxu0 %v8218
        %v8343 = vpop.f32.mrb[0].mxu0
        %v8344 = vadd.f32 %v8147, %v8343
        %v8345 = vpop.f32.mrb[0].mxu0
        %v8346 = vadd.f32 %v8147, %v8345
        %8347 = vmatprep.mubr.f32.mxu0 0.0
        %8348 = vmatmul.mubr.f32.gmra.mrb[0].mxu0 %v8221
        %v8349 = vpop.f32.mrb[0].mxu0
        %v8350 = vadd.f32 %v8152, %v8349
        %v8351 = vpop.f32.mrb[0].mxu0
        %v8352 = vadd.f32 %v8152, %v8351
        %8353 = vmatprep.mubr.f32.mxu0 0.0
        %8354 = vmatmul.mubr.f32.gmra.mrb[0].mxu0 %v8224
        %v8355 = vpop.f32.mrb[0].mxu0
        %v8356 = vadd.f32 %v8157, %v8355
        %v8357 = vpop.f32.mrb[0].mxu0
        %v8358 = vadd.f32 %v8157, %v8357
        %8359 = vmatprep.mubr.f32.mxu0 0.0
        %8360 = vmatmul.mubr.f32.gmra.mrb[0].mxu0 %v8227
        %v8361 = vpop.f32.mrb[0].mxu0
        %v8362 = vadd.f32 %v8162, %v8361
        %v8363 = vpop.f32.mrb[0].mxu0
        %v8364 = vadd.f32 %v8162, %v8363
        %8365 = vmatprep.mubr.f32.mxu0 0.0
        %8366 = vmatmul.mubr.f32.gmra.mrb[0].mxu0 %v8230
        %v8367 = vpop.f32.mrb[0].mxu0
        %v8368 = vadd.f32 %v8167, %v8367
        %v8369 = vpop.f32.mrb[0].mxu0
        %v8370 = vadd.f32 %v8167, %v8369
        %8371 = vmatprep.mubr.f32.mxu0 0.0
        %8372 = vmatmul.mubr.f32.gmra.mrb[0].mxu0 %v8233
        %v8373 = vpop.f32.mrb[0].mxu0
        %v8374 = vadd.f32 %v8172, %v8373
        %v8375 = vpop.f32.mrb[0].mxu0
        %v8376 = vadd.f32 %v8172, %v8375
        %8377 = vmatprep.mubr.f32.mxu0 0.0
        %8378 = vmatmul.mubr.f32.gmra.mrb[0].mxu0 %v8236
        %v8379 = vpop.f32.mrb[0].mxu0
        %v8380 = vadd.f32 %v8177, %v8379
        %v8381 = vpop.f32.mrb[0].mxu0
        %v8382 = vadd.f32 %v8177, %v8381
        %8383 = vmatprep.mubr.f32.mxu0 0.0
        %8384 = vmatmul.mubr.f32.gmra.mrb[0].mxu0 %v8239
        %v8385 = vpop.f32.mrb[0].mxu0
        %v8386 = vadd.f32 %v8182, %v8385
        %v8387 = vpop.f32.mrb[0].mxu0
        %v8388 = vadd.f32 %v8182, %v8387
        %8389 = vmatprep.mubr.f32.mxu0 0.0
        %8390 = vmatmul.mubr.f32.gmra.mrb[0].mxu0 %v8242
        %v8391 = vpop.f32.mrb[0].mxu0
        %v8392 = vadd.f32 %v8187, %v8391
        %v8393 = vpop.f32.mrb[0].mxu0
        %v8394 = vadd.f32 %v8187, %v8393
        %8395 = vmatprep.mubr.f32.mxu0 0.0
        %8396 = vmatmul.mubr.f32.gmra.mrb[0].mxu0 %v8245
        %v8397 = vpop.f32.mrb[0].mxu0
        %v8398 = vadd.f32 %v8192, %v8397
        %v8399 = vpop.f32.mrb[0].mxu0
        %v8400 = vadd.f32 %v8192, %v8399
        %8401 = vmatprep.mubr.f32.mxu0 0.0
        %8402 = vmatmul.mubr.f32.gmra.mrb[0].mxu0 %v8248
        %v8403 = vpop.f32.mrb[0].mxu0
        %v8404 = vadd.f32 %v8197, %v8403
        %v8405 = vpop.f32.mrb[0].mxu0
        %v8406 = vadd.f32 %v8197, %v8405
        %8407 = vmatprep.mubr.f32.mxu0 0.0
        %8408 = vmatmul.mubr.f32.gmra.mrb[0].mxu0 %v8251
        %v8409 = vpop.f32.mrb[0].mxu0
        %v8410 = vadd.f32 %v8202, %v8409
        %v8411 = vpop.f32.mrb[0].mxu0
        %v8412 = vadd.f32 %v8202, %v8411
        %8413 = vdwg.mxu0
        %v8414 = vmul.f32 %v8320, 0.5
        %v8415 = vmul.f32 %v8322, 0.5
        %v8416 = vmul.f32 %v8326, 0.5
        %v8417 = vmul.f32 %v8328, 0.5
        %v8418 = vmul.f32 %v8332, 0.5
        %v8419 = vmul.f32 %v8334, 0.5
        %v8420 = vmul.f32 %v8338, 0.5
        %v8421 = vmul.f32 %v8340, 0.5
        %v8422 = vmul.f32 %v8344, 0.5
        %v8423 = vmul.f32 %v8346, 0.5
        %v8424 = vmul.f32 %v8350, 0.5
        %v8425 = vmul.f32 %v8352, 0.5
        %v8426 = vmul.f32 %v8356, 0.5
        %v8427 = vmul.f32 %v8358, 0.5
        %v8428 = vmul.f32 %v8362, 0.5
        %v8429 = vmul.f32 %v8364, 0.5
        %v8430 = vmul.f32 %v8368, 0.5
        %v8431 = vmul.f32 %v8370, 0.5
        %v8432 = vmul.f32 %v8374, 0.5
        %v8433 = vmul.f32 %v8376, 0.5
        %v8434 = vmul.f32 %v8380, 0.5
        %v8435 = vmul.f32 %v8382, 0.5
        %v8436 = vmul.f32 %v8386, 0.5
        %v8437 = vmul.f32 %v8388, 0.5
        %v8438 = vmul.f32 %v8392, 0.5
        %v8439 = vmul.f32 %v8394, 0.5
        %v8440 = vmul.f32 %v8398, 0.5
        %v8441 = vmul.f32 %v8400, 0.5
        %v8442 = vmul.f32 %v8404, 0.5
        %v8443 = vmul.f32 %v8406, 0.5
        %v8444 = vmul.f32 %v8410, 0.5
        %v8445 = vmul.f32 %v8412, 0.5
        %v8446 = vmul.f32 %v8320, 0.70710677
        %v8447 = vmul.f32 %v8322, 0.70710677
        %v8448 = vmul.f32 %v8326, 0.70710677
        %v8449 = vmul.f32 %v8328, 0.70710677
        %v8450 = vmul.f32 %v8332, 0.70710677
        %v8451 = vmul.f32 %v8334, 0.70710677
        %v8452 = vmul.f32 %v8338, 0.70710677
        %v8453 = vmul.f32 %v8340, 0.70710677
        %v8454 = vmul.f32 %v8344, 0.70710677
        %v8455 = vmul.f32 %v8346, 0.70710677
        %v8456 = vmul.f32 %v8350, 0.70710677
        %v8457 = vmul.f32 %v8352, 0.70710677
        %v8458 = vmul.f32 %v8356, 0.70710677
        %v8459 = vmul.f32 %v8358, 0.70710677
        %v8460 = vmul.f32 %v8362, 0.70710677
        %v8461 = vmul.f32 %v8364, 0.70710677
        %v8462 = vmul.f32 %v8368, 0.70710677
        %v8463 = vmul.f32 %v8370, 0.70710677
        %v8464 = vmul.f32 %v8374, 0.70710677
        %v8465 = vmul.f32 %v8376, 0.70710677
        %v8466 = vmul.f32 %v8380, 0.70710677
        %v8467 = vmul.f32 %v8382, 0.70710677
        %v8468 = vmul.f32 %v8386, 0.70710677
        %v8469 = vmul.f32 %v8388, 0.70710677
        %v8470 = vmul.f32 %v8392, 0.70710677
        %v8471 = vmul.f32 %v8394, 0.70710677
        %v8472 = vmul.f32 %v8398, 0.70710677
        %v8473 = vmul.f32 %v8400, 0.70710677
        %v8474 = vmul.f32 %v8404, 0.70710677
        %v8475 = vmul.f32 %v8406, 0.70710677
        %v8476 = vmul.f32 %v8410, 0.70710677
        %v8477 = vmul.f32 %v8412, 0.70710677
        %v8478 = verf.f32.pop %v8446
        %v8479 = verf.f32.pop %v8447
        %v8480 = verf.f32.pop %v8448
        %v8481 = verf.f32.pop %v8449
        %v8482 = verf.f32.pop %v8450
        %v8483 = verf.f32.pop %v8451
        %v8484 = verf.f32.pop %v8452
        %v8485 = verf.f32.pop %v8453
        %v8486 = verf.f32.pop %v8454
        %v8487 = verf.f32.pop %v8455
        %v8488 = verf.f32.pop %v8456
        %v8489 = verf.f32.pop %v8457
        %v8490 = verf.f32.pop %v8458
        %v8491 = verf.f32.pop %v8459
        %v8492 = verf.f32.pop %v8460
        %v8493 = verf.f32.pop %v8461
        %v8494 = verf.f32.pop %v8462
        %v8495 = verf.f32.pop %v8463
        %v8496 = verf.f32.pop %v8464
        %v8497 = verf.f32.pop %v8465
        %v8498 = verf.f32.pop %v8466
        %v8499 = verf.f32.pop %v8467
        %v8500 = verf.f32.pop %v8468
        %v8501 = verf.f32.pop %v8469
        %v8502 = verf.f32.pop %v8470
        %v8503 = verf.f32.pop %v8471
        %v8504 = verf.f32.pop %v8472
        %v8505 = verf.f32.pop %v8473
        %v8506 = verf.f32.pop %v8474
        %v8507 = verf.f32.pop %v8475
        %v8508 = verf.f32.pop %v8476
        %v8509 = verf.f32.pop %v8477
        %v8510 = vadd.f32 %v8478, 1.0
        %v8511 = vadd.f32 %v8479, 1.0
        %v8512 = vadd.f32 %v8480, 1.0
        %v8513 = vadd.f32 %v8481, 1.0
        %v8514 = vadd.f32 %v8482, 1.0
        %v8515 = vadd.f32 %v8483, 1.0
        %v8516 = vadd.f32 %v8484, 1.0
        %v8517 = vadd.f32 %v8485, 1.0
        %v8518 = vadd.f32 %v8486, 1.0
        %v8519 = vadd.f32 %v8487, 1.0
        %v8520 = vadd.f32 %v8488, 1.0
        %v8521 = vadd.f32 %v8489, 1.0
        %v8522 = vadd.f32 %v8490, 1.0
        %v8523 = vadd.f32 %v8491, 1.0
        %v8524 = vadd.f32 %v8492, 1.0
        %v8525 = vadd.f32 %v8493, 1.0
        %v8526 = vadd.f32 %v8494, 1.0
        %v8527 = vadd.f32 %v8495, 1.0
        %v8528 = vadd.f32 %v8496, 1.0
        %v8529 = vadd.f32 %v8497, 1.0
        %v8530 = vadd.f32 %v8498, 1.0
        %v8531 = vadd.f32 %v8499, 1.0
        %v8532 = vadd.f32 %v8500, 1.0
        %v8533 = vadd.f32 %v8501, 1.0
        %v8534 = vadd.f32 %v8502, 1.0
        %v8535 = vadd.f32 %v8503, 1.0
        %v8536 = vadd.f32 %v8504, 1.0
        %v8537 = vadd.f32 %v8505, 1.0
        %v8538 = vadd.f32 %v8506, 1.0
        %v8539 = vadd.f32 %v8507, 1.0
        %v8540 = vadd.f32 %v8508, 1.0
        %v8541 = vadd.f32 %v8509, 1.0
        %v8542 = vmul.f32 %v8414, %v8510
        %v8543 = vmul.f32 %v8415, %v8511
        %v8544 = vmul.f32 %v8416, %v8512
        %v8545 = vmul.f32 %v8417, %v8513
        %v8546 = vmul.f32 %v8418, %v8514
        %v8547 = vmul.f32 %v8419, %v8515
        %v8548 = vmul.f32 %v8420, %v8516
        %v8549 = vmul.f32 %v8421, %v8517
        %v8550 = vmul.f32 %v8422, %v8518
        %v8551 = vmul.f32 %v8423, %v8519
        %v8552 = vmul.f32 %v8424, %v8520
        %v8553 = vmul.f32 %v8425, %v8521
        %v8554 = vmul.f32 %v8426, %v8522
        %v8555 = vmul.f32 %v8427, %v8523
        %v8556 = vmul.f32 %v8428, %v8524
        %v8557 = vmul.f32 %v8429, %v8525
        %v8558 = vmul.f32 %v8430, %v8526
        %v8559 = vmul.f32 %v8431, %v8527
        %v8560 = vmul.f32 %v8432, %v8528
        %v8561 = vmul.f32 %v8433, %v8529
        %v8562 = vmul.f32 %v8434, %v8530
        %v8563 = vmul.f32 %v8435, %v8531
        %v8564 = vmul.f32 %v8436, %v8532
        %v8565 = vmul.f32 %v8437, %v8533
        %v8566 = vmul.f32 %v8438, %v8534
        %v8567 = vmul.f32 %v8439, %v8535
        %v8568 = vmul.f32 %v8440, %v8536
        %v8569 = vmul.f32 %v8441, %v8537
        %v8570 = vmul.f32 %v8442, %v8538
        %v8571 = vmul.f32 %v8443, %v8539
        %v8572 = vmul.f32 %v8444, %v8540
        %v8573 = vmul.f32 %v8445, %v8541
        %v8574 = vld [vmem:[%s9] sm:$0xff]
        %v8575 = vld [vmem:[%s9 + $0x8] sm:$0xff]
        %v8576 = vld [vmem:[%s9 + $0x10] sm:$0xff]
        %v8577 = vld [vmem:[%s9 + $0x18] sm:$0xff]
        %v8578 = vld [vmem:[%s10] sm:$0xff]
        %v8579 = vld [vmem:[%s10 + $0x8] sm:$0xff]
        %v8580 = vld [vmem:[%s10 + $0x10] sm:$0xff]
        %v8581 = vld [vmem:[%s10 + $0x18] sm:$0xff]
        %8583 = vset.pattern.permute.xlu0 0
        %8584 = vperm.xlu0 %8583, %v8578
        %v8585 = vpop.permute.xlu0 %8584
        %8588 = vset.pattern.permute.xlu0 0
        %8589 = vperm.xlu0 %8588, %v8579
        %v8590 = vpop.permute.xlu0 %8589
        %8593 = vset.pattern.permute.xlu0 0
        %8594 = vperm.xlu0 %8593, %v8580
        %v8595 = vpop.permute.xlu0 %8594
        %8598 = vset.pattern.permute.xlu0 0
        %8599 = vperm.xlu0 %8598, %v8581
        %v8600 = vpop.permute.xlu0 %8599
        %8602 = vmatprep.subr.mxu0 %v8543
        %8603 = vmatpush1.msra.mxu0 %v8542
        %8604 = vmatprep.subr.mxu0 %v8545
        %8605 = vmatpush1.msra.mxu0 %v8544
        %8606 = vmatprep.subr.mxu0 %v8547
        %8607 = vmatpush1.msra.mxu0 %v8546
        %8608 = vmatprep.subr.mxu0 %v8549
        %8609 = vmatpush1.msra.mxu0 %v8548
        %8610 = vmatprep.subr.mxu0 %v8551
        %8611 = vmatpush1.msra.mxu0 %v8550
        %8612 = vmatprep.subr.mxu0 %v8553
        %8613 = vmatpush1.msra.mxu0 %v8552
        %8614 = vmatprep.subr.mxu0 %v8555
        %8615 = vmatpush1.msra.mxu0 %v8554
        %8616 = vmatprep.subr.mxu0 %v8557
        %8617 = vmatpush1.msra.mxu0 %v8556
        %8618 = vmatprep.subr.mxu0 %v8559
        %8619 = vmatpush1.msra.mxu0 %v8558
        %8620 = vmatprep.subr.mxu0 %v8561
        %8621 = vmatpush1.msra.mxu0 %v8560
        %8622 = vmatprep.subr.mxu0 %v8563
        %8623 = vmatpush1.msra.mxu0 %v8562
        %8624 = vmatprep.subr.mxu0 %v8565
        %8625 = vmatpush1.msra.mxu0 %v8564
        %8626 = vmatprep.subr.mxu0 %v8567
        %8627 = vmatpush1.msra.mxu0 %v8566
        %8628 = vmatprep.subr.mxu0 %v8569
        %8629 = vmatpush1.msra.mxu0 %v8568
        %8630 = vmatprep.subr.mxu0 %v8571
        %8631 = vmatpush1.msra.mxu0 %v8570
        %8632 = vmatprep.subr.mxu0 %v8573
        %8633 = vmatpush1.msra.mxu0 %v8572
        %8634 = vmatprep.subr.mxu0 0.0
        %8635 = vmatpush1.msra.mxu0 0.0
        %8636 = vmatprep.subr.mxu0 0.0
        %8637 = vmatpush1.msra.mxu0 0.0
        %8638 = vmatprep.subr.mxu0 0.0
        %8639 = vmatpush1.msra.mxu0 0.0
        %8640 = vmatprep.subr.mxu0 0.0
        %8641 = vmatpush1.msra.mxu0 0.0
        %8642 = vmatprep.subr.mxu0 0.0
        %8643 = vmatpush1.msra.mxu0 0.0
        %8644 = vmatprep.subr.mxu0 0.0
        %8645 = vmatpush1.msra.mxu0 0.0
        %8646 = vmatprep.subr.mxu0 0.0
        %8647 = vmatpush1.msra.mxu0 0.0
        %8648 = vmatprep.subr.mxu0 0.0
        %8649 = vmatpush1.msra.mxu0 0.0
        %8650 = vmatprep.subr.mxu0 0.0
        %8651 = vmatpush1.msra.mxu0 0.0
        %8652 = vmatprep.subr.mxu0 0.0
        %8653 = vmatpush1.msra.mxu0 0.0
        %8654 = vmatprep.subr.mxu0 0.0
        %8655 = vmatpush1.msra.mxu0 0.0
        %8656 = vmatprep.subr.mxu0 0.0
        %8657 = vmatpush1.msra.mxu0 0.0
        %8658 = vmatprep.subr.mxu0 0.0
        %8659 = vmatpush1.msra.mxu0 0.0
        %8660 = vmatprep.subr.mxu0 0.0
        %8661 = vmatpush1.msra.mxu0 0.0
        %8662 = vmatprep.subr.mxu0 0.0
        %8663 = vmatpush1.msra.mxu0 0.0
        %8664 = vmatprep.subr.mxu0 0.0
        %8665 = vmatpush1.msra.mxu0 0.0
        %8666 = vmatprep.mubr.f32.mxu0 0.0
        %8667 = vmatmul.mubr.f32.gmra.mrb[0].mxu0 %v8574
        %v8668 = vpop.f32.mrb[0].mxu0
        %v8669 = vadd.f32 %v8585, %v8668
        %v8670 = vpop.f32.mrb[0].mxu0
        %v8671 = vadd.f32 %v8585, %v8670
        %8672 = vmatprep.mubr.f32.mxu0 0.0
        %8673 = vmatmul.mubr.f32.gmra.mrb[0].mxu0 %v8575
        %v8674 = vpop.f32.mrb[0].mxu0
        %v8675 = vadd.f32 %v8590, %v8674
        %v8676 = vpop.f32.mrb[0].mxu0
        %v8677 = vadd.f32 %v8590, %v8676
        %8678 = vmatprep.mubr.f32.mxu0 0.0
        %8679 = vmatmul.mubr.f32.gmra.mrb[0].mxu0 %v8576
        %v8680 = vpop.f32.mrb[0].mxu0
        %v8681 = vadd.f32 %v8595, %v8680
        %v8682 = vpop.f32.mrb[0].mxu0
        %v8683 = vadd.f32 %v8595, %v8682
        %8684 = vmatprep.mubr.f32.mxu0 0.0
        %8685 = vmatmul.mubr.f32.gmra.mrb[0].mxu0 %v8577
        %v8686 = vpop.f32.mrb[0].mxu0
        %v8687 = vadd.f32 %v8600, %v8686
        %v8688 = vpop.f32.mrb[0].mxu0
        %v8689 = vadd.f32 %v8600, %v8688
        %8690 = vdwg.mxu0
        %v8691 = vadd.f32 %v412, %v8669
        %v8692 = vadd.f32 %v413, %v8671
        %v8693 = vadd.f32 %v414, %v8675
        %v8694 = vadd.f32 %v415, %v8677
        %v8695 = vadd.f32 %v416, %v8681
        %v8696 = vadd.f32 %v417, %v8683
        %v8697 = vadd.f32 %v418, %v8687
        %v8698 = vadd.f32 %v419, %v8689
        %8699 = vst [vmem:[%s406] sm:$0xff] %v8691
        %8700 = vst [vmem:[%s406 + $0x8] sm:$0xff] %v8692
        %8701 = vst [vmem:[%s406 + $0x10] sm:$0xff] %v8693
        %8702 = vst [vmem:[%s406 + $0x18] sm:$0xff] %v8694
        %8703 = vst [vmem:[%s406 + $0x20] sm:$0xff] %v8695
        %8704 = vst [vmem:[%s406 + $0x28] sm:$0xff] %v8696
        %8705 = vst [vmem:[%s406 + $0x30] sm:$0xff] %v8697
        %8706 = vst [vmem:[%s406 + $0x38] sm:$0xff] %v8698
        %s8707 = sand.u32 %s291, 1
        %s8708 = scalar_lea.sflag [#allocation3], %s8707
        %s8709 = sand.u32 %s291, 1
        %s8710 = smul.addr %s8709, 64
        %s8711 = scalar_lea.vmem [#allocation2], %s8710
        // Predicated region
        $region69: #{tpu_custom_call.1} parent=67 // pred_check
          %p8712 = pneg %p301
        $region70: #{tpu_custom_call.1} parent=67 // pred_check_branch
          %8714 = sbr.rel (%p8712) target = $region72
        $region71: #{tpu_custom_call.1} parent=67 // pred_region
          %s8716 = ssub.s32 1024, 1024
          %8717 = vsyncadd %s8708, %s8716
          %s8718 = smul.addr %s26, 8
          %s8719 = smul.addr %s8718, 128
          %s8720 = scalar_lea.hbm %s12, %s8719
          %s8721 = sshll.u32 %s8711, 4
          %s8722 = int_to_ptr.vmem [resolvable:$true] %s8721
          %8727 = dma.vmem_to_hbm [thread:$0]  %s8722, 1024, %s8720, %s8708, 256, 256, 16
        $region72: #{tpu_custom_call.1} parent=67 // pred_fallthru
          _
      $region68: #{tpu_custom_call.1} parent=5 // pred_fallthru
        _
      %p8728 = scmp.le.s32.totalorder 2, %s21
      // Predicated region
      $region73: #{tpu_custom_call.1} parent=5 // pred_check
        %p8729 = pneg %p8728
      $region74: #{tpu_custom_call.1} parent=5 // pred_check_branch
        %8731 = sbr.rel (%p8729) target = $region76
      $region75: #{tpu_custom_call.1} parent=5 // pred_region
        %s8732 = ssub.s32 %s21, 2
        // Predicated region
        $region77: #{tpu_custom_call.1} parent=75 // pred_check
          %p8733 = pneg %p307
        $region78: #{tpu_custom_call.1} parent=75 // pred_check_branch
          %8735 = sbr.rel (%p8733) target = $region80
        $region79: #{tpu_custom_call.1} parent=75 // pred_region
          %s8736 = sand.u32 %s292, 1
          %s8737 = scalar_lea.sflag [#allocation3], %s8736
          %s8738 = sand.u32 %s292, 1
          %s8739 = smul.addr %s8738, 64
          %s8740 = scalar_lea.vmem [#allocation2], %s8739
          %8741 = dma.done %s8737, 1024
        $region80: #{tpu_custom_call.1} parent=75 // pred_fallthru
          _
      $region76: #{tpu_custom_call.1} parent=5 // pred_fallthru
        _
    $region6: #{tpu_custom_call.1} parent=1 // loop_footer
      %s25 = sadd.s32 1, %s21
    $region7: #{tpu_custom_call.1} parent=1 // loop_footer_branch
      %20 = sbr.rel target = $region3
    $region8: #{tpu_custom_call.1} parent=1 // loop_exit
      _
    %8742 = vsyncpa [#allocation3], 1
    %s8743 = scalar_lea.sflag [#allocation3], 1
    %8744 = vsyncpa %s8743, 1

</llo_original>
